<compile_context>
chip_gen: v6e
topology: v6e:2x2x1
jax: 0.10.0
libtpu: 0.0.40
codegen_flags: <defaults>
</compile_context>

<pallas_src>
import jax
import jax.numpy as jnp
from jax.experimental import pallas as pl
from jax.experimental.pallas import tpu as pltpu

EPS = 1e-5

# taps used by each output parity for a k=4, s=2, p=1 transposed conv:
#   parity 0 (oh=2m):   (kh=1, ih=m), (kh=3, ih=m-1)
#   parity 1 (oh=2m+1): (kh=0, ih=m+1), (kh=2, ih=m)
_TAPS = {0: ((1, 0), (3, -1)), 1: ((0, 1), (2, 0))}


# ---------------------------------------------------------------------------
# Pallas kernels
# ---------------------------------------------------------------------------
def _deconv_bn_relu_kernel(a_ref, w_ref, g_ref, b_ref, o_ref):
    """Grid axis = phase / spatial tap.

    Per step: one bf16 MXU matmul accumulated (f32) into the resident output
    block o_ref[p].  On the last step: BatchNorm over all (phase, row)
    positions per channel (two-pass centered variance) + ReLU, fully in VMEM.
    """
    p = pl.program_id(0)
    o_ref[p] = jnp.dot(a_ref[0], w_ref[0], preferred_element_type=jnp.float32)

    @pl.when(p == pl.num_programs(0) - 1)
    def _():
        x = o_ref[...]                                    # (P, M, C) f32
        cnt = x.shape[0] * x.shape[1]
        mean = jnp.sum(jnp.sum(x, axis=0), axis=0, keepdims=True) / cnt  # (1,C)
        d = x - mean
        var = jnp.sum(jnp.sum(d * d, axis=0), axis=0, keepdims=True) / cnt
        y = d * jax.lax.rsqrt(var + EPS) * g_ref[...] + b_ref[...]
        o_ref[...] = jnp.maximum(y, 0.0)


def _matmul_bias_tanh_kernel(a_ref, w_ref, b_ref, o_ref):
    acc = jnp.dot(a_ref[...], w_ref[...], preferred_element_type=jnp.float32)
    o_ref[...] = jnp.tanh(acc + b_ref[...])


# ---------------------------------------------------------------------------
# pallas_call wrappers
# ---------------------------------------------------------------------------
def deconv_bn_relu(a_stacked, w_stacked, gamma, beta):
    """a_stacked: (Pa, M, K) bf16 (Pa == P, or 1 for a shared/broadcast input)
       w_stacked: (P, K, C)  bf16
       gamma/beta: (1, C) f32
       returns (P, M, C) f32 = BN(ReLU-fused) conv output, per phase/tap."""
    Pa, M, K = a_stacked.shape
    P, K2, C = w_stacked.shape
    assert K == K2
    a_map = (lambda p: (p, 0, 0)) if Pa == P else (lambda p: (0, 0, 0))
    return pl.pallas_call(
        _deconv_bn_relu_kernel,
        out_shape=jax.ShapeDtypeStruct((P, M, C), jnp.float32),
        grid=(P,),
        in_specs=[
            pl.BlockSpec((1, M, K), a_map),
            pl.BlockSpec((1, K, C), lambda p: (p, 0, 0)),
            pl.BlockSpec((1, C), lambda p: (0, 0)),
            pl.BlockSpec((1, C), lambda p: (0, 0)),
        ],
        # constant index_map -> output stays resident in VMEM across phases
        out_specs=pl.BlockSpec((P, M, C), lambda p: (0, 0, 0)),
        compiler_params=pltpu.CompilerParams(
            dimension_semantics=("arbitrary",)),
    )(a_stacked, w_stacked, gamma, beta)


def matmul_bias_tanh(a, w, bias):
    M, K = a.shape
    K2, C = w.shape
    assert K == K2
    return pl.pallas_call(
        _matmul_bias_tanh_kernel,
        out_shape=jax.ShapeDtypeStruct((M, C), jnp.float32),
        grid=(1,),
        in_specs=[
            pl.BlockSpec((M, K), lambda i: (0, 0)),
            pl.BlockSpec((K, C), lambda i: (0, 0)),
            pl.BlockSpec((1, C), lambda i: (0, 0)),
        ],
        out_specs=pl.BlockSpec((M, C), lambda i: (0, 0)),
        compiler_params=pltpu.CompilerParams(
            dimension_semantics=("arbitrary",)),
    )(a, w, bias)


# ---------------------------------------------------------------------------
# Phase-decomposition glue (cheap shifted views / concats, no zero dilation)
# ---------------------------------------------------------------------------
def _shift_h(x, s, H):
    if s == 0:
        return x
    if s == -1:
        return jnp.pad(x, ((0, 0), (1, 0), (0, 0), (0, 0)))[:, :H]
    return jnp.pad(x, ((0, 0), (0, 1), (0, 0), (0, 0)))[:, 1:]


def _shift_w(x, s, W):
    if s == 0:
        return x
    if s == -1:
        return jnp.pad(x, ((0, 0), (0, 0), (1, 0), (0, 0)))[:, :, :W]
    return jnp.pad(x, ((0, 0), (0, 0), (0, 1), (0, 0)))[:, :, 1:]


def _phase_patches(x, dtype=jnp.bfloat16):
    """x: (N, H, W, Cin) -> (4, N*H*W, 4*Cin) bf16, phase order p=2*ph+pw."""
    N, H, W, C = x.shape
    phases = []
    for ph in (0, 1):
        for pw in (0, 1):
            slabs = []
            for _, sh in _TAPS[ph]:
                xh = _shift_h(x, sh, H)
                for _, sw in _TAPS[pw]:
                    slabs.append(_shift_w(xh, sw, W))
            pm = jnp.concatenate(slabs, axis=-1)            # (N, H, W, 4C)
            phases.append(pm.reshape(N * H * W, 4 * C))
    return jnp.stack(phases, axis=0).astype(dtype)          # (4, NHW, 4C)


def _phase_weights(w_torch):
    """w_torch: (Cin, Cout, 4, 4) -> (4, 4*Cin, Cout), tap order matching
    _phase_patches."""
    blocks_per_phase = []
    for ph in (0, 1):
        for pw in (0, 1):
            blocks = []
            for kh, _ in _TAPS[ph]:
                for kw, _ in _TAPS[pw]:
                    blocks.append(w_torch[:, :, kh, kw])     # (Cin, Cout)
            blocks_per_phase.append(jnp.concatenate(blocks, axis=0))
    return jnp.stack(blocks_per_phase, axis=0)               # (4, 4Cin, Cout)


def _phase_recombine(y, N, H, W, C):
    """y: (4, N*H*W, C) per-phase outputs -> (N, 2H, 2W, C)."""
    y = y.reshape(2, 2, N, H, W, C)                 # (ph, pw, n, m, l, c)
    y = jnp.transpose(y, (2, 3, 0, 4, 1, 5))        # (n, m, ph, l, pw, c)
    return y.reshape(N, 2 * H, 2 * W, C)


# ---------------------------------------------------------------------------
# Parameters (synthetic, matching weight_init(0.0, 0.02): normal weights,
# zero conv biases, BN gamma=1 / beta=0), pre-packed into kernel layouts.
# ---------------------------------------------------------------------------
def init_params(key):
    ks = jax.random.split(key, 5)
    std = 0.02
    # torch-layout ConvTranspose2d weights: (Cin, Cout, KH, KW)
    w1_1 = std * jax.random.normal(ks[0], (100, 256, 4, 4), jnp.float32)
    w1_2 = std * jax.random.normal(ks[1], (10, 256, 4, 4), jnp.float32)
    w2 = std * jax.random.normal(ks[2], (512, 256, 4, 4), jnp.float32)
    w3 = std * jax.random.normal(ks[3], (256, 128, 4, 4), jnp.float32)
    w4 = std * jax.random.normal(ks[4], (128, 1, 4, 4), jnp.float32)

    p = {}

    # Fused head: both 1x1-input deconvs in one matmul. Rows = [z(100)|y(10)|pad],
    # 16 spatial taps x 512 output channels ([x-branch 256 | y-branch 256]).
    wh = jnp.zeros((16, 128, 512), jnp.float32)
    wh = wh.at[:, :100, :256].set(
        jnp.transpose(w1_1, (2, 3, 0, 1)).reshape(16, 100, 256))
    wh = wh.at[:, 100:110, 256:].set(
        jnp.transpose(w1_2, (2, 3, 0, 1)).reshape(16, 10, 256))
    p["w_head"] = wh.astype(jnp.bfloat16)
    p["bn_head_g"] = jnp.ones((1, 512), jnp.float32)    # [bn1_1_g | bn1_2_g]
    p["bn_head_b"] = jnp.zeros((1, 512), jnp.float32)   # [bn1_1_b | bn1_2_b]
    # conv biases feeding BN are dropped: BN mean-subtraction cancels them.

    # Stride-2 deconvs: phase-decomposed bf16 weights.
    p["w2_ph"] = _phase_weights(w2).astype(jnp.bfloat16)   # (4, 2048, 256)
    p["bn2_g"] = jnp.ones((1, 256), jnp.float32)
    p["bn2_b"] = jnp.zeros((1, 256), jnp.float32)
    p["w3_ph"] = _phase_weights(w3).astype(jnp.bfloat16)   # (4, 1024, 128)
    p["bn3_g"] = jnp.ones((1, 128), jnp.float32)
    p["bn3_b"] = jnp.zeros((1, 128), jnp.float32)

    # deconv4 (Cout=1) + tanh: pack the 4 phases block-diagonally into 4 lane
    # columns of a single (2048, 4) weight (instead of padding Cout 1 -> 128).
    w4_ph = _phase_weights(w4)                              # (4, 512, 1)
    w4bd = jnp.zeros((4 * 512, 4), jnp.float32)
    for q in range(4):
        w4bd = w4bd.at[q * 512:(q + 1) * 512, q].set(w4_ph[q, :, 0])
    p["w4_bd"] = w4bd.astype(jnp.bfloat16)
    p["b4"] = jnp.zeros((1, 4), jnp.float32)                # zero-init bias
    return p


# ---------------------------------------------------------------------------
# Forward pass (mirrors Generator.forward; NCHW in / NCHW out)
# ---------------------------------------------------------------------------
def generator_forward(params, z_nchw, label_nchw):
    N = z_nchw.shape[0]
    z = z_nchw.reshape(N, 100).astype(jnp.float32)
    y = label_nchw.reshape(N, 10).astype(jnp.float32)

    # Head: deconv1_1(z) & deconv1_2(y) on 1x1 input + their BN + ReLU, fused.
    zy = jnp.concatenate([z, y, jnp.zeros((N, 18), jnp.float32)], axis=1)
    a_head = zy.astype(jnp.bfloat16)[None]                  # (1, N, 128)
    h = deconv_bn_relu(a_head, params["w_head"],
                       params["bn_head_g"], params["bn_head_b"])  # (16, N, 512)
    h = jnp.transpose(h, (1, 0, 2)).reshape(N, 4, 4, 512)   # == cat([x, y], C)

    # deconv2 + BN + ReLU -> (N, 8, 8, 256)
    h = deconv_bn_relu(_phase_patches(h), params["w2_ph"],
                       params["bn2_g"], params["bn2_b"])
    h = _phase_recombine(h, N, 4, 4, 256)

    # deconv3 + BN + ReLU -> (N, 16, 16, 128)
    h = deconv_bn_relu(_phase_patches(h), params["w3_ph"],
                       params["bn3_g"], params["bn3_b"])
    h = _phase_recombine(h, N, 8, 8, 128)

    # deconv4 + tanh -> (N, 1, 32, 32)
    p4 = _phase_patches(h)                                  # (4, N*256, 512)
    a4 = jnp.concatenate([p4[0], p4[1], p4[2], p4[3]], axis=1)  # (N*256, 2048)
    o4 = matmul_bias_tanh(a4, params["w4_bd"], params["b4"])    # (N*256, 4)
    o4 = o4.reshape(N, 16, 16, 2, 2)                        # (n, m, l, ph, pw)
    o4 = jnp.transpose(o4, (0, 1, 3, 2, 4)).reshape(N, 32, 32)
    return o4.reshape(N, 1, 32, 32)


if __name__ == "__main__":
    key = jax.random.PRNGKey(0)
    k_param, k_z, k_lab = jax.random.split(key, 3)

    params = init_params(k_param)
    batch = 2
    z = jax.random.normal(k_z, (batch, 100, 1, 1), jnp.float32)       # noise
    label = jax.random.normal(k_lab, (batch, 10, 1, 1), jnp.float32)  # condition

    out = jax.jit(generator_forward)(params, z, label)
    out = jax.block_until_ready(out)

    assert out.shape == (batch, 1, 32, 32), out.shape
    assert bool(jnp.all(jnp.isfinite(out)))
    assert bool(jnp.all(jnp.abs(out) <= 1.0 + 1e-6))  # tanh range
    print("KERNEL_OK")
</pallas_src>

<mosaic_0001>
module attributes {stable_mosaic.version = 11 : i64} {
  func.func @_deconv_bn_relu_kernel(%arg0: i32, %arg1: memref<1x2x128xbf16, #tpu.memory_space<vmem>>, %arg2: memref<1x128x512xbf16, #tpu.memory_space<vmem>>, %arg3: memref<1x512xf32, #tpu.memory_space<vmem>>, %arg4: memref<1x512xf32, #tpu.memory_space<vmem>>, %arg5: memref<16x2x512xf32, #tpu.memory_space<vmem>>) attributes {dimension_semantics = [#tpu.dimension_semantics<arbitrary>], iteration_bounds = array<i64: 16>, scalar_prefetch = 0 : i64, scratch_operands = 0 : i64, tpu.core_type = #tpu.core_type<tc>, window_params = [{pipeline_mode = #tpu.pipeline_mode<synchronous>, transform_indices = @transform_0, window_bounds = array<i64: 1, 2, 128>}, {transform_indices = @transform_1, window_bounds = array<i64: 1, 128, 512>}, {pipeline_mode = #tpu.pipeline_mode<synchronous>, transform_indices = @transform_2, window_bounds = array<i64: 1, 512>}, {pipeline_mode = #tpu.pipeline_mode<synchronous>, transform_indices = @transform_3, window_bounds = array<i64: 1, 512>}, {pipeline_mode = #tpu.pipeline_mode<synchronous>, transform_indices = @transform_4, window_bounds = array<i64: 16, 2, 512>}]} {
    %c0 = arith.constant 0 : index
    %c0_0 = arith.constant 0 : index
    %c0_1 = arith.constant 0 : index
    %0 = vector.load %arg1[%c0, %c0_0, %c0_1] : memref<1x2x128xbf16, #tpu.memory_space<vmem>>, vector<1x2x128xbf16>
    %1 = vector.shape_cast %0 : vector<1x2x128xbf16> to vector<2x128xbf16>
    %c0_2 = arith.constant 0 : index
    %c0_3 = arith.constant 0 : index
    %c0_4 = arith.constant 0 : index
    %2 = vector.load %arg2[%c0_2, %c0_3, %c0_4] : memref<1x128x512xbf16, #tpu.memory_space<vmem>>, vector<1x128x512xbf16>
    %3 = vector.shape_cast %2 : vector<1x128x512xbf16> to vector<128x512xbf16>
    %cst = arith.constant dense<0.000000e+00> : vector<2x512xf32>
    %4 = tpu.matmul %1, %3, %cst {dimension_numbers = #tpu.dot_dimension_numbers<[1], [0], [0], [1], [0, 0, 1, 1], [], []>} : vector<2x128xbf16>, vector<128x512xbf16>, vector<2x512xf32> -> vector<2x512xf32>
    %5 = arith.index_cast %arg0 : i32 to index
    %c0_5 = arith.constant 0 : index
    %c0_6 = arith.constant 0 : index
    %6 = vector.load %arg5[%5, %c0_5, %c0_6] : memref<16x2x512xf32, #tpu.memory_space<vmem>>, vector<1x2x512xf32>
    %7 = vector.shape_cast %6 : vector<1x2x512xf32> to vector<2x512xf32>
    %8 = vector.shape_cast %4 : vector<2x512xf32> to vector<1x2x512xf32>
    tpu.vector_store %arg5[%5, %c0_5, %c0_6], %8 {strides = array<i32>} : memref<16x2x512xf32, #tpu.memory_space<vmem>>, vector<1x2x512xf32>,
    %c15_i32 = arith.constant 15 : i32
    %9 = arith.cmpi eq, %arg0, %c15_i32 : i32
    %10 = arith.extui %9 : i1 to i32
    %c0_i32 = arith.constant 0 : i32
    %11 = arith.cmpi ne, %10, %c0_i32 : i32
    scf.if %11 {
      %c0_7 = arith.constant 0 : index
      %c0_8 = arith.constant 0 : index
      %c0_9 = arith.constant 0 : index
      %12 = vector.load %arg5[%c0_7, %c0_8, %c0_9] : memref<16x2x512xf32, #tpu.memory_space<vmem>>, vector<16x2x512xf32>
      %cst_10 = arith.constant dense<0.000000e+00> : vector<2x512xf32>
      %13 = vector.multi_reduction <add>, %12, %cst_10 [0] : vector<16x2x512xf32> to vector<2x512xf32>
      %cst_11 = arith.constant dense<0.000000e+00> : vector<512xf32>
      %14 = vector.multi_reduction <add>, %13, %cst_11 [0] : vector<2x512xf32> to vector<512xf32>
      %15 = vector.shape_cast %14 : vector<512xf32> to vector<1x512xf32>
      %cst_12 = arith.constant 3.200000e+01 : f32
      %16 = vector.broadcast %cst_12 : f32 to vector<1x512xf32>
      %17 = arith.divf %15, %16 : vector<1x512xf32>
      %18 = vector.shape_cast %17 : vector<1x512xf32> to vector<1x1x512xf32>
      %19 = vector.broadcast %18 : vector<1x1x512xf32> to vector<16x2x512xf32>
      %20 = arith.subf %12, %19 : vector<16x2x512xf32>
      %21 = arith.mulf %20, %20 : vector<16x2x512xf32>
      %cst_13 = arith.constant dense<0.000000e+00> : vector<2x512xf32>
      %22 = vector.multi_reduction <add>, %21, %cst_13 [0] : vector<16x2x512xf32> to vector<2x512xf32>
      %cst_14 = arith.constant dense<0.000000e+00> : vector<512xf32>
      %23 = vector.multi_reduction <add>, %22, %cst_14 [0] : vector<2x512xf32> to vector<512xf32>
      %24 = vector.shape_cast %23 : vector<512xf32> to vector<1x512xf32>
      %cst_15 = arith.constant 3.200000e+01 : f32
      %25 = vector.broadcast %cst_15 : f32 to vector<1x512xf32>
      %26 = arith.divf %24, %25 : vector<1x512xf32>
      %cst_16 = arith.constant 9.99999974E-6 : f32
      %27 = vector.broadcast %cst_16 : f32 to vector<1x512xf32>
      %28 = arith.addf %26, %27 : vector<1x512xf32>
      %29 = math.rsqrt %28 : vector<1x512xf32>
      %30 = vector.shape_cast %29 : vector<1x512xf32> to vector<1x1x512xf32>
      %31 = vector.broadcast %30 : vector<1x1x512xf32> to vector<16x2x512xf32>
      %32 = arith.mulf %20, %31 : vector<16x2x512xf32>
      %c0_17 = arith.constant 0 : index
      %c0_18 = arith.constant 0 : index
      %33 = vector.load %arg3[%c0_17, %c0_18] : memref<1x512xf32, #tpu.memory_space<vmem>>, vector<1x512xf32>
      %34 = vector.shape_cast %33 : vector<1x512xf32> to vector<1x1x512xf32>
      %35 = vector.broadcast %34 : vector<1x1x512xf32> to vector<16x2x512xf32>
      %36 = arith.mulf %32, %35 : vector<16x2x512xf32>
      %c0_19 = arith.constant 0 : index
      %c0_20 = arith.constant 0 : index
      %37 = vector.load %arg4[%c0_19, %c0_20] : memref<1x512xf32, #tpu.memory_space<vmem>>, vector<1x512xf32>
      %38 = vector.shape_cast %37 : vector<1x512xf32> to vector<1x1x512xf32>
      %39 = vector.broadcast %38 : vector<1x1x512xf32> to vector<16x2x512xf32>
      %40 = arith.addf %36, %39 : vector<16x2x512xf32>
      %cst_21 = arith.constant 0.000000e+00 : f32
      %41 = vector.broadcast %cst_21 : f32 to vector<16x2x512xf32>
      %42 = arith.maximumf %40, %41 : vector<16x2x512xf32>
      %c0_22 = arith.constant 0 : index
      %c0_23 = arith.constant 0 : index
      %c0_24 = arith.constant 0 : index
      %43 = vector.load %arg5[%c0_22, %c0_23, %c0_24] : memref<16x2x512xf32, #tpu.memory_space<vmem>>, vector<16x2x512xf32>
      tpu.vector_store %arg5[%c0_22, %c0_23, %c0_24], %42 {strides = array<i32>} : memref<16x2x512xf32, #tpu.memory_space<vmem>>, vector<16x2x512xf32>,
    } else {
    }
    return
  }
  func.func @transform_0(%arg0: i32) -> (i32, i32, i32) {
    %c0_i32 = arith.constant 0 : i32
    %c0_i32_0 = arith.constant 0 : i32
    %c0_i32_1 = arith.constant 0 : i32
    %c0_i32_2 = arith.constant 0 : i32
    return %c0_i32, %c0_i32_0, %c0_i32_1 : i32, i32, i32
  }
  func.func @transform_1(%arg0: i32) -> (i32, i32, i32) {
    %c0_i32 = arith.constant 0 : i32
    %c0_i32_0 = arith.constant 0 : i32
    %c0_i32_1 = arith.constant 0 : i32
    return %arg0, %c0_i32, %c0_i32_0 : i32, i32, i32
  }
  func.func @transform_2(%arg0: i32) -> (i32, i32) {
    %c0_i32 = arith.constant 0 : i32
    %c0_i32_0 = arith.constant 0 : i32
    %c0_i32_1 = arith.constant 0 : i32
    return %c0_i32, %c0_i32_0 : i32, i32
  }
  func.func @transform_3(%arg0: i32) -> (i32, i32) {
    %c0_i32 = arith.constant 0 : i32
    %c0_i32_0 = arith.constant 0 : i32
    %c0_i32_1 = arith.constant 0 : i32
    return %c0_i32, %c0_i32_0 : i32, i32
  }
  func.func @transform_4(%arg0: i32) -> (i32, i32, i32) {
    %c0_i32 = arith.constant 0 : i32
    %c0_i32_0 = arith.constant 0 : i32
    %c0_i32_1 = arith.constant 0 : i32
    %c0_i32_2 = arith.constant 0 : i32
    return %c0_i32, %c0_i32_0, %c0_i32_1 : i32, i32, i32
  }
}

module attributes {stable_mosaic.version = 11 : i64} {
  func.func @_deconv_bn_relu_kernel(%arg0: i32, %arg1: memref<1x32x2048xbf16, #tpu.memory_space<vmem>>, %arg2: memref<1x2048x256xbf16, #tpu.memory_space<vmem>>, %arg3: memref<1x256xf32, #tpu.memory_space<vmem>>, %arg4: memref<1x256xf32, #tpu.memory_space<vmem>>, %arg5: memref<4x32x256xf32, #tpu.memory_space<vmem>>) attributes {dimension_semantics = [#tpu.dimension_semantics<arbitrary>], iteration_bounds = array<i64: 4>, scalar_prefetch = 0 : i64, scratch_operands = 0 : i64, tpu.core_type = #tpu.core_type<tc>, window_params = [{transform_indices = @transform_0, window_bounds = array<i64: 1, 32, 2048>}, {transform_indices = @transform_1, window_bounds = array<i64: 1, 2048, 256>}, {pipeline_mode = #tpu.pipeline_mode<synchronous>, transform_indices = @transform_2, window_bounds = array<i64: 1, 256>}, {pipeline_mode = #tpu.pipeline_mode<synchronous>, transform_indices = @transform_3, window_bounds = array<i64: 1, 256>}, {pipeline_mode = #tpu.pipeline_mode<synchronous>, transform_indices = @transform_4, window_bounds = array<i64: 4, 32, 256>}]} {
    %c0 = arith.constant 0 : index
    %c0_0 = arith.constant 0 : index
    %c0_1 = arith.constant 0 : index
    %0 = vector.load %arg1[%c0, %c0_0, %c0_1] : memref<1x32x2048xbf16, #tpu.memory_space<vmem>>, vector<1x32x2048xbf16>
    %1 = vector.shape_cast %0 : vector<1x32x2048xbf16> to vector<32x2048xbf16>
    %c0_2 = arith.constant 0 : index
    %c0_3 = arith.constant 0 : index
    %c0_4 = arith.constant 0 : index
    %2 = vector.load %arg2[%c0_2, %c0_3, %c0_4] : memref<1x2048x256xbf16, #tpu.memory_space<vmem>>, vector<1x2048x256xbf16>
    %3 = vector.shape_cast %2 : vector<1x2048x256xbf16> to vector<2048x256xbf16>
    %cst = arith.constant dense<0.000000e+00> : vector<32x256xf32>
    %4 = tpu.matmul %1, %3, %cst {dimension_numbers = #tpu.dot_dimension_numbers<[1], [0], [0], [1], [0, 0, 1, 1], [], []>} : vector<32x2048xbf16>, vector<2048x256xbf16>, vector<32x256xf32> -> vector<32x256xf32>
    %5 = arith.index_cast %arg0 : i32 to index
    %c0_5 = arith.constant 0 : index
    %c0_6 = arith.constant 0 : index
    %6 = vector.load %arg5[%5, %c0_5, %c0_6] : memref<4x32x256xf32, #tpu.memory_space<vmem>>, vector<1x32x256xf32>
    %7 = vector.shape_cast %6 : vector<1x32x256xf32> to vector<32x256xf32>
    %8 = vector.shape_cast %4 : vector<32x256xf32> to vector<1x32x256xf32>
    tpu.vector_store %arg5[%5, %c0_5, %c0_6], %8 {strides = array<i32>} : memref<4x32x256xf32, #tpu.memory_space<vmem>>, vector<1x32x256xf32>,
    %c3_i32 = arith.constant 3 : i32
    %9 = arith.cmpi eq, %arg0, %c3_i32 : i32
    %10 = arith.extui %9 : i1 to i32
    %c0_i32 = arith.constant 0 : i32
    %11 = arith.cmpi ne, %10, %c0_i32 : i32
    scf.if %11 {
      %c0_7 = arith.constant 0 : index
      %c0_8 = arith.constant 0 : index
      %c0_9 = arith.constant 0 : index
      %12 = vector.load %arg5[%c0_7, %c0_8, %c0_9] : memref<4x32x256xf32, #tpu.memory_space<vmem>>, vector<4x32x256xf32>
      %cst_10 = arith.constant dense<0.000000e+00> : vector<32x256xf32>
      %13 = vector.multi_reduction <add>, %12, %cst_10 [0] : vector<4x32x256xf32> to vector<32x256xf32>
      %cst_11 = arith.constant dense<0.000000e+00> : vector<256xf32>
      %14 = vector.multi_reduction <add>, %13, %cst_11 [0] : vector<32x256xf32> to vector<256xf32>
      %15 = vector.shape_cast %14 : vector<256xf32> to vector<1x256xf32>
      %cst_12 = arith.constant 1.280000e+02 : f32
      %16 = vector.broadcast %cst_12 : f32 to vector<1x256xf32>
      %17 = arith.divf %15, %16 : vector<1x256xf32>
      %18 = vector.shape_cast %17 : vector<1x256xf32> to vector<1x1x256xf32>
      %19 = vector.broadcast %18 : vector<1x1x256xf32> to vector<4x32x256xf32>
      %20 = arith.subf %12, %19 : vector<4x32x256xf32>
      %21 = arith.mulf %20, %20 : vector<4x32x256xf32>
      %cst_13 = arith.constant dense<0.000000e+00> : vector<32x256xf32>
      %22 = vector.multi_reduction <add>, %21, %cst_13 [0] : vector<4x32x256xf32> to vector<32x256xf32>
      %cst_14 = arith.constant dense<0.000000e+00> : vector<256xf32>
      %23 = vector.multi_reduction <add>, %22, %cst_14 [0] : vector<32x256xf32> to vector<256xf32>
      %24 = vector.shape_cast %23 : vector<256xf32> to vector<1x256xf32>
      %cst_15 = arith.constant 1.280000e+02 : f32
      %25 = vector.broadcast %cst_15 : f32 to vector<1x256xf32>
      %26 = arith.divf %24, %25 : vector<1x256xf32>
      %cst_16 = arith.constant 9.99999974E-6 : f32
      %27 = vector.broadcast %cst_16 : f32 to vector<1x256xf32>
      %28 = arith.addf %26, %27 : vector<1x256xf32>
      %29 = math.rsqrt %28 : vector<1x256xf32>
      %30 = vector.shape_cast %29 : vector<1x256xf32> to vector<1x1x256xf32>
      %31 = vector.broadcast %30 : vector<1x1x256xf32> to vector<4x32x256xf32>
      %32 = arith.mulf %20, %31 : vector<4x32x256xf32>
      %c0_17 = arith.constant 0 : index
      %c0_18 = arith.constant 0 : index
      %33 = vector.load %arg3[%c0_17, %c0_18] : memref<1x256xf32, #tpu.memory_space<vmem>>, vector<1x256xf32>
      %34 = vector.shape_cast %33 : vector<1x256xf32> to vector<1x1x256xf32>
      %35 = vector.broadcast %34 : vector<1x1x256xf32> to vector<4x32x256xf32>
      %36 = arith.mulf %32, %35 : vector<4x32x256xf32>
      %c0_19 = arith.constant 0 : index
      %c0_20 = arith.constant 0 : index
      %37 = vector.load %arg4[%c0_19, %c0_20] : memref<1x256xf32, #tpu.memory_space<vmem>>, vector<1x256xf32>
      %38 = vector.shape_cast %37 : vector<1x256xf32> to vector<1x1x256xf32>
      %39 = vector.broadcast %38 : vector<1x1x256xf32> to vector<4x32x256xf32>
      %40 = arith.addf %36, %39 : vector<4x32x256xf32>
      %cst_21 = arith.constant 0.000000e+00 : f32
      %41 = vector.broadcast %cst_21 : f32 to vector<4x32x256xf32>
      %42 = arith.maximumf %40, %41 : vector<4x32x256xf32>
      %c0_22 = arith.constant 0 : index
      %c0_23 = arith.constant 0 : index
      %c0_24 = arith.constant 0 : index
      %43 = vector.load %arg5[%c0_22, %c0_23, %c0_24] : memref<4x32x256xf32, #tpu.memory_space<vmem>>, vector<4x32x256xf32>
      tpu.vector_store %arg5[%c0_22, %c0_23, %c0_24], %42 {strides = array<i32>} : memref<4x32x256xf32, #tpu.memory_space<vmem>>, vector<4x32x256xf32>,
    } else {
    }
    return
  }
  func.func @transform_0(%arg0: i32) -> (i32, i32, i32) {
    %c0_i32 = arith.constant 0 : i32
    %c0_i32_0 = arith.constant 0 : i32
    %c0_i32_1 = arith.constant 0 : i32
    return %arg0, %c0_i32, %c0_i32_0 : i32, i32, i32
  }
  func.func @transform_1(%arg0: i32) -> (i32, i32, i32) {
    %c0_i32 = arith.constant 0 : i32
    %c0_i32_0 = arith.constant 0 : i32
    %c0_i32_1 = arith.constant 0 : i32
    return %arg0, %c0_i32, %c0_i32_0 : i32, i32, i32
  }
  func.func @transform_2(%arg0: i32) -> (i32, i32) {
    %c0_i32 = arith.constant 0 : i32
    %c0_i32_0 = arith.constant 0 : i32
    %c0_i32_1 = arith.constant 0 : i32
    return %c0_i32, %c0_i32_0 : i32, i32
  }
  func.func @transform_3(%arg0: i32) -> (i32, i32) {
    %c0_i32 = arith.constant 0 : i32
    %c0_i32_0 = arith.constant 0 : i32
    %c0_i32_1 = arith.constant 0 : i32
    return %c0_i32, %c0_i32_0 : i32, i32
  }
  func.func @transform_4(%arg0: i32) -> (i32, i32, i32) {
    %c0_i32 = arith.constant 0 : i32
    %c0_i32_0 = arith.constant 0 : i32
    %c0_i32_1 = arith.constant 0 : i32
    %c0_i32_2 = arith.constant 0 : i32
    return %c0_i32, %c0_i32_0, %c0_i32_1 : i32, i32, i32
  }
}

module attributes {stable_mosaic.version = 11 : i64} {
  func.func @_deconv_bn_relu_kernel(%arg0: i32, %arg1: memref<1x128x1024xbf16, #tpu.memory_space<vmem>>, %arg2: memref<1x1024x128xbf16, #tpu.memory_space<vmem>>, %arg3: memref<1x128xf32, #tpu.memory_space<vmem>>, %arg4: memref<1x128xf32, #tpu.memory_space<vmem>>, %arg5: memref<4x128x128xf32, #tpu.memory_space<vmem>>) attributes {dimension_semantics = [#tpu.dimension_semantics<arbitrary>], iteration_bounds = array<i64: 4>, scalar_prefetch = 0 : i64, scratch_operands = 0 : i64, tpu.core_type = #tpu.core_type<tc>, window_params = [{transform_indices = @transform_0, window_bounds = array<i64: 1, 128, 1024>}, {transform_indices = @transform_1, window_bounds = array<i64: 1, 1024, 128>}, {pipeline_mode = #tpu.pipeline_mode<synchronous>, transform_indices = @transform_2, window_bounds = array<i64: 1, 128>}, {pipeline_mode = #tpu.pipeline_mode<synchronous>, transform_indices = @transform_3, window_bounds = array<i64: 1, 128>}, {pipeline_mode = #tpu.pipeline_mode<synchronous>, transform_indices = @transform_4, window_bounds = array<i64: 4, 128, 128>}]} {
    %c0 = arith.constant 0 : index
    %c0_0 = arith.constant 0 : index
    %c0_1 = arith.constant 0 : index
    %0 = vector.load %arg1[%c0, %c0_0, %c0_1] : memref<1x128x1024xbf16, #tpu.memory_space<vmem>>, vector<1x128x1024xbf16>
    %1 = vector.shape_cast %0 : vector<1x128x1024xbf16> to vector<128x1024xbf16>
    %c0_2 = arith.constant 0 : index
    %c0_3 = arith.constant 0 : index
    %c0_4 = arith.constant 0 : index
    %2 = vector.load %arg2[%c0_2, %c0_3, %c0_4] : memref<1x1024x128xbf16, #tpu.memory_space<vmem>>, vector<1x1024x128xbf16>
    %3 = vector.shape_cast %2 : vector<1x1024x128xbf16> to vector<1024x128xbf16>
    %cst = arith.constant dense<0.000000e+00> : vector<128x128xf32>
    %4 = tpu.matmul %1, %3, %cst {dimension_numbers = #tpu.dot_dimension_numbers<[1], [0], [0], [1], [0, 0, 1, 1], [], []>} : vector<128x1024xbf16>, vector<1024x128xbf16>, vector<128x128xf32> -> vector<128x128xf32>
    %5 = arith.index_cast %arg0 : i32 to index
    %c0_5 = arith.constant 0 : index
    %c0_6 = arith.constant 0 : index
    %6 = vector.load %arg5[%5, %c0_5, %c0_6] : memref<4x128x128xf32, #tpu.memory_space<vmem>>, vector<1x128x128xf32>
    %7 = vector.shape_cast %6 : vector<1x128x128xf32> to vector<128x128xf32>
    %8 = vector.shape_cast %4 : vector<128x128xf32> to vector<1x128x128xf32>
    tpu.vector_store %arg5[%5, %c0_5, %c0_6], %8 {strides = array<i32>} : memref<4x128x128xf32, #tpu.memory_space<vmem>>, vector<1x128x128xf32>,
    %c3_i32 = arith.constant 3 : i32
    %9 = arith.cmpi eq, %arg0, %c3_i32 : i32
    %10 = arith.extui %9 : i1 to i32
    %c0_i32 = arith.constant 0 : i32
    %11 = arith.cmpi ne, %10, %c0_i32 : i32
    scf.if %11 {
      %c0_7 = arith.constant 0 : index
      %c0_8 = arith.constant 0 : index
      %c0_9 = arith.constant 0 : index
      %12 = vector.load %arg5[%c0_7, %c0_8, %c0_9] : memref<4x128x128xf32, #tpu.memory_space<vmem>>, vector<4x128x128xf32>
      %cst_10 = arith.constant dense<0.000000e+00> : vector<128x128xf32>
      %13 = vector.multi_reduction <add>, %12, %cst_10 [0] : vector<4x128x128xf32> to vector<128x128xf32>
      %cst_11 = arith.constant dense<0.000000e+00> : vector<128xf32>
      %14 = vector.multi_reduction <add>, %13, %cst_11 [0] : vector<128x128xf32> to vector<128xf32>
      %15 = vector.shape_cast %14 : vector<128xf32> to vector<1x128xf32>
      %cst_12 = arith.constant 5.120000e+02 : f32
      %16 = vector.broadcast %cst_12 : f32 to vector<1x128xf32>
      %17 = arith.divf %15, %16 : vector<1x128xf32>
      %18 = vector.shape_cast %17 : vector<1x128xf32> to vector<1x1x128xf32>
      %19 = vector.broadcast %18 : vector<1x1x128xf32> to vector<4x128x128xf32>
      %20 = arith.subf %12, %19 : vector<4x128x128xf32>
      %21 = arith.mulf %20, %20 : vector<4x128x128xf32>
      %cst_13 = arith.constant dense<0.000000e+00> : vector<128x128xf32>
      %22 = vector.multi_reduction <add>, %21, %cst_13 [0] : vector<4x128x128xf32> to vector<128x128xf32>
      %cst_14 = arith.constant dense<0.000000e+00> : vector<128xf32>
      %23 = vector.multi_reduction <add>, %22, %cst_14 [0] : vector<128x128xf32> to vector<128xf32>
      %24 = vector.shape_cast %23 : vector<128xf32> to vector<1x128xf32>
      %cst_15 = arith.constant 5.120000e+02 : f32
      %25 = vector.broadcast %cst_15 : f32 to vector<1x128xf32>
      %26 = arith.divf %24, %25 : vector<1x128xf32>
      %cst_16 = arith.constant 9.99999974E-6 : f32
      %27 = vector.broadcast %cst_16 : f32 to vector<1x128xf32>
      %28 = arith.addf %26, %27 : vector<1x128xf32>
      %29 = math.rsqrt %28 : vector<1x128xf32>
      %30 = vector.shape_cast %29 : vector<1x128xf32> to vector<1x1x128xf32>
      %31 = vector.broadcast %30 : vector<1x1x128xf32> to vector<4x128x128xf32>
      %32 = arith.mulf %20, %31 : vector<4x128x128xf32>
      %c0_17 = arith.constant 0 : index
      %c0_18 = arith.constant 0 : index
      %33 = vector.load %arg3[%c0_17, %c0_18] : memref<1x128xf32, #tpu.memory_space<vmem>>, vector<1x128xf32>
      %34 = vector.shape_cast %33 : vector<1x128xf32> to vector<1x1x128xf32>
      %35 = vector.broadcast %34 : vector<1x1x128xf32> to vector<4x128x128xf32>
      %36 = arith.mulf %32, %35 : vector<4x128x128xf32>
      %c0_19 = arith.constant 0 : index
      %c0_20 = arith.constant 0 : index
      %37 = vector.load %arg4[%c0_19, %c0_20] : memref<1x128xf32, #tpu.memory_space<vmem>>, vector<1x128xf32>
      %38 = vector.shape_cast %37 : vector<1x128xf32> to vector<1x1x128xf32>
      %39 = vector.broadcast %38 : vector<1x1x128xf32> to vector<4x128x128xf32>
      %40 = arith.addf %36, %39 : vector<4x128x128xf32>
      %cst_21 = arith.constant 0.000000e+00 : f32
      %41 = vector.broadcast %cst_21 : f32 to vector<4x128x128xf32>
      %42 = arith.maximumf %40, %41 : vector<4x128x128xf32>
      %c0_22 = arith.constant 0 : index
      %c0_23 = arith.constant 0 : index
      %c0_24 = arith.constant 0 : index
      %43 = vector.load %arg5[%c0_22, %c0_23, %c0_24] : memref<4x128x128xf32, #tpu.memory_space<vmem>>, vector<4x128x128xf32>
      tpu.vector_store %arg5[%c0_22, %c0_23, %c0_24], %42 {strides = array<i32>} : memref<4x128x128xf32, #tpu.memory_space<vmem>>, vector<4x128x128xf32>,
    } else {
    }
    return
  }
  func.func @transform_0(%arg0: i32) -> (i32, i32, i32) {
    %c0_i32 = arith.constant 0 : i32
    %c0_i32_0 = arith.constant 0 : i32
    %c0_i32_1 = arith.constant 0 : i32
    return %arg0, %c0_i32, %c0_i32_0 : i32, i32, i32
  }
  func.func @transform_1(%arg0: i32) -> (i32, i32, i32) {
    %c0_i32 = arith.constant 0 : i32
    %c0_i32_0 = arith.constant 0 : i32
    %c0_i32_1 = arith.constant 0 : i32
    return %arg0, %c0_i32, %c0_i32_0 : i32, i32, i32
  }
  func.func @transform_2(%arg0: i32) -> (i32, i32) {
    %c0_i32 = arith.constant 0 : i32
    %c0_i32_0 = arith.constant 0 : i32
    %c0_i32_1 = arith.constant 0 : i32
    return %c0_i32, %c0_i32_0 : i32, i32
  }
  func.func @transform_3(%arg0: i32) -> (i32, i32) {
    %c0_i32 = arith.constant 0 : i32
    %c0_i32_0 = arith.constant 0 : i32
    %c0_i32_1 = arith.constant 0 : i32
    return %c0_i32, %c0_i32_0 : i32, i32
  }
  func.func @transform_4(%arg0: i32) -> (i32, i32, i32) {
    %c0_i32 = arith.constant 0 : i32
    %c0_i32_0 = arith.constant 0 : i32
    %c0_i32_1 = arith.constant 0 : i32
    %c0_i32_2 = arith.constant 0 : i32
    return %c0_i32, %c0_i32_0, %c0_i32_1 : i32, i32, i32
  }
}

module attributes {stable_mosaic.version = 11 : i64} {
  func.func @_matmul_bias_tanh_kernel(%arg0: i32, %arg1: memref<512x2048xbf16, #tpu.memory_space<vmem>>, %arg2: memref<2048x4xbf16, #tpu.memory_space<vmem>>, %arg3: memref<1x4xf32, #tpu.memory_space<vmem>>, %arg4: memref<512x4xf32, #tpu.memory_space<vmem>>) attributes {dimension_semantics = [#tpu.dimension_semantics<arbitrary>], iteration_bounds = array<i64: 1>, scalar_prefetch = 0 : i64, scratch_operands = 0 : i64, tpu.core_type = #tpu.core_type<tc>, window_params = [{pipeline_mode = #tpu.pipeline_mode<synchronous>, transform_indices = @transform_0, window_bounds = array<i64: 512, 2048>}, {pipeline_mode = #tpu.pipeline_mode<synchronous>, transform_indices = @transform_1, window_bounds = array<i64: 2048, 4>}, {pipeline_mode = #tpu.pipeline_mode<synchronous>, transform_indices = @transform_2, window_bounds = array<i64: 1, 4>}, {pipeline_mode = #tpu.pipeline_mode<synchronous>, transform_indices = @transform_3, window_bounds = array<i64: 512, 4>}]} {
    %c0 = arith.constant 0 : index
    %c0_0 = arith.constant 0 : index
    %0 = vector.load %arg1[%c0, %c0_0] : memref<512x2048xbf16, #tpu.memory_space<vmem>>, vector<512x2048xbf16>
    %c0_1 = arith.constant 0 : index
    %c0_2 = arith.constant 0 : index
    %1 = vector.load %arg2[%c0_1, %c0_2] : memref<2048x4xbf16, #tpu.memory_space<vmem>>, vector<2048x4xbf16>
    %cst = arith.constant dense<0.000000e+00> : vector<512x4xf32>
    %2 = tpu.matmul %0, %1, %cst {dimension_numbers = #tpu.dot_dimension_numbers<[1], [0], [0], [1], [0, 0, 1, 1], [], []>} : vector<512x2048xbf16>, vector<2048x4xbf16>, vector<512x4xf32> -> vector<512x4xf32>
    %c0_3 = arith.constant 0 : index
    %c0_4 = arith.constant 0 : index
    %3 = vector.load %arg3[%c0_3, %c0_4] : memref<1x4xf32, #tpu.memory_space<vmem>>, vector<1x4xf32>
    %4 = vector.broadcast %3 : vector<1x4xf32> to vector<512x4xf32>
    %5 = arith.addf %2, %4 : vector<512x4xf32>
    %6 = math.tanh %5 : vector<512x4xf32>
    %c0_5 = arith.constant 0 : index
    %c0_6 = arith.constant 0 : index
    %7 = vector.load %arg4[%c0_5, %c0_6] : memref<512x4xf32, #tpu.memory_space<vmem>>, vector<512x4xf32>
    tpu.vector_store %arg4[%c0_5, %c0_6], %6 {strides = array<i32>} : memref<512x4xf32, #tpu.memory_space<vmem>>, vector<512x4xf32>,
    return
  }
  func.func @transform_0(%arg0: i32) -> (i32, i32) {
    %c0_i32 = arith.constant 0 : i32
    %c0_i32_0 = arith.constant 0 : i32
    %c0_i32_1 = arith.constant 0 : i32
    return %c0_i32, %c0_i32_0 : i32, i32
  }
  func.func @transform_1(%arg0: i32) -> (i32, i32) {
    %c0_i32 = arith.constant 0 : i32
    %c0_i32_0 = arith.constant 0 : i32
    %c0_i32_1 = arith.constant 0 : i32
    return %c0_i32, %c0_i32_0 : i32, i32
  }
  func.func @transform_2(%arg0: i32) -> (i32, i32) {
    %c0_i32 = arith.constant 0 : i32
    %c0_i32_0 = arith.constant 0 : i32
    %c0_i32_1 = arith.constant 0 : i32
    return %c0_i32, %c0_i32_0 : i32, i32
  }
  func.func @transform_3(%arg0: i32) -> (i32, i32) {
    %c0_i32 = arith.constant 0 : i32
    %c0_i32_0 = arith.constant 0 : i32
    %c0_i32_1 = arith.constant 0 : i32
    return %c0_i32, %c0_i32_0 : i32, i32
  }
}

</mosaic_0001>

<llo_original>
// kernel: generator_forward.4
$region0: #{generator_forward.4}
  #allocation0 [shape = 'u32[]', space=smem, size = 0x4, offset = 0x4, fixed_abs, tag = 'smem constant byte address 0x4 - core index']
  #allocation1 [shape = 'u32[144,128]{1,0:T(1,128)}', space=vmem, size = 0x12000, scoped, tag = 'internal scratch']
  %s0 = inlined_call_operand.vmem [shape: bf16[1,2,128], index: 0, kind: input, shape index: {}]
  %s1 = inlined_call_operand.hbm [shape: bf16[16,128,512], index: 1, kind: input, shape index: {}]
  %s2 = inlined_call_operand.hbm [shape: f32[1,512], index: 2, kind: input, shape index: {}]
  %s3 = inlined_call_operand.hbm [shape: f32[1,512], index: 3, kind: input, shape index: {}]
  %s4 = inlined_call_operand.vmem [shape: f32[16,2,512], index: 4, kind: output, shape index: {}]
  %s5 = sld [smem:[#allocation0]]
  $region65: #{generator_forward.4} parent=0
    _
  %s7 = ssub.s32 1, %s5
  %s8 = scalar_select 0, %s7, %s5
  $region1: #{generator_forward.4} parent=0
    #allocation2 [shape = 'u8[262144]{0}', space=vmem, size = 0x40000, scoped, tag = 'input window, operand 1']
    #allocation3 [shape = 's32[2]{0}', space=sflag, size = 0x8, scoped, tag = 'scoped memory for generator_forward.4']
    #allocation4 [shape = 'u8[2048]{0}', space=vmem, size = 0x800, scoped, tag = 'input window, operand 2, single buffered']
    #allocation5 [shape = 's32[1]{0}', space=sflag, size = 0x4, scoped, tag = 'scoped memory for generator_forward.4']
    #allocation6 [shape = 'u8[2048]{0}', space=vmem, size = 0x800, scoped, tag = 'input window, operand 3, single buffered']
    %9 = vsyncpa [#allocation3], 0
    %s10 = scalar_lea.sflag [#allocation3], 1
    %11 = vsyncpa %s10, 0
    %12 = vsyncpa [#allocation5], 0
    loop: start=0, step=1, limit=18
    $region2: #{generator_forward.4} parent=1 // loop_pre_header
      _
    $region3: #{generator_forward.4} parent=1 // loop_header
      %s14 = sphi 0, %s18
      %p15 = scmp.ge.s32.totalorder %s14, 18
      %s22 = sphi 0, %s22
      %s24 = sphi 0, %s22
      %s25 = sphi 0, %s24
      %s39 = sphi 0, %s25
      %s45 = sphi 0, %s47
      %s48 = sphi 0, %s45
      %s49 = sphi 0, %s48
      %s65 = sphi 0, %s49
      %s69 = sphi 0, %s69
      %s71 = sphi 0, %s69
      %s72 = sphi 0, %s71
      %s86 = sphi 0, %s72
      %s90 = sphi 0, %s90
      %s92 = sphi 0, %s90
      %s93 = sphi 0, %s92
      %s107 = sphi 0, %s93
      %s111 = sphi 0, %s111
      %s113 = sphi 0, %s111
      %s114 = sphi 0, %s113
      %s128 = sphi 0, %s114
    $region4: #{generator_forward.4} parent=1 // loop_header_branch
      %17 = sbr.rel (%p15) target = $region8
    $region5: #{generator_forward.4} parent=1 // loop_body
      %s19 = ssub.s32 %s14, 1
      %s20 = ssub.s32 %s14, 2
      %s21 = sadd.s32 %s14, 1
      %s23 = sadd.s32 %s22, 1
      %p26 = scmp.eq.s32.totalorder %s14, 15
      %p27 = scmp.ne.s32.totalorder %s22, %s24
      %p28 = scmp.eq.s32.totalorder %s14, 0
      %p29 = por %p27, %p28
      %p30 = scmp.ne.s32.totalorder %s22, %s24
      %p31 = scmp.eq.s32.totalorder %s19, 15
      %p32 = por %p30, %p31
      %p33 = scmp.ne.s32.totalorder %s24, %s25
      %p34 = scmp.eq.s32.totalorder %s19, 0
      %p35 = por %p33, %p34
      %p36 = scmp.ne.s32.totalorder %s24, %s25
      %p37 = scmp.eq.s32.totalorder %s20, 15
      %p38 = por %p36, %p37
      %p40 = scmp.ne.s32.totalorder %s25, %s39
      %p41 = scmp.eq.s32.totalorder %s20, 0
      %p42 = por %p40, %p41
      %s43 = ssub.s32 %s14, %s21
      %p44 = scmp.eq.s32.totalorder %s43, 0
      %s46 = sadd.s32 %s45, 1
      %s47 = scalar_select %p44, %s45, %s46
      %p50 = pneg %p44
      %p51 = scmp.eq.s32.totalorder %s14, 15
      %p52 = por %p50, %p51
      %p53 = scmp.ne.s32.totalorder %s45, %s48
      %p54 = scmp.eq.s32.totalorder %s14, 0
      %p55 = por %p53, %p54
      %p56 = scmp.ne.s32.totalorder %s45, %s48
      %p57 = scmp.eq.s32.totalorder %s19, 15
      %p58 = por %p56, %p57
      %p59 = scmp.ne.s32.totalorder %s48, %s49
      %p60 = scmp.eq.s32.totalorder %s19, 0
      %p61 = por %p59, %p60
      %p62 = scmp.ne.s32.totalorder %s48, %s49
      %p63 = scmp.eq.s32.totalorder %s20, 15
      %p64 = por %p62, %p63
      %p66 = scmp.ne.s32.totalorder %s49, %s65
      %p67 = scmp.eq.s32.totalorder %s20, 0
      %p68 = por %p66, %p67
      %s70 = sadd.s32 %s69, 1
      %p73 = scmp.eq.s32.totalorder %s14, 15
      %p74 = scmp.ne.s32.totalorder %s69, %s71
      %p75 = scmp.eq.s32.totalorder %s14, 0
      %p76 = por %p74, %p75
      %p77 = scmp.ne.s32.totalorder %s69, %s71
      %p78 = scmp.eq.s32.totalorder %s19, 15
      %p79 = por %p77, %p78
      %p80 = scmp.ne.s32.totalorder %s71, %s72
      %p81 = scmp.eq.s32.totalorder %s19, 0
      %p82 = por %p80, %p81
      %p83 = scmp.ne.s32.totalorder %s71, %s72
      %p84 = scmp.eq.s32.totalorder %s20, 15
      %p85 = por %p83, %p84
      %p87 = scmp.ne.s32.totalorder %s72, %s86
      %p88 = scmp.eq.s32.totalorder %s20, 0
      %p89 = por %p87, %p88
      %s91 = sadd.s32 %s90, 1
      %p94 = scmp.eq.s32.totalorder %s14, 15
      %p95 = scmp.ne.s32.totalorder %s90, %s92
      %p96 = scmp.eq.s32.totalorder %s14, 0
      %p97 = por %p95, %p96
      %p98 = scmp.ne.s32.totalorder %s90, %s92
      %p99 = scmp.eq.s32.totalorder %s19, 15
      %p100 = por %p98, %p99
      %p101 = scmp.ne.s32.totalorder %s92, %s93
      %p102 = scmp.eq.s32.totalorder %s19, 0
      %p103 = por %p101, %p102
      %p104 = scmp.ne.s32.totalorder %s92, %s93
      %p105 = scmp.eq.s32.totalorder %s20, 15
      %p106 = por %p104, %p105
      %p108 = scmp.ne.s32.totalorder %s93, %s107
      %p109 = scmp.eq.s32.totalorder %s20, 0
      %p110 = por %p108, %p109
      %s112 = sadd.s32 %s111, 1
      %p115 = scmp.eq.s32.totalorder %s14, 15
      %p116 = scmp.ne.s32.totalorder %s111, %s113
      %p117 = scmp.eq.s32.totalorder %s14, 0
      %p118 = por %p116, %p117
      %p119 = scmp.ne.s32.totalorder %s111, %s113
      %p120 = scmp.eq.s32.totalorder %s19, 15
      %p121 = por %p119, %p120
      %p122 = scmp.ne.s32.totalorder %s113, %s114
      %p123 = scmp.eq.s32.totalorder %s19, 0
      %p124 = por %p122, %p123
      %p125 = scmp.ne.s32.totalorder %s113, %s114
      %p126 = scmp.eq.s32.totalorder %s20, 15
      %p127 = por %p125, %p126
      %p129 = scmp.ne.s32.totalorder %s114, %s128
      %p130 = scmp.eq.s32.totalorder %s20, 0
      %p131 = por %p129, %p130
      %p132 = scmp.le.s32.totalorder 1, %s14
      %p133 = scmp.lt.s32.totalorder %s14, 17
      %p134 = pnand %p132, %p133
      %p135 = pneg %p134
      // Predicated region
      $region9: #{generator_forward.4} parent=5 // pred_check
        _
      $region10: #{generator_forward.4} parent=5 // pred_check_branch
        %137 = sbr.rel (%p134) target = $region12
      $region11: #{generator_forward.4} parent=5 // pred_region
        %s138 = ssub.s32 %s14, 1
        // Predicated region
        $region13: #{generator_forward.4} parent=11 // pred_check
          %p139 = pneg %p35
        $region14: #{generator_forward.4} parent=11 // pred_check_branch
          %141 = sbr.rel (%p139) target = $region16
        $region15: #{generator_forward.4} parent=11 // pred_region
          _
        $region16: #{generator_forward.4} parent=11 // pred_fallthru
          _
        // Predicated region
        $region17: #{generator_forward.4} parent=11 // pred_check
          %p142 = pneg %p82
        $region18: #{generator_forward.4} parent=11 // pred_check_branch
          %144 = sbr.rel (%p142) target = $region20
        $region19: #{generator_forward.4} parent=11 // pred_region
          %s146 = ssub.s32 64, 64
          %147 = vsyncadd [#allocation5], %s146
          %s149 = sshll.u32 [#allocation4], 4
          %s150 = int_to_ptr.vmem [resolvable:$true] %s149
          %152 = dma.hbm_to_vmem [thread:$0]  %s2, 64, %s150, [#allocation5]
        $region20: #{generator_forward.4} parent=11 // pred_fallthru
          _
        // Predicated region
        $region21: #{generator_forward.4} parent=11 // pred_check
          %p153 = pneg %p103
        $region22: #{generator_forward.4} parent=11 // pred_check_branch
          %155 = sbr.rel (%p153) target = $region24
        $region23: #{generator_forward.4} parent=11 // pred_region
          %s157 = ssub.s32 64, 64
          %158 = vsyncadd [#allocation5], %s157
          %s160 = sshll.u32 [#allocation6], 4
          %s161 = int_to_ptr.vmem [resolvable:$true] %s160
          %163 = dma.hbm_to_vmem [thread:$0]  %s3, 64, %s161, [#allocation5]
        $region24: #{generator_forward.4} parent=11 // pred_fallthru
          _
      $region12: #{generator_forward.4} parent=5 // pred_fallthru
        _
      %p164 = scmp.lt.s32.totalorder %s14, 16
      // Predicated region
      $region25: #{generator_forward.4} parent=5 // pred_check
        %p165 = pneg %p164
      $region26: #{generator_forward.4} parent=5 // pred_check_branch
        %167 = sbr.rel (%p165) target = $region28
      $region27: #{generator_forward.4} parent=5 // pred_region
        // Predicated region
        $region29: #{generator_forward.4} parent=27 // pred_check
          %p168 = pneg %p55
        $region30: #{generator_forward.4} parent=27 // pred_check_branch
          %170 = sbr.rel (%p168) target = $region32
        $region31: #{generator_forward.4} parent=27 // pred_region
          %s171 = sand.u32 %s45, 1
          %s172 = scalar_lea.sflag [#allocation3], %s171
          %s173 = sand.u32 %s45, 1
          %s174 = smul.addr %s173, 256
          %s175 = scalar_lea.vmem [#allocation2], %s174
          %s177 = ssub.s32 4096, 4096
          %178 = vsyncadd %s172, %s177
          %s179 = smul.addr %s14, 64
          %s180 = smul.addr %s179, 64
          %s181 = scalar_lea.hbm %s1, %s180
          %s182 = sshll.u32 %s175, 4
          %s183 = int_to_ptr.vmem [resolvable:$true] %s182
          %188 = dma.hbm_to_vmem [thread:$0]  %s181, 4096, %s183, %s172, 256, 256, 16
        $region32: #{generator_forward.4} parent=27 // pred_fallthru
          _
      $region28: #{generator_forward.4} parent=5 // pred_fallthru
        _
      %p189 = scmp.le.s32.totalorder 1, %s14
      %p190 = scmp.lt.s32.totalorder %s14, 17
      %p191 = pnand %p189, %p190
      %p192 = pneg %p191
      // Predicated region
      $region33: #{generator_forward.4} parent=5 // pred_check
        _
      $region34: #{generator_forward.4} parent=5 // pred_check_branch
        %194 = sbr.rel (%p191) target = $region36
      $region35: #{generator_forward.4} parent=5 // pred_region
        %s195 = ssub.s32 %s14, 1
        %s196 = sand.u32 %s48, 1
        %s197 = scalar_lea.sflag [#allocation3], %s196
        %s198 = sand.u32 %s48, 1
        %s199 = smul.addr %s198, 256
        %s200 = scalar_lea.vmem [#allocation2], %s199
        // Predicated region
        $region37: #{generator_forward.4} parent=35 // pred_check
          %p201 = pneg %p61
        $region38: #{generator_forward.4} parent=35 // pred_check_branch
          %203 = sbr.rel (%p201) target = $region40
        $region39: #{generator_forward.4} parent=35 // pred_region
          %204 = dma.done %s197, 4096
        $region40: #{generator_forward.4} parent=35 // pred_fallthru
          _
        // Predicated region
        $region41: #{generator_forward.4} parent=35 // pred_check
          %p205 = pneg %p82
        $region42: #{generator_forward.4} parent=35 // pred_check_branch
          %207 = sbr.rel (%p205) target = $region44
        $region43: #{generator_forward.4} parent=35 // pred_region
          %208 = dma.done [#allocation5], 64
        $region44: #{generator_forward.4} parent=35 // pred_fallthru
          _
        // Predicated region
        $region45: #{generator_forward.4} parent=35 // pred_check
          %p209 = pneg %p103
        $region46: #{generator_forward.4} parent=35 // pred_check_branch
          %211 = sbr.rel (%p209) target = $region48
        $region47: #{generator_forward.4} parent=35 // pred_region
          %212 = dma.done [#allocation5], 64
        $region48: #{generator_forward.4} parent=35 // pred_fallthru
          _
        %p213 = pneg %p35
        %p214 = pneg %p32
        %s215 = sand.u32 %s48, 1
        %s216 = scalar_lea.sflag [#allocation3], %s215
        %s217 = sand.u32 %s48, 1
        %s218 = smul.addr %s217, 256
        %s219 = scalar_lea.vmem [#allocation2], %s218
        %p220 = pneg %p61
        %p221 = pneg %p58
        %p222 = pneg %p82
        %p223 = pneg %p79
        %p224 = pneg %p103
        %p225 = pneg %p100
        %p226 = pneg %p124
        %p227 = pneg %p121
        %v229 = vld [vmem:[%s0] sm:$0x1]
        %v230 = vld [vmem:[%s200] sm:$0xff]
        %v231 = vld [vmem:[%s200 + $0x8] sm:$0xff]
        %v232 = vld [vmem:[%s200 + $0x10] sm:$0xff]
        %v233 = vld [vmem:[%s200 + $0x18] sm:$0xff]
        %v234 = vld [vmem:[%s200 + $0x20] sm:$0xff]
        %v235 = vld [vmem:[%s200 + $0x28] sm:$0xff]
        %v236 = vld [vmem:[%s200 + $0x30] sm:$0xff]
        %v237 = vld [vmem:[%s200 + $0x38] sm:$0xff]
        %v238 = vld [vmem:[%s200 + $0x40] sm:$0xff]
        %v239 = vld [vmem:[%s200 + $0x48] sm:$0xff]
        %v240 = vld [vmem:[%s200 + $0x50] sm:$0xff]
        %v241 = vld [vmem:[%s200 + $0x58] sm:$0xff]
        %v242 = vld [vmem:[%s200 + $0x60] sm:$0xff]
        %v243 = vld [vmem:[%s200 + $0x68] sm:$0xff]
        %v244 = vld [vmem:[%s200 + $0x70] sm:$0xff]
        %v245 = vld [vmem:[%s200 + $0x78] sm:$0xff]
        %v246 = vld [vmem:[%s200 + $0x80] sm:$0xff]
        %v247 = vld [vmem:[%s200 + $0x88] sm:$0xff]
        %v248 = vld [vmem:[%s200 + $0x90] sm:$0xff]
        %v249 = vld [vmem:[%s200 + $0x98] sm:$0xff]
        %v250 = vld [vmem:[%s200 + $0xa0] sm:$0xff]
        %v251 = vld [vmem:[%s200 + $0xa8] sm:$0xff]
        %v252 = vld [vmem:[%s200 + $0xb0] sm:$0xff]
        %v253 = vld [vmem:[%s200 + $0xb8] sm:$0xff]
        %v254 = vld [vmem:[%s200 + $0xc0] sm:$0xff]
        %v255 = vld [vmem:[%s200 + $0xc8] sm:$0xff]
        %v256 = vld [vmem:[%s200 + $0xd0] sm:$0xff]
        %v257 = vld [vmem:[%s200 + $0xd8] sm:$0xff]
        %v258 = vld [vmem:[%s200 + $0xe0] sm:$0xff]
        %v259 = vld [vmem:[%s200 + $0xe8] sm:$0xff]
        %v260 = vld [vmem:[%s200 + $0xf0] sm:$0xff]
        %v261 = vld [vmem:[%s200 + $0xf8] sm:$0xff]
        %v294 = vunpack.c.l.b16 %v230
        %v295 = vunpack.c.h.b16 %v230
        %v296 = vunpack.c.l.b16 %v231
        %v297 = vunpack.c.h.b16 %v231
        %v298 = vunpack.c.l.b16 %v232
        %v299 = vunpack.c.h.b16 %v232
        %v300 = vunpack.c.l.b16 %v233
        %v301 = vunpack.c.h.b16 %v233
        %v302 = vunpack.c.l.b16 %v234
        %v303 = vunpack.c.h.b16 %v234
        %v304 = vunpack.c.l.b16 %v235
        %v305 = vunpack.c.h.b16 %v235
        %v306 = vunpack.c.l.b16 %v236
        %v307 = vunpack.c.h.b16 %v236
        %v308 = vunpack.c.l.b16 %v237
        %v309 = vunpack.c.h.b16 %v237
        %v310 = vunpack.c.l.b16 %v238
        %v311 = vunpack.c.h.b16 %v238
        %v312 = vunpack.c.l.b16 %v239
        %v313 = vunpack.c.h.b16 %v239
        %v314 = vunpack.c.l.b16 %v240
        %v315 = vunpack.c.h.b16 %v240
        %v316 = vunpack.c.l.b16 %v241
        %v317 = vunpack.c.h.b16 %v241
        %v318 = vunpack.c.l.b16 %v242
        %v319 = vunpack.c.h.b16 %v242
        %v320 = vunpack.c.l.b16 %v243
        %v321 = vunpack.c.h.b16 %v243
        %v322 = vunpack.c.l.b16 %v244
        %v323 = vunpack.c.h.b16 %v244
        %v324 = vunpack.c.l.b16 %v245
        %v325 = vunpack.c.h.b16 %v245
        %v326 = vunpack.c.l.b16 %v246
        %v327 = vunpack.c.h.b16 %v246
        %v328 = vunpack.c.l.b16 %v247
        %v329 = vunpack.c.h.b16 %v247
        %v330 = vunpack.c.l.b16 %v248
        %v331 = vunpack.c.h.b16 %v248
        %v332 = vunpack.c.l.b16 %v249
        %v333 = vunpack.c.h.b16 %v249
        %v334 = vunpack.c.l.b16 %v250
        %v335 = vunpack.c.h.b16 %v250
        %v336 = vunpack.c.l.b16 %v251
        %v337 = vunpack.c.h.b16 %v251
        %v338 = vunpack.c.l.b16 %v252
        %v339 = vunpack.c.h.b16 %v252
        %v340 = vunpack.c.l.b16 %v253
        %v341 = vunpack.c.h.b16 %v253
        %v342 = vunpack.c.l.b16 %v254
        %v343 = vunpack.c.h.b16 %v254
        %v344 = vunpack.c.l.b16 %v255
        %v345 = vunpack.c.h.b16 %v255
        %v346 = vunpack.c.l.b16 %v256
        %v347 = vunpack.c.h.b16 %v256
        %v348 = vunpack.c.l.b16 %v257
        %v349 = vunpack.c.h.b16 %v257
        %v350 = vunpack.c.l.b16 %v258
        %v351 = vunpack.c.h.b16 %v258
        %v352 = vunpack.c.l.b16 %v259
        %v353 = vunpack.c.h.b16 %v259
        %v354 = vunpack.c.l.b16 %v260
        %v355 = vunpack.c.h.b16 %v260
        %v356 = vunpack.c.l.b16 %v261
        %v357 = vunpack.c.h.b16 %v261
        %v358 = vpack.c.b16 %v298, %v294
        %v359 = vpack.c.b16 %v299, %v295
        %v360 = vpack.c.b16 %v300, %v296
        %v361 = vpack.c.b16 %v301, %v297
        %v362 = vpack.c.b16 %v306, %v302
        %v363 = vpack.c.b16 %v307, %v303
        %v364 = vpack.c.b16 %v308, %v304
        %v365 = vpack.c.b16 %v309, %v305
        %v366 = vpack.c.b16 %v314, %v310
        %v367 = vpack.c.b16 %v315, %v311
        %v368 = vpack.c.b16 %v316, %v312
        %v369 = vpack.c.b16 %v317, %v313
        %v370 = vpack.c.b16 %v322, %v318
        %v371 = vpack.c.b16 %v323, %v319
        %v372 = vpack.c.b16 %v324, %v320
        %v373 = vpack.c.b16 %v325, %v321
        %v374 = vpack.c.b16 %v330, %v326
        %v375 = vpack.c.b16 %v331, %v327
        %v376 = vpack.c.b16 %v332, %v328
        %v377 = vpack.c.b16 %v333, %v329
        %v378 = vpack.c.b16 %v338, %v334
        %v379 = vpack.c.b16 %v339, %v335
        %v380 = vpack.c.b16 %v340, %v336
        %v381 = vpack.c.b16 %v341, %v337
        %v382 = vpack.c.b16 %v346, %v342
        %v383 = vpack.c.b16 %v347, %v343
        %v384 = vpack.c.b16 %v348, %v344
        %v385 = vpack.c.b16 %v349, %v345
        %v386 = vpack.c.b16 %v354, %v350
        %v387 = vpack.c.b16 %v355, %v351
        %v388 = vpack.c.b16 %v356, %v352
        %v389 = vpack.c.b16 %v357, %v353
        %422 = vmatprep.subr.bf16.mxu0 %v387
        %423 = vmatpush1.bf16.msra.mxu0 %v386
        %424 = vmatprep.subr.bf16.mxu0 %v383
        %425 = vmatpush1.bf16.msra.mxu0 %v382
        %426 = vmatprep.subr.bf16.mxu0 %v379
        %427 = vmatpush1.bf16.msra.mxu0 %v378
        %428 = vmatprep.subr.bf16.mxu0 %v375
        %429 = vmatpush1.bf16.msra.mxu0 %v374
        %430 = vmatprep.subr.bf16.mxu0 %v371
        %431 = vmatpush1.bf16.msra.mxu0 %v370
        %432 = vmatprep.subr.bf16.mxu0 %v367
        %433 = vmatpush1.bf16.msra.mxu0 %v366
        %434 = vmatprep.subr.bf16.mxu0 %v363
        %435 = vmatpush1.bf16.msra.mxu0 %v362
        %436 = vmatprep.subr.bf16.mxu0 %v359
        %437 = vmatpush1.bf16.msra.mxu0 %v358
        %438 = vmatprep.subr.bf16.mxu0 0
        %439 = vmatpush2.bf16.msra.mxu0 0
        %440 = vmatprep.subr.bf16.mxu0 0
        %441 = vmatpush2.bf16.msra.mxu0 0
        %442 = vmatprep.subr.bf16.mxu0 0
        %443 = vmatpush2.bf16.msra.mxu0 0
        %444 = vmatprep.subr.bf16.mxu0 0
        %445 = vmatpush2.bf16.msra.mxu0 0
        %446 = vmatprep.subr.bf16.mxu0 0
        %447 = vmatpush2.bf16.msra.mxu0 0
        %448 = vmatprep.subr.bf16.mxu0 0
        %449 = vmatpush2.bf16.msra.mxu0 0
        %450 = vmatprep.subr.bf16.mxu0 0
        %451 = vmatpush2.bf16.msra.mxu0 0
        %452 = vmatprep.subr.bf16.mxu0 0
        %453 = vmatpush2.bf16.msra.mxu0 0
        %454 = vmatprep.mubr.bf16.mxu0 0
        %455 = vmatmul.mubr.bf16.gmra.mxu0 %v229
        %v456 = vpop.f32.mrf.mxu0
        %v457 = vadd.f32 0.0, %v456
        %v458 = vpop.f32.mrf.mxu0
        %v459 = vadd.f32 0.0, %v458
        %v460 = vpop.f32.mrf.mxu0
        %v461 = vpop.f32.mrf.mxu0
        %462 = vdwg.mxu0
        %463 = vmatprep.subr.bf16.mxu0 %v389
        %464 = vmatpush1.bf16.msra.mxu0 %v388
        %465 = vmatprep.subr.bf16.mxu0 %v385
        %466 = vmatpush1.bf16.msra.mxu0 %v384
        %467 = vmatprep.subr.bf16.mxu0 %v381
        %468 = vmatpush1.bf16.msra.mxu0 %v380
        %469 = vmatprep.subr.bf16.mxu0 %v377
        %470 = vmatpush1.bf16.msra.mxu0 %v376
        %471 = vmatprep.subr.bf16.mxu0 %v373
        %472 = vmatpush1.bf16.msra.mxu0 %v372
        %473 = vmatprep.subr.bf16.mxu0 %v369
        %474 = vmatpush1.bf16.msra.mxu0 %v368
        %475 = vmatprep.subr.bf16.mxu0 %v365
        %476 = vmatpush1.bf16.msra.mxu0 %v364
        %477 = vmatprep.subr.bf16.mxu0 %v361
        %478 = vmatpush1.bf16.msra.mxu0 %v360
        %479 = vmatprep.subr.bf16.mxu0 0
        %480 = vmatpush2.bf16.msra.mxu0 0
        %481 = vmatprep.subr.bf16.mxu0 0
        %482 = vmatpush2.bf16.msra.mxu0 0
        %483 = vmatprep.subr.bf16.mxu0 0
        %484 = vmatpush2.bf16.msra.mxu0 0
        %485 = vmatprep.subr.bf16.mxu0 0
        %486 = vmatpush2.bf16.msra.mxu0 0
        %487 = vmatprep.subr.bf16.mxu0 0
        %488 = vmatpush2.bf16.msra.mxu0 0
        %489 = vmatprep.subr.bf16.mxu0 0
        %490 = vmatpush2.bf16.msra.mxu0 0
        %491 = vmatprep.subr.bf16.mxu0 0
        %492 = vmatpush2.bf16.msra.mxu0 0
        %493 = vmatprep.subr.bf16.mxu0 0
        %494 = vmatpush2.bf16.msra.mxu0 0
        %495 = vmatprep.mubr.bf16.mxu0 0
        %496 = vmatmul.mubr.bf16.gmra.mxu0 %v229
        %v497 = vpop.f32.mrf.mxu0
        %v498 = vadd.f32 0.0, %v497
        %v499 = vpop.f32.mrf.mxu0
        %v500 = vadd.f32 0.0, %v499
        %v501 = vpop.f32.mrf.mxu0
        %v502 = vpop.f32.mrf.mxu0
        %503 = vdwg.mxu0
        %v508 = vcombine.low %v457, %v459
        %v509 = vcombine.low %v498, %v500
        %v511 = vunpack.c.l.s4 1983009808
        %v512 = vunpack.c.0.s8 %v511
        %v513 = vlaneseq
        %v514 = vshrl.u32 %v513, 7
        %v515 = vsub.s32 %v512, %v514
        %v516 = vrot.slane %v508, %v515
        %v518 = vunpack.c.l.s4 1983009808
        %v519 = vunpack.c.0.s8 %v518
        %v520 = vlaneseq
        %v521 = vshrl.u32 %v520, 7
        %v522 = vsub.s32 %v519, %v521
        %v523 = vrot.slane %v509, %v522
        %v524 = vcombine.low %v516, %v523
        %s526 = smul.u32 %s19, 4
        %s527 = smul.addr %s526, 2
        %s528 = scalar_lea.vmem %s4, %s527
        %529 = vst [vmem:[%s528] sm:$0xff] %v524
        %p530 = scmp.eq.s32.totalorder %s19, 15
        // Predicated region
        $region49: #{generator_forward.4} parent=35 // pred_check
          %p531 = pneg %p530
        $region50: #{generator_forward.4} parent=35 // pred_check_branch
          %533 = sbr.rel (%p531) target = $region52
        $region51: #{generator_forward.4} parent=35 // pred_region
          %v534 = vld [vmem:[%s4] sm:$0xff]
          %v535 = vld [vmem:[%s4 + $0x8] sm:$0xff]
          %v536 = vld [vmem:[%s4 + $0x10] sm:$0xff]
          %v537 = vld [vmem:[%s4 + $0x18] sm:$0xff]
          %v538 = vld [vmem:[%s4 + $0x20] sm:$0xff]
          %v539 = vld [vmem:[%s4 + $0x28] sm:$0xff]
          %v540 = vld [vmem:[%s4 + $0x30] sm:$0xff]
          %v541 = vld [vmem:[%s4 + $0x38] sm:$0xff]
          %v542 = vld [vmem:[%s4 + $0x40] sm:$0xff]
          %v543 = vld [vmem:[%s4 + $0x48] sm:$0xff]
          %v544 = vld [vmem:[%s4 + $0x50] sm:$0xff]
          %v545 = vld [vmem:[%s4 + $0x58] sm:$0xff]
          %v546 = vld [vmem:[%s4 + $0x60] sm:$0xff]
          %v547 = vld [vmem:[%s4 + $0x68] sm:$0xff]
          %v548 = vld [vmem:[%s4 + $0x70] sm:$0xff]
          %v549 = vld [vmem:[%s4 + $0x78] sm:$0xff]
          %v566 = vcombine.high %v534, %v534
          %v568 = vunpack.c.l.s4 1983009808
          %v569 = vunpack.c.0.s8 %v568
          %v570 = vlaneseq
          %v571 = vshrl.u32 %v570, 7
          %v572 = vsub.s32 %v569, %v571
          %v573 = vrot.slane %v534, %v572
          %v575 = vunpack.c.l.s4 1983009808
          %v576 = vunpack.c.0.s8 %v575
          %v577 = vlaneseq
          %v578 = vshrl.u32 %v577, 7
          %v579 = vsub.s32 %v576, %v578
          %v580 = vrot.slane %v566, %v579
          %v581 = vcombine.high %v573, %v573
          %v582 = vcombine.high %v580, %v580
          %v583 = vcombine.high %v535, %v535
          %v585 = vunpack.c.l.s4 1983009808
          %v586 = vunpack.c.0.s8 %v585
          %v587 = vlaneseq
          %v588 = vshrl.u32 %v587, 7
          %v589 = vsub.s32 %v586, %v588
          %v590 = vrot.slane %v535, %v589
          %v592 = vunpack.c.l.s4 1983009808
          %v593 = vunpack.c.0.s8 %v592
          %v594 = vlaneseq
          %v595 = vshrl.u32 %v594, 7
          %v596 = vsub.s32 %v593, %v595
          %v597 = vrot.slane %v583, %v596
          %v598 = vcombine.high %v590, %v590
          %v599 = vcombine.high %v597, %v597
          %v600 = vcombine.high %v536, %v536
          %v602 = vunpack.c.l.s4 1983009808
          %v603 = vunpack.c.0.s8 %v602
          %v604 = vlaneseq
          %v605 = vshrl.u32 %v604, 7
          %v606 = vsub.s32 %v603, %v605
          %v607 = vrot.slane %v536, %v606
          %v609 = vunpack.c.l.s4 1983009808
          %v610 = vunpack.c.0.s8 %v609
          %v611 = vlaneseq
          %v612 = vshrl.u32 %v611, 7
          %v613 = vsub.s32 %v610, %v612
          %v614 = vrot.slane %v600, %v613
          %v615 = vcombine.high %v607, %v607
          %v616 = vcombine.high %v614, %v614
          %v617 = vcombine.high %v537, %v537
          %v619 = vunpack.c.l.s4 1983009808
          %v620 = vunpack.c.0.s8 %v619
          %v621 = vlaneseq
          %v622 = vshrl.u32 %v621, 7
          %v623 = vsub.s32 %v620, %v622
          %v624 = vrot.slane %v537, %v623
          %v626 = vunpack.c.l.s4 1983009808
          %v627 = vunpack.c.0.s8 %v626
          %v628 = vlaneseq
          %v629 = vshrl.u32 %v628, 7
          %v630 = vsub.s32 %v627, %v629
          %v631 = vrot.slane %v617, %v630
          %v632 = vcombine.high %v624, %v624
          %v633 = vcombine.high %v631, %v631
          %v634 = vcombine.high %v538, %v538
          %v636 = vunpack.c.l.s4 1983009808
          %v637 = vunpack.c.0.s8 %v636
          %v638 = vlaneseq
          %v639 = vshrl.u32 %v638, 7
          %v640 = vsub.s32 %v637, %v639
          %v641 = vrot.slane %v538, %v640
          %v643 = vunpack.c.l.s4 1983009808
          %v644 = vunpack.c.0.s8 %v643
          %v645 = vlaneseq
          %v646 = vshrl.u32 %v645, 7
          %v647 = vsub.s32 %v644, %v646
          %v648 = vrot.slane %v634, %v647
          %v649 = vcombine.high %v641, %v641
          %v650 = vcombine.high %v648, %v648
          %v651 = vcombine.high %v539, %v539
          %v653 = vunpack.c.l.s4 1983009808
          %v654 = vunpack.c.0.s8 %v653
          %v655 = vlaneseq
          %v656 = vshrl.u32 %v655, 7
          %v657 = vsub.s32 %v654, %v656
          %v658 = vrot.slane %v539, %v657
          %v660 = vunpack.c.l.s4 1983009808
          %v661 = vunpack.c.0.s8 %v660
          %v662 = vlaneseq
          %v663 = vshrl.u32 %v662, 7
          %v664 = vsub.s32 %v661, %v663
          %v665 = vrot.slane %v651, %v664
          %v666 = vcombine.high %v658, %v658
          %v667 = vcombine.high %v665, %v665
          %v668 = vcombine.high %v540, %v540
          %v670 = vunpack.c.l.s4 1983009808
          %v671 = vunpack.c.0.s8 %v670
          %v672 = vlaneseq
          %v673 = vshrl.u32 %v672, 7
          %v674 = vsub.s32 %v671, %v673
          %v675 = vrot.slane %v540, %v674
          %v677 = vunpack.c.l.s4 1983009808
          %v678 = vunpack.c.0.s8 %v677
          %v679 = vlaneseq
          %v680 = vshrl.u32 %v679, 7
          %v681 = vsub.s32 %v678, %v680
          %v682 = vrot.slane %v668, %v681
          %v683 = vcombine.high %v675, %v675
          %v684 = vcombine.high %v682, %v682
          %v685 = vcombine.high %v541, %v541
          %v687 = vunpack.c.l.s4 1983009808
          %v688 = vunpack.c.0.s8 %v687
          %v689 = vlaneseq
          %v690 = vshrl.u32 %v689, 7
          %v691 = vsub.s32 %v688, %v690
          %v692 = vrot.slane %v541, %v691
          %v694 = vunpack.c.l.s4 1983009808
          %v695 = vunpack.c.0.s8 %v694
          %v696 = vlaneseq
          %v697 = vshrl.u32 %v696, 7
          %v698 = vsub.s32 %v695, %v697
          %v699 = vrot.slane %v685, %v698
          %v700 = vcombine.high %v692, %v692
          %v701 = vcombine.high %v699, %v699
          %v702 = vcombine.high %v542, %v542
          %v704 = vunpack.c.l.s4 1983009808
          %v705 = vunpack.c.0.s8 %v704
          %v706 = vlaneseq
          %v707 = vshrl.u32 %v706, 7
          %v708 = vsub.s32 %v705, %v707
          %v709 = vrot.slane %v542, %v708
          %v711 = vunpack.c.l.s4 1983009808
          %v712 = vunpack.c.0.s8 %v711
          %v713 = vlaneseq
          %v714 = vshrl.u32 %v713, 7
          %v715 = vsub.s32 %v712, %v714
          %v716 = vrot.slane %v702, %v715
          %v717 = vcombine.high %v709, %v709
          %v718 = vcombine.high %v716, %v716
          %v719 = vcombine.high %v543, %v543
          %v721 = vunpack.c.l.s4 1983009808
          %v722 = vunpack.c.0.s8 %v721
          %v723 = vlaneseq
          %v724 = vshrl.u32 %v723, 7
          %v725 = vsub.s32 %v722, %v724
          %v726 = vrot.slane %v543, %v725
          %v728 = vunpack.c.l.s4 1983009808
          %v729 = vunpack.c.0.s8 %v728
          %v730 = vlaneseq
          %v731 = vshrl.u32 %v730, 7
          %v732 = vsub.s32 %v729, %v731
          %v733 = vrot.slane %v719, %v732
          %v734 = vcombine.high %v726, %v726
          %v735 = vcombine.high %v733, %v733
          %v736 = vcombine.high %v544, %v544
          %v738 = vunpack.c.l.s4 1983009808
          %v739 = vunpack.c.0.s8 %v738
          %v740 = vlaneseq
          %v741 = vshrl.u32 %v740, 7
          %v742 = vsub.s32 %v739, %v741
          %v743 = vrot.slane %v544, %v742
          %v745 = vunpack.c.l.s4 1983009808
          %v746 = vunpack.c.0.s8 %v745
          %v747 = vlaneseq
          %v748 = vshrl.u32 %v747, 7
          %v749 = vsub.s32 %v746, %v748
          %v750 = vrot.slane %v736, %v749
          %v751 = vcombine.high %v743, %v743
          %v752 = vcombine.high %v750, %v750
          %v753 = vcombine.high %v545, %v545
          %v755 = vunpack.c.l.s4 1983009808
          %v756 = vunpack.c.0.s8 %v755
          %v757 = vlaneseq
          %v758 = vshrl.u32 %v757, 7
          %v759 = vsub.s32 %v756, %v758
          %v760 = vrot.slane %v545, %v759
          %v762 = vunpack.c.l.s4 1983009808
          %v763 = vunpack.c.0.s8 %v762
          %v764 = vlaneseq
          %v765 = vshrl.u32 %v764, 7
          %v766 = vsub.s32 %v763, %v765
          %v767 = vrot.slane %v753, %v766
          %v768 = vcombine.high %v760, %v760
          %v769 = vcombine.high %v767, %v767
          %v770 = vcombine.high %v546, %v546
          %v772 = vunpack.c.l.s4 1983009808
          %v773 = vunpack.c.0.s8 %v772
          %v774 = vlaneseq
          %v775 = vshrl.u32 %v774, 7
          %v776 = vsub.s32 %v773, %v775
          %v777 = vrot.slane %v546, %v776
          %v779 = vunpack.c.l.s4 1983009808
          %v780 = vunpack.c.0.s8 %v779
          %v781 = vlaneseq
          %v782 = vshrl.u32 %v781, 7
          %v783 = vsub.s32 %v780, %v782
          %v784 = vrot.slane %v770, %v783
          %v785 = vcombine.high %v777, %v777
          %v786 = vcombine.high %v784, %v784
          %v787 = vcombine.high %v547, %v547
          %v789 = vunpack.c.l.s4 1983009808
          %v790 = vunpack.c.0.s8 %v789
          %v791 = vlaneseq
          %v792 = vshrl.u32 %v791, 7
          %v793 = vsub.s32 %v790, %v792
          %v794 = vrot.slane %v547, %v793
          %v796 = vunpack.c.l.s4 1983009808
          %v797 = vunpack.c.0.s8 %v796
          %v798 = vlaneseq
          %v799 = vshrl.u32 %v798, 7
          %v800 = vsub.s32 %v797, %v799
          %v801 = vrot.slane %v787, %v800
          %v802 = vcombine.high %v794, %v794
          %v803 = vcombine.high %v801, %v801
          %v804 = vcombine.high %v548, %v548
          %v806 = vunpack.c.l.s4 1983009808
          %v807 = vunpack.c.0.s8 %v806
          %v808 = vlaneseq
          %v809 = vshrl.u32 %v808, 7
          %v810 = vsub.s32 %v807, %v809
          %v811 = vrot.slane %v548, %v810
          %v813 = vunpack.c.l.s4 1983009808
          %v814 = vunpack.c.0.s8 %v813
          %v815 = vlaneseq
          %v816 = vshrl.u32 %v815, 7
          %v817 = vsub.s32 %v814, %v816
          %v818 = vrot.slane %v804, %v817
          %v819 = vcombine.high %v811, %v811
          %v820 = vcombine.high %v818, %v818
          %v821 = vcombine.high %v549, %v549
          %v823 = vunpack.c.l.s4 1983009808
          %v824 = vunpack.c.0.s8 %v823
          %v825 = vlaneseq
          %v826 = vshrl.u32 %v825, 7
          %v827 = vsub.s32 %v824, %v826
          %v828 = vrot.slane %v549, %v827
          %v830 = vunpack.c.l.s4 1983009808
          %v831 = vunpack.c.0.s8 %v830
          %v832 = vlaneseq
          %v833 = vshrl.u32 %v832, 7
          %v834 = vsub.s32 %v831, %v833
          %v835 = vrot.slane %v821, %v834
          %v836 = vcombine.high %v828, %v828
          %v837 = vcombine.high %v835, %v835
          %vm902 = vcmask 1041408
          %v903 = vsel %vm902, %v573, 0.0
          %v904 = vsel %vm902, %v590, 0.0
          %v905 = vadd.f32 %v903, %v904
          %v906 = vsel %vm902, %v607, 0.0
          %v907 = vadd.f32 %v905, %v906
          %v908 = vsel %vm902, %v624, 0.0
          %v909 = vadd.f32 %v907, %v908
          %v910 = vsel %vm902, %v641, 0.0
          %v911 = vadd.f32 %v909, %v910
          %v912 = vsel %vm902, %v658, 0.0
          %v913 = vadd.f32 %v911, %v912
          %v914 = vsel %vm902, %v675, 0.0
          %v915 = vadd.f32 %v913, %v914
          %v916 = vsel %vm902, %v692, 0.0
          %v917 = vadd.f32 %v915, %v916
          %v918 = vsel %vm902, %v709, 0.0
          %v919 = vadd.f32 %v917, %v918
          %v920 = vsel %vm902, %v726, 0.0
          %v921 = vadd.f32 %v919, %v920
          %v922 = vsel %vm902, %v743, 0.0
          %v923 = vadd.f32 %v921, %v922
          %v924 = vsel %vm902, %v760, 0.0
          %v925 = vadd.f32 %v923, %v924
          %v926 = vsel %vm902, %v777, 0.0
          %v927 = vadd.f32 %v925, %v926
          %v928 = vsel %vm902, %v794, 0.0
          %v929 = vadd.f32 %v927, %v928
          %v930 = vsel %vm902, %v811, 0.0
          %v931 = vadd.f32 %v929, %v930
          %v932 = vsel %vm902, %v828, 0.0
          %v933 = vadd.f32 %v931, %v932
          %v934 = vsel %vm902, %v581, 0.0
          %v935 = vsel %vm902, %v598, 0.0
          %v936 = vadd.f32 %v934, %v935
          %v937 = vsel %vm902, %v615, 0.0
          %v938 = vadd.f32 %v936, %v937
          %v939 = vsel %vm902, %v632, 0.0
          %v940 = vadd.f32 %v938, %v939
          %v941 = vsel %vm902, %v649, 0.0
          %v942 = vadd.f32 %v940, %v941
          %v943 = vsel %vm902, %v666, 0.0
          %v944 = vadd.f32 %v942, %v943
          %v945 = vsel %vm902, %v683, 0.0
          %v946 = vadd.f32 %v944, %v945
          %v947 = vsel %vm902, %v700, 0.0
          %v948 = vadd.f32 %v946, %v947
          %v949 = vsel %vm902, %v717, 0.0
          %v950 = vadd.f32 %v948, %v949
          %v951 = vsel %vm902, %v734, 0.0
          %v952 = vadd.f32 %v950, %v951
          %v953 = vsel %vm902, %v751, 0.0
          %v954 = vadd.f32 %v952, %v953
          %v955 = vsel %vm902, %v768, 0.0
          %v956 = vadd.f32 %v954, %v955
          %v957 = vsel %vm902, %v785, 0.0
          %v958 = vadd.f32 %v956, %v957
          %v959 = vsel %vm902, %v802, 0.0
          %v960 = vadd.f32 %v958, %v959
          %v961 = vsel %vm902, %v819, 0.0
          %v962 = vadd.f32 %v960, %v961
          %v963 = vsel %vm902, %v836, 0.0
          %v964 = vadd.f32 %v962, %v963
          %v965 = vsel %vm902, %v580, 0.0
          %v966 = vsel %vm902, %v597, 0.0
          %v967 = vadd.f32 %v965, %v966
          %v968 = vsel %vm902, %v614, 0.0
          %v969 = vadd.f32 %v967, %v968
          %v970 = vsel %vm902, %v631, 0.0
          %v971 = vadd.f32 %v969, %v970
          %v972 = vsel %vm902, %v648, 0.0
          %v973 = vadd.f32 %v971, %v972
          %v974 = vsel %vm902, %v665, 0.0
          %v975 = vadd.f32 %v973, %v974
          %v976 = vsel %vm902, %v682, 0.0
          %v977 = vadd.f32 %v975, %v976
          %v978 = vsel %vm902, %v699, 0.0
          %v979 = vadd.f32 %v977, %v978
          %v980 = vsel %vm902, %v716, 0.0
          %v981 = vadd.f32 %v979, %v980
          %v982 = vsel %vm902, %v733, 0.0
          %v983 = vadd.f32 %v981, %v982
          %v984 = vsel %vm902, %v750, 0.0
          %v985 = vadd.f32 %v983, %v984
          %v986 = vsel %vm902, %v767, 0.0
          %v987 = vadd.f32 %v985, %v986
          %v988 = vsel %vm902, %v784, 0.0
          %v989 = vadd.f32 %v987, %v988
          %v990 = vsel %vm902, %v801, 0.0
          %v991 = vadd.f32 %v989, %v990
          %v992 = vsel %vm902, %v818, 0.0
          %v993 = vadd.f32 %v991, %v992
          %v994 = vsel %vm902, %v835, 0.0
          %v995 = vadd.f32 %v993, %v994
          %v996 = vsel %vm902, %v582, 0.0
          %v997 = vsel %vm902, %v599, 0.0
          %v998 = vadd.f32 %v996, %v997
          %v999 = vsel %vm902, %v616, 0.0
          %v1000 = vadd.f32 %v998, %v999
          %v1001 = vsel %vm902, %v633, 0.0
          %v1002 = vadd.f32 %v1000, %v1001
          %v1003 = vsel %vm902, %v650, 0.0
          %v1004 = vadd.f32 %v1002, %v1003
          %v1005 = vsel %vm902, %v667, 0.0
          %v1006 = vadd.f32 %v1004, %v1005
          %v1007 = vsel %vm902, %v684, 0.0
          %v1008 = vadd.f32 %v1006, %v1007
          %v1009 = vsel %vm902, %v701, 0.0
          %v1010 = vadd.f32 %v1008, %v1009
          %v1011 = vsel %vm902, %v718, 0.0
          %v1012 = vadd.f32 %v1010, %v1011
          %v1013 = vsel %vm902, %v735, 0.0
          %v1014 = vadd.f32 %v1012, %v1013
          %v1015 = vsel %vm902, %v752, 0.0
          %v1016 = vadd.f32 %v1014, %v1015
          %v1017 = vsel %vm902, %v769, 0.0
          %v1018 = vadd.f32 %v1016, %v1017
          %v1019 = vsel %vm902, %v786, 0.0
          %v1020 = vadd.f32 %v1018, %v1019
          %v1021 = vsel %vm902, %v803, 0.0
          %v1022 = vadd.f32 %v1020, %v1021
          %v1023 = vsel %vm902, %v820, 0.0
          %v1024 = vadd.f32 %v1022, %v1023
          %v1025 = vsel %vm902, %v837, 0.0
          %v1026 = vadd.f32 %v1024, %v1025
          %v1027 = vsel %vm902, %v933, 0.0
          %v1028 = vrot.slane %v1027, 4
          %v1029 = vadd.f32 %v1027, %v1028
          %v1030 = vrot.slane %v1029, 2
          %v1031 = vadd.f32 %v1029, %v1030
          %v1032 = vrot.slane %v1031, 1
          %v1033 = vadd.f32 %v1031, %v1032
          %v1034 = vsel %vm902, %v964, 0.0
          %v1035 = vrot.slane %v1034, 4
          %v1036 = vadd.f32 %v1034, %v1035
          %v1037 = vrot.slane %v1036, 2
          %v1038 = vadd.f32 %v1036, %v1037
          %v1039 = vrot.slane %v1038, 1
          %v1040 = vadd.f32 %v1038, %v1039
          %v1041 = vsel %vm902, %v995, 0.0
          %v1042 = vrot.slane %v1041, 4
          %v1043 = vadd.f32 %v1041, %v1042
          %v1044 = vrot.slane %v1043, 2
          %v1045 = vadd.f32 %v1043, %v1044
          %v1046 = vrot.slane %v1045, 1
          %v1047 = vadd.f32 %v1045, %v1046
          %v1048 = vsel %vm902, %v1026, 0.0
          %v1049 = vrot.slane %v1048, 4
          %v1050 = vadd.f32 %v1048, %v1049
          %v1051 = vrot.slane %v1050, 2
          %v1052 = vadd.f32 %v1050, %v1051
          %v1053 = vrot.slane %v1052, 1
          %v1054 = vadd.f32 %v1052, %v1053
          %v1055 = vrcp.pop 32.0
          %v1056 = vmul.f32 %v1033, %v1055
          %v1057 = vmul.f32 %v1040, %v1055
          %v1058 = vmul.f32 %v1047, %v1055
          %v1059 = vmul.f32 %v1054, %v1055
          %v1064 = vcombine.low %v1056, %v1057
          %v1065 = vcombine.low %v1058, %v1059
          %v1067 = vunpack.c.l.s4 1983009808
          %v1068 = vunpack.c.0.s8 %v1067
          %v1069 = vlaneseq
          %v1070 = vshrl.u32 %v1069, 7
          %v1071 = vsub.s32 %v1068, %v1070
          %v1072 = vrot.slane %v1064, %v1071
          %v1074 = vunpack.c.l.s4 1983009808
          %v1075 = vunpack.c.0.s8 %v1074
          %v1076 = vlaneseq
          %v1077 = vshrl.u32 %v1076, 7
          %v1078 = vsub.s32 %v1075, %v1077
          %v1079 = vrot.slane %v1065, %v1078
          %v1080 = vcombine.low %v1072, %v1079
          %v1082 = vsub.f32 %v534, %v1080
          %v1083 = vsub.f32 %v535, %v1080
          %v1084 = vsub.f32 %v536, %v1080
          %v1085 = vsub.f32 %v537, %v1080
          %v1086 = vsub.f32 %v538, %v1080
          %v1087 = vsub.f32 %v539, %v1080
          %v1088 = vsub.f32 %v540, %v1080
          %v1089 = vsub.f32 %v541, %v1080
          %v1090 = vsub.f32 %v542, %v1080
          %v1091 = vsub.f32 %v543, %v1080
          %v1092 = vsub.f32 %v544, %v1080
          %v1093 = vsub.f32 %v545, %v1080
          %v1094 = vsub.f32 %v546, %v1080
          %v1095 = vsub.f32 %v547, %v1080
          %v1096 = vsub.f32 %v548, %v1080
          %v1097 = vsub.f32 %v549, %v1080
          %v1098 = vmul.f32 %v1082, %v1082
          %v1099 = vmul.f32 %v1083, %v1083
          %v1100 = vmul.f32 %v1084, %v1084
          %v1101 = vmul.f32 %v1085, %v1085
          %v1102 = vmul.f32 %v1086, %v1086
          %v1103 = vmul.f32 %v1087, %v1087
          %v1104 = vmul.f32 %v1088, %v1088
          %v1105 = vmul.f32 %v1089, %v1089
          %v1106 = vmul.f32 %v1090, %v1090
          %v1107 = vmul.f32 %v1091, %v1091
          %v1108 = vmul.f32 %v1092, %v1092
          %v1109 = vmul.f32 %v1093, %v1093
          %v1110 = vmul.f32 %v1094, %v1094
          %v1111 = vmul.f32 %v1095, %v1095
          %v1112 = vmul.f32 %v1096, %v1096
          %v1113 = vmul.f32 %v1097, %v1097
          %v1130 = vcombine.high %v1098, %v1098
          %v1132 = vunpack.c.l.s4 1983009808
          %v1133 = vunpack.c.0.s8 %v1132
          %v1134 = vlaneseq
          %v1135 = vshrl.u32 %v1134, 7
          %v1136 = vsub.s32 %v1133, %v1135
          %v1137 = vrot.slane %v1098, %v1136
          %v1139 = vunpack.c.l.s4 1983009808
          %v1140 = vunpack.c.0.s8 %v1139
          %v1141 = vlaneseq
          %v1142 = vshrl.u32 %v1141, 7
          %v1143 = vsub.s32 %v1140, %v1142
          %v1144 = vrot.slane %v1130, %v1143
          %v1145 = vcombine.high %v1137, %v1137
          %v1146 = vcombine.high %v1144, %v1144
          %v1147 = vcombine.high %v1099, %v1099
          %v1149 = vunpack.c.l.s4 1983009808
          %v1150 = vunpack.c.0.s8 %v1149
          %v1151 = vlaneseq
          %v1152 = vshrl.u32 %v1151, 7
          %v1153 = vsub.s32 %v1150, %v1152
          %v1154 = vrot.slane %v1099, %v1153
          %v1156 = vunpack.c.l.s4 1983009808
          %v1157 = vunpack.c.0.s8 %v1156
          %v1158 = vlaneseq
          %v1159 = vshrl.u32 %v1158, 7
          %v1160 = vsub.s32 %v1157, %v1159
          %v1161 = vrot.slane %v1147, %v1160
          %v1162 = vcombine.high %v1154, %v1154
          %v1163 = vcombine.high %v1161, %v1161
          %v1164 = vcombine.high %v1100, %v1100
          %v1166 = vunpack.c.l.s4 1983009808
          %v1167 = vunpack.c.0.s8 %v1166
          %v1168 = vlaneseq
          %v1169 = vshrl.u32 %v1168, 7
          %v1170 = vsub.s32 %v1167, %v1169
          %v1171 = vrot.slane %v1100, %v1170
          %v1173 = vunpack.c.l.s4 1983009808
          %v1174 = vunpack.c.0.s8 %v1173
          %v1175 = vlaneseq
          %v1176 = vshrl.u32 %v1175, 7
          %v1177 = vsub.s32 %v1174, %v1176
          %v1178 = vrot.slane %v1164, %v1177
          %v1179 = vcombine.high %v1171, %v1171
          %v1180 = vcombine.high %v1178, %v1178
          %v1181 = vcombine.high %v1101, %v1101
          %v1183 = vunpack.c.l.s4 1983009808
          %v1184 = vunpack.c.0.s8 %v1183
          %v1185 = vlaneseq
          %v1186 = vshrl.u32 %v1185, 7
          %v1187 = vsub.s32 %v1184, %v1186
          %v1188 = vrot.slane %v1101, %v1187
          %v1190 = vunpack.c.l.s4 1983009808
          %v1191 = vunpack.c.0.s8 %v1190
          %v1192 = vlaneseq
          %v1193 = vshrl.u32 %v1192, 7
          %v1194 = vsub.s32 %v1191, %v1193
          %v1195 = vrot.slane %v1181, %v1194
          %v1196 = vcombine.high %v1188, %v1188
          %v1197 = vcombine.high %v1195, %v1195
          %v1198 = vcombine.high %v1102, %v1102
          %v1200 = vunpack.c.l.s4 1983009808
          %v1201 = vunpack.c.0.s8 %v1200
          %v1202 = vlaneseq
          %v1203 = vshrl.u32 %v1202, 7
          %v1204 = vsub.s32 %v1201, %v1203
          %v1205 = vrot.slane %v1102, %v1204
          %v1207 = vunpack.c.l.s4 1983009808
          %v1208 = vunpack.c.0.s8 %v1207
          %v1209 = vlaneseq
          %v1210 = vshrl.u32 %v1209, 7
          %v1211 = vsub.s32 %v1208, %v1210
          %v1212 = vrot.slane %v1198, %v1211
          %v1213 = vcombine.high %v1205, %v1205
          %v1214 = vcombine.high %v1212, %v1212
          %v1215 = vcombine.high %v1103, %v1103
          %v1217 = vunpack.c.l.s4 1983009808
          %v1218 = vunpack.c.0.s8 %v1217
          %v1219 = vlaneseq
          %v1220 = vshrl.u32 %v1219, 7
          %v1221 = vsub.s32 %v1218, %v1220
          %v1222 = vrot.slane %v1103, %v1221
          %v1224 = vunpack.c.l.s4 1983009808
          %v1225 = vunpack.c.0.s8 %v1224
          %v1226 = vlaneseq
          %v1227 = vshrl.u32 %v1226, 7
          %v1228 = vsub.s32 %v1225, %v1227
          %v1229 = vrot.slane %v1215, %v1228
          %v1230 = vcombine.high %v1222, %v1222
          %v1231 = vcombine.high %v1229, %v1229
          %v1232 = vcombine.high %v1104, %v1104
          %v1234 = vunpack.c.l.s4 1983009808
          %v1235 = vunpack.c.0.s8 %v1234
          %v1236 = vlaneseq
          %v1237 = vshrl.u32 %v1236, 7
          %v1238 = vsub.s32 %v1235, %v1237
          %v1239 = vrot.slane %v1104, %v1238
          %v1241 = vunpack.c.l.s4 1983009808
          %v1242 = vunpack.c.0.s8 %v1241
          %v1243 = vlaneseq
          %v1244 = vshrl.u32 %v1243, 7
          %v1245 = vsub.s32 %v1242, %v1244
          %v1246 = vrot.slane %v1232, %v1245
          %v1247 = vcombine.high %v1239, %v1239
          %v1248 = vcombine.high %v1246, %v1246
          %v1249 = vcombine.high %v1105, %v1105
          %v1251 = vunpack.c.l.s4 1983009808
          %v1252 = vunpack.c.0.s8 %v1251
          %v1253 = vlaneseq
          %v1254 = vshrl.u32 %v1253, 7
          %v1255 = vsub.s32 %v1252, %v1254
          %v1256 = vrot.slane %v1105, %v1255
          %v1258 = vunpack.c.l.s4 1983009808
          %v1259 = vunpack.c.0.s8 %v1258
          %v1260 = vlaneseq
          %v1261 = vshrl.u32 %v1260, 7
          %v1262 = vsub.s32 %v1259, %v1261
          %v1263 = vrot.slane %v1249, %v1262
          %v1264 = vcombine.high %v1256, %v1256
          %v1265 = vcombine.high %v1263, %v1263
          %v1266 = vcombine.high %v1106, %v1106
          %v1268 = vunpack.c.l.s4 1983009808
          %v1269 = vunpack.c.0.s8 %v1268
          %v1270 = vlaneseq
          %v1271 = vshrl.u32 %v1270, 7
          %v1272 = vsub.s32 %v1269, %v1271
          %v1273 = vrot.slane %v1106, %v1272
          %v1275 = vunpack.c.l.s4 1983009808
          %v1276 = vunpack.c.0.s8 %v1275
          %v1277 = vlaneseq
          %v1278 = vshrl.u32 %v1277, 7
          %v1279 = vsub.s32 %v1276, %v1278
          %v1280 = vrot.slane %v1266, %v1279
          %v1281 = vcombine.high %v1273, %v1273
          %v1282 = vcombine.high %v1280, %v1280
          %v1283 = vcombine.high %v1107, %v1107
          %v1285 = vunpack.c.l.s4 1983009808
          %v1286 = vunpack.c.0.s8 %v1285
          %v1287 = vlaneseq
          %v1288 = vshrl.u32 %v1287, 7
          %v1289 = vsub.s32 %v1286, %v1288
          %v1290 = vrot.slane %v1107, %v1289
          %v1292 = vunpack.c.l.s4 1983009808
          %v1293 = vunpack.c.0.s8 %v1292
          %v1294 = vlaneseq
          %v1295 = vshrl.u32 %v1294, 7
          %v1296 = vsub.s32 %v1293, %v1295
          %v1297 = vrot.slane %v1283, %v1296
          %v1298 = vcombine.high %v1290, %v1290
          %v1299 = vcombine.high %v1297, %v1297
          %v1300 = vcombine.high %v1108, %v1108
          %v1302 = vunpack.c.l.s4 1983009808
          %v1303 = vunpack.c.0.s8 %v1302
          %v1304 = vlaneseq
          %v1305 = vshrl.u32 %v1304, 7
          %v1306 = vsub.s32 %v1303, %v1305
          %v1307 = vrot.slane %v1108, %v1306
          %v1309 = vunpack.c.l.s4 1983009808
          %v1310 = vunpack.c.0.s8 %v1309
          %v1311 = vlaneseq
          %v1312 = vshrl.u32 %v1311, 7
          %v1313 = vsub.s32 %v1310, %v1312
          %v1314 = vrot.slane %v1300, %v1313
          %v1315 = vcombine.high %v1307, %v1307
          %v1316 = vcombine.high %v1314, %v1314
          %v1317 = vcombine.high %v1109, %v1109
          %v1319 = vunpack.c.l.s4 1983009808
          %v1320 = vunpack.c.0.s8 %v1319
          %v1321 = vlaneseq
          %v1322 = vshrl.u32 %v1321, 7
          %v1323 = vsub.s32 %v1320, %v1322
          %v1324 = vrot.slane %v1109, %v1323
          %v1326 = vunpack.c.l.s4 1983009808
          %v1327 = vunpack.c.0.s8 %v1326
          %v1328 = vlaneseq
          %v1329 = vshrl.u32 %v1328, 7
          %v1330 = vsub.s32 %v1327, %v1329
          %v1331 = vrot.slane %v1317, %v1330
          %v1332 = vcombine.high %v1324, %v1324
          %v1333 = vcombine.high %v1331, %v1331
          %v1334 = vcombine.high %v1110, %v1110
          %v1336 = vunpack.c.l.s4 1983009808
          %v1337 = vunpack.c.0.s8 %v1336
          %v1338 = vlaneseq
          %v1339 = vshrl.u32 %v1338, 7
          %v1340 = vsub.s32 %v1337, %v1339
          %v1341 = vrot.slane %v1110, %v1340
          %v1343 = vunpack.c.l.s4 1983009808
          %v1344 = vunpack.c.0.s8 %v1343
          %v1345 = vlaneseq
          %v1346 = vshrl.u32 %v1345, 7
          %v1347 = vsub.s32 %v1344, %v1346
          %v1348 = vrot.slane %v1334, %v1347
          %v1349 = vcombine.high %v1341, %v1341
          %v1350 = vcombine.high %v1348, %v1348
          %v1351 = vcombine.high %v1111, %v1111
          %v1353 = vunpack.c.l.s4 1983009808
          %v1354 = vunpack.c.0.s8 %v1353
          %v1355 = vlaneseq
          %v1356 = vshrl.u32 %v1355, 7
          %v1357 = vsub.s32 %v1354, %v1356
          %v1358 = vrot.slane %v1111, %v1357
          %v1360 = vunpack.c.l.s4 1983009808
          %v1361 = vunpack.c.0.s8 %v1360
          %v1362 = vlaneseq
          %v1363 = vshrl.u32 %v1362, 7
          %v1364 = vsub.s32 %v1361, %v1363
          %v1365 = vrot.slane %v1351, %v1364
          %v1366 = vcombine.high %v1358, %v1358
          %v1367 = vcombine.high %v1365, %v1365
          %v1368 = vcombine.high %v1112, %v1112
          %v1370 = vunpack.c.l.s4 1983009808
          %v1371 = vunpack.c.0.s8 %v1370
          %v1372 = vlaneseq
          %v1373 = vshrl.u32 %v1372, 7
          %v1374 = vsub.s32 %v1371, %v1373
          %v1375 = vrot.slane %v1112, %v1374
          %v1377 = vunpack.c.l.s4 1983009808
          %v1378 = vunpack.c.0.s8 %v1377
          %v1379 = vlaneseq
          %v1380 = vshrl.u32 %v1379, 7
          %v1381 = vsub.s32 %v1378, %v1380
          %v1382 = vrot.slane %v1368, %v1381
          %v1383 = vcombine.high %v1375, %v1375
          %v1384 = vcombine.high %v1382, %v1382
          %v1385 = vcombine.high %v1113, %v1113
          %v1387 = vunpack.c.l.s4 1983009808
          %v1388 = vunpack.c.0.s8 %v1387
          %v1389 = vlaneseq
          %v1390 = vshrl.u32 %v1389, 7
          %v1391 = vsub.s32 %v1388, %v1390
          %v1392 = vrot.slane %v1113, %v1391
          %v1394 = vunpack.c.l.s4 1983009808
          %v1395 = vunpack.c.0.s8 %v1394
          %v1396 = vlaneseq
          %v1397 = vshrl.u32 %v1396, 7
          %v1398 = vsub.s32 %v1395, %v1397
          %v1399 = vrot.slane %v1385, %v1398
          %v1400 = vcombine.high %v1392, %v1392
          %v1401 = vcombine.high %v1399, %v1399
          %v1466 = vsel %vm902, %v1137, 0.0
          %v1467 = vsel %vm902, %v1154, 0.0
          %v1468 = vadd.f32 %v1466, %v1467
          %v1469 = vsel %vm902, %v1171, 0.0
          %v1470 = vadd.f32 %v1468, %v1469
          %v1471 = vsel %vm902, %v1188, 0.0
          %v1472 = vadd.f32 %v1470, %v1471
          %v1473 = vsel %vm902, %v1205, 0.0
          %v1474 = vadd.f32 %v1472, %v1473
          %v1475 = vsel %vm902, %v1222, 0.0
          %v1476 = vadd.f32 %v1474, %v1475
          %v1477 = vsel %vm902, %v1239, 0.0
          %v1478 = vadd.f32 %v1476, %v1477
          %v1479 = vsel %vm902, %v1256, 0.0
          %v1480 = vadd.f32 %v1478, %v1479
          %v1481 = vsel %vm902, %v1273, 0.0
          %v1482 = vadd.f32 %v1480, %v1481
          %v1483 = vsel %vm902, %v1290, 0.0
          %v1484 = vadd.f32 %v1482, %v1483
          %v1485 = vsel %vm902, %v1307, 0.0
          %v1486 = vadd.f32 %v1484, %v1485
          %v1487 = vsel %vm902, %v1324, 0.0
          %v1488 = vadd.f32 %v1486, %v1487
          %v1489 = vsel %vm902, %v1341, 0.0
          %v1490 = vadd.f32 %v1488, %v1489
          %v1491 = vsel %vm902, %v1358, 0.0
          %v1492 = vadd.f32 %v1490, %v1491
          %v1493 = vsel %vm902, %v1375, 0.0
          %v1494 = vadd.f32 %v1492, %v1493
          %v1495 = vsel %vm902, %v1392, 0.0
          %v1496 = vadd.f32 %v1494, %v1495
          %v1497 = vsel %vm902, %v1145, 0.0
          %v1498 = vsel %vm902, %v1162, 0.0
          %v1499 = vadd.f32 %v1497, %v1498
          %v1500 = vsel %vm902, %v1179, 0.0
          %v1501 = vadd.f32 %v1499, %v1500
          %v1502 = vsel %vm902, %v1196, 0.0
          %v1503 = vadd.f32 %v1501, %v1502
          %v1504 = vsel %vm902, %v1213, 0.0
          %v1505 = vadd.f32 %v1503, %v1504
          %v1506 = vsel %vm902, %v1230, 0.0
          %v1507 = vadd.f32 %v1505, %v1506
          %v1508 = vsel %vm902, %v1247, 0.0
          %v1509 = vadd.f32 %v1507, %v1508
          %v1510 = vsel %vm902, %v1264, 0.0
          %v1511 = vadd.f32 %v1509, %v1510
          %v1512 = vsel %vm902, %v1281, 0.0
          %v1513 = vadd.f32 %v1511, %v1512
          %v1514 = vsel %vm902, %v1298, 0.0
          %v1515 = vadd.f32 %v1513, %v1514
          %v1516 = vsel %vm902, %v1315, 0.0
          %v1517 = vadd.f32 %v1515, %v1516
          %v1518 = vsel %vm902, %v1332, 0.0
          %v1519 = vadd.f32 %v1517, %v1518
          %v1520 = vsel %vm902, %v1349, 0.0
          %v1521 = vadd.f32 %v1519, %v1520
          %v1522 = vsel %vm902, %v1366, 0.0
          %v1523 = vadd.f32 %v1521, %v1522
          %v1524 = vsel %vm902, %v1383, 0.0
          %v1525 = vadd.f32 %v1523, %v1524
          %v1526 = vsel %vm902, %v1400, 0.0
          %v1527 = vadd.f32 %v1525, %v1526
          %v1528 = vsel %vm902, %v1144, 0.0
          %v1529 = vsel %vm902, %v1161, 0.0
          %v1530 = vadd.f32 %v1528, %v1529
          %v1531 = vsel %vm902, %v1178, 0.0
          %v1532 = vadd.f32 %v1530, %v1531
          %v1533 = vsel %vm902, %v1195, 0.0
          %v1534 = vadd.f32 %v1532, %v1533
          %v1535 = vsel %vm902, %v1212, 0.0
          %v1536 = vadd.f32 %v1534, %v1535
          %v1537 = vsel %vm902, %v1229, 0.0
          %v1538 = vadd.f32 %v1536, %v1537
          %v1539 = vsel %vm902, %v1246, 0.0
          %v1540 = vadd.f32 %v1538, %v1539
          %v1541 = vsel %vm902, %v1263, 0.0
          %v1542 = vadd.f32 %v1540, %v1541
          %v1543 = vsel %vm902, %v1280, 0.0
          %v1544 = vadd.f32 %v1542, %v1543
          %v1545 = vsel %vm902, %v1297, 0.0
          %v1546 = vadd.f32 %v1544, %v1545
          %v1547 = vsel %vm902, %v1314, 0.0
          %v1548 = vadd.f32 %v1546, %v1547
          %v1549 = vsel %vm902, %v1331, 0.0
          %v1550 = vadd.f32 %v1548, %v1549
          %v1551 = vsel %vm902, %v1348, 0.0
          %v1552 = vadd.f32 %v1550, %v1551
          %v1553 = vsel %vm902, %v1365, 0.0
          %v1554 = vadd.f32 %v1552, %v1553
          %v1555 = vsel %vm902, %v1382, 0.0
          %v1556 = vadd.f32 %v1554, %v1555
          %v1557 = vsel %vm902, %v1399, 0.0
          %v1558 = vadd.f32 %v1556, %v1557
          %v1559 = vsel %vm902, %v1146, 0.0
          %v1560 = vsel %vm902, %v1163, 0.0
          %v1561 = vadd.f32 %v1559, %v1560
          %v1562 = vsel %vm902, %v1180, 0.0
          %v1563 = vadd.f32 %v1561, %v1562
          %v1564 = vsel %vm902, %v1197, 0.0
          %v1565 = vadd.f32 %v1563, %v1564
          %v1566 = vsel %vm902, %v1214, 0.0
          %v1567 = vadd.f32 %v1565, %v1566
          %v1568 = vsel %vm902, %v1231, 0.0
          %v1569 = vadd.f32 %v1567, %v1568
          %v1570 = vsel %vm902, %v1248, 0.0
          %v1571 = vadd.f32 %v1569, %v1570
          %v1572 = vsel %vm902, %v1265, 0.0
          %v1573 = vadd.f32 %v1571, %v1572
          %v1574 = vsel %vm902, %v1282, 0.0
          %v1575 = vadd.f32 %v1573, %v1574
          %v1576 = vsel %vm902, %v1299, 0.0
          %v1577 = vadd.f32 %v1575, %v1576
          %v1578 = vsel %vm902, %v1316, 0.0
          %v1579 = vadd.f32 %v1577, %v1578
          %v1580 = vsel %vm902, %v1333, 0.0
          %v1581 = vadd.f32 %v1579, %v1580
          %v1582 = vsel %vm902, %v1350, 0.0
          %v1583 = vadd.f32 %v1581, %v1582
          %v1584 = vsel %vm902, %v1367, 0.0
          %v1585 = vadd.f32 %v1583, %v1584
          %v1586 = vsel %vm902, %v1384, 0.0
          %v1587 = vadd.f32 %v1585, %v1586
          %v1588 = vsel %vm902, %v1401, 0.0
          %v1589 = vadd.f32 %v1587, %v1588
          %v1590 = vsel %vm902, %v1496, 0.0
          %v1591 = vrot.slane %v1590, 4
          %v1592 = vadd.f32 %v1590, %v1591
          %v1593 = vrot.slane %v1592, 2
          %v1594 = vadd.f32 %v1592, %v1593
          %v1595 = vrot.slane %v1594, 1
          %v1596 = vadd.f32 %v1594, %v1595
          %v1597 = vsel %vm902, %v1527, 0.0
          %v1598 = vrot.slane %v1597, 4
          %v1599 = vadd.f32 %v1597, %v1598
          %v1600 = vrot.slane %v1599, 2
          %v1601 = vadd.f32 %v1599, %v1600
          %v1602 = vrot.slane %v1601, 1
          %v1603 = vadd.f32 %v1601, %v1602
          %v1604 = vsel %vm902, %v1558, 0.0
          %v1605 = vrot.slane %v1604, 4
          %v1606 = vadd.f32 %v1604, %v1605
          %v1607 = vrot.slane %v1606, 2
          %v1608 = vadd.f32 %v1606, %v1607
          %v1609 = vrot.slane %v1608, 1
          %v1610 = vadd.f32 %v1608, %v1609
          %v1611 = vsel %vm902, %v1589, 0.0
          %v1612 = vrot.slane %v1611, 4
          %v1613 = vadd.f32 %v1611, %v1612
          %v1614 = vrot.slane %v1613, 2
          %v1615 = vadd.f32 %v1613, %v1614
          %v1616 = vrot.slane %v1615, 1
          %v1617 = vadd.f32 %v1615, %v1616
          %v1618 = vmul.f32 %v1596, %v1055
          %v1619 = vmul.f32 %v1603, %v1055
          %v1620 = vmul.f32 %v1610, %v1055
          %v1621 = vmul.f32 %v1617, %v1055
          %v1622 = vadd.f32 %v1618, 1e-05
          %v1623 = vadd.f32 %v1619, 1e-05
          %v1624 = vadd.f32 %v1620, 1e-05
          %v1625 = vadd.f32 %v1621, 1e-05
          %v1626 = vrsqrt.pop %v1622
          %v1627 = vrsqrt.pop %v1623
          %v1628 = vrsqrt.pop %v1624
          %v1629 = vrsqrt.pop %v1625
          %v1634 = vcombine.low %v1626, %v1627
          %v1635 = vcombine.low %v1628, %v1629
          %v1637 = vunpack.c.l.s4 1983009808
          %v1638 = vunpack.c.0.s8 %v1637
          %v1639 = vlaneseq
          %v1640 = vshrl.u32 %v1639, 7
          %v1641 = vsub.s32 %v1638, %v1640
          %v1642 = vrot.slane %v1634, %v1641
          %v1644 = vunpack.c.l.s4 1983009808
          %v1645 = vunpack.c.0.s8 %v1644
          %v1646 = vlaneseq
          %v1647 = vshrl.u32 %v1646, 7
          %v1648 = vsub.s32 %v1645, %v1647
          %v1649 = vrot.slane %v1635, %v1648
          %v1650 = vcombine.low %v1642, %v1649
          %v1652 = vmul.f32 %v1082, %v1650
          %v1653 = vmul.f32 %v1083, %v1650
          %v1654 = vmul.f32 %v1084, %v1650
          %v1655 = vmul.f32 %v1085, %v1650
          %v1656 = vmul.f32 %v1086, %v1650
          %v1657 = vmul.f32 %v1087, %v1650
          %v1658 = vmul.f32 %v1088, %v1650
          %v1659 = vmul.f32 %v1089, %v1650
          %v1660 = vmul.f32 %v1090, %v1650
          %v1661 = vmul.f32 %v1091, %v1650
          %v1662 = vmul.f32 %v1092, %v1650
          %v1663 = vmul.f32 %v1093, %v1650
          %v1664 = vmul.f32 %v1094, %v1650
          %v1665 = vmul.f32 %v1095, %v1650
          %v1666 = vmul.f32 %v1096, %v1650
          %v1667 = vmul.f32 %v1097, %v1650
          %v1668 = vld [vmem:[#allocation4] sm:$0xf]
          %v1670 = vlaneseq
          %v1671 = vshrl.u32 %v1670, 7
          %v1672 = vsub.s32 0, %v1671
          %v1673 = vrot.slane %v1668, %v1672
          %v1674 = vlaneseq
          %v1675 = vshrl.u32 %v1674, 7
          %v1676 = vsub.s32 1, %v1675
          %v1677 = vrot.slane %v1668, %v1676
          %v1678 = vlaneseq
          %v1679 = vshrl.u32 %v1678, 7
          %v1680 = vsub.s32 2, %v1679
          %v1681 = vrot.slane %v1668, %v1680
          %v1682 = vlaneseq
          %v1683 = vshrl.u32 %v1682, 7
          %v1684 = vsub.s32 3, %v1683
          %v1685 = vrot.slane %v1668, %v1684
          %v1686 = vcombine.low %v1673, %v1677
          %v1687 = vcombine.low %v1681, %v1685
          %v1689 = vunpack.c.l.s4 1983009808
          %v1690 = vunpack.c.0.s8 %v1689
          %v1691 = vlaneseq
          %v1692 = vshrl.u32 %v1691, 7
          %v1693 = vsub.s32 %v1690, %v1692
          %v1694 = vrot.slane %v1686, %v1693
          %v1696 = vunpack.c.l.s4 1983009808
          %v1697 = vunpack.c.0.s8 %v1696
          %v1698 = vlaneseq
          %v1699 = vshrl.u32 %v1698, 7
          %v1700 = vsub.s32 %v1697, %v1699
          %v1701 = vrot.slane %v1687, %v1700
          %v1702 = vcombine.low %v1694, %v1701
          %v1704 = vmul.f32 %v1652, %v1702
          %v1705 = vmul.f32 %v1653, %v1702
          %v1706 = vmul.f32 %v1654, %v1702
          %v1707 = vmul.f32 %v1655, %v1702
          %v1708 = vmul.f32 %v1656, %v1702
          %v1709 = vmul.f32 %v1657, %v1702
          %v1710 = vmul.f32 %v1658, %v1702
          %v1711 = vmul.f32 %v1659, %v1702
          %v1712 = vmul.f32 %v1660, %v1702
          %v1713 = vmul.f32 %v1661, %v1702
          %v1714 = vmul.f32 %v1662, %v1702
          %v1715 = vmul.f32 %v1663, %v1702
          %v1716 = vmul.f32 %v1664, %v1702
          %v1717 = vmul.f32 %v1665, %v1702
          %v1718 = vmul.f32 %v1666, %v1702
          %v1719 = vmul.f32 %v1667, %v1702
          %v1720 = vld [vmem:[#allocation6] sm:$0xf]
          %v1722 = vlaneseq
          %v1723 = vshrl.u32 %v1722, 7
          %v1724 = vsub.s32 0, %v1723
          %v1725 = vrot.slane %v1720, %v1724
          %v1726 = vlaneseq
          %v1727 = vshrl.u32 %v1726, 7
          %v1728 = vsub.s32 1, %v1727
          %v1729 = vrot.slane %v1720, %v1728
          %v1730 = vlaneseq
          %v1731 = vshrl.u32 %v1730, 7
          %v1732 = vsub.s32 2, %v1731
          %v1733 = vrot.slane %v1720, %v1732
          %v1734 = vlaneseq
          %v1735 = vshrl.u32 %v1734, 7
          %v1736 = vsub.s32 3, %v1735
          %v1737 = vrot.slane %v1720, %v1736
          %v1738 = vcombine.low %v1725, %v1729
          %v1739 = vcombine.low %v1733, %v1737
          %v1741 = vunpack.c.l.s4 1983009808
          %v1742 = vunpack.c.0.s8 %v1741
          %v1743 = vlaneseq
          %v1744 = vshrl.u32 %v1743, 7
          %v1745 = vsub.s32 %v1742, %v1744
          %v1746 = vrot.slane %v1738, %v1745
          %v1748 = vunpack.c.l.s4 1983009808
          %v1749 = vunpack.c.0.s8 %v1748
          %v1750 = vlaneseq
          %v1751 = vshrl.u32 %v1750, 7
          %v1752 = vsub.s32 %v1749, %v1751
          %v1753 = vrot.slane %v1739, %v1752
          %v1754 = vcombine.low %v1746, %v1753
          %v1756 = vadd.f32 %v1704, %v1754
          %v1757 = vadd.f32 %v1705, %v1754
          %v1758 = vadd.f32 %v1706, %v1754
          %v1759 = vadd.f32 %v1707, %v1754
          %v1760 = vadd.f32 %v1708, %v1754
          %v1761 = vadd.f32 %v1709, %v1754
          %v1762 = vadd.f32 %v1710, %v1754
          %v1763 = vadd.f32 %v1711, %v1754
          %v1764 = vadd.f32 %v1712, %v1754
          %v1765 = vadd.f32 %v1713, %v1754
          %v1766 = vadd.f32 %v1714, %v1754
          %v1767 = vadd.f32 %v1715, %v1754
          %v1768 = vadd.f32 %v1716, %v1754
          %v1769 = vadd.f32 %v1717, %v1754
          %v1770 = vadd.f32 %v1718, %v1754
          %v1771 = vadd.f32 %v1719, %v1754
          %v1772 = vmax.f32 %v1756, 0.0
          %v1773 = vmax.f32 %v1757, 0.0
          %v1774 = vmax.f32 %v1758, 0.0
          %v1775 = vmax.f32 %v1759, 0.0
          %v1776 = vmax.f32 %v1760, 0.0
          %v1777 = vmax.f32 %v1761, 0.0
          %v1778 = vmax.f32 %v1762, 0.0
          %v1779 = vmax.f32 %v1763, 0.0
          %v1780 = vmax.f32 %v1764, 0.0
          %v1781 = vmax.f32 %v1765, 0.0
          %v1782 = vmax.f32 %v1766, 0.0
          %v1783 = vmax.f32 %v1767, 0.0
          %v1784 = vmax.f32 %v1768, 0.0
          %v1785 = vmax.f32 %v1769, 0.0
          %v1786 = vmax.f32 %v1770, 0.0
          %v1787 = vmax.f32 %v1771, 0.0
          %1788 = vst [vmem:[%s4] sm:$0xff] %v1772
          %1789 = vst [vmem:[%s4 + $0x8] sm:$0xff] %v1773
          %1790 = vst [vmem:[%s4 + $0x10] sm:$0xff] %v1774
          %1791 = vst [vmem:[%s4 + $0x18] sm:$0xff] %v1775
          %1792 = vst [vmem:[%s4 + $0x20] sm:$0xff] %v1776
          %1793 = vst [vmem:[%s4 + $0x28] sm:$0xff] %v1777
          %1794 = vst [vmem:[%s4 + $0x30] sm:$0xff] %v1778
          %1795 = vst [vmem:[%s4 + $0x38] sm:$0xff] %v1779
          %1796 = vst [vmem:[%s4 + $0x40] sm:$0xff] %v1780
          %1797 = vst [vmem:[%s4 + $0x48] sm:$0xff] %v1781
          %1798 = vst [vmem:[%s4 + $0x50] sm:$0xff] %v1782
          %1799 = vst [vmem:[%s4 + $0x58] sm:$0xff] %v1783
          %1800 = vst [vmem:[%s4 + $0x60] sm:$0xff] %v1784
          %1801 = vst [vmem:[%s4 + $0x68] sm:$0xff] %v1785
          %1802 = vst [vmem:[%s4 + $0x70] sm:$0xff] %v1786
          %1803 = vst [vmem:[%s4 + $0x78] sm:$0xff] %v1787
        $region52: #{generator_forward.4} parent=35 // pred_fallthru
          _
        // Predicated region
        $region53: #{generator_forward.4} parent=35 // pred_check
          %p1804 = pneg %p121
        $region54: #{generator_forward.4} parent=35 // pred_check_branch
          %1806 = sbr.rel (%p1804) target = $region56
        $region55: #{generator_forward.4} parent=35 // pred_region
          _
        $region56: #{generator_forward.4} parent=35 // pred_fallthru
          _
        // Predicated region
        $region57: #{generator_forward.4} parent=35 // pred_check
          %p1807 = pneg %p121
        $region58: #{generator_forward.4} parent=35 // pred_check_branch
          %1809 = sbr.rel (%p1807) target = $region60
        $region59: #{generator_forward.4} parent=35 // pred_region
          _
        $region60: #{generator_forward.4} parent=35 // pred_fallthru
          _
      $region36: #{generator_forward.4} parent=5 // pred_fallthru
        _
      %p1810 = scmp.le.s32.totalorder 2, %s14
      // Predicated region
      $region61: #{generator_forward.4} parent=5 // pred_check
        %p1811 = pneg %p1810
      $region62: #{generator_forward.4} parent=5 // pred_check_branch
        %1813 = sbr.rel (%p1811) target = $region64
      $region63: #{generator_forward.4} parent=5 // pred_region
        %s1814 = ssub.s32 %s14, 2
      $region64: #{generator_forward.4} parent=5 // pred_fallthru
        _
    $region6: #{generator_forward.4} parent=1 // loop_footer
      %s18 = sadd.s32 1, %s14
    $region7: #{generator_forward.4} parent=1 // loop_footer_branch
      %13 = sbr.rel target = $region3
    $region8: #{generator_forward.4} parent=1 // loop_exit
      _
    %1815 = vsyncpa [#allocation3], 1
    %s1816 = scalar_lea.sflag [#allocation3], 1
    %1817 = vsyncpa %s1816, 1
    %1818 = vsyncpa [#allocation5], 1

// kernel: generator_forward.5
$region0: #{generator_forward.5}
  #allocation0 [shape = 'u32[]', space=smem, size = 0x4, offset = 0x4, fixed_abs, tag = 'smem constant byte address 0x4 - core index']
  #allocation1 [shape = 'u32[144,128]{1,0:T(1,128)}', space=vmem, size = 0x12000, scoped, tag = 'internal scratch']
  %s0 = inlined_call_operand.vmem [shape: bf16[4,32,2048], index: 0, kind: input, shape index: {}]
  %s1 = inlined_call_operand.hbm [shape: bf16[4,2048,256], index: 1, kind: input, shape index: {}]
  %s2 = inlined_call_operand.vmem [shape: f32[1,256], index: 2, kind: input, shape index: {}]
  %s3 = inlined_call_operand.vmem [shape: f32[1,256], index: 3, kind: input, shape index: {}]
  %s4 = inlined_call_operand.vmem [shape: f32[4,32,256], index: 4, kind: output, shape index: {}]
  %s5 = sld [smem:[#allocation0]]
  $region57: #{generator_forward.5} parent=0
    _
  %s7 = ssub.s32 1, %s5
  %s8 = scalar_select 0, %s7, %s5
  $region1: #{generator_forward.5} parent=0
    #allocation2 [shape = 'u8[2097152]{0}', space=vmem, size = 0x200000, scoped, tag = 'input window, operand 1']
    #allocation3 [shape = 's32[2]{0}', space=sflag, size = 0x8, scoped, tag = 'scoped memory for generator_forward.5']
    %9 = vsyncpa [#allocation3], 0
    %s10 = scalar_lea.sflag [#allocation3], 1
    %11 = vsyncpa %s10, 0
    loop: start=0, step=1, limit=6
    $region2: #{generator_forward.5} parent=1 // loop_pre_header
      _
    $region3: #{generator_forward.5} parent=1 // loop_header
      %s13 = sphi 0, %s17
      %p14 = scmp.ge.s32.totalorder %s13, 6
      %s23 = sphi 0, %s25
      %s26 = sphi 0, %s23
      %s27 = sphi 0, %s26
      %s43 = sphi 0, %s27
      %s49 = sphi 0, %s51
      %s52 = sphi 0, %s49
      %s53 = sphi 0, %s52
      %s69 = sphi 0, %s53
      %s73 = sphi 0, %s73
      %s75 = sphi 0, %s73
      %s76 = sphi 0, %s75
      %s90 = sphi 0, %s76
      %s94 = sphi 0, %s94
      %s96 = sphi 0, %s94
      %s97 = sphi 0, %s96
      %s111 = sphi 0, %s97
      %s115 = sphi 0, %s115
      %s117 = sphi 0, %s115
      %s118 = sphi 0, %s117
      %s132 = sphi 0, %s118
    $region4: #{generator_forward.5} parent=1 // loop_header_branch
      %16 = sbr.rel (%p14) target = $region8
    $region5: #{generator_forward.5} parent=1 // loop_body
      %s18 = ssub.s32 %s13, 1
      %s19 = ssub.s32 %s13, 2
      %s20 = sadd.s32 %s13, 1
      %s21 = ssub.s32 %s13, %s20
      %p22 = scmp.eq.s32.totalorder %s21, 0
      %s24 = sadd.s32 %s23, 1
      %s25 = scalar_select %p22, %s23, %s24
      %p28 = pneg %p22
      %p29 = scmp.eq.s32.totalorder %s13, 3
      %p30 = por %p28, %p29
      %p31 = scmp.ne.s32.totalorder %s23, %s26
      %p32 = scmp.eq.s32.totalorder %s13, 0
      %p33 = por %p31, %p32
      %p34 = scmp.ne.s32.totalorder %s23, %s26
      %p35 = scmp.eq.s32.totalorder %s18, 3
      %p36 = por %p34, %p35
      %p37 = scmp.ne.s32.totalorder %s26, %s27
      %p38 = scmp.eq.s32.totalorder %s18, 0
      %p39 = por %p37, %p38
      %p40 = scmp.ne.s32.totalorder %s26, %s27
      %p41 = scmp.eq.s32.totalorder %s19, 3
      %p42 = por %p40, %p41
      %p44 = scmp.ne.s32.totalorder %s27, %s43
      %p45 = scmp.eq.s32.totalorder %s19, 0
      %p46 = por %p44, %p45
      %s47 = ssub.s32 %s13, %s20
      %p48 = scmp.eq.s32.totalorder %s47, 0
      %s50 = sadd.s32 %s49, 1
      %s51 = scalar_select %p48, %s49, %s50
      %p54 = pneg %p48
      %p55 = scmp.eq.s32.totalorder %s13, 3
      %p56 = por %p54, %p55
      %p57 = scmp.ne.s32.totalorder %s49, %s52
      %p58 = scmp.eq.s32.totalorder %s13, 0
      %p59 = por %p57, %p58
      %p60 = scmp.ne.s32.totalorder %s49, %s52
      %p61 = scmp.eq.s32.totalorder %s18, 3
      %p62 = por %p60, %p61
      %p63 = scmp.ne.s32.totalorder %s52, %s53
      %p64 = scmp.eq.s32.totalorder %s18, 0
      %p65 = por %p63, %p64
      %p66 = scmp.ne.s32.totalorder %s52, %s53
      %p67 = scmp.eq.s32.totalorder %s19, 3
      %p68 = por %p66, %p67
      %p70 = scmp.ne.s32.totalorder %s53, %s69
      %p71 = scmp.eq.s32.totalorder %s19, 0
      %p72 = por %p70, %p71
      %s74 = sadd.s32 %s73, 1
      %p77 = scmp.eq.s32.totalorder %s13, 3
      %p78 = scmp.ne.s32.totalorder %s73, %s75
      %p79 = scmp.eq.s32.totalorder %s13, 0
      %p80 = por %p78, %p79
      %p81 = scmp.ne.s32.totalorder %s73, %s75
      %p82 = scmp.eq.s32.totalorder %s18, 3
      %p83 = por %p81, %p82
      %p84 = scmp.ne.s32.totalorder %s75, %s76
      %p85 = scmp.eq.s32.totalorder %s18, 0
      %p86 = por %p84, %p85
      %p87 = scmp.ne.s32.totalorder %s75, %s76
      %p88 = scmp.eq.s32.totalorder %s19, 3
      %p89 = por %p87, %p88
      %p91 = scmp.ne.s32.totalorder %s76, %s90
      %p92 = scmp.eq.s32.totalorder %s19, 0
      %p93 = por %p91, %p92
      %s95 = sadd.s32 %s94, 1
      %p98 = scmp.eq.s32.totalorder %s13, 3
      %p99 = scmp.ne.s32.totalorder %s94, %s96
      %p100 = scmp.eq.s32.totalorder %s13, 0
      %p101 = por %p99, %p100
      %p102 = scmp.ne.s32.totalorder %s94, %s96
      %p103 = scmp.eq.s32.totalorder %s18, 3
      %p104 = por %p102, %p103
      %p105 = scmp.ne.s32.totalorder %s96, %s97
      %p106 = scmp.eq.s32.totalorder %s18, 0
      %p107 = por %p105, %p106
      %p108 = scmp.ne.s32.totalorder %s96, %s97
      %p109 = scmp.eq.s32.totalorder %s19, 3
      %p110 = por %p108, %p109
      %p112 = scmp.ne.s32.totalorder %s97, %s111
      %p113 = scmp.eq.s32.totalorder %s19, 0
      %p114 = por %p112, %p113
      %s116 = sadd.s32 %s115, 1
      %p119 = scmp.eq.s32.totalorder %s13, 3
      %p120 = scmp.ne.s32.totalorder %s115, %s117
      %p121 = scmp.eq.s32.totalorder %s13, 0
      %p122 = por %p120, %p121
      %p123 = scmp.ne.s32.totalorder %s115, %s117
      %p124 = scmp.eq.s32.totalorder %s18, 3
      %p125 = por %p123, %p124
      %p126 = scmp.ne.s32.totalorder %s117, %s118
      %p127 = scmp.eq.s32.totalorder %s18, 0
      %p128 = por %p126, %p127
      %p129 = scmp.ne.s32.totalorder %s117, %s118
      %p130 = scmp.eq.s32.totalorder %s19, 3
      %p131 = por %p129, %p130
      %p133 = scmp.ne.s32.totalorder %s118, %s132
      %p134 = scmp.eq.s32.totalorder %s19, 0
      %p135 = por %p133, %p134
      %p136 = scmp.le.s32.totalorder 1, %s13
      %p137 = scmp.lt.s32.totalorder %s13, 5
      %p138 = pnand %p136, %p137
      %p139 = pneg %p138
      // Predicated region
      $region9: #{generator_forward.5} parent=5 // pred_check
        _
      $region10: #{generator_forward.5} parent=5 // pred_check_branch
        %141 = sbr.rel (%p138) target = $region12
      $region11: #{generator_forward.5} parent=5 // pred_region
        %s142 = ssub.s32 %s13, 1
        // Predicated region
        $region13: #{generator_forward.5} parent=11 // pred_check
          %p143 = pneg %p86
        $region14: #{generator_forward.5} parent=11 // pred_check_branch
          %145 = sbr.rel (%p143) target = $region16
        $region15: #{generator_forward.5} parent=11 // pred_region
          _
        $region16: #{generator_forward.5} parent=11 // pred_fallthru
          _
        // Predicated region
        $region17: #{generator_forward.5} parent=11 // pred_check
          %p146 = pneg %p107
        $region18: #{generator_forward.5} parent=11 // pred_check_branch
          %148 = sbr.rel (%p146) target = $region20
        $region19: #{generator_forward.5} parent=11 // pred_region
          _
        $region20: #{generator_forward.5} parent=11 // pred_fallthru
          _
      $region12: #{generator_forward.5} parent=5 // pred_fallthru
        _
      %p149 = scmp.lt.s32.totalorder %s13, 4
      // Predicated region
      $region21: #{generator_forward.5} parent=5 // pred_check
        %p150 = pneg %p149
      $region22: #{generator_forward.5} parent=5 // pred_check_branch
        %152 = sbr.rel (%p150) target = $region24
      $region23: #{generator_forward.5} parent=5 // pred_region
        // Predicated region
        $region25: #{generator_forward.5} parent=23 // pred_check
          %p153 = pneg %p33
        $region26: #{generator_forward.5} parent=23 // pred_check_branch
          %155 = sbr.rel (%p153) target = $region28
        $region27: #{generator_forward.5} parent=23 // pred_region
          %p156 = scmp.lt.s32.totalorder %s13, 3
          %s157 = scalar_select %p156, %s13, 3
          %s158 = smul.addr %s157, 64
          %s159 = smul.addr %s158, 4
          %s160 = scalar_lea.vmem %s0, %s159
        $region28: #{generator_forward.5} parent=23 // pred_fallthru
          _
        // Predicated region
        $region29: #{generator_forward.5} parent=23 // pred_check
          %p161 = pneg %p59
        $region30: #{generator_forward.5} parent=23 // pred_check_branch
          %163 = sbr.rel (%p161) target = $region32
        $region31: #{generator_forward.5} parent=23 // pred_region
          %s164 = sand.u32 %s49, 1
          %s165 = scalar_lea.sflag [#allocation3], %s164
          %s166 = sand.u32 %s49, 1
          %s167 = smul.addr %s166, 2048
          %s168 = scalar_lea.vmem [#allocation2], %s167
          %s170 = ssub.s32 32768, 32768
          %171 = vsyncadd %s165, %s170
          %s172 = smul.addr %s13, 512
          %s173 = smul.addr %s172, 64
          %s174 = scalar_lea.hbm %s1, %s173
          %s175 = sshll.u32 %s168, 4
          %s176 = int_to_ptr.vmem [resolvable:$true] %s175
          %181 = dma.hbm_to_vmem [thread:$0]  %s174, 32768, %s176, %s165, 128, 128, 8
        $region32: #{generator_forward.5} parent=23 // pred_fallthru
          _
      $region24: #{generator_forward.5} parent=5 // pred_fallthru
        _
      %p182 = scmp.le.s32.totalorder 1, %s13
      %p183 = scmp.lt.s32.totalorder %s13, 5
      %p184 = pnand %p182, %p183
      %p185 = pneg %p184
      // Predicated region
      $region33: #{generator_forward.5} parent=5 // pred_check
        _
      $region34: #{generator_forward.5} parent=5 // pred_check_branch
        %187 = sbr.rel (%p184) target = $region36
      $region35: #{generator_forward.5} parent=5 // pred_region
        %s188 = ssub.s32 %s13, 1
        %s189 = sand.u32 %s52, 1
        %s190 = scalar_lea.sflag [#allocation3], %s189
        %s191 = sand.u32 %s52, 1
        %s192 = smul.addr %s191, 2048
        %s193 = scalar_lea.vmem [#allocation2], %s192
        // Predicated region
        $region37: #{generator_forward.5} parent=35 // pred_check
          %p194 = pneg %p65
        $region38: #{generator_forward.5} parent=35 // pred_check_branch
          %196 = sbr.rel (%p194) target = $region40
        $region39: #{generator_forward.5} parent=35 // pred_region
          %197 = dma.done %s190, 32768
        $region40: #{generator_forward.5} parent=35 // pred_fallthru
          _
        %p198 = scmp.lt.s32.totalorder %s18, 3
        %s199 = scalar_select %p198, %s18, 3
        %s200 = smul.addr %s199, 64
        %s201 = smul.addr %s200, 4
        %s202 = scalar_lea.vmem %s0, %s201
        %p203 = pneg %p39
        %p204 = pneg %p36
        %s205 = sand.u32 %s52, 1
        %s206 = scalar_lea.sflag [#allocation3], %s205
        %s207 = sand.u32 %s52, 1
        %s208 = smul.addr %s207, 2048
        %s209 = scalar_lea.vmem [#allocation2], %s208
        %p210 = pneg %p65
        %p211 = pneg %p62
        %p212 = pneg %p86
        %p213 = pneg %p83
        %p214 = pneg %p107
        %p215 = pneg %p104
        %p216 = pneg %p128
        %p217 = pneg %p125
        %p218 = scmp.lt.s32.totalorder %s18, 3
        %s219 = scalar_select %p218, %s18, 3
        %s220 = smul.addr %s219, 64
        %s221 = smul.addr %s220, 4
        %s222 = scalar_lea.vmem %s0, %s221
        %v223 = vld [vmem:[%s222] sm:$0xff]
        %v224 = vld [vmem:[%s222 + $0x8] sm:$0xff]
        %v225 = vld [vmem:[%s222 + $0x10] sm:$0xff]
        %v226 = vld [vmem:[%s222 + $0x18] sm:$0xff]
        %v227 = vld [vmem:[%s222 + $0x20] sm:$0xff]
        %v228 = vld [vmem:[%s222 + $0x28] sm:$0xff]
        %v229 = vld [vmem:[%s222 + $0x30] sm:$0xff]
        %v230 = vld [vmem:[%s222 + $0x38] sm:$0xff]
        %v231 = vld [vmem:[%s222 + $0x40] sm:$0xff]
        %v232 = vld [vmem:[%s222 + $0x48] sm:$0xff]
        %v233 = vld [vmem:[%s222 + $0x50] sm:$0xff]
        %v234 = vld [vmem:[%s222 + $0x58] sm:$0xff]
        %v235 = vld [vmem:[%s222 + $0x60] sm:$0xff]
        %v236 = vld [vmem:[%s222 + $0x68] sm:$0xff]
        %v237 = vld [vmem:[%s222 + $0x70] sm:$0xff]
        %v238 = vld [vmem:[%s222 + $0x78] sm:$0xff]
        %v239 = vld [vmem:[%s222 + $0x80] sm:$0xff]
        %v240 = vld [vmem:[%s222 + $0x88] sm:$0xff]
        %v241 = vld [vmem:[%s222 + $0x90] sm:$0xff]
        %v242 = vld [vmem:[%s222 + $0x98] sm:$0xff]
        %v243 = vld [vmem:[%s222 + $0xa0] sm:$0xff]
        %v244 = vld [vmem:[%s222 + $0xa8] sm:$0xff]
        %v245 = vld [vmem:[%s222 + $0xb0] sm:$0xff]
        %v246 = vld [vmem:[%s222 + $0xb8] sm:$0xff]
        %v247 = vld [vmem:[%s222 + $0xc0] sm:$0xff]
        %v248 = vld [vmem:[%s222 + $0xc8] sm:$0xff]
        %v249 = vld [vmem:[%s222 + $0xd0] sm:$0xff]
        %v250 = vld [vmem:[%s222 + $0xd8] sm:$0xff]
        %v251 = vld [vmem:[%s222 + $0xe0] sm:$0xff]
        %v252 = vld [vmem:[%s222 + $0xe8] sm:$0xff]
        %v253 = vld [vmem:[%s222 + $0xf0] sm:$0xff]
        %v254 = vld [vmem:[%s222 + $0xf8] sm:$0xff]
        %v255 = vld [vmem:[%s193] sm:$0xff]
        %v256 = vld [vmem:[%s193 + $0x8] sm:$0xff]
        %v257 = vld [vmem:[%s193 + $0x10] sm:$0xff]
        %v258 = vld [vmem:[%s193 + $0x18] sm:$0xff]
        %v259 = vld [vmem:[%s193 + $0x20] sm:$0xff]
        %v260 = vld [vmem:[%s193 + $0x28] sm:$0xff]
        %v261 = vld [vmem:[%s193 + $0x30] sm:$0xff]
        %v262 = vld [vmem:[%s193 + $0x38] sm:$0xff]
        %v263 = vld [vmem:[%s193 + $0x40] sm:$0xff]
        %v264 = vld [vmem:[%s193 + $0x48] sm:$0xff]
        %v265 = vld [vmem:[%s193 + $0x50] sm:$0xff]
        %v266 = vld [vmem:[%s193 + $0x58] sm:$0xff]
        %v267 = vld [vmem:[%s193 + $0x60] sm:$0xff]
        %v268 = vld [vmem:[%s193 + $0x68] sm:$0xff]
        %v269 = vld [vmem:[%s193 + $0x70] sm:$0xff]
        %v270 = vld [vmem:[%s193 + $0x78] sm:$0xff]
        %v271 = vld [vmem:[%s193 + $0x80] sm:$0xff]
        %v272 = vld [vmem:[%s193 + $0x88] sm:$0xff]
        %v273 = vld [vmem:[%s193 + $0x90] sm:$0xff]
        %v274 = vld [vmem:[%s193 + $0x98] sm:$0xff]
        %v275 = vld [vmem:[%s193 + $0xa0] sm:$0xff]
        %v276 = vld [vmem:[%s193 + $0xa8] sm:$0xff]
        %v277 = vld [vmem:[%s193 + $0xb0] sm:$0xff]
        %v278 = vld [vmem:[%s193 + $0xb8] sm:$0xff]
        %v279 = vld [vmem:[%s193 + $0xc0] sm:$0xff]
        %v280 = vld [vmem:[%s193 + $0xc8] sm:$0xff]
        %v281 = vld [vmem:[%s193 + $0xd0] sm:$0xff]
        %v282 = vld [vmem:[%s193 + $0xd8] sm:$0xff]
        %v283 = vld [vmem:[%s193 + $0xe0] sm:$0xff]
        %v284 = vld [vmem:[%s193 + $0xe8] sm:$0xff]
        %v285 = vld [vmem:[%s193 + $0xf0] sm:$0xff]
        %v286 = vld [vmem:[%s193 + $0xf8] sm:$0xff]
        %v287 = vld [vmem:[%s193 + $0x100] sm:$0xff]
        %v288 = vld [vmem:[%s193 + $0x108] sm:$0xff]
        %v289 = vld [vmem:[%s193 + $0x110] sm:$0xff]
        %v290 = vld [vmem:[%s193 + $0x118] sm:$0xff]
        %v291 = vld [vmem:[%s193 + $0x120] sm:$0xff]
        %v292 = vld [vmem:[%s193 + $0x128] sm:$0xff]
        %v293 = vld [vmem:[%s193 + $0x130] sm:$0xff]
        %v294 = vld [vmem:[%s193 + $0x138] sm:$0xff]
        %v295 = vld [vmem:[%s193 + $0x140] sm:$0xff]
        %v296 = vld [vmem:[%s193 + $0x148] sm:$0xff]
        %v297 = vld [vmem:[%s193 + $0x150] sm:$0xff]
        %v298 = vld [vmem:[%s193 + $0x158] sm:$0xff]
        %v299 = vld [vmem:[%s193 + $0x160] sm:$0xff]
        %v300 = vld [vmem:[%s193 + $0x168] sm:$0xff]
        %v301 = vld [vmem:[%s193 + $0x170] sm:$0xff]
        %v302 = vld [vmem:[%s193 + $0x178] sm:$0xff]
        %v303 = vld [vmem:[%s193 + $0x180] sm:$0xff]
        %v304 = vld [vmem:[%s193 + $0x188] sm:$0xff]
        %v305 = vld [vmem:[%s193 + $0x190] sm:$0xff]
        %v306 = vld [vmem:[%s193 + $0x198] sm:$0xff]
        %v307 = vld [vmem:[%s193 + $0x1a0] sm:$0xff]
        %v308 = vld [vmem:[%s193 + $0x1a8] sm:$0xff]
        %v309 = vld [vmem:[%s193 + $0x1b0] sm:$0xff]
        %v310 = vld [vmem:[%s193 + $0x1b8] sm:$0xff]
        %v311 = vld [vmem:[%s193 + $0x1c0] sm:$0xff]
        %v312 = vld [vmem:[%s193 + $0x1c8] sm:$0xff]
        %v313 = vld [vmem:[%s193 + $0x1d0] sm:$0xff]
        %v314 = vld [vmem:[%s193 + $0x1d8] sm:$0xff]
        %v315 = vld [vmem:[%s193 + $0x1e0] sm:$0xff]
        %v316 = vld [vmem:[%s193 + $0x1e8] sm:$0xff]
        %v317 = vld [vmem:[%s193 + $0x1f0] sm:$0xff]
        %v318 = vld [vmem:[%s193 + $0x1f8] sm:$0xff]
        %v319 = vld [vmem:[%s193 + $0x200] sm:$0xff]
        %v320 = vld [vmem:[%s193 + $0x208] sm:$0xff]
        %v321 = vld [vmem:[%s193 + $0x210] sm:$0xff]
        %v322 = vld [vmem:[%s193 + $0x218] sm:$0xff]
        %v323 = vld [vmem:[%s193 + $0x220] sm:$0xff]
        %v324 = vld [vmem:[%s193 + $0x228] sm:$0xff]
        %v325 = vld [vmem:[%s193 + $0x230] sm:$0xff]
        %v326 = vld [vmem:[%s193 + $0x238] sm:$0xff]
        %v327 = vld [vmem:[%s193 + $0x240] sm:$0xff]
        %v328 = vld [vmem:[%s193 + $0x248] sm:$0xff]
        %v329 = vld [vmem:[%s193 + $0x250] sm:$0xff]
        %v330 = vld [vmem:[%s193 + $0x258] sm:$0xff]
        %v331 = vld [vmem:[%s193 + $0x260] sm:$0xff]
        %v332 = vld [vmem:[%s193 + $0x268] sm:$0xff]
        %v333 = vld [vmem:[%s193 + $0x270] sm:$0xff]
        %v334 = vld [vmem:[%s193 + $0x278] sm:$0xff]
        %v335 = vld [vmem:[%s193 + $0x280] sm:$0xff]
        %v336 = vld [vmem:[%s193 + $0x288] sm:$0xff]
        %v337 = vld [vmem:[%s193 + $0x290] sm:$0xff]
        %v338 = vld [vmem:[%s193 + $0x298] sm:$0xff]
        %v339 = vld [vmem:[%s193 + $0x2a0] sm:$0xff]
        %v340 = vld [vmem:[%s193 + $0x2a8] sm:$0xff]
        %v341 = vld [vmem:[%s193 + $0x2b0] sm:$0xff]
        %v342 = vld [vmem:[%s193 + $0x2b8] sm:$0xff]
        %v343 = vld [vmem:[%s193 + $0x2c0] sm:$0xff]
        %v344 = vld [vmem:[%s193 + $0x2c8] sm:$0xff]
        %v345 = vld [vmem:[%s193 + $0x2d0] sm:$0xff]
        %v346 = vld [vmem:[%s193 + $0x2d8] sm:$0xff]
        %v347 = vld [vmem:[%s193 + $0x2e0] sm:$0xff]
        %v348 = vld [vmem:[%s193 + $0x2e8] sm:$0xff]
        %v349 = vld [vmem:[%s193 + $0x2f0] sm:$0xff]
        %v350 = vld [vmem:[%s193 + $0x2f8] sm:$0xff]
        %v351 = vld [vmem:[%s193 + $0x300] sm:$0xff]
        %v352 = vld [vmem:[%s193 + $0x308] sm:$0xff]
        %v353 = vld [vmem:[%s193 + $0x310] sm:$0xff]
        %v354 = vld [vmem:[%s193 + $0x318] sm:$0xff]
        %v355 = vld [vmem:[%s193 + $0x320] sm:$0xff]
        %v356 = vld [vmem:[%s193 + $0x328] sm:$0xff]
        %v357 = vld [vmem:[%s193 + $0x330] sm:$0xff]
        %v358 = vld [vmem:[%s193 + $0x338] sm:$0xff]
        %v359 = vld [vmem:[%s193 + $0x340] sm:$0xff]
        %v360 = vld [vmem:[%s193 + $0x348] sm:$0xff]
        %v361 = vld [vmem:[%s193 + $0x350] sm:$0xff]
        %v362 = vld [vmem:[%s193 + $0x358] sm:$0xff]
        %v363 = vld [vmem:[%s193 + $0x360] sm:$0xff]
        %v364 = vld [vmem:[%s193 + $0x368] sm:$0xff]
        %v365 = vld [vmem:[%s193 + $0x370] sm:$0xff]
        %v366 = vld [vmem:[%s193 + $0x378] sm:$0xff]
        %v367 = vld [vmem:[%s193 + $0x380] sm:$0xff]
        %v368 = vld [vmem:[%s193 + $0x388] sm:$0xff]
        %v369 = vld [vmem:[%s193 + $0x390] sm:$0xff]
        %v370 = vld [vmem:[%s193 + $0x398] sm:$0xff]
        %v371 = vld [vmem:[%s193 + $0x3a0] sm:$0xff]
        %v372 = vld [vmem:[%s193 + $0x3a8] sm:$0xff]
        %v373 = vld [vmem:[%s193 + $0x3b0] sm:$0xff]
        %v374 = vld [vmem:[%s193 + $0x3b8] sm:$0xff]
        %v375 = vld [vmem:[%s193 + $0x3c0] sm:$0xff]
        %v376 = vld [vmem:[%s193 + $0x3c8] sm:$0xff]
        %v377 = vld [vmem:[%s193 + $0x3d0] sm:$0xff]
        %v378 = vld [vmem:[%s193 + $0x3d8] sm:$0xff]
        %v379 = vld [vmem:[%s193 + $0x3e0] sm:$0xff]
        %v380 = vld [vmem:[%s193 + $0x3e8] sm:$0xff]
        %v381 = vld [vmem:[%s193 + $0x3f0] sm:$0xff]
        %v382 = vld [vmem:[%s193 + $0x3f8] sm:$0xff]
        %v383 = vld [vmem:[%s193 + $0x400] sm:$0xff]
        %v384 = vld [vmem:[%s193 + $0x408] sm:$0xff]
        %v385 = vld [vmem:[%s193 + $0x410] sm:$0xff]
        %v386 = vld [vmem:[%s193 + $0x418] sm:$0xff]
        %v387 = vld [vmem:[%s193 + $0x420] sm:$0xff]
        %v388 = vld [vmem:[%s193 + $0x428] sm:$0xff]
        %v389 = vld [vmem:[%s193 + $0x430] sm:$0xff]
        %v390 = vld [vmem:[%s193 + $0x438] sm:$0xff]
        %v391 = vld [vmem:[%s193 + $0x440] sm:$0xff]
        %v392 = vld [vmem:[%s193 + $0x448] sm:$0xff]
        %v393 = vld [vmem:[%s193 + $0x450] sm:$0xff]
        %v394 = vld [vmem:[%s193 + $0x458] sm:$0xff]
        %v395 = vld [vmem:[%s193 + $0x460] sm:$0xff]
        %v396 = vld [vmem:[%s193 + $0x468] sm:$0xff]
        %v397 = vld [vmem:[%s193 + $0x470] sm:$0xff]
        %v398 = vld [vmem:[%s193 + $0x478] sm:$0xff]
        %v399 = vld [vmem:[%s193 + $0x480] sm:$0xff]
        %v400 = vld [vmem:[%s193 + $0x488] sm:$0xff]
        %v401 = vld [vmem:[%s193 + $0x490] sm:$0xff]
        %v402 = vld [vmem:[%s193 + $0x498] sm:$0xff]
        %v403 = vld [vmem:[%s193 + $0x4a0] sm:$0xff]
        %v404 = vld [vmem:[%s193 + $0x4a8] sm:$0xff]
        %v405 = vld [vmem:[%s193 + $0x4b0] sm:$0xff]
        %v406 = vld [vmem:[%s193 + $0x4b8] sm:$0xff]
        %v407 = vld [vmem:[%s193 + $0x4c0] sm:$0xff]
        %v408 = vld [vmem:[%s193 + $0x4c8] sm:$0xff]
        %v409 = vld [vmem:[%s193 + $0x4d0] sm:$0xff]
        %v410 = vld [vmem:[%s193 + $0x4d8] sm:$0xff]
        %v411 = vld [vmem:[%s193 + $0x4e0] sm:$0xff]
        %v412 = vld [vmem:[%s193 + $0x4e8] sm:$0xff]
        %v413 = vld [vmem:[%s193 + $0x4f0] sm:$0xff]
        %v414 = vld [vmem:[%s193 + $0x4f8] sm:$0xff]
        %v415 = vld [vmem:[%s193 + $0x500] sm:$0xff]
        %v416 = vld [vmem:[%s193 + $0x508] sm:$0xff]
        %v417 = vld [vmem:[%s193 + $0x510] sm:$0xff]
        %v418 = vld [vmem:[%s193 + $0x518] sm:$0xff]
        %v419 = vld [vmem:[%s193 + $0x520] sm:$0xff]
        %v420 = vld [vmem:[%s193 + $0x528] sm:$0xff]
        %v421 = vld [vmem:[%s193 + $0x530] sm:$0xff]
        %v422 = vld [vmem:[%s193 + $0x538] sm:$0xff]
        %v423 = vld [vmem:[%s193 + $0x540] sm:$0xff]
        %v424 = vld [vmem:[%s193 + $0x548] sm:$0xff]
        %v425 = vld [vmem:[%s193 + $0x550] sm:$0xff]
        %v426 = vld [vmem:[%s193 + $0x558] sm:$0xff]
        %v427 = vld [vmem:[%s193 + $0x560] sm:$0xff]
        %v428 = vld [vmem:[%s193 + $0x568] sm:$0xff]
        %v429 = vld [vmem:[%s193 + $0x570] sm:$0xff]
        %v430 = vld [vmem:[%s193 + $0x578] sm:$0xff]
        %v431 = vld [vmem:[%s193 + $0x580] sm:$0xff]
        %v432 = vld [vmem:[%s193 + $0x588] sm:$0xff]
        %v433 = vld [vmem:[%s193 + $0x590] sm:$0xff]
        %v434 = vld [vmem:[%s193 + $0x598] sm:$0xff]
        %v435 = vld [vmem:[%s193 + $0x5a0] sm:$0xff]
        %v436 = vld [vmem:[%s193 + $0x5a8] sm:$0xff]
        %v437 = vld [vmem:[%s193 + $0x5b0] sm:$0xff]
        %v438 = vld [vmem:[%s193 + $0x5b8] sm:$0xff]
        %v439 = vld [vmem:[%s193 + $0x5c0] sm:$0xff]
        %v440 = vld [vmem:[%s193 + $0x5c8] sm:$0xff]
        %v441 = vld [vmem:[%s193 + $0x5d0] sm:$0xff]
        %v442 = vld [vmem:[%s193 + $0x5d8] sm:$0xff]
        %v443 = vld [vmem:[%s193 + $0x5e0] sm:$0xff]
        %v444 = vld [vmem:[%s193 + $0x5e8] sm:$0xff]
        %v445 = vld [vmem:[%s193 + $0x5f0] sm:$0xff]
        %v446 = vld [vmem:[%s193 + $0x5f8] sm:$0xff]
        %v447 = vld [vmem:[%s193 + $0x600] sm:$0xff]
        %v448 = vld [vmem:[%s193 + $0x608] sm:$0xff]
        %v449 = vld [vmem:[%s193 + $0x610] sm:$0xff]
        %v450 = vld [vmem:[%s193 + $0x618] sm:$0xff]
        %v451 = vld [vmem:[%s193 + $0x620] sm:$0xff]
        %v452 = vld [vmem:[%s193 + $0x628] sm:$0xff]
        %v453 = vld [vmem:[%s193 + $0x630] sm:$0xff]
        %v454 = vld [vmem:[%s193 + $0x638] sm:$0xff]
        %v455 = vld [vmem:[%s193 + $0x640] sm:$0xff]
        %v456 = vld [vmem:[%s193 + $0x648] sm:$0xff]
        %v457 = vld [vmem:[%s193 + $0x650] sm:$0xff]
        %v458 = vld [vmem:[%s193 + $0x658] sm:$0xff]
        %v459 = vld [vmem:[%s193 + $0x660] sm:$0xff]
        %v460 = vld [vmem:[%s193 + $0x668] sm:$0xff]
        %v461 = vld [vmem:[%s193 + $0x670] sm:$0xff]
        %v462 = vld [vmem:[%s193 + $0x678] sm:$0xff]
        %v463 = vld [vmem:[%s193 + $0x680] sm:$0xff]
        %v464 = vld [vmem:[%s193 + $0x688] sm:$0xff]
        %v465 = vld [vmem:[%s193 + $0x690] sm:$0xff]
        %v466 = vld [vmem:[%s193 + $0x698] sm:$0xff]
        %v467 = vld [vmem:[%s193 + $0x6a0] sm:$0xff]
        %v468 = vld [vmem:[%s193 + $0x6a8] sm:$0xff]
        %v469 = vld [vmem:[%s193 + $0x6b0] sm:$0xff]
        %v470 = vld [vmem:[%s193 + $0x6b8] sm:$0xff]
        %v471 = vld [vmem:[%s193 + $0x6c0] sm:$0xff]
        %v472 = vld [vmem:[%s193 + $0x6c8] sm:$0xff]
        %v473 = vld [vmem:[%s193 + $0x6d0] sm:$0xff]
        %v474 = vld [vmem:[%s193 + $0x6d8] sm:$0xff]
        %v475 = vld [vmem:[%s193 + $0x6e0] sm:$0xff]
        %v476 = vld [vmem:[%s193 + $0x6e8] sm:$0xff]
        %v477 = vld [vmem:[%s193 + $0x6f0] sm:$0xff]
        %v478 = vld [vmem:[%s193 + $0x6f8] sm:$0xff]
        %v479 = vld [vmem:[%s193 + $0x700] sm:$0xff]
        %v480 = vld [vmem:[%s193 + $0x708] sm:$0xff]
        %v481 = vld [vmem:[%s193 + $0x710] sm:$0xff]
        %v482 = vld [vmem:[%s193 + $0x718] sm:$0xff]
        %v483 = vld [vmem:[%s193 + $0x720] sm:$0xff]
        %v484 = vld [vmem:[%s193 + $0x728] sm:$0xff]
        %v485 = vld [vmem:[%s193 + $0x730] sm:$0xff]
        %v486 = vld [vmem:[%s193 + $0x738] sm:$0xff]
        %v487 = vld [vmem:[%s193 + $0x740] sm:$0xff]
        %v488 = vld [vmem:[%s193 + $0x748] sm:$0xff]
        %v489 = vld [vmem:[%s193 + $0x750] sm:$0xff]
        %v490 = vld [vmem:[%s193 + $0x758] sm:$0xff]
        %v491 = vld [vmem:[%s193 + $0x760] sm:$0xff]
        %v492 = vld [vmem:[%s193 + $0x768] sm:$0xff]
        %v493 = vld [vmem:[%s193 + $0x770] sm:$0xff]
        %v494 = vld [vmem:[%s193 + $0x778] sm:$0xff]
        %v495 = vld [vmem:[%s193 + $0x780] sm:$0xff]
        %v496 = vld [vmem:[%s193 + $0x788] sm:$0xff]
        %v497 = vld [vmem:[%s193 + $0x790] sm:$0xff]
        %v498 = vld [vmem:[%s193 + $0x798] sm:$0xff]
        %v499 = vld [vmem:[%s193 + $0x7a0] sm:$0xff]
        %v500 = vld [vmem:[%s193 + $0x7a8] sm:$0xff]
        %v501 = vld [vmem:[%s193 + $0x7b0] sm:$0xff]
        %v502 = vld [vmem:[%s193 + $0x7b8] sm:$0xff]
        %v503 = vld [vmem:[%s193 + $0x7c0] sm:$0xff]
        %v504 = vld [vmem:[%s193 + $0x7c8] sm:$0xff]
        %v505 = vld [vmem:[%s193 + $0x7d0] sm:$0xff]
        %v506 = vld [vmem:[%s193 + $0x7d8] sm:$0xff]
        %v507 = vld [vmem:[%s193 + $0x7e0] sm:$0xff]
        %v508 = vld [vmem:[%s193 + $0x7e8] sm:$0xff]
        %v509 = vld [vmem:[%s193 + $0x7f0] sm:$0xff]
        %v510 = vld [vmem:[%s193 + $0x7f8] sm:$0xff]
        %v543 = vunpack.c.l.b16 %v223
        %v544 = vunpack.c.h.b16 %v223
        %v545 = vunpack.c.l.b16 %v224
        %v546 = vunpack.c.h.b16 %v224
        %v547 = vunpack.c.l.b16 %v225
        %v548 = vunpack.c.h.b16 %v225
        %v549 = vunpack.c.l.b16 %v226
        %v550 = vunpack.c.h.b16 %v226
        %v551 = vunpack.c.l.b16 %v227
        %v552 = vunpack.c.h.b16 %v227
        %v553 = vunpack.c.l.b16 %v228
        %v554 = vunpack.c.h.b16 %v228
        %v555 = vunpack.c.l.b16 %v229
        %v556 = vunpack.c.h.b16 %v229
        %v557 = vunpack.c.l.b16 %v230
        %v558 = vunpack.c.h.b16 %v230
        %v559 = vunpack.c.l.b16 %v231
        %v560 = vunpack.c.h.b16 %v231
        %v561 = vunpack.c.l.b16 %v232
        %v562 = vunpack.c.h.b16 %v232
        %v563 = vunpack.c.l.b16 %v233
        %v564 = vunpack.c.h.b16 %v233
        %v565 = vunpack.c.l.b16 %v234
        %v566 = vunpack.c.h.b16 %v234
        %v567 = vunpack.c.l.b16 %v235
        %v568 = vunpack.c.h.b16 %v235
        %v569 = vunpack.c.l.b16 %v236
        %v570 = vunpack.c.h.b16 %v236
        %v571 = vunpack.c.l.b16 %v237
        %v572 = vunpack.c.h.b16 %v237
        %v573 = vunpack.c.l.b16 %v238
        %v574 = vunpack.c.h.b16 %v238
        %v575 = vunpack.c.l.b16 %v239
        %v576 = vunpack.c.h.b16 %v239
        %v577 = vunpack.c.l.b16 %v240
        %v578 = vunpack.c.h.b16 %v240
        %v579 = vunpack.c.l.b16 %v241
        %v580 = vunpack.c.h.b16 %v241
        %v581 = vunpack.c.l.b16 %v242
        %v582 = vunpack.c.h.b16 %v242
        %v583 = vunpack.c.l.b16 %v243
        %v584 = vunpack.c.h.b16 %v243
        %v585 = vunpack.c.l.b16 %v244
        %v586 = vunpack.c.h.b16 %v244
        %v587 = vunpack.c.l.b16 %v245
        %v588 = vunpack.c.h.b16 %v245
        %v589 = vunpack.c.l.b16 %v246
        %v590 = vunpack.c.h.b16 %v246
        %v591 = vunpack.c.l.b16 %v247
        %v592 = vunpack.c.h.b16 %v247
        %v593 = vunpack.c.l.b16 %v248
        %v594 = vunpack.c.h.b16 %v248
        %v595 = vunpack.c.l.b16 %v249
        %v596 = vunpack.c.h.b16 %v249
        %v597 = vunpack.c.l.b16 %v250
        %v598 = vunpack.c.h.b16 %v250
        %v599 = vunpack.c.l.b16 %v251
        %v600 = vunpack.c.h.b16 %v251
        %v601 = vunpack.c.l.b16 %v252
        %v602 = vunpack.c.h.b16 %v252
        %v603 = vunpack.c.l.b16 %v253
        %v604 = vunpack.c.h.b16 %v253
        %v605 = vunpack.c.l.b16 %v254
        %v606 = vunpack.c.h.b16 %v254
        %v607 = vpack.c.b16 %v559, %v543
        %v608 = vpack.c.b16 %v560, %v544
        %v609 = vpack.c.b16 %v561, %v545
        %v610 = vpack.c.b16 %v562, %v546
        %v611 = vpack.c.b16 %v563, %v547
        %v612 = vpack.c.b16 %v564, %v548
        %v613 = vpack.c.b16 %v565, %v549
        %v614 = vpack.c.b16 %v566, %v550
        %v615 = vpack.c.b16 %v567, %v551
        %v616 = vpack.c.b16 %v568, %v552
        %v617 = vpack.c.b16 %v569, %v553
        %v618 = vpack.c.b16 %v570, %v554
        %v619 = vpack.c.b16 %v571, %v555
        %v620 = vpack.c.b16 %v572, %v556
        %v621 = vpack.c.b16 %v573, %v557
        %v622 = vpack.c.b16 %v574, %v558
        %v623 = vpack.c.b16 %v591, %v575
        %v624 = vpack.c.b16 %v592, %v576
        %v625 = vpack.c.b16 %v593, %v577
        %v626 = vpack.c.b16 %v594, %v578
        %v627 = vpack.c.b16 %v595, %v579
        %v628 = vpack.c.b16 %v596, %v580
        %v629 = vpack.c.b16 %v597, %v581
        %v630 = vpack.c.b16 %v598, %v582
        %v631 = vpack.c.b16 %v599, %v583
        %v632 = vpack.c.b16 %v600, %v584
        %v633 = vpack.c.b16 %v601, %v585
        %v634 = vpack.c.b16 %v602, %v586
        %v635 = vpack.c.b16 %v603, %v587
        %v636 = vpack.c.b16 %v604, %v588
        %v637 = vpack.c.b16 %v605, %v589
        %v638 = vpack.c.b16 %v606, %v590
        %v927 = vunpack.c.l.b16 %v255
        %v928 = vunpack.c.h.b16 %v255
        %v929 = vunpack.c.l.b16 %v256
        %v930 = vunpack.c.h.b16 %v256
        %v931 = vunpack.c.l.b16 %v257
        %v932 = vunpack.c.h.b16 %v257
        %v933 = vunpack.c.l.b16 %v258
        %v934 = vunpack.c.h.b16 %v258
        %v935 = vunpack.c.l.b16 %v259
        %v936 = vunpack.c.h.b16 %v259
        %v937 = vunpack.c.l.b16 %v260
        %v938 = vunpack.c.h.b16 %v260
        %v939 = vunpack.c.l.b16 %v261
        %v940 = vunpack.c.h.b16 %v261
        %v941 = vunpack.c.l.b16 %v262
        %v942 = vunpack.c.h.b16 %v262
        %v943 = vunpack.c.l.b16 %v263
        %v944 = vunpack.c.h.b16 %v263
        %v945 = vunpack.c.l.b16 %v264
        %v946 = vunpack.c.h.b16 %v264
        %v947 = vunpack.c.l.b16 %v265
        %v948 = vunpack.c.h.b16 %v265
        %v949 = vunpack.c.l.b16 %v266
        %v950 = vunpack.c.h.b16 %v266
        %v951 = vunpack.c.l.b16 %v267
        %v952 = vunpack.c.h.b16 %v267
        %v953 = vunpack.c.l.b16 %v268
        %v954 = vunpack.c.h.b16 %v268
        %v955 = vunpack.c.l.b16 %v269
        %v956 = vunpack.c.h.b16 %v269
        %v957 = vunpack.c.l.b16 %v270
        %v958 = vunpack.c.h.b16 %v270
        %v959 = vunpack.c.l.b16 %v271
        %v960 = vunpack.c.h.b16 %v271
        %v961 = vunpack.c.l.b16 %v272
        %v962 = vunpack.c.h.b16 %v272
        %v963 = vunpack.c.l.b16 %v273
        %v964 = vunpack.c.h.b16 %v273
        %v965 = vunpack.c.l.b16 %v274
        %v966 = vunpack.c.h.b16 %v274
        %v967 = vunpack.c.l.b16 %v275
        %v968 = vunpack.c.h.b16 %v275
        %v969 = vunpack.c.l.b16 %v276
        %v970 = vunpack.c.h.b16 %v276
        %v971 = vunpack.c.l.b16 %v277
        %v972 = vunpack.c.h.b16 %v277
        %v973 = vunpack.c.l.b16 %v278
        %v974 = vunpack.c.h.b16 %v278
        %v975 = vunpack.c.l.b16 %v279
        %v976 = vunpack.c.h.b16 %v279
        %v977 = vunpack.c.l.b16 %v280
        %v978 = vunpack.c.h.b16 %v280
        %v979 = vunpack.c.l.b16 %v281
        %v980 = vunpack.c.h.b16 %v281
        %v981 = vunpack.c.l.b16 %v282
        %v982 = vunpack.c.h.b16 %v282
        %v983 = vunpack.c.l.b16 %v283
        %v984 = vunpack.c.h.b16 %v283
        %v985 = vunpack.c.l.b16 %v284
        %v986 = vunpack.c.h.b16 %v284
        %v987 = vunpack.c.l.b16 %v285
        %v988 = vunpack.c.h.b16 %v285
        %v989 = vunpack.c.l.b16 %v286
        %v990 = vunpack.c.h.b16 %v286
        %v991 = vunpack.c.l.b16 %v287
        %v992 = vunpack.c.h.b16 %v287
        %v993 = vunpack.c.l.b16 %v288
        %v994 = vunpack.c.h.b16 %v288
        %v995 = vunpack.c.l.b16 %v289
        %v996 = vunpack.c.h.b16 %v289
        %v997 = vunpack.c.l.b16 %v290
        %v998 = vunpack.c.h.b16 %v290
        %v999 = vunpack.c.l.b16 %v291
        %v1000 = vunpack.c.h.b16 %v291
        %v1001 = vunpack.c.l.b16 %v292
        %v1002 = vunpack.c.h.b16 %v292
        %v1003 = vunpack.c.l.b16 %v293
        %v1004 = vunpack.c.h.b16 %v293
        %v1005 = vunpack.c.l.b16 %v294
        %v1006 = vunpack.c.h.b16 %v294
        %v1007 = vunpack.c.l.b16 %v295
        %v1008 = vunpack.c.h.b16 %v295
        %v1009 = vunpack.c.l.b16 %v296
        %v1010 = vunpack.c.h.b16 %v296
        %v1011 = vunpack.c.l.b16 %v297
        %v1012 = vunpack.c.h.b16 %v297
        %v1013 = vunpack.c.l.b16 %v298
        %v1014 = vunpack.c.h.b16 %v298
        %v1015 = vunpack.c.l.b16 %v299
        %v1016 = vunpack.c.h.b16 %v299
        %v1017 = vunpack.c.l.b16 %v300
        %v1018 = vunpack.c.h.b16 %v300
        %v1019 = vunpack.c.l.b16 %v301
        %v1020 = vunpack.c.h.b16 %v301
        %v1021 = vunpack.c.l.b16 %v302
        %v1022 = vunpack.c.h.b16 %v302
        %v1023 = vunpack.c.l.b16 %v303
        %v1024 = vunpack.c.h.b16 %v303
        %v1025 = vunpack.c.l.b16 %v304
        %v1026 = vunpack.c.h.b16 %v304
        %v1027 = vunpack.c.l.b16 %v305
        %v1028 = vunpack.c.h.b16 %v305
        %v1029 = vunpack.c.l.b16 %v306
        %v1030 = vunpack.c.h.b16 %v306
        %v1031 = vunpack.c.l.b16 %v307
        %v1032 = vunpack.c.h.b16 %v307
        %v1033 = vunpack.c.l.b16 %v308
        %v1034 = vunpack.c.h.b16 %v308
        %v1035 = vunpack.c.l.b16 %v309
        %v1036 = vunpack.c.h.b16 %v309
        %v1037 = vunpack.c.l.b16 %v310
        %v1038 = vunpack.c.h.b16 %v310
        %v1039 = vunpack.c.l.b16 %v311
        %v1040 = vunpack.c.h.b16 %v311
        %v1041 = vunpack.c.l.b16 %v312
        %v1042 = vunpack.c.h.b16 %v312
        %v1043 = vunpack.c.l.b16 %v313
        %v1044 = vunpack.c.h.b16 %v313
        %v1045 = vunpack.c.l.b16 %v314
        %v1046 = vunpack.c.h.b16 %v314
        %v1047 = vunpack.c.l.b16 %v315
        %v1048 = vunpack.c.h.b16 %v315
        %v1049 = vunpack.c.l.b16 %v316
        %v1050 = vunpack.c.h.b16 %v316
        %v1051 = vunpack.c.l.b16 %v317
        %v1052 = vunpack.c.h.b16 %v317
        %v1053 = vunpack.c.l.b16 %v318
        %v1054 = vunpack.c.h.b16 %v318
        %v1055 = vunpack.c.l.b16 %v319
        %v1056 = vunpack.c.h.b16 %v319
        %v1057 = vunpack.c.l.b16 %v320
        %v1058 = vunpack.c.h.b16 %v320
        %v1059 = vunpack.c.l.b16 %v321
        %v1060 = vunpack.c.h.b16 %v321
        %v1061 = vunpack.c.l.b16 %v322
        %v1062 = vunpack.c.h.b16 %v322
        %v1063 = vunpack.c.l.b16 %v323
        %v1064 = vunpack.c.h.b16 %v323
        %v1065 = vunpack.c.l.b16 %v324
        %v1066 = vunpack.c.h.b16 %v324
        %v1067 = vunpack.c.l.b16 %v325
        %v1068 = vunpack.c.h.b16 %v325
        %v1069 = vunpack.c.l.b16 %v326
        %v1070 = vunpack.c.h.b16 %v326
        %v1071 = vunpack.c.l.b16 %v327
        %v1072 = vunpack.c.h.b16 %v327
        %v1073 = vunpack.c.l.b16 %v328
        %v1074 = vunpack.c.h.b16 %v328
        %v1075 = vunpack.c.l.b16 %v329
        %v1076 = vunpack.c.h.b16 %v329
        %v1077 = vunpack.c.l.b16 %v330
        %v1078 = vunpack.c.h.b16 %v330
        %v1079 = vunpack.c.l.b16 %v331
        %v1080 = vunpack.c.h.b16 %v331
        %v1081 = vunpack.c.l.b16 %v332
        %v1082 = vunpack.c.h.b16 %v332
        %v1083 = vunpack.c.l.b16 %v333
        %v1084 = vunpack.c.h.b16 %v333
        %v1085 = vunpack.c.l.b16 %v334
        %v1086 = vunpack.c.h.b16 %v334
        %v1087 = vunpack.c.l.b16 %v335
        %v1088 = vunpack.c.h.b16 %v335
        %v1089 = vunpack.c.l.b16 %v336
        %v1090 = vunpack.c.h.b16 %v336
        %v1091 = vunpack.c.l.b16 %v337
        %v1092 = vunpack.c.h.b16 %v337
        %v1093 = vunpack.c.l.b16 %v338
        %v1094 = vunpack.c.h.b16 %v338
        %v1095 = vunpack.c.l.b16 %v339
        %v1096 = vunpack.c.h.b16 %v339
        %v1097 = vunpack.c.l.b16 %v340
        %v1098 = vunpack.c.h.b16 %v340
        %v1099 = vunpack.c.l.b16 %v341
        %v1100 = vunpack.c.h.b16 %v341
        %v1101 = vunpack.c.l.b16 %v342
        %v1102 = vunpack.c.h.b16 %v342
        %v1103 = vunpack.c.l.b16 %v343
        %v1104 = vunpack.c.h.b16 %v343
        %v1105 = vunpack.c.l.b16 %v344
        %v1106 = vunpack.c.h.b16 %v344
        %v1107 = vunpack.c.l.b16 %v345
        %v1108 = vunpack.c.h.b16 %v345
        %v1109 = vunpack.c.l.b16 %v346
        %v1110 = vunpack.c.h.b16 %v346
        %v1111 = vunpack.c.l.b16 %v347
        %v1112 = vunpack.c.h.b16 %v347
        %v1113 = vunpack.c.l.b16 %v348
        %v1114 = vunpack.c.h.b16 %v348
        %v1115 = vunpack.c.l.b16 %v349
        %v1116 = vunpack.c.h.b16 %v349
        %v1117 = vunpack.c.l.b16 %v350
        %v1118 = vunpack.c.h.b16 %v350
        %v1119 = vunpack.c.l.b16 %v351
        %v1120 = vunpack.c.h.b16 %v351
        %v1121 = vunpack.c.l.b16 %v352
        %v1122 = vunpack.c.h.b16 %v352
        %v1123 = vunpack.c.l.b16 %v353
        %v1124 = vunpack.c.h.b16 %v353
        %v1125 = vunpack.c.l.b16 %v354
        %v1126 = vunpack.c.h.b16 %v354
        %v1127 = vunpack.c.l.b16 %v355
        %v1128 = vunpack.c.h.b16 %v355
        %v1129 = vunpack.c.l.b16 %v356
        %v1130 = vunpack.c.h.b16 %v356
        %v1131 = vunpack.c.l.b16 %v357
        %v1132 = vunpack.c.h.b16 %v357
        %v1133 = vunpack.c.l.b16 %v358
        %v1134 = vunpack.c.h.b16 %v358
        %v1135 = vunpack.c.l.b16 %v359
        %v1136 = vunpack.c.h.b16 %v359
        %v1137 = vunpack.c.l.b16 %v360
        %v1138 = vunpack.c.h.b16 %v360
        %v1139 = vunpack.c.l.b16 %v361
        %v1140 = vunpack.c.h.b16 %v361
        %v1141 = vunpack.c.l.b16 %v362
        %v1142 = vunpack.c.h.b16 %v362
        %v1143 = vunpack.c.l.b16 %v363
        %v1144 = vunpack.c.h.b16 %v363
        %v1145 = vunpack.c.l.b16 %v364
        %v1146 = vunpack.c.h.b16 %v364
        %v1147 = vunpack.c.l.b16 %v365
        %v1148 = vunpack.c.h.b16 %v365
        %v1149 = vunpack.c.l.b16 %v366
        %v1150 = vunpack.c.h.b16 %v366
        %v1151 = vunpack.c.l.b16 %v367
        %v1152 = vunpack.c.h.b16 %v367
        %v1153 = vunpack.c.l.b16 %v368
        %v1154 = vunpack.c.h.b16 %v368
        %v1155 = vunpack.c.l.b16 %v369
        %v1156 = vunpack.c.h.b16 %v369
        %v1157 = vunpack.c.l.b16 %v370
        %v1158 = vunpack.c.h.b16 %v370
        %v1159 = vunpack.c.l.b16 %v371
        %v1160 = vunpack.c.h.b16 %v371
        %v1161 = vunpack.c.l.b16 %v372
        %v1162 = vunpack.c.h.b16 %v372
        %v1163 = vunpack.c.l.b16 %v373
        %v1164 = vunpack.c.h.b16 %v373
        %v1165 = vunpack.c.l.b16 %v374
        %v1166 = vunpack.c.h.b16 %v374
        %v1167 = vunpack.c.l.b16 %v375
        %v1168 = vunpack.c.h.b16 %v375
        %v1169 = vunpack.c.l.b16 %v376
        %v1170 = vunpack.c.h.b16 %v376
        %v1171 = vunpack.c.l.b16 %v377
        %v1172 = vunpack.c.h.b16 %v377
        %v1173 = vunpack.c.l.b16 %v378
        %v1174 = vunpack.c.h.b16 %v378
        %v1175 = vunpack.c.l.b16 %v379
        %v1176 = vunpack.c.h.b16 %v379
        %v1177 = vunpack.c.l.b16 %v380
        %v1178 = vunpack.c.h.b16 %v380
        %v1179 = vunpack.c.l.b16 %v381
        %v1180 = vunpack.c.h.b16 %v381
        %v1181 = vunpack.c.l.b16 %v382
        %v1182 = vunpack.c.h.b16 %v382
        %v1183 = vunpack.c.l.b16 %v383
        %v1184 = vunpack.c.h.b16 %v383
        %v1185 = vunpack.c.l.b16 %v384
        %v1186 = vunpack.c.h.b16 %v384
        %v1187 = vunpack.c.l.b16 %v385
        %v1188 = vunpack.c.h.b16 %v385
        %v1189 = vunpack.c.l.b16 %v386
        %v1190 = vunpack.c.h.b16 %v386
        %v1191 = vunpack.c.l.b16 %v387
        %v1192 = vunpack.c.h.b16 %v387
        %v1193 = vunpack.c.l.b16 %v388
        %v1194 = vunpack.c.h.b16 %v388
        %v1195 = vunpack.c.l.b16 %v389
        %v1196 = vunpack.c.h.b16 %v389
        %v1197 = vunpack.c.l.b16 %v390
        %v1198 = vunpack.c.h.b16 %v390
        %v1199 = vunpack.c.l.b16 %v391
        %v1200 = vunpack.c.h.b16 %v391
        %v1201 = vunpack.c.l.b16 %v392
        %v1202 = vunpack.c.h.b16 %v392
        %v1203 = vunpack.c.l.b16 %v393
        %v1204 = vunpack.c.h.b16 %v393
        %v1205 = vunpack.c.l.b16 %v394
        %v1206 = vunpack.c.h.b16 %v394
        %v1207 = vunpack.c.l.b16 %v395
        %v1208 = vunpack.c.h.b16 %v395
        %v1209 = vunpack.c.l.b16 %v396
        %v1210 = vunpack.c.h.b16 %v396
        %v1211 = vunpack.c.l.b16 %v397
        %v1212 = vunpack.c.h.b16 %v397
        %v1213 = vunpack.c.l.b16 %v398
        %v1214 = vunpack.c.h.b16 %v398
        %v1215 = vunpack.c.l.b16 %v399
        %v1216 = vunpack.c.h.b16 %v399
        %v1217 = vunpack.c.l.b16 %v400
        %v1218 = vunpack.c.h.b16 %v400
        %v1219 = vunpack.c.l.b16 %v401
        %v1220 = vunpack.c.h.b16 %v401
        %v1221 = vunpack.c.l.b16 %v402
        %v1222 = vunpack.c.h.b16 %v402
        %v1223 = vunpack.c.l.b16 %v403
        %v1224 = vunpack.c.h.b16 %v403
        %v1225 = vunpack.c.l.b16 %v404
        %v1226 = vunpack.c.h.b16 %v404
        %v1227 = vunpack.c.l.b16 %v405
        %v1228 = vunpack.c.h.b16 %v405
        %v1229 = vunpack.c.l.b16 %v406
        %v1230 = vunpack.c.h.b16 %v406
        %v1231 = vunpack.c.l.b16 %v407
        %v1232 = vunpack.c.h.b16 %v407
        %v1233 = vunpack.c.l.b16 %v408
        %v1234 = vunpack.c.h.b16 %v408
        %v1235 = vunpack.c.l.b16 %v409
        %v1236 = vunpack.c.h.b16 %v409
        %v1237 = vunpack.c.l.b16 %v410
        %v1238 = vunpack.c.h.b16 %v410
        %v1239 = vunpack.c.l.b16 %v411
        %v1240 = vunpack.c.h.b16 %v411
        %v1241 = vunpack.c.l.b16 %v412
        %v1242 = vunpack.c.h.b16 %v412
        %v1243 = vunpack.c.l.b16 %v413
        %v1244 = vunpack.c.h.b16 %v413
        %v1245 = vunpack.c.l.b16 %v414
        %v1246 = vunpack.c.h.b16 %v414
        %v1247 = vunpack.c.l.b16 %v415
        %v1248 = vunpack.c.h.b16 %v415
        %v1249 = vunpack.c.l.b16 %v416
        %v1250 = vunpack.c.h.b16 %v416
        %v1251 = vunpack.c.l.b16 %v417
        %v1252 = vunpack.c.h.b16 %v417
        %v1253 = vunpack.c.l.b16 %v418
        %v1254 = vunpack.c.h.b16 %v418
        %v1255 = vunpack.c.l.b16 %v419
        %v1256 = vunpack.c.h.b16 %v419
        %v1257 = vunpack.c.l.b16 %v420
        %v1258 = vunpack.c.h.b16 %v420
        %v1259 = vunpack.c.l.b16 %v421
        %v1260 = vunpack.c.h.b16 %v421
        %v1261 = vunpack.c.l.b16 %v422
        %v1262 = vunpack.c.h.b16 %v422
        %v1263 = vunpack.c.l.b16 %v423
        %v1264 = vunpack.c.h.b16 %v423
        %v1265 = vunpack.c.l.b16 %v424
        %v1266 = vunpack.c.h.b16 %v424
        %v1267 = vunpack.c.l.b16 %v425
        %v1268 = vunpack.c.h.b16 %v425
        %v1269 = vunpack.c.l.b16 %v426
        %v1270 = vunpack.c.h.b16 %v426
        %v1271 = vunpack.c.l.b16 %v427
        %v1272 = vunpack.c.h.b16 %v427
        %v1273 = vunpack.c.l.b16 %v428
        %v1274 = vunpack.c.h.b16 %v428
        %v1275 = vunpack.c.l.b16 %v429
        %v1276 = vunpack.c.h.b16 %v429
        %v1277 = vunpack.c.l.b16 %v430
        %v1278 = vunpack.c.h.b16 %v430
        %v1279 = vunpack.c.l.b16 %v431
        %v1280 = vunpack.c.h.b16 %v431
        %v1281 = vunpack.c.l.b16 %v432
        %v1282 = vunpack.c.h.b16 %v432
        %v1283 = vunpack.c.l.b16 %v433
        %v1284 = vunpack.c.h.b16 %v433
        %v1285 = vunpack.c.l.b16 %v434
        %v1286 = vunpack.c.h.b16 %v434
        %v1287 = vunpack.c.l.b16 %v435
        %v1288 = vunpack.c.h.b16 %v435
        %v1289 = vunpack.c.l.b16 %v436
        %v1290 = vunpack.c.h.b16 %v436
        %v1291 = vunpack.c.l.b16 %v437
        %v1292 = vunpack.c.h.b16 %v437
        %v1293 = vunpack.c.l.b16 %v438
        %v1294 = vunpack.c.h.b16 %v438
        %v1295 = vunpack.c.l.b16 %v439
        %v1296 = vunpack.c.h.b16 %v439
        %v1297 = vunpack.c.l.b16 %v440
        %v1298 = vunpack.c.h.b16 %v440
        %v1299 = vunpack.c.l.b16 %v441
        %v1300 = vunpack.c.h.b16 %v441
        %v1301 = vunpack.c.l.b16 %v442
        %v1302 = vunpack.c.h.b16 %v442
        %v1303 = vunpack.c.l.b16 %v443
        %v1304 = vunpack.c.h.b16 %v443
        %v1305 = vunpack.c.l.b16 %v444
        %v1306 = vunpack.c.h.b16 %v444
        %v1307 = vunpack.c.l.b16 %v445
        %v1308 = vunpack.c.h.b16 %v445
        %v1309 = vunpack.c.l.b16 %v446
        %v1310 = vunpack.c.h.b16 %v446
        %v1311 = vunpack.c.l.b16 %v447
        %v1312 = vunpack.c.h.b16 %v447
        %v1313 = vunpack.c.l.b16 %v448
        %v1314 = vunpack.c.h.b16 %v448
        %v1315 = vunpack.c.l.b16 %v449
        %v1316 = vunpack.c.h.b16 %v449
        %v1317 = vunpack.c.l.b16 %v450
        %v1318 = vunpack.c.h.b16 %v450
        %v1319 = vunpack.c.l.b16 %v451
        %v1320 = vunpack.c.h.b16 %v451
        %v1321 = vunpack.c.l.b16 %v452
        %v1322 = vunpack.c.h.b16 %v452
        %v1323 = vunpack.c.l.b16 %v453
        %v1324 = vunpack.c.h.b16 %v453
        %v1325 = vunpack.c.l.b16 %v454
        %v1326 = vunpack.c.h.b16 %v454
        %v1327 = vunpack.c.l.b16 %v455
        %v1328 = vunpack.c.h.b16 %v455
        %v1329 = vunpack.c.l.b16 %v456
        %v1330 = vunpack.c.h.b16 %v456
        %v1331 = vunpack.c.l.b16 %v457
        %v1332 = vunpack.c.h.b16 %v457
        %v1333 = vunpack.c.l.b16 %v458
        %v1334 = vunpack.c.h.b16 %v458
        %v1335 = vunpack.c.l.b16 %v459
        %v1336 = vunpack.c.h.b16 %v459
        %v1337 = vunpack.c.l.b16 %v460
        %v1338 = vunpack.c.h.b16 %v460
        %v1339 = vunpack.c.l.b16 %v461
        %v1340 = vunpack.c.h.b16 %v461
        %v1341 = vunpack.c.l.b16 %v462
        %v1342 = vunpack.c.h.b16 %v462
        %v1343 = vunpack.c.l.b16 %v463
        %v1344 = vunpack.c.h.b16 %v463
        %v1345 = vunpack.c.l.b16 %v464
        %v1346 = vunpack.c.h.b16 %v464
        %v1347 = vunpack.c.l.b16 %v465
        %v1348 = vunpack.c.h.b16 %v465
        %v1349 = vunpack.c.l.b16 %v466
        %v1350 = vunpack.c.h.b16 %v466
        %v1351 = vunpack.c.l.b16 %v467
        %v1352 = vunpack.c.h.b16 %v467
        %v1353 = vunpack.c.l.b16 %v468
        %v1354 = vunpack.c.h.b16 %v468
        %v1355 = vunpack.c.l.b16 %v469
        %v1356 = vunpack.c.h.b16 %v469
        %v1357 = vunpack.c.l.b16 %v470
        %v1358 = vunpack.c.h.b16 %v470
        %v1359 = vunpack.c.l.b16 %v471
        %v1360 = vunpack.c.h.b16 %v471
        %v1361 = vunpack.c.l.b16 %v472
        %v1362 = vunpack.c.h.b16 %v472
        %v1363 = vunpack.c.l.b16 %v473
        %v1364 = vunpack.c.h.b16 %v473
        %v1365 = vunpack.c.l.b16 %v474
        %v1366 = vunpack.c.h.b16 %v474
        %v1367 = vunpack.c.l.b16 %v475
        %v1368 = vunpack.c.h.b16 %v475
        %v1369 = vunpack.c.l.b16 %v476
        %v1370 = vunpack.c.h.b16 %v476
        %v1371 = vunpack.c.l.b16 %v477
        %v1372 = vunpack.c.h.b16 %v477
        %v1373 = vunpack.c.l.b16 %v478
        %v1374 = vunpack.c.h.b16 %v478
        %v1375 = vunpack.c.l.b16 %v479
        %v1376 = vunpack.c.h.b16 %v479
        %v1377 = vunpack.c.l.b16 %v480
        %v1378 = vunpack.c.h.b16 %v480
        %v1379 = vunpack.c.l.b16 %v481
        %v1380 = vunpack.c.h.b16 %v481
        %v1381 = vunpack.c.l.b16 %v482
        %v1382 = vunpack.c.h.b16 %v482
        %v1383 = vunpack.c.l.b16 %v483
        %v1384 = vunpack.c.h.b16 %v483
        %v1385 = vunpack.c.l.b16 %v484
        %v1386 = vunpack.c.h.b16 %v484
        %v1387 = vunpack.c.l.b16 %v485
        %v1388 = vunpack.c.h.b16 %v485
        %v1389 = vunpack.c.l.b16 %v486
        %v1390 = vunpack.c.h.b16 %v486
        %v1391 = vunpack.c.l.b16 %v487
        %v1392 = vunpack.c.h.b16 %v487
        %v1393 = vunpack.c.l.b16 %v488
        %v1394 = vunpack.c.h.b16 %v488
        %v1395 = vunpack.c.l.b16 %v489
        %v1396 = vunpack.c.h.b16 %v489
        %v1397 = vunpack.c.l.b16 %v490
        %v1398 = vunpack.c.h.b16 %v490
        %v1399 = vunpack.c.l.b16 %v491
        %v1400 = vunpack.c.h.b16 %v491
        %v1401 = vunpack.c.l.b16 %v492
        %v1402 = vunpack.c.h.b16 %v492
        %v1403 = vunpack.c.l.b16 %v493
        %v1404 = vunpack.c.h.b16 %v493
        %v1405 = vunpack.c.l.b16 %v494
        %v1406 = vunpack.c.h.b16 %v494
        %v1407 = vunpack.c.l.b16 %v495
        %v1408 = vunpack.c.h.b16 %v495
        %v1409 = vunpack.c.l.b16 %v496
        %v1410 = vunpack.c.h.b16 %v496
        %v1411 = vunpack.c.l.b16 %v497
        %v1412 = vunpack.c.h.b16 %v497
        %v1413 = vunpack.c.l.b16 %v498
        %v1414 = vunpack.c.h.b16 %v498
        %v1415 = vunpack.c.l.b16 %v499
        %v1416 = vunpack.c.h.b16 %v499
        %v1417 = vunpack.c.l.b16 %v500
        %v1418 = vunpack.c.h.b16 %v500
        %v1419 = vunpack.c.l.b16 %v501
        %v1420 = vunpack.c.h.b16 %v501
        %v1421 = vunpack.c.l.b16 %v502
        %v1422 = vunpack.c.h.b16 %v502
        %v1423 = vunpack.c.l.b16 %v503
        %v1424 = vunpack.c.h.b16 %v503
        %v1425 = vunpack.c.l.b16 %v504
        %v1426 = vunpack.c.h.b16 %v504
        %v1427 = vunpack.c.l.b16 %v505
        %v1428 = vunpack.c.h.b16 %v505
        %v1429 = vunpack.c.l.b16 %v506
        %v1430 = vunpack.c.h.b16 %v506
        %v1431 = vunpack.c.l.b16 %v507
        %v1432 = vunpack.c.h.b16 %v507
        %v1433 = vunpack.c.l.b16 %v508
        %v1434 = vunpack.c.h.b16 %v508
        %v1435 = vunpack.c.l.b16 %v509
        %v1436 = vunpack.c.h.b16 %v509
        %v1437 = vunpack.c.l.b16 %v510
        %v1438 = vunpack.c.h.b16 %v510
        %v1439 = vpack.c.b16 %v929, %v927
        %v1440 = vpack.c.b16 %v930, %v928
        %v1441 = vpack.c.b16 %v933, %v931
        %v1442 = vpack.c.b16 %v934, %v932
        %v1443 = vpack.c.b16 %v937, %v935
        %v1444 = vpack.c.b16 %v938, %v936
        %v1445 = vpack.c.b16 %v941, %v939
        %v1446 = vpack.c.b16 %v942, %v940
        %v1447 = vpack.c.b16 %v945, %v943
        %v1448 = vpack.c.b16 %v946, %v944
        %v1449 = vpack.c.b16 %v949, %v947
        %v1450 = vpack.c.b16 %v950, %v948
        %v1451 = vpack.c.b16 %v953, %v951
        %v1452 = vpack.c.b16 %v954, %v952
        %v1453 = vpack.c.b16 %v957, %v955
        %v1454 = vpack.c.b16 %v958, %v956
        %v1455 = vpack.c.b16 %v961, %v959
        %v1456 = vpack.c.b16 %v962, %v960
        %v1457 = vpack.c.b16 %v965, %v963
        %v1458 = vpack.c.b16 %v966, %v964
        %v1459 = vpack.c.b16 %v969, %v967
        %v1460 = vpack.c.b16 %v970, %v968
        %v1461 = vpack.c.b16 %v973, %v971
        %v1462 = vpack.c.b16 %v974, %v972
        %v1463 = vpack.c.b16 %v977, %v975
        %v1464 = vpack.c.b16 %v978, %v976
        %v1465 = vpack.c.b16 %v981, %v979
        %v1466 = vpack.c.b16 %v982, %v980
        %v1467 = vpack.c.b16 %v985, %v983
        %v1468 = vpack.c.b16 %v986, %v984
        %v1469 = vpack.c.b16 %v989, %v987
        %v1470 = vpack.c.b16 %v990, %v988
        %v1471 = vpack.c.b16 %v993, %v991
        %v1472 = vpack.c.b16 %v994, %v992
        %v1473 = vpack.c.b16 %v997, %v995
        %v1474 = vpack.c.b16 %v998, %v996
        %v1475 = vpack.c.b16 %v1001, %v999
        %v1476 = vpack.c.b16 %v1002, %v1000
        %v1477 = vpack.c.b16 %v1005, %v1003
        %v1478 = vpack.c.b16 %v1006, %v1004
        %v1479 = vpack.c.b16 %v1009, %v1007
        %v1480 = vpack.c.b16 %v1010, %v1008
        %v1481 = vpack.c.b16 %v1013, %v1011
        %v1482 = vpack.c.b16 %v1014, %v1012
        %v1483 = vpack.c.b16 %v1017, %v1015
        %v1484 = vpack.c.b16 %v1018, %v1016
        %v1485 = vpack.c.b16 %v1021, %v1019
        %v1486 = vpack.c.b16 %v1022, %v1020
        %v1487 = vpack.c.b16 %v1025, %v1023
        %v1488 = vpack.c.b16 %v1026, %v1024
        %v1489 = vpack.c.b16 %v1029, %v1027
        %v1490 = vpack.c.b16 %v1030, %v1028
        %v1491 = vpack.c.b16 %v1033, %v1031
        %v1492 = vpack.c.b16 %v1034, %v1032
        %v1493 = vpack.c.b16 %v1037, %v1035
        %v1494 = vpack.c.b16 %v1038, %v1036
        %v1495 = vpack.c.b16 %v1041, %v1039
        %v1496 = vpack.c.b16 %v1042, %v1040
        %v1497 = vpack.c.b16 %v1045, %v1043
        %v1498 = vpack.c.b16 %v1046, %v1044
        %v1499 = vpack.c.b16 %v1049, %v1047
        %v1500 = vpack.c.b16 %v1050, %v1048
        %v1501 = vpack.c.b16 %v1053, %v1051
        %v1502 = vpack.c.b16 %v1054, %v1052
        %v1503 = vpack.c.b16 %v1057, %v1055
        %v1504 = vpack.c.b16 %v1058, %v1056
        %v1505 = vpack.c.b16 %v1061, %v1059
        %v1506 = vpack.c.b16 %v1062, %v1060
        %v1507 = vpack.c.b16 %v1065, %v1063
        %v1508 = vpack.c.b16 %v1066, %v1064
        %v1509 = vpack.c.b16 %v1069, %v1067
        %v1510 = vpack.c.b16 %v1070, %v1068
        %v1511 = vpack.c.b16 %v1073, %v1071
        %v1512 = vpack.c.b16 %v1074, %v1072
        %v1513 = vpack.c.b16 %v1077, %v1075
        %v1514 = vpack.c.b16 %v1078, %v1076
        %v1515 = vpack.c.b16 %v1081, %v1079
        %v1516 = vpack.c.b16 %v1082, %v1080
        %v1517 = vpack.c.b16 %v1085, %v1083
        %v1518 = vpack.c.b16 %v1086, %v1084
        %v1519 = vpack.c.b16 %v1089, %v1087
        %v1520 = vpack.c.b16 %v1090, %v1088
        %v1521 = vpack.c.b16 %v1093, %v1091
        %v1522 = vpack.c.b16 %v1094, %v1092
        %v1523 = vpack.c.b16 %v1097, %v1095
        %v1524 = vpack.c.b16 %v1098, %v1096
        %v1525 = vpack.c.b16 %v1101, %v1099
        %v1526 = vpack.c.b16 %v1102, %v1100
        %v1527 = vpack.c.b16 %v1105, %v1103
        %v1528 = vpack.c.b16 %v1106, %v1104
        %v1529 = vpack.c.b16 %v1109, %v1107
        %v1530 = vpack.c.b16 %v1110, %v1108
        %v1531 = vpack.c.b16 %v1113, %v1111
        %v1532 = vpack.c.b16 %v1114, %v1112
        %v1533 = vpack.c.b16 %v1117, %v1115
        %v1534 = vpack.c.b16 %v1118, %v1116
        %v1535 = vpack.c.b16 %v1121, %v1119
        %v1536 = vpack.c.b16 %v1122, %v1120
        %v1537 = vpack.c.b16 %v1125, %v1123
        %v1538 = vpack.c.b16 %v1126, %v1124
        %v1539 = vpack.c.b16 %v1129, %v1127
        %v1540 = vpack.c.b16 %v1130, %v1128
        %v1541 = vpack.c.b16 %v1133, %v1131
        %v1542 = vpack.c.b16 %v1134, %v1132
        %v1543 = vpack.c.b16 %v1137, %v1135
        %v1544 = vpack.c.b16 %v1138, %v1136
        %v1545 = vpack.c.b16 %v1141, %v1139
        %v1546 = vpack.c.b16 %v1142, %v1140
        %v1547 = vpack.c.b16 %v1145, %v1143
        %v1548 = vpack.c.b16 %v1146, %v1144
        %v1549 = vpack.c.b16 %v1149, %v1147
        %v1550 = vpack.c.b16 %v1150, %v1148
        %v1551 = vpack.c.b16 %v1153, %v1151
        %v1552 = vpack.c.b16 %v1154, %v1152
        %v1553 = vpack.c.b16 %v1157, %v1155
        %v1554 = vpack.c.b16 %v1158, %v1156
        %v1555 = vpack.c.b16 %v1161, %v1159
        %v1556 = vpack.c.b16 %v1162, %v1160
        %v1557 = vpack.c.b16 %v1165, %v1163
        %v1558 = vpack.c.b16 %v1166, %v1164
        %v1559 = vpack.c.b16 %v1169, %v1167
        %v1560 = vpack.c.b16 %v1170, %v1168
        %v1561 = vpack.c.b16 %v1173, %v1171
        %v1562 = vpack.c.b16 %v1174, %v1172
        %v1563 = vpack.c.b16 %v1177, %v1175
        %v1564 = vpack.c.b16 %v1178, %v1176
        %v1565 = vpack.c.b16 %v1181, %v1179
        %v1566 = vpack.c.b16 %v1182, %v1180
        %v1567 = vpack.c.b16 %v1185, %v1183
        %v1568 = vpack.c.b16 %v1186, %v1184
        %v1569 = vpack.c.b16 %v1189, %v1187
        %v1570 = vpack.c.b16 %v1190, %v1188
        %v1571 = vpack.c.b16 %v1193, %v1191
        %v1572 = vpack.c.b16 %v1194, %v1192
        %v1573 = vpack.c.b16 %v1197, %v1195
        %v1574 = vpack.c.b16 %v1198, %v1196
        %v1575 = vpack.c.b16 %v1201, %v1199
        %v1576 = vpack.c.b16 %v1202, %v1200
        %v1577 = vpack.c.b16 %v1205, %v1203
        %v1578 = vpack.c.b16 %v1206, %v1204
        %v1579 = vpack.c.b16 %v1209, %v1207
        %v1580 = vpack.c.b16 %v1210, %v1208
        %v1581 = vpack.c.b16 %v1213, %v1211
        %v1582 = vpack.c.b16 %v1214, %v1212
        %v1583 = vpack.c.b16 %v1217, %v1215
        %v1584 = vpack.c.b16 %v1218, %v1216
        %v1585 = vpack.c.b16 %v1221, %v1219
        %v1586 = vpack.c.b16 %v1222, %v1220
        %v1587 = vpack.c.b16 %v1225, %v1223
        %v1588 = vpack.c.b16 %v1226, %v1224
        %v1589 = vpack.c.b16 %v1229, %v1227
        %v1590 = vpack.c.b16 %v1230, %v1228
        %v1591 = vpack.c.b16 %v1233, %v1231
        %v1592 = vpack.c.b16 %v1234, %v1232
        %v1593 = vpack.c.b16 %v1237, %v1235
        %v1594 = vpack.c.b16 %v1238, %v1236
        %v1595 = vpack.c.b16 %v1241, %v1239
        %v1596 = vpack.c.b16 %v1242, %v1240
        %v1597 = vpack.c.b16 %v1245, %v1243
        %v1598 = vpack.c.b16 %v1246, %v1244
        %v1599 = vpack.c.b16 %v1249, %v1247
        %v1600 = vpack.c.b16 %v1250, %v1248
        %v1601 = vpack.c.b16 %v1253, %v1251
        %v1602 = vpack.c.b16 %v1254, %v1252
        %v1603 = vpack.c.b16 %v1257, %v1255
        %v1604 = vpack.c.b16 %v1258, %v1256
        %v1605 = vpack.c.b16 %v1261, %v1259
        %v1606 = vpack.c.b16 %v1262, %v1260
        %v1607 = vpack.c.b16 %v1265, %v1263
        %v1608 = vpack.c.b16 %v1266, %v1264
        %v1609 = vpack.c.b16 %v1269, %v1267
        %v1610 = vpack.c.b16 %v1270, %v1268
        %v1611 = vpack.c.b16 %v1273, %v1271
        %v1612 = vpack.c.b16 %v1274, %v1272
        %v1613 = vpack.c.b16 %v1277, %v1275
        %v1614 = vpack.c.b16 %v1278, %v1276
        %v1615 = vpack.c.b16 %v1281, %v1279
        %v1616 = vpack.c.b16 %v1282, %v1280
        %v1617 = vpack.c.b16 %v1285, %v1283
        %v1618 = vpack.c.b16 %v1286, %v1284
        %v1619 = vpack.c.b16 %v1289, %v1287
        %v1620 = vpack.c.b16 %v1290, %v1288
        %v1621 = vpack.c.b16 %v1293, %v1291
        %v1622 = vpack.c.b16 %v1294, %v1292
        %v1623 = vpack.c.b16 %v1297, %v1295
        %v1624 = vpack.c.b16 %v1298, %v1296
        %v1625 = vpack.c.b16 %v1301, %v1299
        %v1626 = vpack.c.b16 %v1302, %v1300
        %v1627 = vpack.c.b16 %v1305, %v1303
        %v1628 = vpack.c.b16 %v1306, %v1304
        %v1629 = vpack.c.b16 %v1309, %v1307
        %v1630 = vpack.c.b16 %v1310, %v1308
        %v1631 = vpack.c.b16 %v1313, %v1311
        %v1632 = vpack.c.b16 %v1314, %v1312
        %v1633 = vpack.c.b16 %v1317, %v1315
        %v1634 = vpack.c.b16 %v1318, %v1316
        %v1635 = vpack.c.b16 %v1321, %v1319
        %v1636 = vpack.c.b16 %v1322, %v1320
        %v1637 = vpack.c.b16 %v1325, %v1323
        %v1638 = vpack.c.b16 %v1326, %v1324
        %v1639 = vpack.c.b16 %v1329, %v1327
        %v1640 = vpack.c.b16 %v1330, %v1328
        %v1641 = vpack.c.b16 %v1333, %v1331
        %v1642 = vpack.c.b16 %v1334, %v1332
        %v1643 = vpack.c.b16 %v1337, %v1335
        %v1644 = vpack.c.b16 %v1338, %v1336
        %v1645 = vpack.c.b16 %v1341, %v1339
        %v1646 = vpack.c.b16 %v1342, %v1340
        %v1647 = vpack.c.b16 %v1345, %v1343
        %v1648 = vpack.c.b16 %v1346, %v1344
        %v1649 = vpack.c.b16 %v1349, %v1347
        %v1650 = vpack.c.b16 %v1350, %v1348
        %v1651 = vpack.c.b16 %v1353, %v1351
        %v1652 = vpack.c.b16 %v1354, %v1352
        %v1653 = vpack.c.b16 %v1357, %v1355
        %v1654 = vpack.c.b16 %v1358, %v1356
        %v1655 = vpack.c.b16 %v1361, %v1359
        %v1656 = vpack.c.b16 %v1362, %v1360
        %v1657 = vpack.c.b16 %v1365, %v1363
        %v1658 = vpack.c.b16 %v1366, %v1364
        %v1659 = vpack.c.b16 %v1369, %v1367
        %v1660 = vpack.c.b16 %v1370, %v1368
        %v1661 = vpack.c.b16 %v1373, %v1371
        %v1662 = vpack.c.b16 %v1374, %v1372
        %v1663 = vpack.c.b16 %v1377, %v1375
        %v1664 = vpack.c.b16 %v1378, %v1376
        %v1665 = vpack.c.b16 %v1381, %v1379
        %v1666 = vpack.c.b16 %v1382, %v1380
        %v1667 = vpack.c.b16 %v1385, %v1383
        %v1668 = vpack.c.b16 %v1386, %v1384
        %v1669 = vpack.c.b16 %v1389, %v1387
        %v1670 = vpack.c.b16 %v1390, %v1388
        %v1671 = vpack.c.b16 %v1393, %v1391
        %v1672 = vpack.c.b16 %v1394, %v1392
        %v1673 = vpack.c.b16 %v1397, %v1395
        %v1674 = vpack.c.b16 %v1398, %v1396
        %v1675 = vpack.c.b16 %v1401, %v1399
        %v1676 = vpack.c.b16 %v1402, %v1400
        %v1677 = vpack.c.b16 %v1405, %v1403
        %v1678 = vpack.c.b16 %v1406, %v1404
        %v1679 = vpack.c.b16 %v1409, %v1407
        %v1680 = vpack.c.b16 %v1410, %v1408
        %v1681 = vpack.c.b16 %v1413, %v1411
        %v1682 = vpack.c.b16 %v1414, %v1412
        %v1683 = vpack.c.b16 %v1417, %v1415
        %v1684 = vpack.c.b16 %v1418, %v1416
        %v1685 = vpack.c.b16 %v1421, %v1419
        %v1686 = vpack.c.b16 %v1422, %v1420
        %v1687 = vpack.c.b16 %v1425, %v1423
        %v1688 = vpack.c.b16 %v1426, %v1424
        %v1689 = vpack.c.b16 %v1429, %v1427
        %v1690 = vpack.c.b16 %v1430, %v1428
        %v1691 = vpack.c.b16 %v1433, %v1431
        %v1692 = vpack.c.b16 %v1434, %v1432
        %v1693 = vpack.c.b16 %v1437, %v1435
        %v1694 = vpack.c.b16 %v1438, %v1436
        %1951 = vmatprep.subr.bf16.mxu0 %v1454
        %1952 = vmatpush1.bf16.msra.mxu0 %v1453
        %1953 = vmatprep.subr.bf16.mxu0 %v1452
        %1954 = vmatpush1.bf16.msra.mxu0 %v1451
        %1955 = vmatprep.subr.bf16.mxu0 %v1450
        %1956 = vmatpush1.bf16.msra.mxu0 %v1449
        %1957 = vmatprep.subr.bf16.mxu0 %v1448
        %1958 = vmatpush1.bf16.msra.mxu0 %v1447
        %1959 = vmatprep.subr.bf16.mxu0 %v1446
        %1960 = vmatpush1.bf16.msra.mxu0 %v1445
        %1961 = vmatprep.subr.bf16.mxu0 %v1444
        %1962 = vmatpush1.bf16.msra.mxu0 %v1443
        %1963 = vmatprep.subr.bf16.mxu0 %v1442
        %1964 = vmatpush1.bf16.msra.mxu0 %v1441
        %1965 = vmatprep.subr.bf16.mxu0 %v1440
        %1966 = vmatpush1.bf16.msra.mxu0 %v1439
        %1967 = vmatprep.subr.bf16.mxu0 %v1470
        %1968 = vmatpush2.bf16.msra.mxu0 %v1469
        %1969 = vmatprep.subr.bf16.mxu0 %v1468
        %1970 = vmatpush2.bf16.msra.mxu0 %v1467
        %1971 = vmatprep.subr.bf16.mxu0 %v1466
        %1972 = vmatpush2.bf16.msra.mxu0 %v1465
        %1973 = vmatprep.subr.bf16.mxu0 %v1464
        %1974 = vmatpush2.bf16.msra.mxu0 %v1463
        %1975 = vmatprep.subr.bf16.mxu0 %v1462
        %1976 = vmatpush2.bf16.msra.mxu0 %v1461
        %1977 = vmatprep.subr.bf16.mxu0 %v1460
        %1978 = vmatpush2.bf16.msra.mxu0 %v1459
        %1979 = vmatprep.subr.bf16.mxu0 %v1458
        %1980 = vmatpush2.bf16.msra.mxu0 %v1457
        %1981 = vmatprep.subr.bf16.mxu0 %v1456
        %1982 = vmatpush2.bf16.msra.mxu0 %v1455
        %1983 = vmatprep.mubr.bf16.mxu0 %v608
        %1984 = vmatmul.mubr.bf16.gmra.mxu0 %v607
        %v1985 = vpop.f32.mrf.mxu0
        %v1986 = vadd.f32 0.0, %v1985
        %v1987 = vpop.f32.mrf.mxu0
        %v1988 = vadd.f32 0.0, %v1987
        %v1989 = vpop.f32.mrf.mxu0
        %v1990 = vadd.f32 0.0, %v1989
        %v1991 = vpop.f32.mrf.mxu0
        %v1992 = vadd.f32 0.0, %v1991
        %1993 = vmatprep.mubr.bf16.mxu0 %v624
        %1994 = vmatmul.mubr.bf16.gmra.mxu0 %v623
        %v1995 = vpop.f32.mrf.mxu0
        %v1996 = vadd.f32 0.0, %v1995
        %v1997 = vpop.f32.mrf.mxu0
        %v1998 = vadd.f32 0.0, %v1997
        %v1999 = vpop.f32.mrf.mxu0
        %v2000 = vadd.f32 0.0, %v1999
        %v2001 = vpop.f32.mrf.mxu0
        %v2002 = vadd.f32 0.0, %v2001
        %2003 = vdwg.mxu0
        %2004 = vmatprep.subr.bf16.mxu0 %v1486
        %2005 = vmatpush1.bf16.msra.mxu0 %v1485
        %2006 = vmatprep.subr.bf16.mxu0 %v1484
        %2007 = vmatpush1.bf16.msra.mxu0 %v1483
        %2008 = vmatprep.subr.bf16.mxu0 %v1482
        %2009 = vmatpush1.bf16.msra.mxu0 %v1481
        %2010 = vmatprep.subr.bf16.mxu0 %v1480
        %2011 = vmatpush1.bf16.msra.mxu0 %v1479
        %2012 = vmatprep.subr.bf16.mxu0 %v1478
        %2013 = vmatpush1.bf16.msra.mxu0 %v1477
        %2014 = vmatprep.subr.bf16.mxu0 %v1476
        %2015 = vmatpush1.bf16.msra.mxu0 %v1475
        %2016 = vmatprep.subr.bf16.mxu0 %v1474
        %2017 = vmatpush1.bf16.msra.mxu0 %v1473
        %2018 = vmatprep.subr.bf16.mxu0 %v1472
        %2019 = vmatpush1.bf16.msra.mxu0 %v1471
        %2020 = vmatprep.subr.bf16.mxu0 %v1502
        %2021 = vmatpush2.bf16.msra.mxu0 %v1501
        %2022 = vmatprep.subr.bf16.mxu0 %v1500
        %2023 = vmatpush2.bf16.msra.mxu0 %v1499
        %2024 = vmatprep.subr.bf16.mxu0 %v1498
        %2025 = vmatpush2.bf16.msra.mxu0 %v1497
        %2026 = vmatprep.subr.bf16.mxu0 %v1496
        %2027 = vmatpush2.bf16.msra.mxu0 %v1495
        %2028 = vmatprep.subr.bf16.mxu0 %v1494
        %2029 = vmatpush2.bf16.msra.mxu0 %v1493
        %2030 = vmatprep.subr.bf16.mxu0 %v1492
        %2031 = vmatpush2.bf16.msra.mxu0 %v1491
        %2032 = vmatprep.subr.bf16.mxu0 %v1490
        %2033 = vmatpush2.bf16.msra.mxu0 %v1489
        %2034 = vmatprep.subr.bf16.mxu0 %v1488
        %2035 = vmatpush2.bf16.msra.mxu0 %v1487
        %2036 = vmatprep.mubr.bf16.mxu0 %v610
        %2037 = vmatmul.mubr.bf16.gmra.mxu0 %v609
        %v2038 = vpop.f32.mrf.mxu0
        %v2039 = vadd.f32 %v1986, %v2038
        %v2040 = vpop.f32.mrf.mxu0
        %v2041 = vadd.f32 %v1988, %v2040
        %v2042 = vpop.f32.mrf.mxu0
        %v2043 = vadd.f32 %v1990, %v2042
        %v2044 = vpop.f32.mrf.mxu0
        %v2045 = vadd.f32 %v1992, %v2044
        %2046 = vmatprep.mubr.bf16.mxu0 %v626
        %2047 = vmatmul.mubr.bf16.gmra.mxu0 %v625
        %v2048 = vpop.f32.mrf.mxu0
        %v2049 = vadd.f32 %v1996, %v2048
        %v2050 = vpop.f32.mrf.mxu0
        %v2051 = vadd.f32 %v1998, %v2050
        %v2052 = vpop.f32.mrf.mxu0
        %v2053 = vadd.f32 %v2000, %v2052
        %v2054 = vpop.f32.mrf.mxu0
        %v2055 = vadd.f32 %v2002, %v2054
        %2056 = vdwg.mxu0
        %2057 = vmatprep.subr.bf16.mxu0 %v1518
        %2058 = vmatpush1.bf16.msra.mxu0 %v1517
        %2059 = vmatprep.subr.bf16.mxu0 %v1516
        %2060 = vmatpush1.bf16.msra.mxu0 %v1515
        %2061 = vmatprep.subr.bf16.mxu0 %v1514
        %2062 = vmatpush1.bf16.msra.mxu0 %v1513
        %2063 = vmatprep.subr.bf16.mxu0 %v1512
        %2064 = vmatpush1.bf16.msra.mxu0 %v1511
        %2065 = vmatprep.subr.bf16.mxu0 %v1510
        %2066 = vmatpush1.bf16.msra.mxu0 %v1509
        %2067 = vmatprep.subr.bf16.mxu0 %v1508
        %2068 = vmatpush1.bf16.msra.mxu0 %v1507
        %2069 = vmatprep.subr.bf16.mxu0 %v1506
        %2070 = vmatpush1.bf16.msra.mxu0 %v1505
        %2071 = vmatprep.subr.bf16.mxu0 %v1504
        %2072 = vmatpush1.bf16.msra.mxu0 %v1503
        %2073 = vmatprep.subr.bf16.mxu0 %v1534
        %2074 = vmatpush2.bf16.msra.mxu0 %v1533
        %2075 = vmatprep.subr.bf16.mxu0 %v1532
        %2076 = vmatpush2.bf16.msra.mxu0 %v1531
        %2077 = vmatprep.subr.bf16.mxu0 %v1530
        %2078 = vmatpush2.bf16.msra.mxu0 %v1529
        %2079 = vmatprep.subr.bf16.mxu0 %v1528
        %2080 = vmatpush2.bf16.msra.mxu0 %v1527
        %2081 = vmatprep.subr.bf16.mxu0 %v1526
        %2082 = vmatpush2.bf16.msra.mxu0 %v1525
        %2083 = vmatprep.subr.bf16.mxu0 %v1524
        %2084 = vmatpush2.bf16.msra.mxu0 %v1523
        %2085 = vmatprep.subr.bf16.mxu0 %v1522
        %2086 = vmatpush2.bf16.msra.mxu0 %v1521
        %2087 = vmatprep.subr.bf16.mxu0 %v1520
        %2088 = vmatpush2.bf16.msra.mxu0 %v1519
        %2089 = vmatprep.mubr.bf16.mxu0 %v612
        %2090 = vmatmul.mubr.bf16.gmra.mxu0 %v611
        %v2091 = vpop.f32.mrf.mxu0
        %v2092 = vadd.f32 %v2039, %v2091
        %v2093 = vpop.f32.mrf.mxu0
        %v2094 = vadd.f32 %v2041, %v2093
        %v2095 = vpop.f32.mrf.mxu0
        %v2096 = vadd.f32 %v2043, %v2095
        %v2097 = vpop.f32.mrf.mxu0
        %v2098 = vadd.f32 %v2045, %v2097
        %2099 = vmatprep.mubr.bf16.mxu0 %v628
        %2100 = vmatmul.mubr.bf16.gmra.mxu0 %v627
        %v2101 = vpop.f32.mrf.mxu0
        %v2102 = vadd.f32 %v2049, %v2101
        %v2103 = vpop.f32.mrf.mxu0
        %v2104 = vadd.f32 %v2051, %v2103
        %v2105 = vpop.f32.mrf.mxu0
        %v2106 = vadd.f32 %v2053, %v2105
        %v2107 = vpop.f32.mrf.mxu0
        %v2108 = vadd.f32 %v2055, %v2107
        %2109 = vdwg.mxu0
        %2110 = vmatprep.subr.bf16.mxu0 %v1550
        %2111 = vmatpush1.bf16.msra.mxu0 %v1549
        %2112 = vmatprep.subr.bf16.mxu0 %v1548
        %2113 = vmatpush1.bf16.msra.mxu0 %v1547
        %2114 = vmatprep.subr.bf16.mxu0 %v1546
        %2115 = vmatpush1.bf16.msra.mxu0 %v1545
        %2116 = vmatprep.subr.bf16.mxu0 %v1544
        %2117 = vmatpush1.bf16.msra.mxu0 %v1543
        %2118 = vmatprep.subr.bf16.mxu0 %v1542
        %2119 = vmatpush1.bf16.msra.mxu0 %v1541
        %2120 = vmatprep.subr.bf16.mxu0 %v1540
        %2121 = vmatpush1.bf16.msra.mxu0 %v1539
        %2122 = vmatprep.subr.bf16.mxu0 %v1538
        %2123 = vmatpush1.bf16.msra.mxu0 %v1537
        %2124 = vmatprep.subr.bf16.mxu0 %v1536
        %2125 = vmatpush1.bf16.msra.mxu0 %v1535
        %2126 = vmatprep.subr.bf16.mxu0 %v1566
        %2127 = vmatpush2.bf16.msra.mxu0 %v1565
        %2128 = vmatprep.subr.bf16.mxu0 %v1564
        %2129 = vmatpush2.bf16.msra.mxu0 %v1563
        %2130 = vmatprep.subr.bf16.mxu0 %v1562
        %2131 = vmatpush2.bf16.msra.mxu0 %v1561
        %2132 = vmatprep.subr.bf16.mxu0 %v1560
        %2133 = vmatpush2.bf16.msra.mxu0 %v1559
        %2134 = vmatprep.subr.bf16.mxu0 %v1558
        %2135 = vmatpush2.bf16.msra.mxu0 %v1557
        %2136 = vmatprep.subr.bf16.mxu0 %v1556
        %2137 = vmatpush2.bf16.msra.mxu0 %v1555
        %2138 = vmatprep.subr.bf16.mxu0 %v1554
        %2139 = vmatpush2.bf16.msra.mxu0 %v1553
        %2140 = vmatprep.subr.bf16.mxu0 %v1552
        %2141 = vmatpush2.bf16.msra.mxu0 %v1551
        %2142 = vmatprep.mubr.bf16.mxu0 %v614
        %2143 = vmatmul.mubr.bf16.gmra.mxu0 %v613
        %v2144 = vpop.f32.mrf.mxu0
        %v2145 = vadd.f32 %v2092, %v2144
        %v2146 = vpop.f32.mrf.mxu0
        %v2147 = vadd.f32 %v2094, %v2146
        %v2148 = vpop.f32.mrf.mxu0
        %v2149 = vadd.f32 %v2096, %v2148
        %v2150 = vpop.f32.mrf.mxu0
        %v2151 = vadd.f32 %v2098, %v2150
        %2152 = vmatprep.mubr.bf16.mxu0 %v630
        %2153 = vmatmul.mubr.bf16.gmra.mxu0 %v629
        %v2154 = vpop.f32.mrf.mxu0
        %v2155 = vadd.f32 %v2102, %v2154
        %v2156 = vpop.f32.mrf.mxu0
        %v2157 = vadd.f32 %v2104, %v2156
        %v2158 = vpop.f32.mrf.mxu0
        %v2159 = vadd.f32 %v2106, %v2158
        %v2160 = vpop.f32.mrf.mxu0
        %v2161 = vadd.f32 %v2108, %v2160
        %2162 = vdwg.mxu0
        %2163 = vmatprep.subr.bf16.mxu0 %v1582
        %2164 = vmatpush1.bf16.msra.mxu0 %v1581
        %2165 = vmatprep.subr.bf16.mxu0 %v1580
        %2166 = vmatpush1.bf16.msra.mxu0 %v1579
        %2167 = vmatprep.subr.bf16.mxu0 %v1578
        %2168 = vmatpush1.bf16.msra.mxu0 %v1577
        %2169 = vmatprep.subr.bf16.mxu0 %v1576
        %2170 = vmatpush1.bf16.msra.mxu0 %v1575
        %2171 = vmatprep.subr.bf16.mxu0 %v1574
        %2172 = vmatpush1.bf16.msra.mxu0 %v1573
        %2173 = vmatprep.subr.bf16.mxu0 %v1572
        %2174 = vmatpush1.bf16.msra.mxu0 %v1571
        %2175 = vmatprep.subr.bf16.mxu0 %v1570
        %2176 = vmatpush1.bf16.msra.mxu0 %v1569
        %2177 = vmatprep.subr.bf16.mxu0 %v1568
        %2178 = vmatpush1.bf16.msra.mxu0 %v1567
        %2179 = vmatprep.subr.bf16.mxu0 %v1598
        %2180 = vmatpush2.bf16.msra.mxu0 %v1597
        %2181 = vmatprep.subr.bf16.mxu0 %v1596
        %2182 = vmatpush2.bf16.msra.mxu0 %v1595
        %2183 = vmatprep.subr.bf16.mxu0 %v1594
        %2184 = vmatpush2.bf16.msra.mxu0 %v1593
        %2185 = vmatprep.subr.bf16.mxu0 %v1592
        %2186 = vmatpush2.bf16.msra.mxu0 %v1591
        %2187 = vmatprep.subr.bf16.mxu0 %v1590
        %2188 = vmatpush2.bf16.msra.mxu0 %v1589
        %2189 = vmatprep.subr.bf16.mxu0 %v1588
        %2190 = vmatpush2.bf16.msra.mxu0 %v1587
        %2191 = vmatprep.subr.bf16.mxu0 %v1586
        %2192 = vmatpush2.bf16.msra.mxu0 %v1585
        %2193 = vmatprep.subr.bf16.mxu0 %v1584
        %2194 = vmatpush2.bf16.msra.mxu0 %v1583
        %2195 = vmatprep.mubr.bf16.mxu0 %v616
        %2196 = vmatmul.mubr.bf16.gmra.mxu0 %v615
        %v2197 = vpop.f32.mrf.mxu0
        %v2198 = vadd.f32 %v2145, %v2197
        %v2199 = vpop.f32.mrf.mxu0
        %v2200 = vadd.f32 %v2147, %v2199
        %v2201 = vpop.f32.mrf.mxu0
        %v2202 = vadd.f32 %v2149, %v2201
        %v2203 = vpop.f32.mrf.mxu0
        %v2204 = vadd.f32 %v2151, %v2203
        %2205 = vmatprep.mubr.bf16.mxu0 %v632
        %2206 = vmatmul.mubr.bf16.gmra.mxu0 %v631
        %v2207 = vpop.f32.mrf.mxu0
        %v2208 = vadd.f32 %v2155, %v2207
        %v2209 = vpop.f32.mrf.mxu0
        %v2210 = vadd.f32 %v2157, %v2209
        %v2211 = vpop.f32.mrf.mxu0
        %v2212 = vadd.f32 %v2159, %v2211
        %v2213 = vpop.f32.mrf.mxu0
        %v2214 = vadd.f32 %v2161, %v2213
        %2215 = vdwg.mxu0
        %2216 = vmatprep.subr.bf16.mxu0 %v1614
        %2217 = vmatpush1.bf16.msra.mxu0 %v1613
        %2218 = vmatprep.subr.bf16.mxu0 %v1612
        %2219 = vmatpush1.bf16.msra.mxu0 %v1611
        %2220 = vmatprep.subr.bf16.mxu0 %v1610
        %2221 = vmatpush1.bf16.msra.mxu0 %v1609
        %2222 = vmatprep.subr.bf16.mxu0 %v1608
        %2223 = vmatpush1.bf16.msra.mxu0 %v1607
        %2224 = vmatprep.subr.bf16.mxu0 %v1606
        %2225 = vmatpush1.bf16.msra.mxu0 %v1605
        %2226 = vmatprep.subr.bf16.mxu0 %v1604
        %2227 = vmatpush1.bf16.msra.mxu0 %v1603
        %2228 = vmatprep.subr.bf16.mxu0 %v1602
        %2229 = vmatpush1.bf16.msra.mxu0 %v1601
        %2230 = vmatprep.subr.bf16.mxu0 %v1600
        %2231 = vmatpush1.bf16.msra.mxu0 %v1599
        %2232 = vmatprep.subr.bf16.mxu0 %v1630
        %2233 = vmatpush2.bf16.msra.mxu0 %v1629
        %2234 = vmatprep.subr.bf16.mxu0 %v1628
        %2235 = vmatpush2.bf16.msra.mxu0 %v1627
        %2236 = vmatprep.subr.bf16.mxu0 %v1626
        %2237 = vmatpush2.bf16.msra.mxu0 %v1625
        %2238 = vmatprep.subr.bf16.mxu0 %v1624
        %2239 = vmatpush2.bf16.msra.mxu0 %v1623
        %2240 = vmatprep.subr.bf16.mxu0 %v1622
        %2241 = vmatpush2.bf16.msra.mxu0 %v1621
        %2242 = vmatprep.subr.bf16.mxu0 %v1620
        %2243 = vmatpush2.bf16.msra.mxu0 %v1619
        %2244 = vmatprep.subr.bf16.mxu0 %v1618
        %2245 = vmatpush2.bf16.msra.mxu0 %v1617
        %2246 = vmatprep.subr.bf16.mxu0 %v1616
        %2247 = vmatpush2.bf16.msra.mxu0 %v1615
        %2248 = vmatprep.mubr.bf16.mxu0 %v618
        %2249 = vmatmul.mubr.bf16.gmra.mxu0 %v617
        %v2250 = vpop.f32.mrf.mxu0
        %v2251 = vadd.f32 %v2198, %v2250
        %v2252 = vpop.f32.mrf.mxu0
        %v2253 = vadd.f32 %v2200, %v2252
        %v2254 = vpop.f32.mrf.mxu0
        %v2255 = vadd.f32 %v2202, %v2254
        %v2256 = vpop.f32.mrf.mxu0
        %v2257 = vadd.f32 %v2204, %v2256
        %2258 = vmatprep.mubr.bf16.mxu0 %v634
        %2259 = vmatmul.mubr.bf16.gmra.mxu0 %v633
        %v2260 = vpop.f32.mrf.mxu0
        %v2261 = vadd.f32 %v2208, %v2260
        %v2262 = vpop.f32.mrf.mxu0
        %v2263 = vadd.f32 %v2210, %v2262
        %v2264 = vpop.f32.mrf.mxu0
        %v2265 = vadd.f32 %v2212, %v2264
        %v2266 = vpop.f32.mrf.mxu0
        %v2267 = vadd.f32 %v2214, %v2266
        %2268 = vdwg.mxu0
        %2269 = vmatprep.subr.bf16.mxu0 %v1646
        %2270 = vmatpush1.bf16.msra.mxu0 %v1645
        %2271 = vmatprep.subr.bf16.mxu0 %v1644
        %2272 = vmatpush1.bf16.msra.mxu0 %v1643
        %2273 = vmatprep.subr.bf16.mxu0 %v1642
        %2274 = vmatpush1.bf16.msra.mxu0 %v1641
        %2275 = vmatprep.subr.bf16.mxu0 %v1640
        %2276 = vmatpush1.bf16.msra.mxu0 %v1639
        %2277 = vmatprep.subr.bf16.mxu0 %v1638
        %2278 = vmatpush1.bf16.msra.mxu0 %v1637
        %2279 = vmatprep.subr.bf16.mxu0 %v1636
        %2280 = vmatpush1.bf16.msra.mxu0 %v1635
        %2281 = vmatprep.subr.bf16.mxu0 %v1634
        %2282 = vmatpush1.bf16.msra.mxu0 %v1633
        %2283 = vmatprep.subr.bf16.mxu0 %v1632
        %2284 = vmatpush1.bf16.msra.mxu0 %v1631
        %2285 = vmatprep.subr.bf16.mxu0 %v1662
        %2286 = vmatpush2.bf16.msra.mxu0 %v1661
        %2287 = vmatprep.subr.bf16.mxu0 %v1660
        %2288 = vmatpush2.bf16.msra.mxu0 %v1659
        %2289 = vmatprep.subr.bf16.mxu0 %v1658
        %2290 = vmatpush2.bf16.msra.mxu0 %v1657
        %2291 = vmatprep.subr.bf16.mxu0 %v1656
        %2292 = vmatpush2.bf16.msra.mxu0 %v1655
        %2293 = vmatprep.subr.bf16.mxu0 %v1654
        %2294 = vmatpush2.bf16.msra.mxu0 %v1653
        %2295 = vmatprep.subr.bf16.mxu0 %v1652
        %2296 = vmatpush2.bf16.msra.mxu0 %v1651
        %2297 = vmatprep.subr.bf16.mxu0 %v1650
        %2298 = vmatpush2.bf16.msra.mxu0 %v1649
        %2299 = vmatprep.subr.bf16.mxu0 %v1648
        %2300 = vmatpush2.bf16.msra.mxu0 %v1647
        %2301 = vmatprep.mubr.bf16.mxu0 %v620
        %2302 = vmatmul.mubr.bf16.gmra.mxu0 %v619
        %v2303 = vpop.f32.mrf.mxu0
        %v2304 = vadd.f32 %v2251, %v2303
        %v2305 = vpop.f32.mrf.mxu0
        %v2306 = vadd.f32 %v2253, %v2305
        %v2307 = vpop.f32.mrf.mxu0
        %v2308 = vadd.f32 %v2255, %v2307
        %v2309 = vpop.f32.mrf.mxu0
        %v2310 = vadd.f32 %v2257, %v2309
        %2311 = vmatprep.mubr.bf16.mxu0 %v636
        %2312 = vmatmul.mubr.bf16.gmra.mxu0 %v635
        %v2313 = vpop.f32.mrf.mxu0
        %v2314 = vadd.f32 %v2261, %v2313
        %v2315 = vpop.f32.mrf.mxu0
        %v2316 = vadd.f32 %v2263, %v2315
        %v2317 = vpop.f32.mrf.mxu0
        %v2318 = vadd.f32 %v2265, %v2317
        %v2319 = vpop.f32.mrf.mxu0
        %v2320 = vadd.f32 %v2267, %v2319
        %2321 = vdwg.mxu0
        %2322 = vmatprep.subr.bf16.mxu0 %v1678
        %2323 = vmatpush1.bf16.msra.mxu0 %v1677
        %2324 = vmatprep.subr.bf16.mxu0 %v1676
        %2325 = vmatpush1.bf16.msra.mxu0 %v1675
        %2326 = vmatprep.subr.bf16.mxu0 %v1674
        %2327 = vmatpush1.bf16.msra.mxu0 %v1673
        %2328 = vmatprep.subr.bf16.mxu0 %v1672
        %2329 = vmatpush1.bf16.msra.mxu0 %v1671
        %2330 = vmatprep.subr.bf16.mxu0 %v1670
        %2331 = vmatpush1.bf16.msra.mxu0 %v1669
        %2332 = vmatprep.subr.bf16.mxu0 %v1668
        %2333 = vmatpush1.bf16.msra.mxu0 %v1667
        %2334 = vmatprep.subr.bf16.mxu0 %v1666
        %2335 = vmatpush1.bf16.msra.mxu0 %v1665
        %2336 = vmatprep.subr.bf16.mxu0 %v1664
        %2337 = vmatpush1.bf16.msra.mxu0 %v1663
        %2338 = vmatprep.subr.bf16.mxu0 %v1694
        %2339 = vmatpush2.bf16.msra.mxu0 %v1693
        %2340 = vmatprep.subr.bf16.mxu0 %v1692
        %2341 = vmatpush2.bf16.msra.mxu0 %v1691
        %2342 = vmatprep.subr.bf16.mxu0 %v1690
        %2343 = vmatpush2.bf16.msra.mxu0 %v1689
        %2344 = vmatprep.subr.bf16.mxu0 %v1688
        %2345 = vmatpush2.bf16.msra.mxu0 %v1687
        %2346 = vmatprep.subr.bf16.mxu0 %v1686
        %2347 = vmatpush2.bf16.msra.mxu0 %v1685
        %2348 = vmatprep.subr.bf16.mxu0 %v1684
        %2349 = vmatpush2.bf16.msra.mxu0 %v1683
        %2350 = vmatprep.subr.bf16.mxu0 %v1682
        %2351 = vmatpush2.bf16.msra.mxu0 %v1681
        %2352 = vmatprep.subr.bf16.mxu0 %v1680
        %2353 = vmatpush2.bf16.msra.mxu0 %v1679
        %2354 = vmatprep.mubr.bf16.mxu0 %v622
        %2355 = vmatmul.mubr.bf16.gmra.mxu0 %v621
        %v2356 = vpop.f32.mrf.mxu0
        %v2357 = vadd.f32 %v2304, %v2356
        %v2358 = vpop.f32.mrf.mxu0
        %v2359 = vadd.f32 %v2306, %v2358
        %v2360 = vpop.f32.mrf.mxu0
        %v2361 = vadd.f32 %v2308, %v2360
        %v2362 = vpop.f32.mrf.mxu0
        %v2363 = vadd.f32 %v2310, %v2362
        %2364 = vmatprep.mubr.bf16.mxu0 %v638
        %2365 = vmatmul.mubr.bf16.gmra.mxu0 %v637
        %v2366 = vpop.f32.mrf.mxu0
        %v2367 = vadd.f32 %v2314, %v2366
        %v2368 = vpop.f32.mrf.mxu0
        %v2369 = vadd.f32 %v2316, %v2368
        %v2370 = vpop.f32.mrf.mxu0
        %v2371 = vadd.f32 %v2318, %v2370
        %v2372 = vpop.f32.mrf.mxu0
        %v2373 = vadd.f32 %v2320, %v2372
        %2374 = vdwg.mxu0
        %s2375 = smul.u32 %s18, 8
        %s2376 = smul.addr %s2375, 8
        %s2377 = scalar_lea.vmem %s4, %s2376
        %2378 = vst [vmem:[%s2377] sm:$0xff] %v2357
        %2379 = vst [vmem:[%s2377 + $0x8] sm:$0xff] %v2359
        %2380 = vst [vmem:[%s2377 + $0x10] sm:$0xff] %v2361
        %2381 = vst [vmem:[%s2377 + $0x18] sm:$0xff] %v2363
        %2382 = vst [vmem:[%s2377 + $0x20] sm:$0xff] %v2367
        %2383 = vst [vmem:[%s2377 + $0x28] sm:$0xff] %v2369
        %2384 = vst [vmem:[%s2377 + $0x30] sm:$0xff] %v2371
        %2385 = vst [vmem:[%s2377 + $0x38] sm:$0xff] %v2373
        %p2386 = scmp.eq.s32.totalorder %s18, 3
        // Predicated region
        $region41: #{generator_forward.5} parent=35 // pred_check
          %p2387 = pneg %p2386
        $region42: #{generator_forward.5} parent=35 // pred_check_branch
          %2389 = sbr.rel (%p2387) target = $region44
        $region43: #{generator_forward.5} parent=35 // pred_region
          %v2390 = vld [vmem:[%s4] sm:$0xff]
          %v2391 = vld [vmem:[%s4 + $0x8] sm:$0xff]
          %v2392 = vld [vmem:[%s4 + $0x10] sm:$0xff]
          %v2393 = vld [vmem:[%s4 + $0x18] sm:$0xff]
          %v2394 = vld [vmem:[%s4 + $0x20] sm:$0xff]
          %v2395 = vld [vmem:[%s4 + $0x28] sm:$0xff]
          %v2396 = vld [vmem:[%s4 + $0x30] sm:$0xff]
          %v2397 = vld [vmem:[%s4 + $0x38] sm:$0xff]
          %v2398 = vld [vmem:[%s4 + $0x40] sm:$0xff]
          %v2399 = vld [vmem:[%s4 + $0x48] sm:$0xff]
          %v2400 = vld [vmem:[%s4 + $0x50] sm:$0xff]
          %v2401 = vld [vmem:[%s4 + $0x58] sm:$0xff]
          %v2402 = vld [vmem:[%s4 + $0x60] sm:$0xff]
          %v2403 = vld [vmem:[%s4 + $0x68] sm:$0xff]
          %v2404 = vld [vmem:[%s4 + $0x70] sm:$0xff]
          %v2405 = vld [vmem:[%s4 + $0x78] sm:$0xff]
          %v2406 = vld [vmem:[%s4 + $0x80] sm:$0xff]
          %v2407 = vld [vmem:[%s4 + $0x88] sm:$0xff]
          %v2408 = vld [vmem:[%s4 + $0x90] sm:$0xff]
          %v2409 = vld [vmem:[%s4 + $0x98] sm:$0xff]
          %v2410 = vld [vmem:[%s4 + $0xa0] sm:$0xff]
          %v2411 = vld [vmem:[%s4 + $0xa8] sm:$0xff]
          %v2412 = vld [vmem:[%s4 + $0xb0] sm:$0xff]
          %v2413 = vld [vmem:[%s4 + $0xb8] sm:$0xff]
          %v2414 = vld [vmem:[%s4 + $0xc0] sm:$0xff]
          %v2415 = vld [vmem:[%s4 + $0xc8] sm:$0xff]
          %v2416 = vld [vmem:[%s4 + $0xd0] sm:$0xff]
          %v2417 = vld [vmem:[%s4 + $0xd8] sm:$0xff]
          %v2418 = vld [vmem:[%s4 + $0xe0] sm:$0xff]
          %v2419 = vld [vmem:[%s4 + $0xe8] sm:$0xff]
          %v2420 = vld [vmem:[%s4 + $0xf0] sm:$0xff]
          %v2421 = vld [vmem:[%s4 + $0xf8] sm:$0xff]
          %v2422 = vadd.f32 %v2390, %v2398
          %v2423 = vadd.f32 %v2422, %v2406
          %v2424 = vadd.f32 %v2423, %v2414
          %v2425 = vadd.f32 %v2391, %v2399
          %v2426 = vadd.f32 %v2425, %v2407
          %v2427 = vadd.f32 %v2426, %v2415
          %v2428 = vadd.f32 %v2392, %v2400
          %v2429 = vadd.f32 %v2428, %v2408
          %v2430 = vadd.f32 %v2429, %v2416
          %v2431 = vadd.f32 %v2393, %v2401
          %v2432 = vadd.f32 %v2431, %v2409
          %v2433 = vadd.f32 %v2432, %v2417
          %v2434 = vadd.f32 %v2394, %v2402
          %v2435 = vadd.f32 %v2434, %v2410
          %v2436 = vadd.f32 %v2435, %v2418
          %v2437 = vadd.f32 %v2395, %v2403
          %v2438 = vadd.f32 %v2437, %v2411
          %v2439 = vadd.f32 %v2438, %v2419
          %v2440 = vadd.f32 %v2396, %v2404
          %v2441 = vadd.f32 %v2440, %v2412
          %v2442 = vadd.f32 %v2441, %v2420
          %v2443 = vadd.f32 %v2397, %v2405
          %v2444 = vadd.f32 %v2443, %v2413
          %v2445 = vadd.f32 %v2444, %v2421
          %v2446 = vadd.f32 %v2424, %v2430
          %v2447 = vadd.f32 %v2446, %v2436
          %v2448 = vadd.f32 %v2447, %v2442
          %v2449 = vrot.slane %v2448, 4
          %v2450 = vadd.f32 %v2448, %v2449
          %v2451 = vrot.slane %v2450, 2
          %v2452 = vadd.f32 %v2450, %v2451
          %v2453 = vrot.slane %v2452, 1
          %v2454 = vadd.f32 %v2452, %v2453
          %v2455 = vadd.f32 %v2427, %v2433
          %v2456 = vadd.f32 %v2455, %v2439
          %v2457 = vadd.f32 %v2456, %v2445
          %v2458 = vrot.slane %v2457, 4
          %v2459 = vadd.f32 %v2457, %v2458
          %v2460 = vrot.slane %v2459, 2
          %v2461 = vadd.f32 %v2459, %v2460
          %v2462 = vrot.slane %v2461, 1
          %v2463 = vadd.f32 %v2461, %v2462
          %v2464 = vrcp.pop 128.0
          %v2465 = vmul.f32 %v2454, %v2464
          %v2466 = vmul.f32 %v2463, %v2464
          %v2467 = vsub.f32 %v2390, %v2465
          %v2468 = vsub.f32 %v2391, %v2466
          %v2469 = vsub.f32 %v2392, %v2465
          %v2470 = vsub.f32 %v2393, %v2466
          %v2471 = vsub.f32 %v2394, %v2465
          %v2472 = vsub.f32 %v2395, %v2466
          %v2473 = vsub.f32 %v2396, %v2465
          %v2474 = vsub.f32 %v2397, %v2466
          %v2475 = vsub.f32 %v2398, %v2465
          %v2476 = vsub.f32 %v2399, %v2466
          %v2477 = vsub.f32 %v2400, %v2465
          %v2478 = vsub.f32 %v2401, %v2466
          %v2479 = vsub.f32 %v2402, %v2465
          %v2480 = vsub.f32 %v2403, %v2466
          %v2481 = vsub.f32 %v2404, %v2465
          %v2482 = vsub.f32 %v2405, %v2466
          %v2483 = vsub.f32 %v2406, %v2465
          %v2484 = vsub.f32 %v2407, %v2466
          %v2485 = vsub.f32 %v2408, %v2465
          %v2486 = vsub.f32 %v2409, %v2466
          %v2487 = vsub.f32 %v2410, %v2465
          %v2488 = vsub.f32 %v2411, %v2466
          %v2489 = vsub.f32 %v2412, %v2465
          %v2490 = vsub.f32 %v2413, %v2466
          %v2491 = vsub.f32 %v2414, %v2465
          %v2492 = vsub.f32 %v2415, %v2466
          %v2493 = vsub.f32 %v2416, %v2465
          %v2494 = vsub.f32 %v2417, %v2466
          %v2495 = vsub.f32 %v2418, %v2465
          %v2496 = vsub.f32 %v2419, %v2466
          %v2497 = vsub.f32 %v2420, %v2465
          %v2498 = vsub.f32 %v2421, %v2466
          %v2499 = vmul.f32 %v2467, %v2467
          %v2500 = vmul.f32 %v2468, %v2468
          %v2501 = vmul.f32 %v2469, %v2469
          %v2502 = vmul.f32 %v2470, %v2470
          %v2503 = vmul.f32 %v2471, %v2471
          %v2504 = vmul.f32 %v2472, %v2472
          %v2505 = vmul.f32 %v2473, %v2473
          %v2506 = vmul.f32 %v2474, %v2474
          %v2507 = vmul.f32 %v2475, %v2475
          %v2508 = vmul.f32 %v2476, %v2476
          %v2509 = vmul.f32 %v2477, %v2477
          %v2510 = vmul.f32 %v2478, %v2478
          %v2511 = vmul.f32 %v2479, %v2479
          %v2512 = vmul.f32 %v2480, %v2480
          %v2513 = vmul.f32 %v2481, %v2481
          %v2514 = vmul.f32 %v2482, %v2482
          %v2515 = vmul.f32 %v2483, %v2483
          %v2516 = vmul.f32 %v2484, %v2484
          %v2517 = vmul.f32 %v2485, %v2485
          %v2518 = vmul.f32 %v2486, %v2486
          %v2519 = vmul.f32 %v2487, %v2487
          %v2520 = vmul.f32 %v2488, %v2488
          %v2521 = vmul.f32 %v2489, %v2489
          %v2522 = vmul.f32 %v2490, %v2490
          %v2523 = vmul.f32 %v2491, %v2491
          %v2524 = vmul.f32 %v2492, %v2492
          %v2525 = vmul.f32 %v2493, %v2493
          %v2526 = vmul.f32 %v2494, %v2494
          %v2527 = vmul.f32 %v2495, %v2495
          %v2528 = vmul.f32 %v2496, %v2496
          %v2529 = vmul.f32 %v2497, %v2497
          %v2530 = vmul.f32 %v2498, %v2498
          %v2531 = vadd.f32 %v2499, %v2507
          %v2532 = vadd.f32 %v2531, %v2515
          %v2533 = vadd.f32 %v2532, %v2523
          %v2534 = vadd.f32 %v2500, %v2508
          %v2535 = vadd.f32 %v2534, %v2516
          %v2536 = vadd.f32 %v2535, %v2524
          %v2537 = vadd.f32 %v2501, %v2509
          %v2538 = vadd.f32 %v2537, %v2517
          %v2539 = vadd.f32 %v2538, %v2525
          %v2540 = vadd.f32 %v2502, %v2510
          %v2541 = vadd.f32 %v2540, %v2518
          %v2542 = vadd.f32 %v2541, %v2526
          %v2543 = vadd.f32 %v2503, %v2511
          %v2544 = vadd.f32 %v2543, %v2519
          %v2545 = vadd.f32 %v2544, %v2527
          %v2546 = vadd.f32 %v2504, %v2512
          %v2547 = vadd.f32 %v2546, %v2520
          %v2548 = vadd.f32 %v2547, %v2528
          %v2549 = vadd.f32 %v2505, %v2513
          %v2550 = vadd.f32 %v2549, %v2521
          %v2551 = vadd.f32 %v2550, %v2529
          %v2552 = vadd.f32 %v2506, %v2514
          %v2553 = vadd.f32 %v2552, %v2522
          %v2554 = vadd.f32 %v2553, %v2530
          %v2555 = vadd.f32 %v2533, %v2539
          %v2556 = vadd.f32 %v2555, %v2545
          %v2557 = vadd.f32 %v2556, %v2551
          %v2558 = vrot.slane %v2557, 4
          %v2559 = vadd.f32 %v2557, %v2558
          %v2560 = vrot.slane %v2559, 2
          %v2561 = vadd.f32 %v2559, %v2560
          %v2562 = vrot.slane %v2561, 1
          %v2563 = vadd.f32 %v2561, %v2562
          %v2564 = vadd.f32 %v2536, %v2542
          %v2565 = vadd.f32 %v2564, %v2548
          %v2566 = vadd.f32 %v2565, %v2554
          %v2567 = vrot.slane %v2566, 4
          %v2568 = vadd.f32 %v2566, %v2567
          %v2569 = vrot.slane %v2568, 2
          %v2570 = vadd.f32 %v2568, %v2569
          %v2571 = vrot.slane %v2570, 1
          %v2572 = vadd.f32 %v2570, %v2571
          %v2573 = vmul.f32 %v2563, %v2464
          %v2574 = vmul.f32 %v2572, %v2464
          %v2575 = vadd.f32 %v2573, 1e-05
          %v2576 = vadd.f32 %v2574, 1e-05
          %v2577 = vrsqrt.pop %v2575
          %v2578 = vrsqrt.pop %v2576
          %v2579 = vmul.f32 %v2467, %v2577
          %v2580 = vmul.f32 %v2468, %v2578
          %v2581 = vmul.f32 %v2469, %v2577
          %v2582 = vmul.f32 %v2470, %v2578
          %v2583 = vmul.f32 %v2471, %v2577
          %v2584 = vmul.f32 %v2472, %v2578
          %v2585 = vmul.f32 %v2473, %v2577
          %v2586 = vmul.f32 %v2474, %v2578
          %v2587 = vmul.f32 %v2475, %v2577
          %v2588 = vmul.f32 %v2476, %v2578
          %v2589 = vmul.f32 %v2477, %v2577
          %v2590 = vmul.f32 %v2478, %v2578
          %v2591 = vmul.f32 %v2479, %v2577
          %v2592 = vmul.f32 %v2480, %v2578
          %v2593 = vmul.f32 %v2481, %v2577
          %v2594 = vmul.f32 %v2482, %v2578
          %v2595 = vmul.f32 %v2483, %v2577
          %v2596 = vmul.f32 %v2484, %v2578
          %v2597 = vmul.f32 %v2485, %v2577
          %v2598 = vmul.f32 %v2486, %v2578
          %v2599 = vmul.f32 %v2487, %v2577
          %v2600 = vmul.f32 %v2488, %v2578
          %v2601 = vmul.f32 %v2489, %v2577
          %v2602 = vmul.f32 %v2490, %v2578
          %v2603 = vmul.f32 %v2491, %v2577
          %v2604 = vmul.f32 %v2492, %v2578
          %v2605 = vmul.f32 %v2493, %v2577
          %v2606 = vmul.f32 %v2494, %v2578
          %v2607 = vmul.f32 %v2495, %v2577
          %v2608 = vmul.f32 %v2496, %v2578
          %v2609 = vmul.f32 %v2497, %v2577
          %v2610 = vmul.f32 %v2498, %v2578
          %v2611 = vld [vmem:[%s2] sm:$0x3]
          %v2613 = vlaneseq
          %v2614 = vshrl.u32 %v2613, 7
          %v2615 = vsub.s32 0, %v2614
          %v2616 = vrot.slane %v2611, %v2615
          %v2617 = vlaneseq
          %v2618 = vshrl.u32 %v2617, 7
          %v2619 = vsub.s32 1, %v2618
          %v2620 = vrot.slane %v2611, %v2619
          %v2623 = vmul.f32 %v2579, %v2616
          %v2624 = vmul.f32 %v2580, %v2620
          %v2625 = vmul.f32 %v2581, %v2616
          %v2626 = vmul.f32 %v2582, %v2620
          %v2627 = vmul.f32 %v2583, %v2616
          %v2628 = vmul.f32 %v2584, %v2620
          %v2629 = vmul.f32 %v2585, %v2616
          %v2630 = vmul.f32 %v2586, %v2620
          %v2631 = vmul.f32 %v2587, %v2616
          %v2632 = vmul.f32 %v2588, %v2620
          %v2633 = vmul.f32 %v2589, %v2616
          %v2634 = vmul.f32 %v2590, %v2620
          %v2635 = vmul.f32 %v2591, %v2616
          %v2636 = vmul.f32 %v2592, %v2620
          %v2637 = vmul.f32 %v2593, %v2616
          %v2638 = vmul.f32 %v2594, %v2620
          %v2639 = vmul.f32 %v2595, %v2616
          %v2640 = vmul.f32 %v2596, %v2620
          %v2641 = vmul.f32 %v2597, %v2616
          %v2642 = vmul.f32 %v2598, %v2620
          %v2643 = vmul.f32 %v2599, %v2616
          %v2644 = vmul.f32 %v2600, %v2620
          %v2645 = vmul.f32 %v2601, %v2616
          %v2646 = vmul.f32 %v2602, %v2620
          %v2647 = vmul.f32 %v2603, %v2616
          %v2648 = vmul.f32 %v2604, %v2620
          %v2649 = vmul.f32 %v2605, %v2616
          %v2650 = vmul.f32 %v2606, %v2620
          %v2651 = vmul.f32 %v2607, %v2616
          %v2652 = vmul.f32 %v2608, %v2620
          %v2653 = vmul.f32 %v2609, %v2616
          %v2654 = vmul.f32 %v2610, %v2620
          %v2655 = vld [vmem:[%s3] sm:$0x3]
          %v2657 = vlaneseq
          %v2658 = vshrl.u32 %v2657, 7
          %v2659 = vsub.s32 0, %v2658
          %v2660 = vrot.slane %v2655, %v2659
          %v2661 = vlaneseq
          %v2662 = vshrl.u32 %v2661, 7
          %v2663 = vsub.s32 1, %v2662
          %v2664 = vrot.slane %v2655, %v2663
          %v2667 = vadd.f32 %v2623, %v2660
          %v2668 = vadd.f32 %v2624, %v2664
          %v2669 = vadd.f32 %v2625, %v2660
          %v2670 = vadd.f32 %v2626, %v2664
          %v2671 = vadd.f32 %v2627, %v2660
          %v2672 = vadd.f32 %v2628, %v2664
          %v2673 = vadd.f32 %v2629, %v2660
          %v2674 = vadd.f32 %v2630, %v2664
          %v2675 = vadd.f32 %v2631, %v2660
          %v2676 = vadd.f32 %v2632, %v2664
          %v2677 = vadd.f32 %v2633, %v2660
          %v2678 = vadd.f32 %v2634, %v2664
          %v2679 = vadd.f32 %v2635, %v2660
          %v2680 = vadd.f32 %v2636, %v2664
          %v2681 = vadd.f32 %v2637, %v2660
          %v2682 = vadd.f32 %v2638, %v2664
          %v2683 = vadd.f32 %v2639, %v2660
          %v2684 = vadd.f32 %v2640, %v2664
          %v2685 = vadd.f32 %v2641, %v2660
          %v2686 = vadd.f32 %v2642, %v2664
          %v2687 = vadd.f32 %v2643, %v2660
          %v2688 = vadd.f32 %v2644, %v2664
          %v2689 = vadd.f32 %v2645, %v2660
          %v2690 = vadd.f32 %v2646, %v2664
          %v2691 = vadd.f32 %v2647, %v2660
          %v2692 = vadd.f32 %v2648, %v2664
          %v2693 = vadd.f32 %v2649, %v2660
          %v2694 = vadd.f32 %v2650, %v2664
          %v2695 = vadd.f32 %v2651, %v2660
          %v2696 = vadd.f32 %v2652, %v2664
          %v2697 = vadd.f32 %v2653, %v2660
          %v2698 = vadd.f32 %v2654, %v2664
          %v2699 = vmax.f32 %v2667, 0.0
          %v2700 = vmax.f32 %v2668, 0.0
          %v2701 = vmax.f32 %v2669, 0.0
          %v2702 = vmax.f32 %v2670, 0.0
          %v2703 = vmax.f32 %v2671, 0.0
          %v2704 = vmax.f32 %v2672, 0.0
          %v2705 = vmax.f32 %v2673, 0.0
          %v2706 = vmax.f32 %v2674, 0.0
          %v2707 = vmax.f32 %v2675, 0.0
          %v2708 = vmax.f32 %v2676, 0.0
          %v2709 = vmax.f32 %v2677, 0.0
          %v2710 = vmax.f32 %v2678, 0.0
          %v2711 = vmax.f32 %v2679, 0.0
          %v2712 = vmax.f32 %v2680, 0.0
          %v2713 = vmax.f32 %v2681, 0.0
          %v2714 = vmax.f32 %v2682, 0.0
          %v2715 = vmax.f32 %v2683, 0.0
          %v2716 = vmax.f32 %v2684, 0.0
          %v2717 = vmax.f32 %v2685, 0.0
          %v2718 = vmax.f32 %v2686, 0.0
          %v2719 = vmax.f32 %v2687, 0.0
          %v2720 = vmax.f32 %v2688, 0.0
          %v2721 = vmax.f32 %v2689, 0.0
          %v2722 = vmax.f32 %v2690, 0.0
          %v2723 = vmax.f32 %v2691, 0.0
          %v2724 = vmax.f32 %v2692, 0.0
          %v2725 = vmax.f32 %v2693, 0.0
          %v2726 = vmax.f32 %v2694, 0.0
          %v2727 = vmax.f32 %v2695, 0.0
          %v2728 = vmax.f32 %v2696, 0.0
          %v2729 = vmax.f32 %v2697, 0.0
          %v2730 = vmax.f32 %v2698, 0.0
          %2731 = vst [vmem:[%s4] sm:$0xff] %v2699
          %2732 = vst [vmem:[%s4 + $0x8] sm:$0xff] %v2700
          %2733 = vst [vmem:[%s4 + $0x10] sm:$0xff] %v2701
          %2734 = vst [vmem:[%s4 + $0x18] sm:$0xff] %v2702
          %2735 = vst [vmem:[%s4 + $0x20] sm:$0xff] %v2703
          %2736 = vst [vmem:[%s4 + $0x28] sm:$0xff] %v2704
          %2737 = vst [vmem:[%s4 + $0x30] sm:$0xff] %v2705
          %2738 = vst [vmem:[%s4 + $0x38] sm:$0xff] %v2706
          %2739 = vst [vmem:[%s4 + $0x40] sm:$0xff] %v2707
          %2740 = vst [vmem:[%s4 + $0x48] sm:$0xff] %v2708
          %2741 = vst [vmem:[%s4 + $0x50] sm:$0xff] %v2709
          %2742 = vst [vmem:[%s4 + $0x58] sm:$0xff] %v2710
          %2743 = vst [vmem:[%s4 + $0x60] sm:$0xff] %v2711
          %2744 = vst [vmem:[%s4 + $0x68] sm:$0xff] %v2712
          %2745 = vst [vmem:[%s4 + $0x70] sm:$0xff] %v2713
          %2746 = vst [vmem:[%s4 + $0x78] sm:$0xff] %v2714
          %2747 = vst [vmem:[%s4 + $0x80] sm:$0xff] %v2715
          %2748 = vst [vmem:[%s4 + $0x88] sm:$0xff] %v2716
          %2749 = vst [vmem:[%s4 + $0x90] sm:$0xff] %v2717
          %2750 = vst [vmem:[%s4 + $0x98] sm:$0xff] %v2718
          %2751 = vst [vmem:[%s4 + $0xa0] sm:$0xff] %v2719
          %2752 = vst [vmem:[%s4 + $0xa8] sm:$0xff] %v2720
          %2753 = vst [vmem:[%s4 + $0xb0] sm:$0xff] %v2721
          %2754 = vst [vmem:[%s4 + $0xb8] sm:$0xff] %v2722
          %2755 = vst [vmem:[%s4 + $0xc0] sm:$0xff] %v2723
          %2756 = vst [vmem:[%s4 + $0xc8] sm:$0xff] %v2724
          %2757 = vst [vmem:[%s4 + $0xd0] sm:$0xff] %v2725
          %2758 = vst [vmem:[%s4 + $0xd8] sm:$0xff] %v2726
          %2759 = vst [vmem:[%s4 + $0xe0] sm:$0xff] %v2727
          %2760 = vst [vmem:[%s4 + $0xe8] sm:$0xff] %v2728
          %2761 = vst [vmem:[%s4 + $0xf0] sm:$0xff] %v2729
          %2762 = vst [vmem:[%s4 + $0xf8] sm:$0xff] %v2730
        $region44: #{generator_forward.5} parent=35 // pred_fallthru
          _
        // Predicated region
        $region45: #{generator_forward.5} parent=35 // pred_check
          %p2763 = pneg %p125
        $region46: #{generator_forward.5} parent=35 // pred_check_branch
          %2765 = sbr.rel (%p2763) target = $region48
        $region47: #{generator_forward.5} parent=35 // pred_region
          _
        $region48: #{generator_forward.5} parent=35 // pred_fallthru
          _
        // Predicated region
        $region49: #{generator_forward.5} parent=35 // pred_check
          %p2766 = pneg %p125
        $region50: #{generator_forward.5} parent=35 // pred_check_branch
          %2768 = sbr.rel (%p2766) target = $region52
        $region51: #{generator_forward.5} parent=35 // pred_region
          _
        $region52: #{generator_forward.5} parent=35 // pred_fallthru
          _
      $region36: #{generator_forward.5} parent=5 // pred_fallthru
        _
      %p2769 = scmp.le.s32.totalorder 2, %s13
      // Predicated region
      $region53: #{generator_forward.5} parent=5 // pred_check
        %p2770 = pneg %p2769
      $region54: #{generator_forward.5} parent=5 // pred_check_branch
        %2772 = sbr.rel (%p2770) target = $region56
      $region55: #{generator_forward.5} parent=5 // pred_region
        %s2773 = ssub.s32 %s13, 2
      $region56: #{generator_forward.5} parent=5 // pred_fallthru
        _
    $region6: #{generator_forward.5} parent=1 // loop_footer
      %s17 = sadd.s32 1, %s13
    $region7: #{generator_forward.5} parent=1 // loop_footer_branch
      %12 = sbr.rel target = $region3
    $region8: #{generator_forward.5} parent=1 // loop_exit
      _
    %2774 = vsyncpa [#allocation3], 1
    %s2775 = scalar_lea.sflag [#allocation3], 1
    %2776 = vsyncpa %s2775, 1

// kernel: generator_forward.6
$region0: #{generator_forward.6}
  #allocation0 [shape = 'u32[]', space=smem, size = 0x4, offset = 0x4, fixed_abs, tag = 'smem constant byte address 0x4 - core index']
  #allocation1 [shape = 'u32[144,128]{1,0:T(1,128)}', space=vmem, size = 0x12000, scoped, tag = 'internal scratch']
  %s0 = inlined_call_operand.vmem [shape: bf16[4,128,1024], index: 0, kind: input, shape index: {}]
  %s1 = inlined_call_operand.vmem [shape: bf16[4,1024,128], index: 1, kind: input, shape index: {}]
  %s2 = inlined_call_operand.vmem [shape: f32[1,128], index: 2, kind: input, shape index: {}]
  %s3 = inlined_call_operand.vmem [shape: f32[1,128], index: 3, kind: input, shape index: {}]
  %s4 = inlined_call_operand.vmem [shape: f32[4,128,128], index: 4, kind: output, shape index: {}]
  %s5 = sld [smem:[#allocation0]]
  $region53: #{generator_forward.6} parent=0
    _
  %s7 = ssub.s32 1, %s5
  %s8 = scalar_select 0, %s7, %s5
  loop: start=0, step=1, limit=6
  $region2: #{generator_forward.6} parent=0 // loop_pre_header
    _
  $region3: #{generator_forward.6} parent=0 // loop_header
    %s10 = sphi 0, %s14
    %p11 = scmp.ge.s32.totalorder %s10, 6
    %s20 = sphi 0, %s22
    %s23 = sphi 0, %s20
    %s24 = sphi 0, %s23
    %s40 = sphi 0, %s24
    %s46 = sphi 0, %s48
    %s49 = sphi 0, %s46
    %s50 = sphi 0, %s49
    %s66 = sphi 0, %s50
    %s70 = sphi 0, %s70
    %s72 = sphi 0, %s70
    %s73 = sphi 0, %s72
    %s87 = sphi 0, %s73
    %s91 = sphi 0, %s91
    %s93 = sphi 0, %s91
    %s94 = sphi 0, %s93
    %s108 = sphi 0, %s94
    %s112 = sphi 0, %s112
    %s114 = sphi 0, %s112
    %s115 = sphi 0, %s114
    %s129 = sphi 0, %s115
  $region4: #{generator_forward.6} parent=0 // loop_header_branch
    %13 = sbr.rel (%p11) target = $region8
  $region5: #{generator_forward.6} parent=0 // loop_body
    %s15 = ssub.s32 %s10, 1
    %s16 = ssub.s32 %s10, 2
    %s17 = sadd.s32 %s10, 1
    %s18 = ssub.s32 %s10, %s17
    %p19 = scmp.eq.s32.totalorder %s18, 0
    %s21 = sadd.s32 %s20, 1
    %s22 = scalar_select %p19, %s20, %s21
    %p25 = pneg %p19
    %p26 = scmp.eq.s32.totalorder %s10, 3
    %p27 = por %p25, %p26
    %p28 = scmp.ne.s32.totalorder %s20, %s23
    %p29 = scmp.eq.s32.totalorder %s10, 0
    %p30 = por %p28, %p29
    %p31 = scmp.ne.s32.totalorder %s20, %s23
    %p32 = scmp.eq.s32.totalorder %s15, 3
    %p33 = por %p31, %p32
    %p34 = scmp.ne.s32.totalorder %s23, %s24
    %p35 = scmp.eq.s32.totalorder %s15, 0
    %p36 = por %p34, %p35
    %p37 = scmp.ne.s32.totalorder %s23, %s24
    %p38 = scmp.eq.s32.totalorder %s16, 3
    %p39 = por %p37, %p38
    %p41 = scmp.ne.s32.totalorder %s24, %s40
    %p42 = scmp.eq.s32.totalorder %s16, 0
    %p43 = por %p41, %p42
    %s44 = ssub.s32 %s10, %s17
    %p45 = scmp.eq.s32.totalorder %s44, 0
    %s47 = sadd.s32 %s46, 1
    %s48 = scalar_select %p45, %s46, %s47
    %p51 = pneg %p45
    %p52 = scmp.eq.s32.totalorder %s10, 3
    %p53 = por %p51, %p52
    %p54 = scmp.ne.s32.totalorder %s46, %s49
    %p55 = scmp.eq.s32.totalorder %s10, 0
    %p56 = por %p54, %p55
    %p57 = scmp.ne.s32.totalorder %s46, %s49
    %p58 = scmp.eq.s32.totalorder %s15, 3
    %p59 = por %p57, %p58
    %p60 = scmp.ne.s32.totalorder %s49, %s50
    %p61 = scmp.eq.s32.totalorder %s15, 0
    %p62 = por %p60, %p61
    %p63 = scmp.ne.s32.totalorder %s49, %s50
    %p64 = scmp.eq.s32.totalorder %s16, 3
    %p65 = por %p63, %p64
    %p67 = scmp.ne.s32.totalorder %s50, %s66
    %p68 = scmp.eq.s32.totalorder %s16, 0
    %p69 = por %p67, %p68
    %s71 = sadd.s32 %s70, 1
    %p74 = scmp.eq.s32.totalorder %s10, 3
    %p75 = scmp.ne.s32.totalorder %s70, %s72
    %p76 = scmp.eq.s32.totalorder %s10, 0
    %p77 = por %p75, %p76
    %p78 = scmp.ne.s32.totalorder %s70, %s72
    %p79 = scmp.eq.s32.totalorder %s15, 3
    %p80 = por %p78, %p79
    %p81 = scmp.ne.s32.totalorder %s72, %s73
    %p82 = scmp.eq.s32.totalorder %s15, 0
    %p83 = por %p81, %p82
    %p84 = scmp.ne.s32.totalorder %s72, %s73
    %p85 = scmp.eq.s32.totalorder %s16, 3
    %p86 = por %p84, %p85
    %p88 = scmp.ne.s32.totalorder %s73, %s87
    %p89 = scmp.eq.s32.totalorder %s16, 0
    %p90 = por %p88, %p89
    %s92 = sadd.s32 %s91, 1
    %p95 = scmp.eq.s32.totalorder %s10, 3
    %p96 = scmp.ne.s32.totalorder %s91, %s93
    %p97 = scmp.eq.s32.totalorder %s10, 0
    %p98 = por %p96, %p97
    %p99 = scmp.ne.s32.totalorder %s91, %s93
    %p100 = scmp.eq.s32.totalorder %s15, 3
    %p101 = por %p99, %p100
    %p102 = scmp.ne.s32.totalorder %s93, %s94
    %p103 = scmp.eq.s32.totalorder %s15, 0
    %p104 = por %p102, %p103
    %p105 = scmp.ne.s32.totalorder %s93, %s94
    %p106 = scmp.eq.s32.totalorder %s16, 3
    %p107 = por %p105, %p106
    %p109 = scmp.ne.s32.totalorder %s94, %s108
    %p110 = scmp.eq.s32.totalorder %s16, 0
    %p111 = por %p109, %p110
    %s113 = sadd.s32 %s112, 1
    %p116 = scmp.eq.s32.totalorder %s10, 3
    %p117 = scmp.ne.s32.totalorder %s112, %s114
    %p118 = scmp.eq.s32.totalorder %s10, 0
    %p119 = por %p117, %p118
    %p120 = scmp.ne.s32.totalorder %s112, %s114
    %p121 = scmp.eq.s32.totalorder %s15, 3
    %p122 = por %p120, %p121
    %p123 = scmp.ne.s32.totalorder %s114, %s115
    %p124 = scmp.eq.s32.totalorder %s15, 0
    %p125 = por %p123, %p124
    %p126 = scmp.ne.s32.totalorder %s114, %s115
    %p127 = scmp.eq.s32.totalorder %s16, 3
    %p128 = por %p126, %p127
    %p130 = scmp.ne.s32.totalorder %s115, %s129
    %p131 = scmp.eq.s32.totalorder %s16, 0
    %p132 = por %p130, %p131
    %p133 = scmp.le.s32.totalorder 1, %s10
    %p134 = scmp.lt.s32.totalorder %s10, 5
    %p135 = pnand %p133, %p134
    %p136 = pneg %p135
    // Predicated region
    $region9: #{generator_forward.6} parent=5 // pred_check
      _
    $region10: #{generator_forward.6} parent=5 // pred_check_branch
      %138 = sbr.rel (%p135) target = $region12
    $region11: #{generator_forward.6} parent=5 // pred_region
      %s139 = ssub.s32 %s10, 1
      // Predicated region
      $region13: #{generator_forward.6} parent=11 // pred_check
        %p140 = pneg %p83
      $region14: #{generator_forward.6} parent=11 // pred_check_branch
        %142 = sbr.rel (%p140) target = $region16
      $region15: #{generator_forward.6} parent=11 // pred_region
        _
      $region16: #{generator_forward.6} parent=11 // pred_fallthru
        _
      // Predicated region
      $region17: #{generator_forward.6} parent=11 // pred_check
        %p143 = pneg %p104
      $region18: #{generator_forward.6} parent=11 // pred_check_branch
        %145 = sbr.rel (%p143) target = $region20
      $region19: #{generator_forward.6} parent=11 // pred_region
        _
      $region20: #{generator_forward.6} parent=11 // pred_fallthru
        _
    $region12: #{generator_forward.6} parent=5 // pred_fallthru
      _
    %p146 = scmp.lt.s32.totalorder %s10, 4
    // Predicated region
    $region21: #{generator_forward.6} parent=5 // pred_check
      %p147 = pneg %p146
    $region22: #{generator_forward.6} parent=5 // pred_check_branch
      %149 = sbr.rel (%p147) target = $region24
    $region23: #{generator_forward.6} parent=5 // pred_region
      // Predicated region
      $region25: #{generator_forward.6} parent=23 // pred_check
        %p150 = pneg %p30
      $region26: #{generator_forward.6} parent=23 // pred_check_branch
        %152 = sbr.rel (%p150) target = $region28
      $region27: #{generator_forward.6} parent=23 // pred_region
        %p153 = scmp.lt.s32.totalorder %s10, 3
        %s154 = scalar_select %p153, %s10, 3
        %s155 = smul.addr %s154, 128
        %s156 = smul.addr %s155, 4
        %s157 = scalar_lea.vmem %s0, %s156
      $region28: #{generator_forward.6} parent=23 // pred_fallthru
        _
      // Predicated region
      $region29: #{generator_forward.6} parent=23 // pred_check
        %p158 = pneg %p56
      $region30: #{generator_forward.6} parent=23 // pred_check_branch
        %160 = sbr.rel (%p158) target = $region32
      $region31: #{generator_forward.6} parent=23 // pred_region
        %p161 = scmp.lt.s32.totalorder %s10, 3
        %s162 = scalar_select %p161, %s10, 3
        %s163 = smul.addr %s162, 128
        %s164 = smul.addr %s163, 4
        %s165 = scalar_lea.vmem %s1, %s164
      $region32: #{generator_forward.6} parent=23 // pred_fallthru
        _
    $region24: #{generator_forward.6} parent=5 // pred_fallthru
      _
    %p166 = scmp.le.s32.totalorder 1, %s10
    %p167 = scmp.lt.s32.totalorder %s10, 5
    %p168 = pnand %p166, %p167
    %p169 = pneg %p168
    // Predicated region
    $region33: #{generator_forward.6} parent=5 // pred_check
      _
    $region34: #{generator_forward.6} parent=5 // pred_check_branch
      %171 = sbr.rel (%p168) target = $region36
    $region35: #{generator_forward.6} parent=5 // pred_region
      %s172 = ssub.s32 %s10, 1
      %p173 = scmp.lt.s32.totalorder %s15, 3
      %s174 = scalar_select %p173, %s15, 3
      %s175 = smul.addr %s174, 128
      %s176 = smul.addr %s175, 4
      %s177 = scalar_lea.vmem %s0, %s176
      %p178 = pneg %p36
      %p179 = pneg %p33
      %p180 = scmp.lt.s32.totalorder %s15, 3
      %s181 = scalar_select %p180, %s15, 3
      %s182 = smul.addr %s181, 128
      %s183 = smul.addr %s182, 4
      %s184 = scalar_lea.vmem %s1, %s183
      %p185 = pneg %p62
      %p186 = pneg %p59
      %p187 = pneg %p83
      %p188 = pneg %p80
      %p189 = pneg %p104
      %p190 = pneg %p101
      %p191 = pneg %p125
      %p192 = pneg %p122
      %p193 = scmp.lt.s32.totalorder %s15, 3
      %s194 = scalar_select %p193, %s15, 3
      %s195 = smul.addr %s194, 128
      %s196 = smul.addr %s195, 4
      %s197 = scalar_lea.vmem %s0, %s196
      %p198 = scmp.lt.s32.totalorder %s15, 3
      %s199 = scalar_select %p198, %s15, 3
      %s200 = smul.addr %s199, 128
      %s201 = smul.addr %s200, 4
      %s202 = scalar_lea.vmem %s1, %s201
      %v204 = vld [vmem:[%s197] sm:$0xff]
      %v205 = vld [vmem:[%s197 + $0x8] sm:$0xff]
      %v206 = vld [vmem:[%s197 + $0x10] sm:$0xff]
      %v207 = vld [vmem:[%s197 + $0x18] sm:$0xff]
      %v208 = vld [vmem:[%s197 + $0x20] sm:$0xff]
      %v209 = vld [vmem:[%s197 + $0x28] sm:$0xff]
      %v210 = vld [vmem:[%s197 + $0x30] sm:$0xff]
      %v211 = vld [vmem:[%s197 + $0x38] sm:$0xff]
      %v212 = vld [vmem:[%s197 + $0x40] sm:$0xff]
      %v213 = vld [vmem:[%s197 + $0x48] sm:$0xff]
      %v214 = vld [vmem:[%s197 + $0x50] sm:$0xff]
      %v215 = vld [vmem:[%s197 + $0x58] sm:$0xff]
      %v216 = vld [vmem:[%s197 + $0x60] sm:$0xff]
      %v217 = vld [vmem:[%s197 + $0x68] sm:$0xff]
      %v218 = vld [vmem:[%s197 + $0x70] sm:$0xff]
      %v219 = vld [vmem:[%s197 + $0x78] sm:$0xff]
      %v220 = vld [vmem:[%s197 + $0x80] sm:$0xff]
      %v221 = vld [vmem:[%s197 + $0x88] sm:$0xff]
      %v222 = vld [vmem:[%s197 + $0x90] sm:$0xff]
      %v223 = vld [vmem:[%s197 + $0x98] sm:$0xff]
      %v224 = vld [vmem:[%s197 + $0xa0] sm:$0xff]
      %v225 = vld [vmem:[%s197 + $0xa8] sm:$0xff]
      %v226 = vld [vmem:[%s197 + $0xb0] sm:$0xff]
      %v227 = vld [vmem:[%s197 + $0xb8] sm:$0xff]
      %v228 = vld [vmem:[%s197 + $0xc0] sm:$0xff]
      %v229 = vld [vmem:[%s197 + $0xc8] sm:$0xff]
      %v230 = vld [vmem:[%s197 + $0xd0] sm:$0xff]
      %v231 = vld [vmem:[%s197 + $0xd8] sm:$0xff]
      %v232 = vld [vmem:[%s197 + $0xe0] sm:$0xff]
      %v233 = vld [vmem:[%s197 + $0xe8] sm:$0xff]
      %v234 = vld [vmem:[%s197 + $0xf0] sm:$0xff]
      %v235 = vld [vmem:[%s197 + $0xf8] sm:$0xff]
      %v236 = vld [vmem:[%s197 + $0x100] sm:$0xff]
      %v237 = vld [vmem:[%s197 + $0x108] sm:$0xff]
      %v238 = vld [vmem:[%s197 + $0x110] sm:$0xff]
      %v239 = vld [vmem:[%s197 + $0x118] sm:$0xff]
      %v240 = vld [vmem:[%s197 + $0x120] sm:$0xff]
      %v241 = vld [vmem:[%s197 + $0x128] sm:$0xff]
      %v242 = vld [vmem:[%s197 + $0x130] sm:$0xff]
      %v243 = vld [vmem:[%s197 + $0x138] sm:$0xff]
      %v244 = vld [vmem:[%s197 + $0x140] sm:$0xff]
      %v245 = vld [vmem:[%s197 + $0x148] sm:$0xff]
      %v246 = vld [vmem:[%s197 + $0x150] sm:$0xff]
      %v247 = vld [vmem:[%s197 + $0x158] sm:$0xff]
      %v248 = vld [vmem:[%s197 + $0x160] sm:$0xff]
      %v249 = vld [vmem:[%s197 + $0x168] sm:$0xff]
      %v250 = vld [vmem:[%s197 + $0x170] sm:$0xff]
      %v251 = vld [vmem:[%s197 + $0x178] sm:$0xff]
      %v252 = vld [vmem:[%s197 + $0x180] sm:$0xff]
      %v253 = vld [vmem:[%s197 + $0x188] sm:$0xff]
      %v254 = vld [vmem:[%s197 + $0x190] sm:$0xff]
      %v255 = vld [vmem:[%s197 + $0x198] sm:$0xff]
      %v256 = vld [vmem:[%s197 + $0x1a0] sm:$0xff]
      %v257 = vld [vmem:[%s197 + $0x1a8] sm:$0xff]
      %v258 = vld [vmem:[%s197 + $0x1b0] sm:$0xff]
      %v259 = vld [vmem:[%s197 + $0x1b8] sm:$0xff]
      %v260 = vld [vmem:[%s197 + $0x1c0] sm:$0xff]
      %v261 = vld [vmem:[%s197 + $0x1c8] sm:$0xff]
      %v262 = vld [vmem:[%s197 + $0x1d0] sm:$0xff]
      %v263 = vld [vmem:[%s197 + $0x1d8] sm:$0xff]
      %v264 = vld [vmem:[%s197 + $0x1e0] sm:$0xff]
      %v265 = vld [vmem:[%s197 + $0x1e8] sm:$0xff]
      %v266 = vld [vmem:[%s197 + $0x1f0] sm:$0xff]
      %v267 = vld [vmem:[%s197 + $0x1f8] sm:$0xff]
      %v268 = vld [vmem:[%s202] sm:$0xf]
      %v269 = vld [vmem:[%s202 + $0x4] sm:$0xf]
      %v270 = vld [vmem:[%s202 + $0x8] sm:$0xf]
      %v271 = vld [vmem:[%s202 + $0xc] sm:$0xf]
      %v272 = vld [vmem:[%s202 + $0x10] sm:$0xf]
      %v273 = vld [vmem:[%s202 + $0x14] sm:$0xf]
      %v274 = vld [vmem:[%s202 + $0x18] sm:$0xf]
      %v275 = vld [vmem:[%s202 + $0x1c] sm:$0xf]
      %v276 = vld [vmem:[%s202 + $0x20] sm:$0xf]
      %v277 = vld [vmem:[%s202 + $0x24] sm:$0xf]
      %v278 = vld [vmem:[%s202 + $0x28] sm:$0xf]
      %v279 = vld [vmem:[%s202 + $0x2c] sm:$0xf]
      %v280 = vld [vmem:[%s202 + $0x30] sm:$0xf]
      %v281 = vld [vmem:[%s202 + $0x34] sm:$0xf]
      %v282 = vld [vmem:[%s202 + $0x38] sm:$0xf]
      %v283 = vld [vmem:[%s202 + $0x3c] sm:$0xf]
      %v284 = vld [vmem:[%s202 + $0x40] sm:$0xf]
      %v285 = vld [vmem:[%s202 + $0x44] sm:$0xf]
      %v286 = vld [vmem:[%s202 + $0x48] sm:$0xf]
      %v287 = vld [vmem:[%s202 + $0x4c] sm:$0xf]
      %v288 = vld [vmem:[%s202 + $0x50] sm:$0xf]
      %v289 = vld [vmem:[%s202 + $0x54] sm:$0xf]
      %v290 = vld [vmem:[%s202 + $0x58] sm:$0xf]
      %v291 = vld [vmem:[%s202 + $0x5c] sm:$0xf]
      %v292 = vld [vmem:[%s202 + $0x60] sm:$0xf]
      %v293 = vld [vmem:[%s202 + $0x64] sm:$0xf]
      %v294 = vld [vmem:[%s202 + $0x68] sm:$0xf]
      %v295 = vld [vmem:[%s202 + $0x6c] sm:$0xf]
      %v296 = vld [vmem:[%s202 + $0x70] sm:$0xf]
      %v297 = vld [vmem:[%s202 + $0x74] sm:$0xf]
      %v298 = vld [vmem:[%s202 + $0x78] sm:$0xf]
      %v299 = vld [vmem:[%s202 + $0x7c] sm:$0xf]
      %v300 = vld [vmem:[%s202 + $0x80] sm:$0xf]
      %v301 = vld [vmem:[%s202 + $0x84] sm:$0xf]
      %v302 = vld [vmem:[%s202 + $0x88] sm:$0xf]
      %v303 = vld [vmem:[%s202 + $0x8c] sm:$0xf]
      %v304 = vld [vmem:[%s202 + $0x90] sm:$0xf]
      %v305 = vld [vmem:[%s202 + $0x94] sm:$0xf]
      %v306 = vld [vmem:[%s202 + $0x98] sm:$0xf]
      %v307 = vld [vmem:[%s202 + $0x9c] sm:$0xf]
      %v308 = vld [vmem:[%s202 + $0xa0] sm:$0xf]
      %v309 = vld [vmem:[%s202 + $0xa4] sm:$0xf]
      %v310 = vld [vmem:[%s202 + $0xa8] sm:$0xf]
      %v311 = vld [vmem:[%s202 + $0xac] sm:$0xf]
      %v312 = vld [vmem:[%s202 + $0xb0] sm:$0xf]
      %v313 = vld [vmem:[%s202 + $0xb4] sm:$0xf]
      %v314 = vld [vmem:[%s202 + $0xb8] sm:$0xf]
      %v315 = vld [vmem:[%s202 + $0xbc] sm:$0xf]
      %v316 = vld [vmem:[%s202 + $0xc0] sm:$0xf]
      %v317 = vld [vmem:[%s202 + $0xc4] sm:$0xf]
      %v318 = vld [vmem:[%s202 + $0xc8] sm:$0xf]
      %v319 = vld [vmem:[%s202 + $0xcc] sm:$0xf]
      %v320 = vld [vmem:[%s202 + $0xd0] sm:$0xf]
      %v321 = vld [vmem:[%s202 + $0xd4] sm:$0xf]
      %v322 = vld [vmem:[%s202 + $0xd8] sm:$0xf]
      %v323 = vld [vmem:[%s202 + $0xdc] sm:$0xf]
      %v324 = vld [vmem:[%s202 + $0xe0] sm:$0xf]
      %v325 = vld [vmem:[%s202 + $0xe4] sm:$0xf]
      %v326 = vld [vmem:[%s202 + $0xe8] sm:$0xf]
      %v327 = vld [vmem:[%s202 + $0xec] sm:$0xf]
      %v328 = vld [vmem:[%s202 + $0xf0] sm:$0xf]
      %v329 = vld [vmem:[%s202 + $0xf4] sm:$0xf]
      %v330 = vld [vmem:[%s202 + $0xf8] sm:$0xf]
      %v331 = vld [vmem:[%s202 + $0xfc] sm:$0xf]
      %v332 = vld [vmem:[%s202 + $0x100] sm:$0xf]
      %v333 = vld [vmem:[%s202 + $0x104] sm:$0xf]
      %v334 = vld [vmem:[%s202 + $0x108] sm:$0xf]
      %v335 = vld [vmem:[%s202 + $0x10c] sm:$0xf]
      %v336 = vld [vmem:[%s202 + $0x110] sm:$0xf]
      %v337 = vld [vmem:[%s202 + $0x114] sm:$0xf]
      %v338 = vld [vmem:[%s202 + $0x118] sm:$0xf]
      %v339 = vld [vmem:[%s202 + $0x11c] sm:$0xf]
      %v340 = vld [vmem:[%s202 + $0x120] sm:$0xf]
      %v341 = vld [vmem:[%s202 + $0x124] sm:$0xf]
      %v342 = vld [vmem:[%s202 + $0x128] sm:$0xf]
      %v343 = vld [vmem:[%s202 + $0x12c] sm:$0xf]
      %v344 = vld [vmem:[%s202 + $0x130] sm:$0xf]
      %v345 = vld [vmem:[%s202 + $0x134] sm:$0xf]
      %v346 = vld [vmem:[%s202 + $0x138] sm:$0xf]
      %v347 = vld [vmem:[%s202 + $0x13c] sm:$0xf]
      %v348 = vld [vmem:[%s202 + $0x140] sm:$0xf]
      %v349 = vld [vmem:[%s202 + $0x144] sm:$0xf]
      %v350 = vld [vmem:[%s202 + $0x148] sm:$0xf]
      %v351 = vld [vmem:[%s202 + $0x14c] sm:$0xf]
      %v352 = vld [vmem:[%s202 + $0x150] sm:$0xf]
      %v353 = vld [vmem:[%s202 + $0x154] sm:$0xf]
      %v354 = vld [vmem:[%s202 + $0x158] sm:$0xf]
      %v355 = vld [vmem:[%s202 + $0x15c] sm:$0xf]
      %v356 = vld [vmem:[%s202 + $0x160] sm:$0xf]
      %v357 = vld [vmem:[%s202 + $0x164] sm:$0xf]
      %v358 = vld [vmem:[%s202 + $0x168] sm:$0xf]
      %v359 = vld [vmem:[%s202 + $0x16c] sm:$0xf]
      %v360 = vld [vmem:[%s202 + $0x170] sm:$0xf]
      %v361 = vld [vmem:[%s202 + $0x174] sm:$0xf]
      %v362 = vld [vmem:[%s202 + $0x178] sm:$0xf]
      %v363 = vld [vmem:[%s202 + $0x17c] sm:$0xf]
      %v364 = vld [vmem:[%s202 + $0x180] sm:$0xf]
      %v365 = vld [vmem:[%s202 + $0x184] sm:$0xf]
      %v366 = vld [vmem:[%s202 + $0x188] sm:$0xf]
      %v367 = vld [vmem:[%s202 + $0x18c] sm:$0xf]
      %v368 = vld [vmem:[%s202 + $0x190] sm:$0xf]
      %v369 = vld [vmem:[%s202 + $0x194] sm:$0xf]
      %v370 = vld [vmem:[%s202 + $0x198] sm:$0xf]
      %v371 = vld [vmem:[%s202 + $0x19c] sm:$0xf]
      %v372 = vld [vmem:[%s202 + $0x1a0] sm:$0xf]
      %v373 = vld [vmem:[%s202 + $0x1a4] sm:$0xf]
      %v374 = vld [vmem:[%s202 + $0x1a8] sm:$0xf]
      %v375 = vld [vmem:[%s202 + $0x1ac] sm:$0xf]
      %v376 = vld [vmem:[%s202 + $0x1b0] sm:$0xf]
      %v377 = vld [vmem:[%s202 + $0x1b4] sm:$0xf]
      %v378 = vld [vmem:[%s202 + $0x1b8] sm:$0xf]
      %v379 = vld [vmem:[%s202 + $0x1bc] sm:$0xf]
      %v380 = vld [vmem:[%s202 + $0x1c0] sm:$0xf]
      %v381 = vld [vmem:[%s202 + $0x1c4] sm:$0xf]
      %v382 = vld [vmem:[%s202 + $0x1c8] sm:$0xf]
      %v383 = vld [vmem:[%s202 + $0x1cc] sm:$0xf]
      %v384 = vld [vmem:[%s202 + $0x1d0] sm:$0xf]
      %v385 = vld [vmem:[%s202 + $0x1d4] sm:$0xf]
      %v386 = vld [vmem:[%s202 + $0x1d8] sm:$0xf]
      %v387 = vld [vmem:[%s202 + $0x1dc] sm:$0xf]
      %v388 = vld [vmem:[%s202 + $0x1e0] sm:$0xf]
      %v389 = vld [vmem:[%s202 + $0x1e4] sm:$0xf]
      %v390 = vld [vmem:[%s202 + $0x1e8] sm:$0xf]
      %v391 = vld [vmem:[%s202 + $0x1ec] sm:$0xf]
      %v392 = vld [vmem:[%s202 + $0x1f0] sm:$0xf]
      %v393 = vld [vmem:[%s202 + $0x1f4] sm:$0xf]
      %v394 = vld [vmem:[%s202 + $0x1f8] sm:$0xf]
      %v395 = vld [vmem:[%s202 + $0x1fc] sm:$0xf]
      %v460 = vunpack.c.l.b16 %v204
      %v461 = vunpack.c.h.b16 %v204
      %v462 = vunpack.c.l.b16 %v205
      %v463 = vunpack.c.h.b16 %v205
      %v464 = vunpack.c.l.b16 %v206
      %v465 = vunpack.c.h.b16 %v206
      %v466 = vunpack.c.l.b16 %v207
      %v467 = vunpack.c.h.b16 %v207
      %v468 = vunpack.c.l.b16 %v208
      %v469 = vunpack.c.h.b16 %v208
      %v470 = vunpack.c.l.b16 %v209
      %v471 = vunpack.c.h.b16 %v209
      %v472 = vunpack.c.l.b16 %v210
      %v473 = vunpack.c.h.b16 %v210
      %v474 = vunpack.c.l.b16 %v211
      %v475 = vunpack.c.h.b16 %v211
      %v476 = vunpack.c.l.b16 %v212
      %v477 = vunpack.c.h.b16 %v212
      %v478 = vunpack.c.l.b16 %v213
      %v479 = vunpack.c.h.b16 %v213
      %v480 = vunpack.c.l.b16 %v214
      %v481 = vunpack.c.h.b16 %v214
      %v482 = vunpack.c.l.b16 %v215
      %v483 = vunpack.c.h.b16 %v215
      %v484 = vunpack.c.l.b16 %v216
      %v485 = vunpack.c.h.b16 %v216
      %v486 = vunpack.c.l.b16 %v217
      %v487 = vunpack.c.h.b16 %v217
      %v488 = vunpack.c.l.b16 %v218
      %v489 = vunpack.c.h.b16 %v218
      %v490 = vunpack.c.l.b16 %v219
      %v491 = vunpack.c.h.b16 %v219
      %v492 = vunpack.c.l.b16 %v220
      %v493 = vunpack.c.h.b16 %v220
      %v494 = vunpack.c.l.b16 %v221
      %v495 = vunpack.c.h.b16 %v221
      %v496 = vunpack.c.l.b16 %v222
      %v497 = vunpack.c.h.b16 %v222
      %v498 = vunpack.c.l.b16 %v223
      %v499 = vunpack.c.h.b16 %v223
      %v500 = vunpack.c.l.b16 %v224
      %v501 = vunpack.c.h.b16 %v224
      %v502 = vunpack.c.l.b16 %v225
      %v503 = vunpack.c.h.b16 %v225
      %v504 = vunpack.c.l.b16 %v226
      %v505 = vunpack.c.h.b16 %v226
      %v506 = vunpack.c.l.b16 %v227
      %v507 = vunpack.c.h.b16 %v227
      %v508 = vunpack.c.l.b16 %v228
      %v509 = vunpack.c.h.b16 %v228
      %v510 = vunpack.c.l.b16 %v229
      %v511 = vunpack.c.h.b16 %v229
      %v512 = vunpack.c.l.b16 %v230
      %v513 = vunpack.c.h.b16 %v230
      %v514 = vunpack.c.l.b16 %v231
      %v515 = vunpack.c.h.b16 %v231
      %v516 = vunpack.c.l.b16 %v232
      %v517 = vunpack.c.h.b16 %v232
      %v518 = vunpack.c.l.b16 %v233
      %v519 = vunpack.c.h.b16 %v233
      %v520 = vunpack.c.l.b16 %v234
      %v521 = vunpack.c.h.b16 %v234
      %v522 = vunpack.c.l.b16 %v235
      %v523 = vunpack.c.h.b16 %v235
      %v524 = vunpack.c.l.b16 %v236
      %v525 = vunpack.c.h.b16 %v236
      %v526 = vunpack.c.l.b16 %v237
      %v527 = vunpack.c.h.b16 %v237
      %v528 = vunpack.c.l.b16 %v238
      %v529 = vunpack.c.h.b16 %v238
      %v530 = vunpack.c.l.b16 %v239
      %v531 = vunpack.c.h.b16 %v239
      %v532 = vunpack.c.l.b16 %v240
      %v533 = vunpack.c.h.b16 %v240
      %v534 = vunpack.c.l.b16 %v241
      %v535 = vunpack.c.h.b16 %v241
      %v536 = vunpack.c.l.b16 %v242
      %v537 = vunpack.c.h.b16 %v242
      %v538 = vunpack.c.l.b16 %v243
      %v539 = vunpack.c.h.b16 %v243
      %v540 = vunpack.c.l.b16 %v244
      %v541 = vunpack.c.h.b16 %v244
      %v542 = vunpack.c.l.b16 %v245
      %v543 = vunpack.c.h.b16 %v245
      %v544 = vunpack.c.l.b16 %v246
      %v545 = vunpack.c.h.b16 %v246
      %v546 = vunpack.c.l.b16 %v247
      %v547 = vunpack.c.h.b16 %v247
      %v548 = vunpack.c.l.b16 %v248
      %v549 = vunpack.c.h.b16 %v248
      %v550 = vunpack.c.l.b16 %v249
      %v551 = vunpack.c.h.b16 %v249
      %v552 = vunpack.c.l.b16 %v250
      %v553 = vunpack.c.h.b16 %v250
      %v554 = vunpack.c.l.b16 %v251
      %v555 = vunpack.c.h.b16 %v251
      %v556 = vunpack.c.l.b16 %v252
      %v557 = vunpack.c.h.b16 %v252
      %v558 = vunpack.c.l.b16 %v253
      %v559 = vunpack.c.h.b16 %v253
      %v560 = vunpack.c.l.b16 %v254
      %v561 = vunpack.c.h.b16 %v254
      %v562 = vunpack.c.l.b16 %v255
      %v563 = vunpack.c.h.b16 %v255
      %v564 = vunpack.c.l.b16 %v256
      %v565 = vunpack.c.h.b16 %v256
      %v566 = vunpack.c.l.b16 %v257
      %v567 = vunpack.c.h.b16 %v257
      %v568 = vunpack.c.l.b16 %v258
      %v569 = vunpack.c.h.b16 %v258
      %v570 = vunpack.c.l.b16 %v259
      %v571 = vunpack.c.h.b16 %v259
      %v572 = vunpack.c.l.b16 %v260
      %v573 = vunpack.c.h.b16 %v260
      %v574 = vunpack.c.l.b16 %v261
      %v575 = vunpack.c.h.b16 %v261
      %v576 = vunpack.c.l.b16 %v262
      %v577 = vunpack.c.h.b16 %v262
      %v578 = vunpack.c.l.b16 %v263
      %v579 = vunpack.c.h.b16 %v263
      %v580 = vunpack.c.l.b16 %v264
      %v581 = vunpack.c.h.b16 %v264
      %v582 = vunpack.c.l.b16 %v265
      %v583 = vunpack.c.h.b16 %v265
      %v584 = vunpack.c.l.b16 %v266
      %v585 = vunpack.c.h.b16 %v266
      %v586 = vunpack.c.l.b16 %v267
      %v587 = vunpack.c.h.b16 %v267
      %v588 = vpack.c.b16 %v468, %v460
      %v589 = vpack.c.b16 %v469, %v461
      %v590 = vpack.c.b16 %v470, %v462
      %v591 = vpack.c.b16 %v471, %v463
      %v592 = vpack.c.b16 %v472, %v464
      %v593 = vpack.c.b16 %v473, %v465
      %v594 = vpack.c.b16 %v474, %v466
      %v595 = vpack.c.b16 %v475, %v467
      %v596 = vpack.c.b16 %v484, %v476
      %v597 = vpack.c.b16 %v485, %v477
      %v598 = vpack.c.b16 %v486, %v478
      %v599 = vpack.c.b16 %v487, %v479
      %v600 = vpack.c.b16 %v488, %v480
      %v601 = vpack.c.b16 %v489, %v481
      %v602 = vpack.c.b16 %v490, %v482
      %v603 = vpack.c.b16 %v491, %v483
      %v604 = vpack.c.b16 %v500, %v492
      %v605 = vpack.c.b16 %v501, %v493
      %v606 = vpack.c.b16 %v502, %v494
      %v607 = vpack.c.b16 %v503, %v495
      %v608 = vpack.c.b16 %v504, %v496
      %v609 = vpack.c.b16 %v505, %v497
      %v610 = vpack.c.b16 %v506, %v498
      %v611 = vpack.c.b16 %v507, %v499
      %v612 = vpack.c.b16 %v516, %v508
      %v613 = vpack.c.b16 %v517, %v509
      %v614 = vpack.c.b16 %v518, %v510
      %v615 = vpack.c.b16 %v519, %v511
      %v616 = vpack.c.b16 %v520, %v512
      %v617 = vpack.c.b16 %v521, %v513
      %v618 = vpack.c.b16 %v522, %v514
      %v619 = vpack.c.b16 %v523, %v515
      %v620 = vpack.c.b16 %v532, %v524
      %v621 = vpack.c.b16 %v533, %v525
      %v622 = vpack.c.b16 %v534, %v526
      %v623 = vpack.c.b16 %v535, %v527
      %v624 = vpack.c.b16 %v536, %v528
      %v625 = vpack.c.b16 %v537, %v529
      %v626 = vpack.c.b16 %v538, %v530
      %v627 = vpack.c.b16 %v539, %v531
      %v628 = vpack.c.b16 %v548, %v540
      %v629 = vpack.c.b16 %v549, %v541
      %v630 = vpack.c.b16 %v550, %v542
      %v631 = vpack.c.b16 %v551, %v543
      %v632 = vpack.c.b16 %v552, %v544
      %v633 = vpack.c.b16 %v553, %v545
      %v634 = vpack.c.b16 %v554, %v546
      %v635 = vpack.c.b16 %v555, %v547
      %v636 = vpack.c.b16 %v564, %v556
      %v637 = vpack.c.b16 %v565, %v557
      %v638 = vpack.c.b16 %v566, %v558
      %v639 = vpack.c.b16 %v567, %v559
      %v640 = vpack.c.b16 %v568, %v560
      %v641 = vpack.c.b16 %v569, %v561
      %v642 = vpack.c.b16 %v570, %v562
      %v643 = vpack.c.b16 %v571, %v563
      %v644 = vpack.c.b16 %v580, %v572
      %v645 = vpack.c.b16 %v581, %v573
      %v646 = vpack.c.b16 %v582, %v574
      %v647 = vpack.c.b16 %v583, %v575
      %v648 = vpack.c.b16 %v584, %v576
      %v649 = vpack.c.b16 %v585, %v577
      %v650 = vpack.c.b16 %v586, %v578
      %v651 = vpack.c.b16 %v587, %v579
      %v844 = vunpack.c.l.b16 %v268
      %v845 = vunpack.c.l.b16 %v269
      %v846 = vunpack.c.l.b16 %v270
      %v847 = vunpack.c.l.b16 %v271
      %v848 = vunpack.c.l.b16 %v272
      %v849 = vunpack.c.l.b16 %v273
      %v850 = vunpack.c.l.b16 %v274
      %v851 = vunpack.c.l.b16 %v275
      %v852 = vunpack.c.l.b16 %v276
      %v853 = vunpack.c.l.b16 %v277
      %v854 = vunpack.c.l.b16 %v278
      %v855 = vunpack.c.l.b16 %v279
      %v856 = vunpack.c.l.b16 %v280
      %v857 = vunpack.c.l.b16 %v281
      %v858 = vunpack.c.l.b16 %v282
      %v859 = vunpack.c.l.b16 %v283
      %v860 = vunpack.c.l.b16 %v284
      %v861 = vunpack.c.l.b16 %v285
      %v862 = vunpack.c.l.b16 %v286
      %v863 = vunpack.c.l.b16 %v287
      %v864 = vunpack.c.l.b16 %v288
      %v865 = vunpack.c.l.b16 %v289
      %v866 = vunpack.c.l.b16 %v290
      %v867 = vunpack.c.l.b16 %v291
      %v868 = vunpack.c.l.b16 %v292
      %v869 = vunpack.c.l.b16 %v293
      %v870 = vunpack.c.l.b16 %v294
      %v871 = vunpack.c.l.b16 %v295
      %v872 = vunpack.c.l.b16 %v296
      %v873 = vunpack.c.l.b16 %v297
      %v874 = vunpack.c.l.b16 %v298
      %v875 = vunpack.c.l.b16 %v299
      %v876 = vunpack.c.l.b16 %v300
      %v877 = vunpack.c.l.b16 %v301
      %v878 = vunpack.c.l.b16 %v302
      %v879 = vunpack.c.l.b16 %v303
      %v880 = vunpack.c.l.b16 %v304
      %v881 = vunpack.c.l.b16 %v305
      %v882 = vunpack.c.l.b16 %v306
      %v883 = vunpack.c.l.b16 %v307
      %v884 = vunpack.c.l.b16 %v308
      %v885 = vunpack.c.l.b16 %v309
      %v886 = vunpack.c.l.b16 %v310
      %v887 = vunpack.c.l.b16 %v311
      %v888 = vunpack.c.l.b16 %v312
      %v889 = vunpack.c.l.b16 %v313
      %v890 = vunpack.c.l.b16 %v314
      %v891 = vunpack.c.l.b16 %v315
      %v892 = vunpack.c.l.b16 %v316
      %v893 = vunpack.c.l.b16 %v317
      %v894 = vunpack.c.l.b16 %v318
      %v895 = vunpack.c.l.b16 %v319
      %v896 = vunpack.c.l.b16 %v320
      %v897 = vunpack.c.l.b16 %v321
      %v898 = vunpack.c.l.b16 %v322
      %v899 = vunpack.c.l.b16 %v323
      %v900 = vunpack.c.l.b16 %v324
      %v901 = vunpack.c.l.b16 %v325
      %v902 = vunpack.c.l.b16 %v326
      %v903 = vunpack.c.l.b16 %v327
      %v904 = vunpack.c.l.b16 %v328
      %v905 = vunpack.c.l.b16 %v329
      %v906 = vunpack.c.l.b16 %v330
      %v907 = vunpack.c.l.b16 %v331
      %v908 = vunpack.c.l.b16 %v332
      %v909 = vunpack.c.l.b16 %v333
      %v910 = vunpack.c.l.b16 %v334
      %v911 = vunpack.c.l.b16 %v335
      %v912 = vunpack.c.l.b16 %v336
      %v913 = vunpack.c.l.b16 %v337
      %v914 = vunpack.c.l.b16 %v338
      %v915 = vunpack.c.l.b16 %v339
      %v916 = vunpack.c.l.b16 %v340
      %v917 = vunpack.c.l.b16 %v341
      %v918 = vunpack.c.l.b16 %v342
      %v919 = vunpack.c.l.b16 %v343
      %v920 = vunpack.c.l.b16 %v344
      %v921 = vunpack.c.l.b16 %v345
      %v922 = vunpack.c.l.b16 %v346
      %v923 = vunpack.c.l.b16 %v347
      %v924 = vunpack.c.l.b16 %v348
      %v925 = vunpack.c.l.b16 %v349
      %v926 = vunpack.c.l.b16 %v350
      %v927 = vunpack.c.l.b16 %v351
      %v928 = vunpack.c.l.b16 %v352
      %v929 = vunpack.c.l.b16 %v353
      %v930 = vunpack.c.l.b16 %v354
      %v931 = vunpack.c.l.b16 %v355
      %v932 = vunpack.c.l.b16 %v356
      %v933 = vunpack.c.l.b16 %v357
      %v934 = vunpack.c.l.b16 %v358
      %v935 = vunpack.c.l.b16 %v359
      %v936 = vunpack.c.l.b16 %v360
      %v937 = vunpack.c.l.b16 %v361
      %v938 = vunpack.c.l.b16 %v362
      %v939 = vunpack.c.l.b16 %v363
      %v940 = vunpack.c.l.b16 %v364
      %v941 = vunpack.c.l.b16 %v365
      %v942 = vunpack.c.l.b16 %v366
      %v943 = vunpack.c.l.b16 %v367
      %v944 = vunpack.c.l.b16 %v368
      %v945 = vunpack.c.l.b16 %v369
      %v946 = vunpack.c.l.b16 %v370
      %v947 = vunpack.c.l.b16 %v371
      %v948 = vunpack.c.l.b16 %v372
      %v949 = vunpack.c.l.b16 %v373
      %v950 = vunpack.c.l.b16 %v374
      %v951 = vunpack.c.l.b16 %v375
      %v952 = vunpack.c.l.b16 %v376
      %v953 = vunpack.c.l.b16 %v377
      %v954 = vunpack.c.l.b16 %v378
      %v955 = vunpack.c.l.b16 %v379
      %v956 = vunpack.c.l.b16 %v380
      %v957 = vunpack.c.l.b16 %v381
      %v958 = vunpack.c.l.b16 %v382
      %v959 = vunpack.c.l.b16 %v383
      %v960 = vunpack.c.l.b16 %v384
      %v961 = vunpack.c.l.b16 %v385
      %v962 = vunpack.c.l.b16 %v386
      %v963 = vunpack.c.l.b16 %v387
      %v964 = vunpack.c.l.b16 %v388
      %v965 = vunpack.c.l.b16 %v389
      %v966 = vunpack.c.l.b16 %v390
      %v967 = vunpack.c.l.b16 %v391
      %v968 = vunpack.c.l.b16 %v392
      %v969 = vunpack.c.l.b16 %v393
      %v970 = vunpack.c.l.b16 %v394
      %v971 = vunpack.c.l.b16 %v395
      %v972 = vpack.c.b16 %v845, %v844
      %v973 = vpack.c.b16 %v847, %v846
      %v974 = vpack.c.b16 %v849, %v848
      %v975 = vpack.c.b16 %v851, %v850
      %v976 = vpack.c.b16 %v853, %v852
      %v977 = vpack.c.b16 %v855, %v854
      %v978 = vpack.c.b16 %v857, %v856
      %v979 = vpack.c.b16 %v859, %v858
      %v980 = vpack.c.b16 %v861, %v860
      %v981 = vpack.c.b16 %v863, %v862
      %v982 = vpack.c.b16 %v865, %v864
      %v983 = vpack.c.b16 %v867, %v866
      %v984 = vpack.c.b16 %v869, %v868
      %v985 = vpack.c.b16 %v871, %v870
      %v986 = vpack.c.b16 %v873, %v872
      %v987 = vpack.c.b16 %v875, %v874
      %v988 = vpack.c.b16 %v877, %v876
      %v989 = vpack.c.b16 %v879, %v878
      %v990 = vpack.c.b16 %v881, %v880
      %v991 = vpack.c.b16 %v883, %v882
      %v992 = vpack.c.b16 %v885, %v884
      %v993 = vpack.c.b16 %v887, %v886
      %v994 = vpack.c.b16 %v889, %v888
      %v995 = vpack.c.b16 %v891, %v890
      %v996 = vpack.c.b16 %v893, %v892
      %v997 = vpack.c.b16 %v895, %v894
      %v998 = vpack.c.b16 %v897, %v896
      %v999 = vpack.c.b16 %v899, %v898
      %v1000 = vpack.c.b16 %v901, %v900
      %v1001 = vpack.c.b16 %v903, %v902
      %v1002 = vpack.c.b16 %v905, %v904
      %v1003 = vpack.c.b16 %v907, %v906
      %v1004 = vpack.c.b16 %v909, %v908
      %v1005 = vpack.c.b16 %v911, %v910
      %v1006 = vpack.c.b16 %v913, %v912
      %v1007 = vpack.c.b16 %v915, %v914
      %v1008 = vpack.c.b16 %v917, %v916
      %v1009 = vpack.c.b16 %v919, %v918
      %v1010 = vpack.c.b16 %v921, %v920
      %v1011 = vpack.c.b16 %v923, %v922
      %v1012 = vpack.c.b16 %v925, %v924
      %v1013 = vpack.c.b16 %v927, %v926
      %v1014 = vpack.c.b16 %v929, %v928
      %v1015 = vpack.c.b16 %v931, %v930
      %v1016 = vpack.c.b16 %v933, %v932
      %v1017 = vpack.c.b16 %v935, %v934
      %v1018 = vpack.c.b16 %v937, %v936
      %v1019 = vpack.c.b16 %v939, %v938
      %v1020 = vpack.c.b16 %v941, %v940
      %v1021 = vpack.c.b16 %v943, %v942
      %v1022 = vpack.c.b16 %v945, %v944
      %v1023 = vpack.c.b16 %v947, %v946
      %v1024 = vpack.c.b16 %v949, %v948
      %v1025 = vpack.c.b16 %v951, %v950
      %v1026 = vpack.c.b16 %v953, %v952
      %v1027 = vpack.c.b16 %v955, %v954
      %v1028 = vpack.c.b16 %v957, %v956
      %v1029 = vpack.c.b16 %v959, %v958
      %v1030 = vpack.c.b16 %v961, %v960
      %v1031 = vpack.c.b16 %v963, %v962
      %v1032 = vpack.c.b16 %v965, %v964
      %v1033 = vpack.c.b16 %v967, %v966
      %v1034 = vpack.c.b16 %v969, %v968
      %v1035 = vpack.c.b16 %v971, %v970
      %1100 = vmatprep.subr.bf16.mxu0 0
      %1101 = vmatpush1.bf16.msra.mxu0 %v979
      %1102 = vmatprep.subr.bf16.mxu0 0
      %1103 = vmatpush1.bf16.msra.mxu0 %v978
      %1104 = vmatprep.subr.bf16.mxu0 0
      %1105 = vmatpush1.bf16.msra.mxu0 %v977
      %1106 = vmatprep.subr.bf16.mxu0 0
      %1107 = vmatpush1.bf16.msra.mxu0 %v976
      %1108 = vmatprep.subr.bf16.mxu0 0
      %1109 = vmatpush1.bf16.msra.mxu0 %v975
      %1110 = vmatprep.subr.bf16.mxu0 0
      %1111 = vmatpush1.bf16.msra.mxu0 %v974
      %1112 = vmatprep.subr.bf16.mxu0 0
      %1113 = vmatpush1.bf16.msra.mxu0 %v973
      %1114 = vmatprep.subr.bf16.mxu0 0
      %1115 = vmatpush1.bf16.msra.mxu0 %v972
      %1116 = vmatprep.subr.bf16.mxu0 0
      %1117 = vmatpush2.bf16.msra.mxu0 %v987
      %1118 = vmatprep.subr.bf16.mxu0 0
      %1119 = vmatpush2.bf16.msra.mxu0 %v986
      %1120 = vmatprep.subr.bf16.mxu0 0
      %1121 = vmatpush2.bf16.msra.mxu0 %v985
      %1122 = vmatprep.subr.bf16.mxu0 0
      %1123 = vmatpush2.bf16.msra.mxu0 %v984
      %1124 = vmatprep.subr.bf16.mxu0 0
      %1125 = vmatpush2.bf16.msra.mxu0 %v983
      %1126 = vmatprep.subr.bf16.mxu0 0
      %1127 = vmatpush2.bf16.msra.mxu0 %v982
      %1128 = vmatprep.subr.bf16.mxu0 0
      %1129 = vmatpush2.bf16.msra.mxu0 %v981
      %1130 = vmatprep.subr.bf16.mxu0 0
      %1131 = vmatpush2.bf16.msra.mxu0 %v980
      %1132 = vmatprep.mubr.bf16.mxu0 %v589
      %1133 = vmatmul.mubr.bf16.gmra.mxu0 %v588
      %v1134 = vpop.f32.mrf.mxu0
      %v1135 = vadd.f32 0.0, %v1134
      %v1136 = vpop.f32.mrf.mxu0
      %v1137 = vpop.f32.mrf.mxu0
      %v1138 = vadd.f32 0.0, %v1137
      %v1139 = vpop.f32.mrf.mxu0
      %1140 = vmatprep.mubr.bf16.mxu0 %v597
      %1141 = vmatmul.mubr.bf16.gmra.mxu0 %v596
      %v1142 = vpop.f32.mrf.mxu0
      %v1143 = vadd.f32 0.0, %v1142
      %v1144 = vpop.f32.mrf.mxu0
      %v1145 = vpop.f32.mrf.mxu0
      %v1146 = vadd.f32 0.0, %v1145
      %v1147 = vpop.f32.mrf.mxu0
      %1148 = vmatprep.mubr.bf16.mxu0 %v605
      %1149 = vmatmul.mubr.bf16.gmra.mxu0 %v604
      %v1150 = vpop.f32.mrf.mxu0
      %v1151 = vadd.f32 0.0, %v1150
      %v1152 = vpop.f32.mrf.mxu0
      %v1153 = vpop.f32.mrf.mxu0
      %v1154 = vadd.f32 0.0, %v1153
      %v1155 = vpop.f32.mrf.mxu0
      %1156 = vmatprep.mubr.bf16.mxu0 %v613
      %1157 = vmatmul.mubr.bf16.gmra.mxu0 %v612
      %v1158 = vpop.f32.mrf.mxu0
      %v1159 = vadd.f32 0.0, %v1158
      %v1160 = vpop.f32.mrf.mxu0
      %v1161 = vpop.f32.mrf.mxu0
      %v1162 = vadd.f32 0.0, %v1161
      %v1163 = vpop.f32.mrf.mxu0
      %1164 = vmatprep.mubr.bf16.mxu0 %v621
      %1165 = vmatmul.mubr.bf16.gmra.mxu0 %v620
      %v1166 = vpop.f32.mrf.mxu0
      %v1167 = vadd.f32 0.0, %v1166
      %v1168 = vpop.f32.mrf.mxu0
      %v1169 = vpop.f32.mrf.mxu0
      %v1170 = vadd.f32 0.0, %v1169
      %v1171 = vpop.f32.mrf.mxu0
      %1172 = vmatprep.mubr.bf16.mxu0 %v629
      %1173 = vmatmul.mubr.bf16.gmra.mxu0 %v628
      %v1174 = vpop.f32.mrf.mxu0
      %v1175 = vadd.f32 0.0, %v1174
      %v1176 = vpop.f32.mrf.mxu0
      %v1177 = vpop.f32.mrf.mxu0
      %v1178 = vadd.f32 0.0, %v1177
      %v1179 = vpop.f32.mrf.mxu0
      %1180 = vmatprep.mubr.bf16.mxu0 %v637
      %1181 = vmatmul.mubr.bf16.gmra.mxu0 %v636
      %v1182 = vpop.f32.mrf.mxu0
      %v1183 = vadd.f32 0.0, %v1182
      %v1184 = vpop.f32.mrf.mxu0
      %v1185 = vpop.f32.mrf.mxu0
      %v1186 = vadd.f32 0.0, %v1185
      %v1187 = vpop.f32.mrf.mxu0
      %1188 = vmatprep.mubr.bf16.mxu0 %v645
      %1189 = vmatmul.mubr.bf16.gmra.mxu0 %v644
      %v1190 = vpop.f32.mrf.mxu0
      %v1191 = vadd.f32 0.0, %v1190
      %v1192 = vpop.f32.mrf.mxu0
      %v1193 = vpop.f32.mrf.mxu0
      %v1194 = vadd.f32 0.0, %v1193
      %v1195 = vpop.f32.mrf.mxu0
      %1196 = vdwg.mxu0
      %1197 = vmatprep.subr.bf16.mxu0 0
      %1198 = vmatpush1.bf16.msra.mxu0 %v995
      %1199 = vmatprep.subr.bf16.mxu0 0
      %1200 = vmatpush1.bf16.msra.mxu0 %v994
      %1201 = vmatprep.subr.bf16.mxu0 0
      %1202 = vmatpush1.bf16.msra.mxu0 %v993
      %1203 = vmatprep.subr.bf16.mxu0 0
      %1204 = vmatpush1.bf16.msra.mxu0 %v992
      %1205 = vmatprep.subr.bf16.mxu0 0
      %1206 = vmatpush1.bf16.msra.mxu0 %v991
      %1207 = vmatprep.subr.bf16.mxu0 0
      %1208 = vmatpush1.bf16.msra.mxu0 %v990
      %1209 = vmatprep.subr.bf16.mxu0 0
      %1210 = vmatpush1.bf16.msra.mxu0 %v989
      %1211 = vmatprep.subr.bf16.mxu0 0
      %1212 = vmatpush1.bf16.msra.mxu0 %v988
      %1213 = vmatprep.subr.bf16.mxu0 0
      %1214 = vmatpush2.bf16.msra.mxu0 %v1003
      %1215 = vmatprep.subr.bf16.mxu0 0
      %1216 = vmatpush2.bf16.msra.mxu0 %v1002
      %1217 = vmatprep.subr.bf16.mxu0 0
      %1218 = vmatpush2.bf16.msra.mxu0 %v1001
      %1219 = vmatprep.subr.bf16.mxu0 0
      %1220 = vmatpush2.bf16.msra.mxu0 %v1000
      %1221 = vmatprep.subr.bf16.mxu0 0
      %1222 = vmatpush2.bf16.msra.mxu0 %v999
      %1223 = vmatprep.subr.bf16.mxu0 0
      %1224 = vmatpush2.bf16.msra.mxu0 %v998
      %1225 = vmatprep.subr.bf16.mxu0 0
      %1226 = vmatpush2.bf16.msra.mxu0 %v997
      %1227 = vmatprep.subr.bf16.mxu0 0
      %1228 = vmatpush2.bf16.msra.mxu0 %v996
      %1229 = vmatprep.mubr.bf16.mxu0 %v591
      %1230 = vmatmul.mubr.bf16.gmra.mxu0 %v590
      %v1231 = vpop.f32.mrf.mxu0
      %v1232 = vadd.f32 %v1135, %v1231
      %v1233 = vpop.f32.mrf.mxu0
      %v1234 = vpop.f32.mrf.mxu0
      %v1235 = vadd.f32 %v1138, %v1234
      %v1236 = vpop.f32.mrf.mxu0
      %1237 = vmatprep.mubr.bf16.mxu0 %v599
      %1238 = vmatmul.mubr.bf16.gmra.mxu0 %v598
      %v1239 = vpop.f32.mrf.mxu0
      %v1240 = vadd.f32 %v1143, %v1239
      %v1241 = vpop.f32.mrf.mxu0
      %v1242 = vpop.f32.mrf.mxu0
      %v1243 = vadd.f32 %v1146, %v1242
      %v1244 = vpop.f32.mrf.mxu0
      %1245 = vmatprep.mubr.bf16.mxu0 %v607
      %1246 = vmatmul.mubr.bf16.gmra.mxu0 %v606
      %v1247 = vpop.f32.mrf.mxu0
      %v1248 = vadd.f32 %v1151, %v1247
      %v1249 = vpop.f32.mrf.mxu0
      %v1250 = vpop.f32.mrf.mxu0
      %v1251 = vadd.f32 %v1154, %v1250
      %v1252 = vpop.f32.mrf.mxu0
      %1253 = vmatprep.mubr.bf16.mxu0 %v615
      %1254 = vmatmul.mubr.bf16.gmra.mxu0 %v614
      %v1255 = vpop.f32.mrf.mxu0
      %v1256 = vadd.f32 %v1159, %v1255
      %v1257 = vpop.f32.mrf.mxu0
      %v1258 = vpop.f32.mrf.mxu0
      %v1259 = vadd.f32 %v1162, %v1258
      %v1260 = vpop.f32.mrf.mxu0
      %1261 = vmatprep.mubr.bf16.mxu0 %v623
      %1262 = vmatmul.mubr.bf16.gmra.mxu0 %v622
      %v1263 = vpop.f32.mrf.mxu0
      %v1264 = vadd.f32 %v1167, %v1263
      %v1265 = vpop.f32.mrf.mxu0
      %v1266 = vpop.f32.mrf.mxu0
      %v1267 = vadd.f32 %v1170, %v1266
      %v1268 = vpop.f32.mrf.mxu0
      %1269 = vmatprep.mubr.bf16.mxu0 %v631
      %1270 = vmatmul.mubr.bf16.gmra.mxu0 %v630
      %v1271 = vpop.f32.mrf.mxu0
      %v1272 = vadd.f32 %v1175, %v1271
      %v1273 = vpop.f32.mrf.mxu0
      %v1274 = vpop.f32.mrf.mxu0
      %v1275 = vadd.f32 %v1178, %v1274
      %v1276 = vpop.f32.mrf.mxu0
      %1277 = vmatprep.mubr.bf16.mxu0 %v639
      %1278 = vmatmul.mubr.bf16.gmra.mxu0 %v638
      %v1279 = vpop.f32.mrf.mxu0
      %v1280 = vadd.f32 %v1183, %v1279
      %v1281 = vpop.f32.mrf.mxu0
      %v1282 = vpop.f32.mrf.mxu0
      %v1283 = vadd.f32 %v1186, %v1282
      %v1284 = vpop.f32.mrf.mxu0
      %1285 = vmatprep.mubr.bf16.mxu0 %v647
      %1286 = vmatmul.mubr.bf16.gmra.mxu0 %v646
      %v1287 = vpop.f32.mrf.mxu0
      %v1288 = vadd.f32 %v1191, %v1287
      %v1289 = vpop.f32.mrf.mxu0
      %v1290 = vpop.f32.mrf.mxu0
      %v1291 = vadd.f32 %v1194, %v1290
      %v1292 = vpop.f32.mrf.mxu0
      %1293 = vdwg.mxu0
      %1294 = vmatprep.subr.bf16.mxu0 0
      %1295 = vmatpush1.bf16.msra.mxu0 %v1011
      %1296 = vmatprep.subr.bf16.mxu0 0
      %1297 = vmatpush1.bf16.msra.mxu0 %v1010
      %1298 = vmatprep.subr.bf16.mxu0 0
      %1299 = vmatpush1.bf16.msra.mxu0 %v1009
      %1300 = vmatprep.subr.bf16.mxu0 0
      %1301 = vmatpush1.bf16.msra.mxu0 %v1008
      %1302 = vmatprep.subr.bf16.mxu0 0
      %1303 = vmatpush1.bf16.msra.mxu0 %v1007
      %1304 = vmatprep.subr.bf16.mxu0 0
      %1305 = vmatpush1.bf16.msra.mxu0 %v1006
      %1306 = vmatprep.subr.bf16.mxu0 0
      %1307 = vmatpush1.bf16.msra.mxu0 %v1005
      %1308 = vmatprep.subr.bf16.mxu0 0
      %1309 = vmatpush1.bf16.msra.mxu0 %v1004
      %1310 = vmatprep.subr.bf16.mxu0 0
      %1311 = vmatpush2.bf16.msra.mxu0 %v1019
      %1312 = vmatprep.subr.bf16.mxu0 0
      %1313 = vmatpush2.bf16.msra.mxu0 %v1018
      %1314 = vmatprep.subr.bf16.mxu0 0
      %1315 = vmatpush2.bf16.msra.mxu0 %v1017
      %1316 = vmatprep.subr.bf16.mxu0 0
      %1317 = vmatpush2.bf16.msra.mxu0 %v1016
      %1318 = vmatprep.subr.bf16.mxu0 0
      %1319 = vmatpush2.bf16.msra.mxu0 %v1015
      %1320 = vmatprep.subr.bf16.mxu0 0
      %1321 = vmatpush2.bf16.msra.mxu0 %v1014
      %1322 = vmatprep.subr.bf16.mxu0 0
      %1323 = vmatpush2.bf16.msra.mxu0 %v1013
      %1324 = vmatprep.subr.bf16.mxu0 0
      %1325 = vmatpush2.bf16.msra.mxu0 %v1012
      %1326 = vmatprep.mubr.bf16.mxu0 %v593
      %1327 = vmatmul.mubr.bf16.gmra.mxu0 %v592
      %v1328 = vpop.f32.mrf.mxu0
      %v1329 = vadd.f32 %v1232, %v1328
      %v1330 = vpop.f32.mrf.mxu0
      %v1331 = vpop.f32.mrf.mxu0
      %v1332 = vadd.f32 %v1235, %v1331
      %v1333 = vpop.f32.mrf.mxu0
      %1334 = vmatprep.mubr.bf16.mxu0 %v601
      %1335 = vmatmul.mubr.bf16.gmra.mxu0 %v600
      %v1336 = vpop.f32.mrf.mxu0
      %v1337 = vadd.f32 %v1240, %v1336
      %v1338 = vpop.f32.mrf.mxu0
      %v1339 = vpop.f32.mrf.mxu0
      %v1340 = vadd.f32 %v1243, %v1339
      %v1341 = vpop.f32.mrf.mxu0
      %1342 = vmatprep.mubr.bf16.mxu0 %v609
      %1343 = vmatmul.mubr.bf16.gmra.mxu0 %v608
      %v1344 = vpop.f32.mrf.mxu0
      %v1345 = vadd.f32 %v1248, %v1344
      %v1346 = vpop.f32.mrf.mxu0
      %v1347 = vpop.f32.mrf.mxu0
      %v1348 = vadd.f32 %v1251, %v1347
      %v1349 = vpop.f32.mrf.mxu0
      %1350 = vmatprep.mubr.bf16.mxu0 %v617
      %1351 = vmatmul.mubr.bf16.gmra.mxu0 %v616
      %v1352 = vpop.f32.mrf.mxu0
      %v1353 = vadd.f32 %v1256, %v1352
      %v1354 = vpop.f32.mrf.mxu0
      %v1355 = vpop.f32.mrf.mxu0
      %v1356 = vadd.f32 %v1259, %v1355
      %v1357 = vpop.f32.mrf.mxu0
      %1358 = vmatprep.mubr.bf16.mxu0 %v625
      %1359 = vmatmul.mubr.bf16.gmra.mxu0 %v624
      %v1360 = vpop.f32.mrf.mxu0
      %v1361 = vadd.f32 %v1264, %v1360
      %v1362 = vpop.f32.mrf.mxu0
      %v1363 = vpop.f32.mrf.mxu0
      %v1364 = vadd.f32 %v1267, %v1363
      %v1365 = vpop.f32.mrf.mxu0
      %1366 = vmatprep.mubr.bf16.mxu0 %v633
      %1367 = vmatmul.mubr.bf16.gmra.mxu0 %v632
      %v1368 = vpop.f32.mrf.mxu0
      %v1369 = vadd.f32 %v1272, %v1368
      %v1370 = vpop.f32.mrf.mxu0
      %v1371 = vpop.f32.mrf.mxu0
      %v1372 = vadd.f32 %v1275, %v1371
      %v1373 = vpop.f32.mrf.mxu0
      %1374 = vmatprep.mubr.bf16.mxu0 %v641
      %1375 = vmatmul.mubr.bf16.gmra.mxu0 %v640
      %v1376 = vpop.f32.mrf.mxu0
      %v1377 = vadd.f32 %v1280, %v1376
      %v1378 = vpop.f32.mrf.mxu0
      %v1379 = vpop.f32.mrf.mxu0
      %v1380 = vadd.f32 %v1283, %v1379
      %v1381 = vpop.f32.mrf.mxu0
      %1382 = vmatprep.mubr.bf16.mxu0 %v649
      %1383 = vmatmul.mubr.bf16.gmra.mxu0 %v648
      %v1384 = vpop.f32.mrf.mxu0
      %v1385 = vadd.f32 %v1288, %v1384
      %v1386 = vpop.f32.mrf.mxu0
      %v1387 = vpop.f32.mrf.mxu0
      %v1388 = vadd.f32 %v1291, %v1387
      %v1389 = vpop.f32.mrf.mxu0
      %1390 = vdwg.mxu0
      %1391 = vmatprep.subr.bf16.mxu0 0
      %1392 = vmatpush1.bf16.msra.mxu0 %v1027
      %1393 = vmatprep.subr.bf16.mxu0 0
      %1394 = vmatpush1.bf16.msra.mxu0 %v1026
      %1395 = vmatprep.subr.bf16.mxu0 0
      %1396 = vmatpush1.bf16.msra.mxu0 %v1025
      %1397 = vmatprep.subr.bf16.mxu0 0
      %1398 = vmatpush1.bf16.msra.mxu0 %v1024
      %1399 = vmatprep.subr.bf16.mxu0 0
      %1400 = vmatpush1.bf16.msra.mxu0 %v1023
      %1401 = vmatprep.subr.bf16.mxu0 0
      %1402 = vmatpush1.bf16.msra.mxu0 %v1022
      %1403 = vmatprep.subr.bf16.mxu0 0
      %1404 = vmatpush1.bf16.msra.mxu0 %v1021
      %1405 = vmatprep.subr.bf16.mxu0 0
      %1406 = vmatpush1.bf16.msra.mxu0 %v1020
      %1407 = vmatprep.subr.bf16.mxu0 0
      %1408 = vmatpush2.bf16.msra.mxu0 %v1035
      %1409 = vmatprep.subr.bf16.mxu0 0
      %1410 = vmatpush2.bf16.msra.mxu0 %v1034
      %1411 = vmatprep.subr.bf16.mxu0 0
      %1412 = vmatpush2.bf16.msra.mxu0 %v1033
      %1413 = vmatprep.subr.bf16.mxu0 0
      %1414 = vmatpush2.bf16.msra.mxu0 %v1032
      %1415 = vmatprep.subr.bf16.mxu0 0
      %1416 = vmatpush2.bf16.msra.mxu0 %v1031
      %1417 = vmatprep.subr.bf16.mxu0 0
      %1418 = vmatpush2.bf16.msra.mxu0 %v1030
      %1419 = vmatprep.subr.bf16.mxu0 0
      %1420 = vmatpush2.bf16.msra.mxu0 %v1029
      %1421 = vmatprep.subr.bf16.mxu0 0
      %1422 = vmatpush2.bf16.msra.mxu0 %v1028
      %1423 = vmatprep.mubr.bf16.mxu0 %v595
      %1424 = vmatmul.mubr.bf16.gmra.mxu0 %v594
      %v1425 = vpop.f32.mrf.mxu0
      %v1426 = vadd.f32 %v1329, %v1425
      %v1427 = vpop.f32.mrf.mxu0
      %v1428 = vpop.f32.mrf.mxu0
      %v1429 = vadd.f32 %v1332, %v1428
      %v1430 = vpop.f32.mrf.mxu0
      %1431 = vmatprep.mubr.bf16.mxu0 %v603
      %1432 = vmatmul.mubr.bf16.gmra.mxu0 %v602
      %v1433 = vpop.f32.mrf.mxu0
      %v1434 = vadd.f32 %v1337, %v1433
      %v1435 = vpop.f32.mrf.mxu0
      %v1436 = vpop.f32.mrf.mxu0
      %v1437 = vadd.f32 %v1340, %v1436
      %v1438 = vpop.f32.mrf.mxu0
      %1439 = vmatprep.mubr.bf16.mxu0 %v611
      %1440 = vmatmul.mubr.bf16.gmra.mxu0 %v610
      %v1441 = vpop.f32.mrf.mxu0
      %v1442 = vadd.f32 %v1345, %v1441
      %v1443 = vpop.f32.mrf.mxu0
      %v1444 = vpop.f32.mrf.mxu0
      %v1445 = vadd.f32 %v1348, %v1444
      %v1446 = vpop.f32.mrf.mxu0
      %1447 = vmatprep.mubr.bf16.mxu0 %v619
      %1448 = vmatmul.mubr.bf16.gmra.mxu0 %v618
      %v1449 = vpop.f32.mrf.mxu0
      %v1450 = vadd.f32 %v1353, %v1449
      %v1451 = vpop.f32.mrf.mxu0
      %v1452 = vpop.f32.mrf.mxu0
      %v1453 = vadd.f32 %v1356, %v1452
      %v1454 = vpop.f32.mrf.mxu0
      %1455 = vmatprep.mubr.bf16.mxu0 %v627
      %1456 = vmatmul.mubr.bf16.gmra.mxu0 %v626
      %v1457 = vpop.f32.mrf.mxu0
      %v1458 = vadd.f32 %v1361, %v1457
      %v1459 = vpop.f32.mrf.mxu0
      %v1460 = vpop.f32.mrf.mxu0
      %v1461 = vadd.f32 %v1364, %v1460
      %v1462 = vpop.f32.mrf.mxu0
      %1463 = vmatprep.mubr.bf16.mxu0 %v635
      %1464 = vmatmul.mubr.bf16.gmra.mxu0 %v634
      %v1465 = vpop.f32.mrf.mxu0
      %v1466 = vadd.f32 %v1369, %v1465
      %v1467 = vpop.f32.mrf.mxu0
      %v1468 = vpop.f32.mrf.mxu0
      %v1469 = vadd.f32 %v1372, %v1468
      %v1470 = vpop.f32.mrf.mxu0
      %1471 = vmatprep.mubr.bf16.mxu0 %v643
      %1472 = vmatmul.mubr.bf16.gmra.mxu0 %v642
      %v1473 = vpop.f32.mrf.mxu0
      %v1474 = vadd.f32 %v1377, %v1473
      %v1475 = vpop.f32.mrf.mxu0
      %v1476 = vpop.f32.mrf.mxu0
      %v1477 = vadd.f32 %v1380, %v1476
      %v1478 = vpop.f32.mrf.mxu0
      %1479 = vmatprep.mubr.bf16.mxu0 %v651
      %1480 = vmatmul.mubr.bf16.gmra.mxu0 %v650
      %v1481 = vpop.f32.mrf.mxu0
      %v1482 = vadd.f32 %v1385, %v1481
      %v1483 = vpop.f32.mrf.mxu0
      %v1484 = vpop.f32.mrf.mxu0
      %v1485 = vadd.f32 %v1388, %v1484
      %v1486 = vpop.f32.mrf.mxu0
      %1487 = vdwg.mxu0
      %s1488 = smul.u32 %s15, 128
      %s1489 = scalar_lea.vmem %s4, %s1488
      %1490 = vst [vmem:[%s1489] sm:$0xff] %v1426
      %1491 = vst [vmem:[%s1489 + $0x8] sm:$0xff] %v1429
      %1492 = vst [vmem:[%s1489 + $0x10] sm:$0xff] %v1434
      %1493 = vst [vmem:[%s1489 + $0x18] sm:$0xff] %v1437
      %1494 = vst [vmem:[%s1489 + $0x20] sm:$0xff] %v1442
      %1495 = vst [vmem:[%s1489 + $0x28] sm:$0xff] %v1445
      %1496 = vst [vmem:[%s1489 + $0x30] sm:$0xff] %v1450
      %1497 = vst [vmem:[%s1489 + $0x38] sm:$0xff] %v1453
      %1498 = vst [vmem:[%s1489 + $0x40] sm:$0xff] %v1458
      %1499 = vst [vmem:[%s1489 + $0x48] sm:$0xff] %v1461
      %1500 = vst [vmem:[%s1489 + $0x50] sm:$0xff] %v1466
      %1501 = vst [vmem:[%s1489 + $0x58] sm:$0xff] %v1469
      %1502 = vst [vmem:[%s1489 + $0x60] sm:$0xff] %v1474
      %1503 = vst [vmem:[%s1489 + $0x68] sm:$0xff] %v1477
      %1504 = vst [vmem:[%s1489 + $0x70] sm:$0xff] %v1482
      %1505 = vst [vmem:[%s1489 + $0x78] sm:$0xff] %v1485
      %p1506 = scmp.eq.s32.totalorder %s15, 3
      // Predicated region
      $region37: #{generator_forward.6} parent=35 // pred_check
        %p1507 = pneg %p1506
      $region38: #{generator_forward.6} parent=35 // pred_check_branch
        %1509 = sbr.rel (%p1507) target = $region40
      $region39: #{generator_forward.6} parent=35 // pred_region
        %v1510 = vld [vmem:[%s4] sm:$0xff]
        %v1511 = vld [vmem:[%s4 + $0x8] sm:$0xff]
        %v1512 = vld [vmem:[%s4 + $0x10] sm:$0xff]
        %v1513 = vld [vmem:[%s4 + $0x18] sm:$0xff]
        %v1514 = vld [vmem:[%s4 + $0x20] sm:$0xff]
        %v1515 = vld [vmem:[%s4 + $0x28] sm:$0xff]
        %v1516 = vld [vmem:[%s4 + $0x30] sm:$0xff]
        %v1517 = vld [vmem:[%s4 + $0x38] sm:$0xff]
        %v1518 = vld [vmem:[%s4 + $0x40] sm:$0xff]
        %v1519 = vld [vmem:[%s4 + $0x48] sm:$0xff]
        %v1520 = vld [vmem:[%s4 + $0x50] sm:$0xff]
        %v1521 = vld [vmem:[%s4 + $0x58] sm:$0xff]
        %v1522 = vld [vmem:[%s4 + $0x60] sm:$0xff]
        %v1523 = vld [vmem:[%s4 + $0x68] sm:$0xff]
        %v1524 = vld [vmem:[%s4 + $0x70] sm:$0xff]
        %v1525 = vld [vmem:[%s4 + $0x78] sm:$0xff]
        %v1526 = vld [vmem:[%s4 + $0x80] sm:$0xff]
        %v1527 = vld [vmem:[%s4 + $0x88] sm:$0xff]
        %v1528 = vld [vmem:[%s4 + $0x90] sm:$0xff]
        %v1529 = vld [vmem:[%s4 + $0x98] sm:$0xff]
        %v1530 = vld [vmem:[%s4 + $0xa0] sm:$0xff]
        %v1531 = vld [vmem:[%s4 + $0xa8] sm:$0xff]
        %v1532 = vld [vmem:[%s4 + $0xb0] sm:$0xff]
        %v1533 = vld [vmem:[%s4 + $0xb8] sm:$0xff]
        %v1534 = vld [vmem:[%s4 + $0xc0] sm:$0xff]
        %v1535 = vld [vmem:[%s4 + $0xc8] sm:$0xff]
        %v1536 = vld [vmem:[%s4 + $0xd0] sm:$0xff]
        %v1537 = vld [vmem:[%s4 + $0xd8] sm:$0xff]
        %v1538 = vld [vmem:[%s4 + $0xe0] sm:$0xff]
        %v1539 = vld [vmem:[%s4 + $0xe8] sm:$0xff]
        %v1540 = vld [vmem:[%s4 + $0xf0] sm:$0xff]
        %v1541 = vld [vmem:[%s4 + $0xf8] sm:$0xff]
        %v1542 = vld [vmem:[%s4 + $0x100] sm:$0xff]
        %v1543 = vld [vmem:[%s4 + $0x108] sm:$0xff]
        %v1544 = vld [vmem:[%s4 + $0x110] sm:$0xff]
        %v1545 = vld [vmem:[%s4 + $0x118] sm:$0xff]
        %v1546 = vld [vmem:[%s4 + $0x120] sm:$0xff]
        %v1547 = vld [vmem:[%s4 + $0x128] sm:$0xff]
        %v1548 = vld [vmem:[%s4 + $0x130] sm:$0xff]
        %v1549 = vld [vmem:[%s4 + $0x138] sm:$0xff]
        %v1550 = vld [vmem:[%s4 + $0x140] sm:$0xff]
        %v1551 = vld [vmem:[%s4 + $0x148] sm:$0xff]
        %v1552 = vld [vmem:[%s4 + $0x150] sm:$0xff]
        %v1553 = vld [vmem:[%s4 + $0x158] sm:$0xff]
        %v1554 = vld [vmem:[%s4 + $0x160] sm:$0xff]
        %v1555 = vld [vmem:[%s4 + $0x168] sm:$0xff]
        %v1556 = vld [vmem:[%s4 + $0x170] sm:$0xff]
        %v1557 = vld [vmem:[%s4 + $0x178] sm:$0xff]
        %v1558 = vld [vmem:[%s4 + $0x180] sm:$0xff]
        %v1559 = vld [vmem:[%s4 + $0x188] sm:$0xff]
        %v1560 = vld [vmem:[%s4 + $0x190] sm:$0xff]
        %v1561 = vld [vmem:[%s4 + $0x198] sm:$0xff]
        %v1562 = vld [vmem:[%s4 + $0x1a0] sm:$0xff]
        %v1563 = vld [vmem:[%s4 + $0x1a8] sm:$0xff]
        %v1564 = vld [vmem:[%s4 + $0x1b0] sm:$0xff]
        %v1565 = vld [vmem:[%s4 + $0x1b8] sm:$0xff]
        %v1566 = vld [vmem:[%s4 + $0x1c0] sm:$0xff]
        %v1567 = vld [vmem:[%s4 + $0x1c8] sm:$0xff]
        %v1568 = vld [vmem:[%s4 + $0x1d0] sm:$0xff]
        %v1569 = vld [vmem:[%s4 + $0x1d8] sm:$0xff]
        %v1570 = vld [vmem:[%s4 + $0x1e0] sm:$0xff]
        %v1571 = vld [vmem:[%s4 + $0x1e8] sm:$0xff]
        %v1572 = vld [vmem:[%s4 + $0x1f0] sm:$0xff]
        %v1573 = vld [vmem:[%s4 + $0x1f8] sm:$0xff]
        %v1574 = vadd.f32 %v1510, %v1526
        %v1575 = vadd.f32 %v1574, %v1542
        %v1576 = vadd.f32 %v1575, %v1558
        %v1577 = vadd.f32 %v1511, %v1527
        %v1578 = vadd.f32 %v1577, %v1543
        %v1579 = vadd.f32 %v1578, %v1559
        %v1580 = vadd.f32 %v1512, %v1528
        %v1581 = vadd.f32 %v1580, %v1544
        %v1582 = vadd.f32 %v1581, %v1560
        %v1583 = vadd.f32 %v1513, %v1529
        %v1584 = vadd.f32 %v1583, %v1545
        %v1585 = vadd.f32 %v1584, %v1561
        %v1586 = vadd.f32 %v1514, %v1530
        %v1587 = vadd.f32 %v1586, %v1546
        %v1588 = vadd.f32 %v1587, %v1562
        %v1589 = vadd.f32 %v1515, %v1531
        %v1590 = vadd.f32 %v1589, %v1547
        %v1591 = vadd.f32 %v1590, %v1563
        %v1592 = vadd.f32 %v1516, %v1532
        %v1593 = vadd.f32 %v1592, %v1548
        %v1594 = vadd.f32 %v1593, %v1564
        %v1595 = vadd.f32 %v1517, %v1533
        %v1596 = vadd.f32 %v1595, %v1549
        %v1597 = vadd.f32 %v1596, %v1565
        %v1598 = vadd.f32 %v1518, %v1534
        %v1599 = vadd.f32 %v1598, %v1550
        %v1600 = vadd.f32 %v1599, %v1566
        %v1601 = vadd.f32 %v1519, %v1535
        %v1602 = vadd.f32 %v1601, %v1551
        %v1603 = vadd.f32 %v1602, %v1567
        %v1604 = vadd.f32 %v1520, %v1536
        %v1605 = vadd.f32 %v1604, %v1552
        %v1606 = vadd.f32 %v1605, %v1568
        %v1607 = vadd.f32 %v1521, %v1537
        %v1608 = vadd.f32 %v1607, %v1553
        %v1609 = vadd.f32 %v1608, %v1569
        %v1610 = vadd.f32 %v1522, %v1538
        %v1611 = vadd.f32 %v1610, %v1554
        %v1612 = vadd.f32 %v1611, %v1570
        %v1613 = vadd.f32 %v1523, %v1539
        %v1614 = vadd.f32 %v1613, %v1555
        %v1615 = vadd.f32 %v1614, %v1571
        %v1616 = vadd.f32 %v1524, %v1540
        %v1617 = vadd.f32 %v1616, %v1556
        %v1618 = vadd.f32 %v1617, %v1572
        %v1619 = vadd.f32 %v1525, %v1541
        %v1620 = vadd.f32 %v1619, %v1557
        %v1621 = vadd.f32 %v1620, %v1573
        %v1622 = vadd.f32 %v1576, %v1579
        %v1623 = vadd.f32 %v1622, %v1582
        %v1624 = vadd.f32 %v1623, %v1585
        %v1625 = vadd.f32 %v1624, %v1588
        %v1626 = vadd.f32 %v1625, %v1591
        %v1627 = vadd.f32 %v1626, %v1594
        %v1628 = vadd.f32 %v1627, %v1597
        %v1629 = vadd.f32 %v1628, %v1600
        %v1630 = vadd.f32 %v1629, %v1603
        %v1631 = vadd.f32 %v1630, %v1606
        %v1632 = vadd.f32 %v1631, %v1609
        %v1633 = vadd.f32 %v1632, %v1612
        %v1634 = vadd.f32 %v1633, %v1615
        %v1635 = vadd.f32 %v1634, %v1618
        %v1636 = vadd.f32 %v1635, %v1621
        %v1637 = vrot.slane %v1636, 4
        %v1638 = vadd.f32 %v1636, %v1637
        %v1639 = vrot.slane %v1638, 2
        %v1640 = vadd.f32 %v1638, %v1639
        %v1641 = vrot.slane %v1640, 1
        %v1642 = vadd.f32 %v1640, %v1641
        %v1643 = vrcp.pop 512.0
        %v1644 = vmul.f32 %v1642, %v1643
        %v1645 = vsub.f32 %v1510, %v1644
        %v1646 = vsub.f32 %v1511, %v1644
        %v1647 = vsub.f32 %v1512, %v1644
        %v1648 = vsub.f32 %v1513, %v1644
        %v1649 = vsub.f32 %v1514, %v1644
        %v1650 = vsub.f32 %v1515, %v1644
        %v1651 = vsub.f32 %v1516, %v1644
        %v1652 = vsub.f32 %v1517, %v1644
        %v1653 = vsub.f32 %v1518, %v1644
        %v1654 = vsub.f32 %v1519, %v1644
        %v1655 = vsub.f32 %v1520, %v1644
        %v1656 = vsub.f32 %v1521, %v1644
        %v1657 = vsub.f32 %v1522, %v1644
        %v1658 = vsub.f32 %v1523, %v1644
        %v1659 = vsub.f32 %v1524, %v1644
        %v1660 = vsub.f32 %v1525, %v1644
        %v1661 = vsub.f32 %v1526, %v1644
        %v1662 = vsub.f32 %v1527, %v1644
        %v1663 = vsub.f32 %v1528, %v1644
        %v1664 = vsub.f32 %v1529, %v1644
        %v1665 = vsub.f32 %v1530, %v1644
        %v1666 = vsub.f32 %v1531, %v1644
        %v1667 = vsub.f32 %v1532, %v1644
        %v1668 = vsub.f32 %v1533, %v1644
        %v1669 = vsub.f32 %v1534, %v1644
        %v1670 = vsub.f32 %v1535, %v1644
        %v1671 = vsub.f32 %v1536, %v1644
        %v1672 = vsub.f32 %v1537, %v1644
        %v1673 = vsub.f32 %v1538, %v1644
        %v1674 = vsub.f32 %v1539, %v1644
        %v1675 = vsub.f32 %v1540, %v1644
        %v1676 = vsub.f32 %v1541, %v1644
        %v1677 = vsub.f32 %v1542, %v1644
        %v1678 = vsub.f32 %v1543, %v1644
        %v1679 = vsub.f32 %v1544, %v1644
        %v1680 = vsub.f32 %v1545, %v1644
        %v1681 = vsub.f32 %v1546, %v1644
        %v1682 = vsub.f32 %v1547, %v1644
        %v1683 = vsub.f32 %v1548, %v1644
        %v1684 = vsub.f32 %v1549, %v1644
        %v1685 = vsub.f32 %v1550, %v1644
        %v1686 = vsub.f32 %v1551, %v1644
        %v1687 = vsub.f32 %v1552, %v1644
        %v1688 = vsub.f32 %v1553, %v1644
        %v1689 = vsub.f32 %v1554, %v1644
        %v1690 = vsub.f32 %v1555, %v1644
        %v1691 = vsub.f32 %v1556, %v1644
        %v1692 = vsub.f32 %v1557, %v1644
        %v1693 = vsub.f32 %v1558, %v1644
        %v1694 = vsub.f32 %v1559, %v1644
        %v1695 = vsub.f32 %v1560, %v1644
        %v1696 = vsub.f32 %v1561, %v1644
        %v1697 = vsub.f32 %v1562, %v1644
        %v1698 = vsub.f32 %v1563, %v1644
        %v1699 = vsub.f32 %v1564, %v1644
        %v1700 = vsub.f32 %v1565, %v1644
        %v1701 = vsub.f32 %v1566, %v1644
        %v1702 = vsub.f32 %v1567, %v1644
        %v1703 = vsub.f32 %v1568, %v1644
        %v1704 = vsub.f32 %v1569, %v1644
        %v1705 = vsub.f32 %v1570, %v1644
        %v1706 = vsub.f32 %v1571, %v1644
        %v1707 = vsub.f32 %v1572, %v1644
        %v1708 = vsub.f32 %v1573, %v1644
        %v1709 = vmul.f32 %v1645, %v1645
        %v1710 = vmul.f32 %v1646, %v1646
        %v1711 = vmul.f32 %v1647, %v1647
        %v1712 = vmul.f32 %v1648, %v1648
        %v1713 = vmul.f32 %v1649, %v1649
        %v1714 = vmul.f32 %v1650, %v1650
        %v1715 = vmul.f32 %v1651, %v1651
        %v1716 = vmul.f32 %v1652, %v1652
        %v1717 = vmul.f32 %v1653, %v1653
        %v1718 = vmul.f32 %v1654, %v1654
        %v1719 = vmul.f32 %v1655, %v1655
        %v1720 = vmul.f32 %v1656, %v1656
        %v1721 = vmul.f32 %v1657, %v1657
        %v1722 = vmul.f32 %v1658, %v1658
        %v1723 = vmul.f32 %v1659, %v1659
        %v1724 = vmul.f32 %v1660, %v1660
        %v1725 = vmul.f32 %v1661, %v1661
        %v1726 = vmul.f32 %v1662, %v1662
        %v1727 = vmul.f32 %v1663, %v1663
        %v1728 = vmul.f32 %v1664, %v1664
        %v1729 = vmul.f32 %v1665, %v1665
        %v1730 = vmul.f32 %v1666, %v1666
        %v1731 = vmul.f32 %v1667, %v1667
        %v1732 = vmul.f32 %v1668, %v1668
        %v1733 = vmul.f32 %v1669, %v1669
        %v1734 = vmul.f32 %v1670, %v1670
        %v1735 = vmul.f32 %v1671, %v1671
        %v1736 = vmul.f32 %v1672, %v1672
        %v1737 = vmul.f32 %v1673, %v1673
        %v1738 = vmul.f32 %v1674, %v1674
        %v1739 = vmul.f32 %v1675, %v1675
        %v1740 = vmul.f32 %v1676, %v1676
        %v1741 = vmul.f32 %v1677, %v1677
        %v1742 = vmul.f32 %v1678, %v1678
        %v1743 = vmul.f32 %v1679, %v1679
        %v1744 = vmul.f32 %v1680, %v1680
        %v1745 = vmul.f32 %v1681, %v1681
        %v1746 = vmul.f32 %v1682, %v1682
        %v1747 = vmul.f32 %v1683, %v1683
        %v1748 = vmul.f32 %v1684, %v1684
        %v1749 = vmul.f32 %v1685, %v1685
        %v1750 = vmul.f32 %v1686, %v1686
        %v1751 = vmul.f32 %v1687, %v1687
        %v1752 = vmul.f32 %v1688, %v1688
        %v1753 = vmul.f32 %v1689, %v1689
        %v1754 = vmul.f32 %v1690, %v1690
        %v1755 = vmul.f32 %v1691, %v1691
        %v1756 = vmul.f32 %v1692, %v1692
        %v1757 = vmul.f32 %v1693, %v1693
        %v1758 = vmul.f32 %v1694, %v1694
        %v1759 = vmul.f32 %v1695, %v1695
        %v1760 = vmul.f32 %v1696, %v1696
        %v1761 = vmul.f32 %v1697, %v1697
        %v1762 = vmul.f32 %v1698, %v1698
        %v1763 = vmul.f32 %v1699, %v1699
        %v1764 = vmul.f32 %v1700, %v1700
        %v1765 = vmul.f32 %v1701, %v1701
        %v1766 = vmul.f32 %v1702, %v1702
        %v1767 = vmul.f32 %v1703, %v1703
        %v1768 = vmul.f32 %v1704, %v1704
        %v1769 = vmul.f32 %v1705, %v1705
        %v1770 = vmul.f32 %v1706, %v1706
        %v1771 = vmul.f32 %v1707, %v1707
        %v1772 = vmul.f32 %v1708, %v1708
        %v1773 = vadd.f32 %v1709, %v1725
        %v1774 = vadd.f32 %v1773, %v1741
        %v1775 = vadd.f32 %v1774, %v1757
        %v1776 = vadd.f32 %v1710, %v1726
        %v1777 = vadd.f32 %v1776, %v1742
        %v1778 = vadd.f32 %v1777, %v1758
        %v1779 = vadd.f32 %v1711, %v1727
        %v1780 = vadd.f32 %v1779, %v1743
        %v1781 = vadd.f32 %v1780, %v1759
        %v1782 = vadd.f32 %v1712, %v1728
        %v1783 = vadd.f32 %v1782, %v1744
        %v1784 = vadd.f32 %v1783, %v1760
        %v1785 = vadd.f32 %v1713, %v1729
        %v1786 = vadd.f32 %v1785, %v1745
        %v1787 = vadd.f32 %v1786, %v1761
        %v1788 = vadd.f32 %v1714, %v1730
        %v1789 = vadd.f32 %v1788, %v1746
        %v1790 = vadd.f32 %v1789, %v1762
        %v1791 = vadd.f32 %v1715, %v1731
        %v1792 = vadd.f32 %v1791, %v1747
        %v1793 = vadd.f32 %v1792, %v1763
        %v1794 = vadd.f32 %v1716, %v1732
        %v1795 = vadd.f32 %v1794, %v1748
        %v1796 = vadd.f32 %v1795, %v1764
        %v1797 = vadd.f32 %v1717, %v1733
        %v1798 = vadd.f32 %v1797, %v1749
        %v1799 = vadd.f32 %v1798, %v1765
        %v1800 = vadd.f32 %v1718, %v1734
        %v1801 = vadd.f32 %v1800, %v1750
        %v1802 = vadd.f32 %v1801, %v1766
        %v1803 = vadd.f32 %v1719, %v1735
        %v1804 = vadd.f32 %v1803, %v1751
        %v1805 = vadd.f32 %v1804, %v1767
        %v1806 = vadd.f32 %v1720, %v1736
        %v1807 = vadd.f32 %v1806, %v1752
        %v1808 = vadd.f32 %v1807, %v1768
        %v1809 = vadd.f32 %v1721, %v1737
        %v1810 = vadd.f32 %v1809, %v1753
        %v1811 = vadd.f32 %v1810, %v1769
        %v1812 = vadd.f32 %v1722, %v1738
        %v1813 = vadd.f32 %v1812, %v1754
        %v1814 = vadd.f32 %v1813, %v1770
        %v1815 = vadd.f32 %v1723, %v1739
        %v1816 = vadd.f32 %v1815, %v1755
        %v1817 = vadd.f32 %v1816, %v1771
        %v1818 = vadd.f32 %v1724, %v1740
        %v1819 = vadd.f32 %v1818, %v1756
        %v1820 = vadd.f32 %v1819, %v1772
        %v1821 = vadd.f32 %v1775, %v1778
        %v1822 = vadd.f32 %v1821, %v1781
        %v1823 = vadd.f32 %v1822, %v1784
        %v1824 = vadd.f32 %v1823, %v1787
        %v1825 = vadd.f32 %v1824, %v1790
        %v1826 = vadd.f32 %v1825, %v1793
        %v1827 = vadd.f32 %v1826, %v1796
        %v1828 = vadd.f32 %v1827, %v1799
        %v1829 = vadd.f32 %v1828, %v1802
        %v1830 = vadd.f32 %v1829, %v1805
        %v1831 = vadd.f32 %v1830, %v1808
        %v1832 = vadd.f32 %v1831, %v1811
        %v1833 = vadd.f32 %v1832, %v1814
        %v1834 = vadd.f32 %v1833, %v1817
        %v1835 = vadd.f32 %v1834, %v1820
        %v1836 = vrot.slane %v1835, 4
        %v1837 = vadd.f32 %v1835, %v1836
        %v1838 = vrot.slane %v1837, 2
        %v1839 = vadd.f32 %v1837, %v1838
        %v1840 = vrot.slane %v1839, 1
        %v1841 = vadd.f32 %v1839, %v1840
        %v1842 = vmul.f32 %v1841, %v1643
        %v1843 = vadd.f32 %v1842, 1e-05
        %v1844 = vrsqrt.pop %v1843
        %v1845 = vmul.f32 %v1645, %v1844
        %v1846 = vmul.f32 %v1646, %v1844
        %v1847 = vmul.f32 %v1647, %v1844
        %v1848 = vmul.f32 %v1648, %v1844
        %v1849 = vmul.f32 %v1649, %v1844
        %v1850 = vmul.f32 %v1650, %v1844
        %v1851 = vmul.f32 %v1651, %v1844
        %v1852 = vmul.f32 %v1652, %v1844
        %v1853 = vmul.f32 %v1653, %v1844
        %v1854 = vmul.f32 %v1654, %v1844
        %v1855 = vmul.f32 %v1655, %v1844
        %v1856 = vmul.f32 %v1656, %v1844
        %v1857 = vmul.f32 %v1657, %v1844
        %v1858 = vmul.f32 %v1658, %v1844
        %v1859 = vmul.f32 %v1659, %v1844
        %v1860 = vmul.f32 %v1660, %v1844
        %v1861 = vmul.f32 %v1661, %v1844
        %v1862 = vmul.f32 %v1662, %v1844
        %v1863 = vmul.f32 %v1663, %v1844
        %v1864 = vmul.f32 %v1664, %v1844
        %v1865 = vmul.f32 %v1665, %v1844
        %v1866 = vmul.f32 %v1666, %v1844
        %v1867 = vmul.f32 %v1667, %v1844
        %v1868 = vmul.f32 %v1668, %v1844
        %v1869 = vmul.f32 %v1669, %v1844
        %v1870 = vmul.f32 %v1670, %v1844
        %v1871 = vmul.f32 %v1671, %v1844
        %v1872 = vmul.f32 %v1672, %v1844
        %v1873 = vmul.f32 %v1673, %v1844
        %v1874 = vmul.f32 %v1674, %v1844
        %v1875 = vmul.f32 %v1675, %v1844
        %v1876 = vmul.f32 %v1676, %v1844
        %v1877 = vmul.f32 %v1677, %v1844
        %v1878 = vmul.f32 %v1678, %v1844
        %v1879 = vmul.f32 %v1679, %v1844
        %v1880 = vmul.f32 %v1680, %v1844
        %v1881 = vmul.f32 %v1681, %v1844
        %v1882 = vmul.f32 %v1682, %v1844
        %v1883 = vmul.f32 %v1683, %v1844
        %v1884 = vmul.f32 %v1684, %v1844
        %v1885 = vmul.f32 %v1685, %v1844
        %v1886 = vmul.f32 %v1686, %v1844
        %v1887 = vmul.f32 %v1687, %v1844
        %v1888 = vmul.f32 %v1688, %v1844
        %v1889 = vmul.f32 %v1689, %v1844
        %v1890 = vmul.f32 %v1690, %v1844
        %v1891 = vmul.f32 %v1691, %v1844
        %v1892 = vmul.f32 %v1692, %v1844
        %v1893 = vmul.f32 %v1693, %v1844
        %v1894 = vmul.f32 %v1694, %v1844
        %v1895 = vmul.f32 %v1695, %v1844
        %v1896 = vmul.f32 %v1696, %v1844
        %v1897 = vmul.f32 %v1697, %v1844
        %v1898 = vmul.f32 %v1698, %v1844
        %v1899 = vmul.f32 %v1699, %v1844
        %v1900 = vmul.f32 %v1700, %v1844
        %v1901 = vmul.f32 %v1701, %v1844
        %v1902 = vmul.f32 %v1702, %v1844
        %v1903 = vmul.f32 %v1703, %v1844
        %v1904 = vmul.f32 %v1704, %v1844
        %v1905 = vmul.f32 %v1705, %v1844
        %v1906 = vmul.f32 %v1706, %v1844
        %v1907 = vmul.f32 %v1707, %v1844
        %v1908 = vmul.f32 %v1708, %v1844
        %v1909 = vld [vmem:[%s2] sm:$0x1]
        %v1911 = vlaneseq
        %v1912 = vshrl.u32 %v1911, 7
        %v1913 = vsub.s32 0, %v1912
        %v1914 = vrot.slane %v1909, %v1913
        %v1916 = vmul.f32 %v1845, %v1914
        %v1917 = vmul.f32 %v1846, %v1914
        %v1918 = vmul.f32 %v1847, %v1914
        %v1919 = vmul.f32 %v1848, %v1914
        %v1920 = vmul.f32 %v1849, %v1914
        %v1921 = vmul.f32 %v1850, %v1914
        %v1922 = vmul.f32 %v1851, %v1914
        %v1923 = vmul.f32 %v1852, %v1914
        %v1924 = vmul.f32 %v1853, %v1914
        %v1925 = vmul.f32 %v1854, %v1914
        %v1926 = vmul.f32 %v1855, %v1914
        %v1927 = vmul.f32 %v1856, %v1914
        %v1928 = vmul.f32 %v1857, %v1914
        %v1929 = vmul.f32 %v1858, %v1914
        %v1930 = vmul.f32 %v1859, %v1914
        %v1931 = vmul.f32 %v1860, %v1914
        %v1932 = vmul.f32 %v1861, %v1914
        %v1933 = vmul.f32 %v1862, %v1914
        %v1934 = vmul.f32 %v1863, %v1914
        %v1935 = vmul.f32 %v1864, %v1914
        %v1936 = vmul.f32 %v1865, %v1914
        %v1937 = vmul.f32 %v1866, %v1914
        %v1938 = vmul.f32 %v1867, %v1914
        %v1939 = vmul.f32 %v1868, %v1914
        %v1940 = vmul.f32 %v1869, %v1914
        %v1941 = vmul.f32 %v1870, %v1914
        %v1942 = vmul.f32 %v1871, %v1914
        %v1943 = vmul.f32 %v1872, %v1914
        %v1944 = vmul.f32 %v1873, %v1914
        %v1945 = vmul.f32 %v1874, %v1914
        %v1946 = vmul.f32 %v1875, %v1914
        %v1947 = vmul.f32 %v1876, %v1914
        %v1948 = vmul.f32 %v1877, %v1914
        %v1949 = vmul.f32 %v1878, %v1914
        %v1950 = vmul.f32 %v1879, %v1914
        %v1951 = vmul.f32 %v1880, %v1914
        %v1952 = vmul.f32 %v1881, %v1914
        %v1953 = vmul.f32 %v1882, %v1914
        %v1954 = vmul.f32 %v1883, %v1914
        %v1955 = vmul.f32 %v1884, %v1914
        %v1956 = vmul.f32 %v1885, %v1914
        %v1957 = vmul.f32 %v1886, %v1914
        %v1958 = vmul.f32 %v1887, %v1914
        %v1959 = vmul.f32 %v1888, %v1914
        %v1960 = vmul.f32 %v1889, %v1914
        %v1961 = vmul.f32 %v1890, %v1914
        %v1962 = vmul.f32 %v1891, %v1914
        %v1963 = vmul.f32 %v1892, %v1914
        %v1964 = vmul.f32 %v1893, %v1914
        %v1965 = vmul.f32 %v1894, %v1914
        %v1966 = vmul.f32 %v1895, %v1914
        %v1967 = vmul.f32 %v1896, %v1914
        %v1968 = vmul.f32 %v1897, %v1914
        %v1969 = vmul.f32 %v1898, %v1914
        %v1970 = vmul.f32 %v1899, %v1914
        %v1971 = vmul.f32 %v1900, %v1914
        %v1972 = vmul.f32 %v1901, %v1914
        %v1973 = vmul.f32 %v1902, %v1914
        %v1974 = vmul.f32 %v1903, %v1914
        %v1975 = vmul.f32 %v1904, %v1914
        %v1976 = vmul.f32 %v1905, %v1914
        %v1977 = vmul.f32 %v1906, %v1914
        %v1978 = vmul.f32 %v1907, %v1914
        %v1979 = vmul.f32 %v1908, %v1914
        %v1980 = vld [vmem:[%s3] sm:$0x1]
        %v1982 = vlaneseq
        %v1983 = vshrl.u32 %v1982, 7
        %v1984 = vsub.s32 0, %v1983
        %v1985 = vrot.slane %v1980, %v1984
        %v1987 = vadd.f32 %v1916, %v1985
        %v1988 = vadd.f32 %v1917, %v1985
        %v1989 = vadd.f32 %v1918, %v1985
        %v1990 = vadd.f32 %v1919, %v1985
        %v1991 = vadd.f32 %v1920, %v1985
        %v1992 = vadd.f32 %v1921, %v1985
        %v1993 = vadd.f32 %v1922, %v1985
        %v1994 = vadd.f32 %v1923, %v1985
        %v1995 = vadd.f32 %v1924, %v1985
        %v1996 = vadd.f32 %v1925, %v1985
        %v1997 = vadd.f32 %v1926, %v1985
        %v1998 = vadd.f32 %v1927, %v1985
        %v1999 = vadd.f32 %v1928, %v1985
        %v2000 = vadd.f32 %v1929, %v1985
        %v2001 = vadd.f32 %v1930, %v1985
        %v2002 = vadd.f32 %v1931, %v1985
        %v2003 = vadd.f32 %v1932, %v1985
        %v2004 = vadd.f32 %v1933, %v1985
        %v2005 = vadd.f32 %v1934, %v1985
        %v2006 = vadd.f32 %v1935, %v1985
        %v2007 = vadd.f32 %v1936, %v1985
        %v2008 = vadd.f32 %v1937, %v1985
        %v2009 = vadd.f32 %v1938, %v1985
        %v2010 = vadd.f32 %v1939, %v1985
        %v2011 = vadd.f32 %v1940, %v1985
        %v2012 = vadd.f32 %v1941, %v1985
        %v2013 = vadd.f32 %v1942, %v1985
        %v2014 = vadd.f32 %v1943, %v1985
        %v2015 = vadd.f32 %v1944, %v1985
        %v2016 = vadd.f32 %v1945, %v1985
        %v2017 = vadd.f32 %v1946, %v1985
        %v2018 = vadd.f32 %v1947, %v1985
        %v2019 = vadd.f32 %v1948, %v1985
        %v2020 = vadd.f32 %v1949, %v1985
        %v2021 = vadd.f32 %v1950, %v1985
        %v2022 = vadd.f32 %v1951, %v1985
        %v2023 = vadd.f32 %v1952, %v1985
        %v2024 = vadd.f32 %v1953, %v1985
        %v2025 = vadd.f32 %v1954, %v1985
        %v2026 = vadd.f32 %v1955, %v1985
        %v2027 = vadd.f32 %v1956, %v1985
        %v2028 = vadd.f32 %v1957, %v1985
        %v2029 = vadd.f32 %v1958, %v1985
        %v2030 = vadd.f32 %v1959, %v1985
        %v2031 = vadd.f32 %v1960, %v1985
        %v2032 = vadd.f32 %v1961, %v1985
        %v2033 = vadd.f32 %v1962, %v1985
        %v2034 = vadd.f32 %v1963, %v1985
        %v2035 = vadd.f32 %v1964, %v1985
        %v2036 = vadd.f32 %v1965, %v1985
        %v2037 = vadd.f32 %v1966, %v1985
        %v2038 = vadd.f32 %v1967, %v1985
        %v2039 = vadd.f32 %v1968, %v1985
        %v2040 = vadd.f32 %v1969, %v1985
        %v2041 = vadd.f32 %v1970, %v1985
        %v2042 = vadd.f32 %v1971, %v1985
        %v2043 = vadd.f32 %v1972, %v1985
        %v2044 = vadd.f32 %v1973, %v1985
        %v2045 = vadd.f32 %v1974, %v1985
        %v2046 = vadd.f32 %v1975, %v1985
        %v2047 = vadd.f32 %v1976, %v1985
        %v2048 = vadd.f32 %v1977, %v1985
        %v2049 = vadd.f32 %v1978, %v1985
        %v2050 = vadd.f32 %v1979, %v1985
        %v2051 = vmax.f32 %v1987, 0.0
        %v2052 = vmax.f32 %v1988, 0.0
        %v2053 = vmax.f32 %v1989, 0.0
        %v2054 = vmax.f32 %v1990, 0.0
        %v2055 = vmax.f32 %v1991, 0.0
        %v2056 = vmax.f32 %v1992, 0.0
        %v2057 = vmax.f32 %v1993, 0.0
        %v2058 = vmax.f32 %v1994, 0.0
        %v2059 = vmax.f32 %v1995, 0.0
        %v2060 = vmax.f32 %v1996, 0.0
        %v2061 = vmax.f32 %v1997, 0.0
        %v2062 = vmax.f32 %v1998, 0.0
        %v2063 = vmax.f32 %v1999, 0.0
        %v2064 = vmax.f32 %v2000, 0.0
        %v2065 = vmax.f32 %v2001, 0.0
        %v2066 = vmax.f32 %v2002, 0.0
        %v2067 = vmax.f32 %v2003, 0.0
        %v2068 = vmax.f32 %v2004, 0.0
        %v2069 = vmax.f32 %v2005, 0.0
        %v2070 = vmax.f32 %v2006, 0.0
        %v2071 = vmax.f32 %v2007, 0.0
        %v2072 = vmax.f32 %v2008, 0.0
        %v2073 = vmax.f32 %v2009, 0.0
        %v2074 = vmax.f32 %v2010, 0.0
        %v2075 = vmax.f32 %v2011, 0.0
        %v2076 = vmax.f32 %v2012, 0.0
        %v2077 = vmax.f32 %v2013, 0.0
        %v2078 = vmax.f32 %v2014, 0.0
        %v2079 = vmax.f32 %v2015, 0.0
        %v2080 = vmax.f32 %v2016, 0.0
        %v2081 = vmax.f32 %v2017, 0.0
        %v2082 = vmax.f32 %v2018, 0.0
        %v2083 = vmax.f32 %v2019, 0.0
        %v2084 = vmax.f32 %v2020, 0.0
        %v2085 = vmax.f32 %v2021, 0.0
        %v2086 = vmax.f32 %v2022, 0.0
        %v2087 = vmax.f32 %v2023, 0.0
        %v2088 = vmax.f32 %v2024, 0.0
        %v2089 = vmax.f32 %v2025, 0.0
        %v2090 = vmax.f32 %v2026, 0.0
        %v2091 = vmax.f32 %v2027, 0.0
        %v2092 = vmax.f32 %v2028, 0.0
        %v2093 = vmax.f32 %v2029, 0.0
        %v2094 = vmax.f32 %v2030, 0.0
        %v2095 = vmax.f32 %v2031, 0.0
        %v2096 = vmax.f32 %v2032, 0.0
        %v2097 = vmax.f32 %v2033, 0.0
        %v2098 = vmax.f32 %v2034, 0.0
        %v2099 = vmax.f32 %v2035, 0.0
        %v2100 = vmax.f32 %v2036, 0.0
        %v2101 = vmax.f32 %v2037, 0.0
        %v2102 = vmax.f32 %v2038, 0.0
        %v2103 = vmax.f32 %v2039, 0.0
        %v2104 = vmax.f32 %v2040, 0.0
        %v2105 = vmax.f32 %v2041, 0.0
        %v2106 = vmax.f32 %v2042, 0.0
        %v2107 = vmax.f32 %v2043, 0.0
        %v2108 = vmax.f32 %v2044, 0.0
        %v2109 = vmax.f32 %v2045, 0.0
        %v2110 = vmax.f32 %v2046, 0.0
        %v2111 = vmax.f32 %v2047, 0.0
        %v2112 = vmax.f32 %v2048, 0.0
        %v2113 = vmax.f32 %v2049, 0.0
        %v2114 = vmax.f32 %v2050, 0.0
        %2115 = vst [vmem:[%s4] sm:$0xff] %v2051
        %2116 = vst [vmem:[%s4 + $0x8] sm:$0xff] %v2052
        %2117 = vst [vmem:[%s4 + $0x10] sm:$0xff] %v2053
        %2118 = vst [vmem:[%s4 + $0x18] sm:$0xff] %v2054
        %2119 = vst [vmem:[%s4 + $0x20] sm:$0xff] %v2055
        %2120 = vst [vmem:[%s4 + $0x28] sm:$0xff] %v2056
        %2121 = vst [vmem:[%s4 + $0x30] sm:$0xff] %v2057
        %2122 = vst [vmem:[%s4 + $0x38] sm:$0xff] %v2058
        %2123 = vst [vmem:[%s4 + $0x40] sm:$0xff] %v2059
        %2124 = vst [vmem:[%s4 + $0x48] sm:$0xff] %v2060
        %2125 = vst [vmem:[%s4 + $0x50] sm:$0xff] %v2061
        %2126 = vst [vmem:[%s4 + $0x58] sm:$0xff] %v2062
        %2127 = vst [vmem:[%s4 + $0x60] sm:$0xff] %v2063
        %2128 = vst [vmem:[%s4 + $0x68] sm:$0xff] %v2064
        %2129 = vst [vmem:[%s4 + $0x70] sm:$0xff] %v2065
        %2130 = vst [vmem:[%s4 + $0x78] sm:$0xff] %v2066
        %2131 = vst [vmem:[%s4 + $0x80] sm:$0xff] %v2067
        %2132 = vst [vmem:[%s4 + $0x88] sm:$0xff] %v2068
        %2133 = vst [vmem:[%s4 + $0x90] sm:$0xff] %v2069
        %2134 = vst [vmem:[%s4 + $0x98] sm:$0xff] %v2070
        %2135 = vst [vmem:[%s4 + $0xa0] sm:$0xff] %v2071
        %2136 = vst [vmem:[%s4 + $0xa8] sm:$0xff] %v2072
        %2137 = vst [vmem:[%s4 + $0xb0] sm:$0xff] %v2073
        %2138 = vst [vmem:[%s4 + $0xb8] sm:$0xff] %v2074
        %2139 = vst [vmem:[%s4 + $0xc0] sm:$0xff] %v2075
        %2140 = vst [vmem:[%s4 + $0xc8] sm:$0xff] %v2076
        %2141 = vst [vmem:[%s4 + $0xd0] sm:$0xff] %v2077
        %2142 = vst [vmem:[%s4 + $0xd8] sm:$0xff] %v2078
        %2143 = vst [vmem:[%s4 + $0xe0] sm:$0xff] %v2079
        %2144 = vst [vmem:[%s4 + $0xe8] sm:$0xff] %v2080
        %2145 = vst [vmem:[%s4 + $0xf0] sm:$0xff] %v2081
        %2146 = vst [vmem:[%s4 + $0xf8] sm:$0xff] %v2082
        %2147 = vst [vmem:[%s4 + $0x100] sm:$0xff] %v2083
        %2148 = vst [vmem:[%s4 + $0x108] sm:$0xff] %v2084
        %2149 = vst [vmem:[%s4 + $0x110] sm:$0xff] %v2085
        %2150 = vst [vmem:[%s4 + $0x118] sm:$0xff] %v2086
        %2151 = vst [vmem:[%s4 + $0x120] sm:$0xff] %v2087
        %2152 = vst [vmem:[%s4 + $0x128] sm:$0xff] %v2088
        %2153 = vst [vmem:[%s4 + $0x130] sm:$0xff] %v2089
        %2154 = vst [vmem:[%s4 + $0x138] sm:$0xff] %v2090
        %2155 = vst [vmem:[%s4 + $0x140] sm:$0xff] %v2091
        %2156 = vst [vmem:[%s4 + $0x148] sm:$0xff] %v2092
        %2157 = vst [vmem:[%s4 + $0x150] sm:$0xff] %v2093
        %2158 = vst [vmem:[%s4 + $0x158] sm:$0xff] %v2094
        %2159 = vst [vmem:[%s4 + $0x160] sm:$0xff] %v2095
        %2160 = vst [vmem:[%s4 + $0x168] sm:$0xff] %v2096
        %2161 = vst [vmem:[%s4 + $0x170] sm:$0xff] %v2097
        %2162 = vst [vmem:[%s4 + $0x178] sm:$0xff] %v2098
        %2163 = vst [vmem:[%s4 + $0x180] sm:$0xff] %v2099
        %2164 = vst [vmem:[%s4 + $0x188] sm:$0xff] %v2100
        %2165 = vst [vmem:[%s4 + $0x190] sm:$0xff] %v2101
        %2166 = vst [vmem:[%s4 + $0x198] sm:$0xff] %v2102
        %2167 = vst [vmem:[%s4 + $0x1a0] sm:$0xff] %v2103
        %2168 = vst [vmem:[%s4 + $0x1a8] sm:$0xff] %v2104
        %2169 = vst [vmem:[%s4 + $0x1b0] sm:$0xff] %v2105
        %2170 = vst [vmem:[%s4 + $0x1b8] sm:$0xff] %v2106
        %2171 = vst [vmem:[%s4 + $0x1c0] sm:$0xff] %v2107
        %2172 = vst [vmem:[%s4 + $0x1c8] sm:$0xff] %v2108
        %2173 = vst [vmem:[%s4 + $0x1d0] sm:$0xff] %v2109
        %2174 = vst [vmem:[%s4 + $0x1d8] sm:$0xff] %v2110
        %2175 = vst [vmem:[%s4 + $0x1e0] sm:$0xff] %v2111
        %2176 = vst [vmem:[%s4 + $0x1e8] sm:$0xff] %v2112
        %2177 = vst [vmem:[%s4 + $0x1f0] sm:$0xff] %v2113
        %2178 = vst [vmem:[%s4 + $0x1f8] sm:$0xff] %v2114
      $region40: #{generator_forward.6} parent=35 // pred_fallthru
        _
      // Predicated region
      $region41: #{generator_forward.6} parent=35 // pred_check
        %p2179 = pneg %p122
      $region42: #{generator_forward.6} parent=35 // pred_check_branch
        %2181 = sbr.rel (%p2179) target = $region44
      $region43: #{generator_forward.6} parent=35 // pred_region
        _
      $region44: #{generator_forward.6} parent=35 // pred_fallthru
        _
      // Predicated region
      $region45: #{generator_forward.6} parent=35 // pred_check
        %p2182 = pneg %p122
      $region46: #{generator_forward.6} parent=35 // pred_check_branch
        %2184 = sbr.rel (%p2182) target = $region48
      $region47: #{generator_forward.6} parent=35 // pred_region
        _
      $region48: #{generator_forward.6} parent=35 // pred_fallthru
        _
    $region36: #{generator_forward.6} parent=5 // pred_fallthru
      _
    %p2185 = scmp.le.s32.totalorder 2, %s10
    // Predicated region
    $region49: #{generator_forward.6} parent=5 // pred_check
      %p2186 = pneg %p2185
    $region50: #{generator_forward.6} parent=5 // pred_check_branch
      %2188 = sbr.rel (%p2186) target = $region52
    $region51: #{generator_forward.6} parent=5 // pred_region
      %s2189 = ssub.s32 %s10, 2
    $region52: #{generator_forward.6} parent=5 // pred_fallthru
      _
  $region6: #{generator_forward.6} parent=0 // loop_footer
    %s14 = sadd.s32 1, %s10
  $region7: #{generator_forward.6} parent=0 // loop_footer_branch
    %9 = sbr.rel target = $region3
  $region8: #{generator_forward.6} parent=0 // loop_exit
    _

// kernel: generator_forward.7
$region0: #{generator_forward.7}
  #allocation0 [shape = 'u32[]', space=smem, size = 0x4, offset = 0x4, fixed_abs, tag = 'smem constant byte address 0x4 - core index']
  #allocation1 [shape = 'u32[144,128]{1,0:T(1,128)}', space=vmem, size = 0x12000, scoped, tag = 'internal scratch']
  %s0 = inlined_call_operand.vmem [shape: bf16[512,2048], index: 0, kind: input, shape index: {}]
  %s1 = inlined_call_operand.vmem [shape: bf16[2048,4], index: 1, kind: input, shape index: {}]
  %s2 = inlined_call_operand.vmem [shape: f32[1,4], index: 2, kind: input, shape index: {}]
  %s3 = inlined_call_operand.vmem [shape: f32[512,4], index: 3, kind: output, shape index: {}]
  %s4 = sld [smem:[#allocation0]]
  $region22: #{generator_forward.7} parent=0
    _
  %s6 = ssub.s32 1, %s4
  %s7 = scalar_select 0, %s6, %s4
  // Predicated region
  $region2: #{generator_forward.7} parent=0 // pred_check
    _
  $region3: #{generator_forward.7} parent=0 // pred_check_branch
    %9 = sbr.rel (0) target = $region5
  $region4: #{generator_forward.7} parent=0 // pred_region
    _
  $region5: #{generator_forward.7} parent=0 // pred_fallthru
    _
  // Predicated region
  $region6: #{generator_forward.7} parent=0 // pred_check
    _
  $region7: #{generator_forward.7} parent=0 // pred_check_branch
    %11 = sbr.rel (0) target = $region9
  $region8: #{generator_forward.7} parent=0 // pred_region
    _
  $region9: #{generator_forward.7} parent=0 // pred_fallthru
    _
  // Predicated region
  $region10: #{generator_forward.7} parent=0 // pred_check
    _
  $region11: #{generator_forward.7} parent=0 // pred_check_branch
    %13 = sbr.rel (0) target = $region13
  $region12: #{generator_forward.7} parent=0 // pred_region
    _
  $region13: #{generator_forward.7} parent=0 // pred_fallthru
    _
  %v15 = vld [vmem:[%s0] sm:$0xff]
  %v16 = vld [vmem:[%s0 + $0x8] sm:$0xff]
  %v17 = vld [vmem:[%s0 + $0x10] sm:$0xff]
  %v18 = vld [vmem:[%s0 + $0x18] sm:$0xff]
  %v19 = vld [vmem:[%s0 + $0x20] sm:$0xff]
  %v20 = vld [vmem:[%s0 + $0x28] sm:$0xff]
  %v21 = vld [vmem:[%s0 + $0x30] sm:$0xff]
  %v22 = vld [vmem:[%s0 + $0x38] sm:$0xff]
  %v23 = vld [vmem:[%s0 + $0x40] sm:$0xff]
  %v24 = vld [vmem:[%s0 + $0x48] sm:$0xff]
  %v25 = vld [vmem:[%s0 + $0x50] sm:$0xff]
  %v26 = vld [vmem:[%s0 + $0x58] sm:$0xff]
  %v27 = vld [vmem:[%s0 + $0x60] sm:$0xff]
  %v28 = vld [vmem:[%s0 + $0x68] sm:$0xff]
  %v29 = vld [vmem:[%s0 + $0x70] sm:$0xff]
  %v30 = vld [vmem:[%s0 + $0x78] sm:$0xff]
  %v31 = vld [vmem:[%s0 + $0x80] sm:$0xff]
  %v32 = vld [vmem:[%s0 + $0x88] sm:$0xff]
  %v33 = vld [vmem:[%s0 + $0x90] sm:$0xff]
  %v34 = vld [vmem:[%s0 + $0x98] sm:$0xff]
  %v35 = vld [vmem:[%s0 + $0xa0] sm:$0xff]
  %v36 = vld [vmem:[%s0 + $0xa8] sm:$0xff]
  %v37 = vld [vmem:[%s0 + $0xb0] sm:$0xff]
  %v38 = vld [vmem:[%s0 + $0xb8] sm:$0xff]
  %v39 = vld [vmem:[%s0 + $0xc0] sm:$0xff]
  %v40 = vld [vmem:[%s0 + $0xc8] sm:$0xff]
  %v41 = vld [vmem:[%s0 + $0xd0] sm:$0xff]
  %v42 = vld [vmem:[%s0 + $0xd8] sm:$0xff]
  %v43 = vld [vmem:[%s0 + $0xe0] sm:$0xff]
  %v44 = vld [vmem:[%s0 + $0xe8] sm:$0xff]
  %v45 = vld [vmem:[%s0 + $0xf0] sm:$0xff]
  %v46 = vld [vmem:[%s0 + $0xf8] sm:$0xff]
  %v47 = vld [vmem:[%s0 + $0x100] sm:$0xff]
  %v48 = vld [vmem:[%s0 + $0x108] sm:$0xff]
  %v49 = vld [vmem:[%s0 + $0x110] sm:$0xff]
  %v50 = vld [vmem:[%s0 + $0x118] sm:$0xff]
  %v51 = vld [vmem:[%s0 + $0x120] sm:$0xff]
  %v52 = vld [vmem:[%s0 + $0x128] sm:$0xff]
  %v53 = vld [vmem:[%s0 + $0x130] sm:$0xff]
  %v54 = vld [vmem:[%s0 + $0x138] sm:$0xff]
  %v55 = vld [vmem:[%s0 + $0x140] sm:$0xff]
  %v56 = vld [vmem:[%s0 + $0x148] sm:$0xff]
  %v57 = vld [vmem:[%s0 + $0x150] sm:$0xff]
  %v58 = vld [vmem:[%s0 + $0x158] sm:$0xff]
  %v59 = vld [vmem:[%s0 + $0x160] sm:$0xff]
  %v60 = vld [vmem:[%s0 + $0x168] sm:$0xff]
  %v61 = vld [vmem:[%s0 + $0x170] sm:$0xff]
  %v62 = vld [vmem:[%s0 + $0x178] sm:$0xff]
  %v63 = vld [vmem:[%s0 + $0x180] sm:$0xff]
  %v64 = vld [vmem:[%s0 + $0x188] sm:$0xff]
  %v65 = vld [vmem:[%s0 + $0x190] sm:$0xff]
  %v66 = vld [vmem:[%s0 + $0x198] sm:$0xff]
  %v67 = vld [vmem:[%s0 + $0x1a0] sm:$0xff]
  %v68 = vld [vmem:[%s0 + $0x1a8] sm:$0xff]
  %v69 = vld [vmem:[%s0 + $0x1b0] sm:$0xff]
  %v70 = vld [vmem:[%s0 + $0x1b8] sm:$0xff]
  %v71 = vld [vmem:[%s0 + $0x1c0] sm:$0xff]
  %v72 = vld [vmem:[%s0 + $0x1c8] sm:$0xff]
  %v73 = vld [vmem:[%s0 + $0x1d0] sm:$0xff]
  %v74 = vld [vmem:[%s0 + $0x1d8] sm:$0xff]
  %v75 = vld [vmem:[%s0 + $0x1e0] sm:$0xff]
  %v76 = vld [vmem:[%s0 + $0x1e8] sm:$0xff]
  %v77 = vld [vmem:[%s0 + $0x1f0] sm:$0xff]
  %v78 = vld [vmem:[%s0 + $0x1f8] sm:$0xff]
  %v79 = vld [vmem:[%s0 + $0x200] sm:$0xff]
  %v80 = vld [vmem:[%s0 + $0x208] sm:$0xff]
  %v81 = vld [vmem:[%s0 + $0x210] sm:$0xff]
  %v82 = vld [vmem:[%s0 + $0x218] sm:$0xff]
  %v83 = vld [vmem:[%s0 + $0x220] sm:$0xff]
  %v84 = vld [vmem:[%s0 + $0x228] sm:$0xff]
  %v85 = vld [vmem:[%s0 + $0x230] sm:$0xff]
  %v86 = vld [vmem:[%s0 + $0x238] sm:$0xff]
  %v87 = vld [vmem:[%s0 + $0x240] sm:$0xff]
  %v88 = vld [vmem:[%s0 + $0x248] sm:$0xff]
  %v89 = vld [vmem:[%s0 + $0x250] sm:$0xff]
  %v90 = vld [vmem:[%s0 + $0x258] sm:$0xff]
  %v91 = vld [vmem:[%s0 + $0x260] sm:$0xff]
  %v92 = vld [vmem:[%s0 + $0x268] sm:$0xff]
  %v93 = vld [vmem:[%s0 + $0x270] sm:$0xff]
  %v94 = vld [vmem:[%s0 + $0x278] sm:$0xff]
  %v95 = vld [vmem:[%s0 + $0x280] sm:$0xff]
  %v96 = vld [vmem:[%s0 + $0x288] sm:$0xff]
  %v97 = vld [vmem:[%s0 + $0x290] sm:$0xff]
  %v98 = vld [vmem:[%s0 + $0x298] sm:$0xff]
  %v99 = vld [vmem:[%s0 + $0x2a0] sm:$0xff]
  %v100 = vld [vmem:[%s0 + $0x2a8] sm:$0xff]
  %v101 = vld [vmem:[%s0 + $0x2b0] sm:$0xff]
  %v102 = vld [vmem:[%s0 + $0x2b8] sm:$0xff]
  %v103 = vld [vmem:[%s0 + $0x2c0] sm:$0xff]
  %v104 = vld [vmem:[%s0 + $0x2c8] sm:$0xff]
  %v105 = vld [vmem:[%s0 + $0x2d0] sm:$0xff]
  %v106 = vld [vmem:[%s0 + $0x2d8] sm:$0xff]
  %v107 = vld [vmem:[%s0 + $0x2e0] sm:$0xff]
  %v108 = vld [vmem:[%s0 + $0x2e8] sm:$0xff]
  %v109 = vld [vmem:[%s0 + $0x2f0] sm:$0xff]
  %v110 = vld [vmem:[%s0 + $0x2f8] sm:$0xff]
  %v111 = vld [vmem:[%s0 + $0x300] sm:$0xff]
  %v112 = vld [vmem:[%s0 + $0x308] sm:$0xff]
  %v113 = vld [vmem:[%s0 + $0x310] sm:$0xff]
  %v114 = vld [vmem:[%s0 + $0x318] sm:$0xff]
  %v115 = vld [vmem:[%s0 + $0x320] sm:$0xff]
  %v116 = vld [vmem:[%s0 + $0x328] sm:$0xff]
  %v117 = vld [vmem:[%s0 + $0x330] sm:$0xff]
  %v118 = vld [vmem:[%s0 + $0x338] sm:$0xff]
  %v119 = vld [vmem:[%s0 + $0x340] sm:$0xff]
  %v120 = vld [vmem:[%s0 + $0x348] sm:$0xff]
  %v121 = vld [vmem:[%s0 + $0x350] sm:$0xff]
  %v122 = vld [vmem:[%s0 + $0x358] sm:$0xff]
  %v123 = vld [vmem:[%s0 + $0x360] sm:$0xff]
  %v124 = vld [vmem:[%s0 + $0x368] sm:$0xff]
  %v125 = vld [vmem:[%s0 + $0x370] sm:$0xff]
  %v126 = vld [vmem:[%s0 + $0x378] sm:$0xff]
  %v127 = vld [vmem:[%s0 + $0x380] sm:$0xff]
  %v128 = vld [vmem:[%s0 + $0x388] sm:$0xff]
  %v129 = vld [vmem:[%s0 + $0x390] sm:$0xff]
  %v130 = vld [vmem:[%s0 + $0x398] sm:$0xff]
  %v131 = vld [vmem:[%s0 + $0x3a0] sm:$0xff]
  %v132 = vld [vmem:[%s0 + $0x3a8] sm:$0xff]
  %v133 = vld [vmem:[%s0 + $0x3b0] sm:$0xff]
  %v134 = vld [vmem:[%s0 + $0x3b8] sm:$0xff]
  %v135 = vld [vmem:[%s0 + $0x3c0] sm:$0xff]
  %v136 = vld [vmem:[%s0 + $0x3c8] sm:$0xff]
  %v137 = vld [vmem:[%s0 + $0x3d0] sm:$0xff]
  %v138 = vld [vmem:[%s0 + $0x3d8] sm:$0xff]
  %v139 = vld [vmem:[%s0 + $0x3e0] sm:$0xff]
  %v140 = vld [vmem:[%s0 + $0x3e8] sm:$0xff]
  %v141 = vld [vmem:[%s0 + $0x3f0] sm:$0xff]
  %v142 = vld [vmem:[%s0 + $0x3f8] sm:$0xff]
  %v143 = vld [vmem:[%s0 + $0x400] sm:$0xff]
  %v144 = vld [vmem:[%s0 + $0x408] sm:$0xff]
  %v145 = vld [vmem:[%s0 + $0x410] sm:$0xff]
  %v146 = vld [vmem:[%s0 + $0x418] sm:$0xff]
  %v147 = vld [vmem:[%s0 + $0x420] sm:$0xff]
  %v148 = vld [vmem:[%s0 + $0x428] sm:$0xff]
  %v149 = vld [vmem:[%s0 + $0x430] sm:$0xff]
  %v150 = vld [vmem:[%s0 + $0x438] sm:$0xff]
  %v151 = vld [vmem:[%s0 + $0x440] sm:$0xff]
  %v152 = vld [vmem:[%s0 + $0x448] sm:$0xff]
  %v153 = vld [vmem:[%s0 + $0x450] sm:$0xff]
  %v154 = vld [vmem:[%s0 + $0x458] sm:$0xff]
  %v155 = vld [vmem:[%s0 + $0x460] sm:$0xff]
  %v156 = vld [vmem:[%s0 + $0x468] sm:$0xff]
  %v157 = vld [vmem:[%s0 + $0x470] sm:$0xff]
  %v158 = vld [vmem:[%s0 + $0x478] sm:$0xff]
  %v159 = vld [vmem:[%s0 + $0x480] sm:$0xff]
  %v160 = vld [vmem:[%s0 + $0x488] sm:$0xff]
  %v161 = vld [vmem:[%s0 + $0x490] sm:$0xff]
  %v162 = vld [vmem:[%s0 + $0x498] sm:$0xff]
  %v163 = vld [vmem:[%s0 + $0x4a0] sm:$0xff]
  %v164 = vld [vmem:[%s0 + $0x4a8] sm:$0xff]
  %v165 = vld [vmem:[%s0 + $0x4b0] sm:$0xff]
  %v166 = vld [vmem:[%s0 + $0x4b8] sm:$0xff]
  %v167 = vld [vmem:[%s0 + $0x4c0] sm:$0xff]
  %v168 = vld [vmem:[%s0 + $0x4c8] sm:$0xff]
  %v169 = vld [vmem:[%s0 + $0x4d0] sm:$0xff]
  %v170 = vld [vmem:[%s0 + $0x4d8] sm:$0xff]
  %v171 = vld [vmem:[%s0 + $0x4e0] sm:$0xff]
  %v172 = vld [vmem:[%s0 + $0x4e8] sm:$0xff]
  %v173 = vld [vmem:[%s0 + $0x4f0] sm:$0xff]
  %v174 = vld [vmem:[%s0 + $0x4f8] sm:$0xff]
  %v175 = vld [vmem:[%s0 + $0x500] sm:$0xff]
  %v176 = vld [vmem:[%s0 + $0x508] sm:$0xff]
  %v177 = vld [vmem:[%s0 + $0x510] sm:$0xff]
  %v178 = vld [vmem:[%s0 + $0x518] sm:$0xff]
  %v179 = vld [vmem:[%s0 + $0x520] sm:$0xff]
  %v180 = vld [vmem:[%s0 + $0x528] sm:$0xff]
  %v181 = vld [vmem:[%s0 + $0x530] sm:$0xff]
  %v182 = vld [vmem:[%s0 + $0x538] sm:$0xff]
  %v183 = vld [vmem:[%s0 + $0x540] sm:$0xff]
  %v184 = vld [vmem:[%s0 + $0x548] sm:$0xff]
  %v185 = vld [vmem:[%s0 + $0x550] sm:$0xff]
  %v186 = vld [vmem:[%s0 + $0x558] sm:$0xff]
  %v187 = vld [vmem:[%s0 + $0x560] sm:$0xff]
  %v188 = vld [vmem:[%s0 + $0x568] sm:$0xff]
  %v189 = vld [vmem:[%s0 + $0x570] sm:$0xff]
  %v190 = vld [vmem:[%s0 + $0x578] sm:$0xff]
  %v191 = vld [vmem:[%s0 + $0x580] sm:$0xff]
  %v192 = vld [vmem:[%s0 + $0x588] sm:$0xff]
  %v193 = vld [vmem:[%s0 + $0x590] sm:$0xff]
  %v194 = vld [vmem:[%s0 + $0x598] sm:$0xff]
  %v195 = vld [vmem:[%s0 + $0x5a0] sm:$0xff]
  %v196 = vld [vmem:[%s0 + $0x5a8] sm:$0xff]
  %v197 = vld [vmem:[%s0 + $0x5b0] sm:$0xff]
  %v198 = vld [vmem:[%s0 + $0x5b8] sm:$0xff]
  %v199 = vld [vmem:[%s0 + $0x5c0] sm:$0xff]
  %v200 = vld [vmem:[%s0 + $0x5c8] sm:$0xff]
  %v201 = vld [vmem:[%s0 + $0x5d0] sm:$0xff]
  %v202 = vld [vmem:[%s0 + $0x5d8] sm:$0xff]
  %v203 = vld [vmem:[%s0 + $0x5e0] sm:$0xff]
  %v204 = vld [vmem:[%s0 + $0x5e8] sm:$0xff]
  %v205 = vld [vmem:[%s0 + $0x5f0] sm:$0xff]
  %v206 = vld [vmem:[%s0 + $0x5f8] sm:$0xff]
  %v207 = vld [vmem:[%s0 + $0x600] sm:$0xff]
  %v208 = vld [vmem:[%s0 + $0x608] sm:$0xff]
  %v209 = vld [vmem:[%s0 + $0x610] sm:$0xff]
  %v210 = vld [vmem:[%s0 + $0x618] sm:$0xff]
  %v211 = vld [vmem:[%s0 + $0x620] sm:$0xff]
  %v212 = vld [vmem:[%s0 + $0x628] sm:$0xff]
  %v213 = vld [vmem:[%s0 + $0x630] sm:$0xff]
  %v214 = vld [vmem:[%s0 + $0x638] sm:$0xff]
  %v215 = vld [vmem:[%s0 + $0x640] sm:$0xff]
  %v216 = vld [vmem:[%s0 + $0x648] sm:$0xff]
  %v217 = vld [vmem:[%s0 + $0x650] sm:$0xff]
  %v218 = vld [vmem:[%s0 + $0x658] sm:$0xff]
  %v219 = vld [vmem:[%s0 + $0x660] sm:$0xff]
  %v220 = vld [vmem:[%s0 + $0x668] sm:$0xff]
  %v221 = vld [vmem:[%s0 + $0x670] sm:$0xff]
  %v222 = vld [vmem:[%s0 + $0x678] sm:$0xff]
  %v223 = vld [vmem:[%s0 + $0x680] sm:$0xff]
  %v224 = vld [vmem:[%s0 + $0x688] sm:$0xff]
  %v225 = vld [vmem:[%s0 + $0x690] sm:$0xff]
  %v226 = vld [vmem:[%s0 + $0x698] sm:$0xff]
  %v227 = vld [vmem:[%s0 + $0x6a0] sm:$0xff]
  %v228 = vld [vmem:[%s0 + $0x6a8] sm:$0xff]
  %v229 = vld [vmem:[%s0 + $0x6b0] sm:$0xff]
  %v230 = vld [vmem:[%s0 + $0x6b8] sm:$0xff]
  %v231 = vld [vmem:[%s0 + $0x6c0] sm:$0xff]
  %v232 = vld [vmem:[%s0 + $0x6c8] sm:$0xff]
  %v233 = vld [vmem:[%s0 + $0x6d0] sm:$0xff]
  %v234 = vld [vmem:[%s0 + $0x6d8] sm:$0xff]
  %v235 = vld [vmem:[%s0 + $0x6e0] sm:$0xff]
  %v236 = vld [vmem:[%s0 + $0x6e8] sm:$0xff]
  %v237 = vld [vmem:[%s0 + $0x6f0] sm:$0xff]
  %v238 = vld [vmem:[%s0 + $0x6f8] sm:$0xff]
  %v239 = vld [vmem:[%s0 + $0x700] sm:$0xff]
  %v240 = vld [vmem:[%s0 + $0x708] sm:$0xff]
  %v241 = vld [vmem:[%s0 + $0x710] sm:$0xff]
  %v242 = vld [vmem:[%s0 + $0x718] sm:$0xff]
  %v243 = vld [vmem:[%s0 + $0x720] sm:$0xff]
  %v244 = vld [vmem:[%s0 + $0x728] sm:$0xff]
  %v245 = vld [vmem:[%s0 + $0x730] sm:$0xff]
  %v246 = vld [vmem:[%s0 + $0x738] sm:$0xff]
  %v247 = vld [vmem:[%s0 + $0x740] sm:$0xff]
  %v248 = vld [vmem:[%s0 + $0x748] sm:$0xff]
  %v249 = vld [vmem:[%s0 + $0x750] sm:$0xff]
  %v250 = vld [vmem:[%s0 + $0x758] sm:$0xff]
  %v251 = vld [vmem:[%s0 + $0x760] sm:$0xff]
  %v252 = vld [vmem:[%s0 + $0x768] sm:$0xff]
  %v253 = vld [vmem:[%s0 + $0x770] sm:$0xff]
  %v254 = vld [vmem:[%s0 + $0x778] sm:$0xff]
  %v255 = vld [vmem:[%s0 + $0x780] sm:$0xff]
  %v256 = vld [vmem:[%s0 + $0x788] sm:$0xff]
  %v257 = vld [vmem:[%s0 + $0x790] sm:$0xff]
  %v258 = vld [vmem:[%s0 + $0x798] sm:$0xff]
  %v259 = vld [vmem:[%s0 + $0x7a0] sm:$0xff]
  %v260 = vld [vmem:[%s0 + $0x7a8] sm:$0xff]
  %v261 = vld [vmem:[%s0 + $0x7b0] sm:$0xff]
  %v262 = vld [vmem:[%s0 + $0x7b8] sm:$0xff]
  %v263 = vld [vmem:[%s0 + $0x7c0] sm:$0xff]
  %v264 = vld [vmem:[%s0 + $0x7c8] sm:$0xff]
  %v265 = vld [vmem:[%s0 + $0x7d0] sm:$0xff]
  %v266 = vld [vmem:[%s0 + $0x7d8] sm:$0xff]
  %v267 = vld [vmem:[%s0 + $0x7e0] sm:$0xff]
  %v268 = vld [vmem:[%s0 + $0x7e8] sm:$0xff]
  %v269 = vld [vmem:[%s0 + $0x7f0] sm:$0xff]
  %v270 = vld [vmem:[%s0 + $0x7f8] sm:$0xff]
  %v271 = vld [vmem:[%s0 + $0x800] sm:$0xff]
  %v272 = vld [vmem:[%s0 + $0x808] sm:$0xff]
  %v273 = vld [vmem:[%s0 + $0x810] sm:$0xff]
  %v274 = vld [vmem:[%s0 + $0x818] sm:$0xff]
  %v275 = vld [vmem:[%s0 + $0x820] sm:$0xff]
  %v276 = vld [vmem:[%s0 + $0x828] sm:$0xff]
  %v277 = vld [vmem:[%s0 + $0x830] sm:$0xff]
  %v278 = vld [vmem:[%s0 + $0x838] sm:$0xff]
  %v279 = vld [vmem:[%s0 + $0x840] sm:$0xff]
  %v280 = vld [vmem:[%s0 + $0x848] sm:$0xff]
  %v281 = vld [vmem:[%s0 + $0x850] sm:$0xff]
  %v282 = vld [vmem:[%s0 + $0x858] sm:$0xff]
  %v283 = vld [vmem:[%s0 + $0x860] sm:$0xff]
  %v284 = vld [vmem:[%s0 + $0x868] sm:$0xff]
  %v285 = vld [vmem:[%s0 + $0x870] sm:$0xff]
  %v286 = vld [vmem:[%s0 + $0x878] sm:$0xff]
  %v287 = vld [vmem:[%s0 + $0x880] sm:$0xff]
  %v288 = vld [vmem:[%s0 + $0x888] sm:$0xff]
  %v289 = vld [vmem:[%s0 + $0x890] sm:$0xff]
  %v290 = vld [vmem:[%s0 + $0x898] sm:$0xff]
  %v291 = vld [vmem:[%s0 + $0x8a0] sm:$0xff]
  %v292 = vld [vmem:[%s0 + $0x8a8] sm:$0xff]
  %v293 = vld [vmem:[%s0 + $0x8b0] sm:$0xff]
  %v294 = vld [vmem:[%s0 + $0x8b8] sm:$0xff]
  %v295 = vld [vmem:[%s0 + $0x8c0] sm:$0xff]
  %v296 = vld [vmem:[%s0 + $0x8c8] sm:$0xff]
  %v297 = vld [vmem:[%s0 + $0x8d0] sm:$0xff]
  %v298 = vld [vmem:[%s0 + $0x8d8] sm:$0xff]
  %v299 = vld [vmem:[%s0 + $0x8e0] sm:$0xff]
  %v300 = vld [vmem:[%s0 + $0x8e8] sm:$0xff]
  %v301 = vld [vmem:[%s0 + $0x8f0] sm:$0xff]
  %v302 = vld [vmem:[%s0 + $0x8f8] sm:$0xff]
  %v303 = vld [vmem:[%s0 + $0x900] sm:$0xff]
  %v304 = vld [vmem:[%s0 + $0x908] sm:$0xff]
  %v305 = vld [vmem:[%s0 + $0x910] sm:$0xff]
  %v306 = vld [vmem:[%s0 + $0x918] sm:$0xff]
  %v307 = vld [vmem:[%s0 + $0x920] sm:$0xff]
  %v308 = vld [vmem:[%s0 + $0x928] sm:$0xff]
  %v309 = vld [vmem:[%s0 + $0x930] sm:$0xff]
  %v310 = vld [vmem:[%s0 + $0x938] sm:$0xff]
  %v311 = vld [vmem:[%s0 + $0x940] sm:$0xff]
  %v312 = vld [vmem:[%s0 + $0x948] sm:$0xff]
  %v313 = vld [vmem:[%s0 + $0x950] sm:$0xff]
  %v314 = vld [vmem:[%s0 + $0x958] sm:$0xff]
  %v315 = vld [vmem:[%s0 + $0x960] sm:$0xff]
  %v316 = vld [vmem:[%s0 + $0x968] sm:$0xff]
  %v317 = vld [vmem:[%s0 + $0x970] sm:$0xff]
  %v318 = vld [vmem:[%s0 + $0x978] sm:$0xff]
  %v319 = vld [vmem:[%s0 + $0x980] sm:$0xff]
  %v320 = vld [vmem:[%s0 + $0x988] sm:$0xff]
  %v321 = vld [vmem:[%s0 + $0x990] sm:$0xff]
  %v322 = vld [vmem:[%s0 + $0x998] sm:$0xff]
  %v323 = vld [vmem:[%s0 + $0x9a0] sm:$0xff]
  %v324 = vld [vmem:[%s0 + $0x9a8] sm:$0xff]
  %v325 = vld [vmem:[%s0 + $0x9b0] sm:$0xff]
  %v326 = vld [vmem:[%s0 + $0x9b8] sm:$0xff]
  %v327 = vld [vmem:[%s0 + $0x9c0] sm:$0xff]
  %v328 = vld [vmem:[%s0 + $0x9c8] sm:$0xff]
  %v329 = vld [vmem:[%s0 + $0x9d0] sm:$0xff]
  %v330 = vld [vmem:[%s0 + $0x9d8] sm:$0xff]
  %v331 = vld [vmem:[%s0 + $0x9e0] sm:$0xff]
  %v332 = vld [vmem:[%s0 + $0x9e8] sm:$0xff]
  %v333 = vld [vmem:[%s0 + $0x9f0] sm:$0xff]
  %v334 = vld [vmem:[%s0 + $0x9f8] sm:$0xff]
  %v335 = vld [vmem:[%s0 + $0xa00] sm:$0xff]
  %v336 = vld [vmem:[%s0 + $0xa08] sm:$0xff]
  %v337 = vld [vmem:[%s0 + $0xa10] sm:$0xff]
  %v338 = vld [vmem:[%s0 + $0xa18] sm:$0xff]
  %v339 = vld [vmem:[%s0 + $0xa20] sm:$0xff]
  %v340 = vld [vmem:[%s0 + $0xa28] sm:$0xff]
  %v341 = vld [vmem:[%s0 + $0xa30] sm:$0xff]
  %v342 = vld [vmem:[%s0 + $0xa38] sm:$0xff]
  %v343 = vld [vmem:[%s0 + $0xa40] sm:$0xff]
  %v344 = vld [vmem:[%s0 + $0xa48] sm:$0xff]
  %v345 = vld [vmem:[%s0 + $0xa50] sm:$0xff]
  %v346 = vld [vmem:[%s0 + $0xa58] sm:$0xff]
  %v347 = vld [vmem:[%s0 + $0xa60] sm:$0xff]
  %v348 = vld [vmem:[%s0 + $0xa68] sm:$0xff]
  %v349 = vld [vmem:[%s0 + $0xa70] sm:$0xff]
  %v350 = vld [vmem:[%s0 + $0xa78] sm:$0xff]
  %v351 = vld [vmem:[%s0 + $0xa80] sm:$0xff]
  %v352 = vld [vmem:[%s0 + $0xa88] sm:$0xff]
  %v353 = vld [vmem:[%s0 + $0xa90] sm:$0xff]
  %v354 = vld [vmem:[%s0 + $0xa98] sm:$0xff]
  %v355 = vld [vmem:[%s0 + $0xaa0] sm:$0xff]
  %v356 = vld [vmem:[%s0 + $0xaa8] sm:$0xff]
  %v357 = vld [vmem:[%s0 + $0xab0] sm:$0xff]
  %v358 = vld [vmem:[%s0 + $0xab8] sm:$0xff]
  %v359 = vld [vmem:[%s0 + $0xac0] sm:$0xff]
  %v360 = vld [vmem:[%s0 + $0xac8] sm:$0xff]
  %v361 = vld [vmem:[%s0 + $0xad0] sm:$0xff]
  %v362 = vld [vmem:[%s0 + $0xad8] sm:$0xff]
  %v363 = vld [vmem:[%s0 + $0xae0] sm:$0xff]
  %v364 = vld [vmem:[%s0 + $0xae8] sm:$0xff]
  %v365 = vld [vmem:[%s0 + $0xaf0] sm:$0xff]
  %v366 = vld [vmem:[%s0 + $0xaf8] sm:$0xff]
  %v367 = vld [vmem:[%s0 + $0xb00] sm:$0xff]
  %v368 = vld [vmem:[%s0 + $0xb08] sm:$0xff]
  %v369 = vld [vmem:[%s0 + $0xb10] sm:$0xff]
  %v370 = vld [vmem:[%s0 + $0xb18] sm:$0xff]
  %v371 = vld [vmem:[%s0 + $0xb20] sm:$0xff]
  %v372 = vld [vmem:[%s0 + $0xb28] sm:$0xff]
  %v373 = vld [vmem:[%s0 + $0xb30] sm:$0xff]
  %v374 = vld [vmem:[%s0 + $0xb38] sm:$0xff]
  %v375 = vld [vmem:[%s0 + $0xb40] sm:$0xff]
  %v376 = vld [vmem:[%s0 + $0xb48] sm:$0xff]
  %v377 = vld [vmem:[%s0 + $0xb50] sm:$0xff]
  %v378 = vld [vmem:[%s0 + $0xb58] sm:$0xff]
  %v379 = vld [vmem:[%s0 + $0xb60] sm:$0xff]
  %v380 = vld [vmem:[%s0 + $0xb68] sm:$0xff]
  %v381 = vld [vmem:[%s0 + $0xb70] sm:$0xff]
  %v382 = vld [vmem:[%s0 + $0xb78] sm:$0xff]
  %v383 = vld [vmem:[%s0 + $0xb80] sm:$0xff]
  %v384 = vld [vmem:[%s0 + $0xb88] sm:$0xff]
  %v385 = vld [vmem:[%s0 + $0xb90] sm:$0xff]
  %v386 = vld [vmem:[%s0 + $0xb98] sm:$0xff]
  %v387 = vld [vmem:[%s0 + $0xba0] sm:$0xff]
  %v388 = vld [vmem:[%s0 + $0xba8] sm:$0xff]
  %v389 = vld [vmem:[%s0 + $0xbb0] sm:$0xff]
  %v390 = vld [vmem:[%s0 + $0xbb8] sm:$0xff]
  %v391 = vld [vmem:[%s0 + $0xbc0] sm:$0xff]
  %v392 = vld [vmem:[%s0 + $0xbc8] sm:$0xff]
  %v393 = vld [vmem:[%s0 + $0xbd0] sm:$0xff]
  %v394 = vld [vmem:[%s0 + $0xbd8] sm:$0xff]
  %v395 = vld [vmem:[%s0 + $0xbe0] sm:$0xff]
  %v396 = vld [vmem:[%s0 + $0xbe8] sm:$0xff]
  %v397 = vld [vmem:[%s0 + $0xbf0] sm:$0xff]
  %v398 = vld [vmem:[%s0 + $0xbf8] sm:$0xff]
  %v399 = vld [vmem:[%s0 + $0xc00] sm:$0xff]
  %v400 = vld [vmem:[%s0 + $0xc08] sm:$0xff]
  %v401 = vld [vmem:[%s0 + $0xc10] sm:$0xff]
  %v402 = vld [vmem:[%s0 + $0xc18] sm:$0xff]
  %v403 = vld [vmem:[%s0 + $0xc20] sm:$0xff]
  %v404 = vld [vmem:[%s0 + $0xc28] sm:$0xff]
  %v405 = vld [vmem:[%s0 + $0xc30] sm:$0xff]
  %v406 = vld [vmem:[%s0 + $0xc38] sm:$0xff]
  %v407 = vld [vmem:[%s0 + $0xc40] sm:$0xff]
  %v408 = vld [vmem:[%s0 + $0xc48] sm:$0xff]
  %v409 = vld [vmem:[%s0 + $0xc50] sm:$0xff]
  %v410 = vld [vmem:[%s0 + $0xc58] sm:$0xff]
  %v411 = vld [vmem:[%s0 + $0xc60] sm:$0xff]
  %v412 = vld [vmem:[%s0 + $0xc68] sm:$0xff]
  %v413 = vld [vmem:[%s0 + $0xc70] sm:$0xff]
  %v414 = vld [vmem:[%s0 + $0xc78] sm:$0xff]
  %v415 = vld [vmem:[%s0 + $0xc80] sm:$0xff]
  %v416 = vld [vmem:[%s0 + $0xc88] sm:$0xff]
  %v417 = vld [vmem:[%s0 + $0xc90] sm:$0xff]
  %v418 = vld [vmem:[%s0 + $0xc98] sm:$0xff]
  %v419 = vld [vmem:[%s0 + $0xca0] sm:$0xff]
  %v420 = vld [vmem:[%s0 + $0xca8] sm:$0xff]
  %v421 = vld [vmem:[%s0 + $0xcb0] sm:$0xff]
  %v422 = vld [vmem:[%s0 + $0xcb8] sm:$0xff]
  %v423 = vld [vmem:[%s0 + $0xcc0] sm:$0xff]
  %v424 = vld [vmem:[%s0 + $0xcc8] sm:$0xff]
  %v425 = vld [vmem:[%s0 + $0xcd0] sm:$0xff]
  %v426 = vld [vmem:[%s0 + $0xcd8] sm:$0xff]
  %v427 = vld [vmem:[%s0 + $0xce0] sm:$0xff]
  %v428 = vld [vmem:[%s0 + $0xce8] sm:$0xff]
  %v429 = vld [vmem:[%s0 + $0xcf0] sm:$0xff]
  %v430 = vld [vmem:[%s0 + $0xcf8] sm:$0xff]
  %v431 = vld [vmem:[%s0 + $0xd00] sm:$0xff]
  %v432 = vld [vmem:[%s0 + $0xd08] sm:$0xff]
  %v433 = vld [vmem:[%s0 + $0xd10] sm:$0xff]
  %v434 = vld [vmem:[%s0 + $0xd18] sm:$0xff]
  %v435 = vld [vmem:[%s0 + $0xd20] sm:$0xff]
  %v436 = vld [vmem:[%s0 + $0xd28] sm:$0xff]
  %v437 = vld [vmem:[%s0 + $0xd30] sm:$0xff]
  %v438 = vld [vmem:[%s0 + $0xd38] sm:$0xff]
  %v439 = vld [vmem:[%s0 + $0xd40] sm:$0xff]
  %v440 = vld [vmem:[%s0 + $0xd48] sm:$0xff]
  %v441 = vld [vmem:[%s0 + $0xd50] sm:$0xff]
  %v442 = vld [vmem:[%s0 + $0xd58] sm:$0xff]
  %v443 = vld [vmem:[%s0 + $0xd60] sm:$0xff]
  %v444 = vld [vmem:[%s0 + $0xd68] sm:$0xff]
  %v445 = vld [vmem:[%s0 + $0xd70] sm:$0xff]
  %v446 = vld [vmem:[%s0 + $0xd78] sm:$0xff]
  %v447 = vld [vmem:[%s0 + $0xd80] sm:$0xff]
  %v448 = vld [vmem:[%s0 + $0xd88] sm:$0xff]
  %v449 = vld [vmem:[%s0 + $0xd90] sm:$0xff]
  %v450 = vld [vmem:[%s0 + $0xd98] sm:$0xff]
  %v451 = vld [vmem:[%s0 + $0xda0] sm:$0xff]
  %v452 = vld [vmem:[%s0 + $0xda8] sm:$0xff]
  %v453 = vld [vmem:[%s0 + $0xdb0] sm:$0xff]
  %v454 = vld [vmem:[%s0 + $0xdb8] sm:$0xff]
  %v455 = vld [vmem:[%s0 + $0xdc0] sm:$0xff]
  %v456 = vld [vmem:[%s0 + $0xdc8] sm:$0xff]
  %v457 = vld [vmem:[%s0 + $0xdd0] sm:$0xff]
  %v458 = vld [vmem:[%s0 + $0xdd8] sm:$0xff]
  %v459 = vld [vmem:[%s0 + $0xde0] sm:$0xff]
  %v460 = vld [vmem:[%s0 + $0xde8] sm:$0xff]
  %v461 = vld [vmem:[%s0 + $0xdf0] sm:$0xff]
  %v462 = vld [vmem:[%s0 + $0xdf8] sm:$0xff]
  %v463 = vld [vmem:[%s0 + $0xe00] sm:$0xff]
  %v464 = vld [vmem:[%s0 + $0xe08] sm:$0xff]
  %v465 = vld [vmem:[%s0 + $0xe10] sm:$0xff]
  %v466 = vld [vmem:[%s0 + $0xe18] sm:$0xff]
  %v467 = vld [vmem:[%s0 + $0xe20] sm:$0xff]
  %v468 = vld [vmem:[%s0 + $0xe28] sm:$0xff]
  %v469 = vld [vmem:[%s0 + $0xe30] sm:$0xff]
  %v470 = vld [vmem:[%s0 + $0xe38] sm:$0xff]
  %v471 = vld [vmem:[%s0 + $0xe40] sm:$0xff]
  %v472 = vld [vmem:[%s0 + $0xe48] sm:$0xff]
  %v473 = vld [vmem:[%s0 + $0xe50] sm:$0xff]
  %v474 = vld [vmem:[%s0 + $0xe58] sm:$0xff]
  %v475 = vld [vmem:[%s0 + $0xe60] sm:$0xff]
  %v476 = vld [vmem:[%s0 + $0xe68] sm:$0xff]
  %v477 = vld [vmem:[%s0 + $0xe70] sm:$0xff]
  %v478 = vld [vmem:[%s0 + $0xe78] sm:$0xff]
  %v479 = vld [vmem:[%s0 + $0xe80] sm:$0xff]
  %v480 = vld [vmem:[%s0 + $0xe88] sm:$0xff]
  %v481 = vld [vmem:[%s0 + $0xe90] sm:$0xff]
  %v482 = vld [vmem:[%s0 + $0xe98] sm:$0xff]
  %v483 = vld [vmem:[%s0 + $0xea0] sm:$0xff]
  %v484 = vld [vmem:[%s0 + $0xea8] sm:$0xff]
  %v485 = vld [vmem:[%s0 + $0xeb0] sm:$0xff]
  %v486 = vld [vmem:[%s0 + $0xeb8] sm:$0xff]
  %v487 = vld [vmem:[%s0 + $0xec0] sm:$0xff]
  %v488 = vld [vmem:[%s0 + $0xec8] sm:$0xff]
  %v489 = vld [vmem:[%s0 + $0xed0] sm:$0xff]
  %v490 = vld [vmem:[%s0 + $0xed8] sm:$0xff]
  %v491 = vld [vmem:[%s0 + $0xee0] sm:$0xff]
  %v492 = vld [vmem:[%s0 + $0xee8] sm:$0xff]
  %v493 = vld [vmem:[%s0 + $0xef0] sm:$0xff]
  %v494 = vld [vmem:[%s0 + $0xef8] sm:$0xff]
  %v495 = vld [vmem:[%s0 + $0xf00] sm:$0xff]
  %v496 = vld [vmem:[%s0 + $0xf08] sm:$0xff]
  %v497 = vld [vmem:[%s0 + $0xf10] sm:$0xff]
  %v498 = vld [vmem:[%s0 + $0xf18] sm:$0xff]
  %v499 = vld [vmem:[%s0 + $0xf20] sm:$0xff]
  %v500 = vld [vmem:[%s0 + $0xf28] sm:$0xff]
  %v501 = vld [vmem:[%s0 + $0xf30] sm:$0xff]
  %v502 = vld [vmem:[%s0 + $0xf38] sm:$0xff]
  %v503 = vld [vmem:[%s0 + $0xf40] sm:$0xff]
  %v504 = vld [vmem:[%s0 + $0xf48] sm:$0xff]
  %v505 = vld [vmem:[%s0 + $0xf50] sm:$0xff]
  %v506 = vld [vmem:[%s0 + $0xf58] sm:$0xff]
  %v507 = vld [vmem:[%s0 + $0xf60] sm:$0xff]
  %v508 = vld [vmem:[%s0 + $0xf68] sm:$0xff]
  %v509 = vld [vmem:[%s0 + $0xf70] sm:$0xff]
  %v510 = vld [vmem:[%s0 + $0xf78] sm:$0xff]
  %v511 = vld [vmem:[%s0 + $0xf80] sm:$0xff]
  %v512 = vld [vmem:[%s0 + $0xf88] sm:$0xff]
  %v513 = vld [vmem:[%s0 + $0xf90] sm:$0xff]
  %v514 = vld [vmem:[%s0 + $0xf98] sm:$0xff]
  %v515 = vld [vmem:[%s0 + $0xfa0] sm:$0xff]
  %v516 = vld [vmem:[%s0 + $0xfa8] sm:$0xff]
  %v517 = vld [vmem:[%s0 + $0xfb0] sm:$0xff]
  %v518 = vld [vmem:[%s0 + $0xfb8] sm:$0xff]
  %v519 = vld [vmem:[%s0 + $0xfc0] sm:$0xff]
  %v520 = vld [vmem:[%s0 + $0xfc8] sm:$0xff]
  %v521 = vld [vmem:[%s0 + $0xfd0] sm:$0xff]
  %v522 = vld [vmem:[%s0 + $0xfd8] sm:$0xff]
  %v523 = vld [vmem:[%s0 + $0xfe0] sm:$0xff]
  %v524 = vld [vmem:[%s0 + $0xfe8] sm:$0xff]
  %v525 = vld [vmem:[%s0 + $0xff0] sm:$0xff]
  %v526 = vld [vmem:[%s0 + $0xff8] sm:$0xff]
  %v527 = vld [vmem:[%s1] sm:$0xf]
  %v528 = vld [vmem:[%s1 + $0x4] sm:$0xf]
  %v529 = vld [vmem:[%s1 + $0x8] sm:$0xf]
  %v530 = vld [vmem:[%s1 + $0xc] sm:$0xf]
  %v531 = vld [vmem:[%s1 + $0x10] sm:$0xf]
  %v532 = vld [vmem:[%s1 + $0x14] sm:$0xf]
  %v533 = vld [vmem:[%s1 + $0x18] sm:$0xf]
  %v534 = vld [vmem:[%s1 + $0x1c] sm:$0xf]
  %v535 = vld [vmem:[%s1 + $0x20] sm:$0xf]
  %v536 = vld [vmem:[%s1 + $0x24] sm:$0xf]
  %v537 = vld [vmem:[%s1 + $0x28] sm:$0xf]
  %v538 = vld [vmem:[%s1 + $0x2c] sm:$0xf]
  %v539 = vld [vmem:[%s1 + $0x30] sm:$0xf]
  %v540 = vld [vmem:[%s1 + $0x34] sm:$0xf]
  %v541 = vld [vmem:[%s1 + $0x38] sm:$0xf]
  %v542 = vld [vmem:[%s1 + $0x3c] sm:$0xf]
  %v543 = vld [vmem:[%s1 + $0x40] sm:$0xf]
  %v544 = vld [vmem:[%s1 + $0x44] sm:$0xf]
  %v545 = vld [vmem:[%s1 + $0x48] sm:$0xf]
  %v546 = vld [vmem:[%s1 + $0x4c] sm:$0xf]
  %v547 = vld [vmem:[%s1 + $0x50] sm:$0xf]
  %v548 = vld [vmem:[%s1 + $0x54] sm:$0xf]
  %v549 = vld [vmem:[%s1 + $0x58] sm:$0xf]
  %v550 = vld [vmem:[%s1 + $0x5c] sm:$0xf]
  %v551 = vld [vmem:[%s1 + $0x60] sm:$0xf]
  %v552 = vld [vmem:[%s1 + $0x64] sm:$0xf]
  %v553 = vld [vmem:[%s1 + $0x68] sm:$0xf]
  %v554 = vld [vmem:[%s1 + $0x6c] sm:$0xf]
  %v555 = vld [vmem:[%s1 + $0x70] sm:$0xf]
  %v556 = vld [vmem:[%s1 + $0x74] sm:$0xf]
  %v557 = vld [vmem:[%s1 + $0x78] sm:$0xf]
  %v558 = vld [vmem:[%s1 + $0x7c] sm:$0xf]
  %v559 = vld [vmem:[%s1 + $0x80] sm:$0xf]
  %v560 = vld [vmem:[%s1 + $0x84] sm:$0xf]
  %v561 = vld [vmem:[%s1 + $0x88] sm:$0xf]
  %v562 = vld [vmem:[%s1 + $0x8c] sm:$0xf]
  %v563 = vld [vmem:[%s1 + $0x90] sm:$0xf]
  %v564 = vld [vmem:[%s1 + $0x94] sm:$0xf]
  %v565 = vld [vmem:[%s1 + $0x98] sm:$0xf]
  %v566 = vld [vmem:[%s1 + $0x9c] sm:$0xf]
  %v567 = vld [vmem:[%s1 + $0xa0] sm:$0xf]
  %v568 = vld [vmem:[%s1 + $0xa4] sm:$0xf]
  %v569 = vld [vmem:[%s1 + $0xa8] sm:$0xf]
  %v570 = vld [vmem:[%s1 + $0xac] sm:$0xf]
  %v571 = vld [vmem:[%s1 + $0xb0] sm:$0xf]
  %v572 = vld [vmem:[%s1 + $0xb4] sm:$0xf]
  %v573 = vld [vmem:[%s1 + $0xb8] sm:$0xf]
  %v574 = vld [vmem:[%s1 + $0xbc] sm:$0xf]
  %v575 = vld [vmem:[%s1 + $0xc0] sm:$0xf]
  %v576 = vld [vmem:[%s1 + $0xc4] sm:$0xf]
  %v577 = vld [vmem:[%s1 + $0xc8] sm:$0xf]
  %v578 = vld [vmem:[%s1 + $0xcc] sm:$0xf]
  %v579 = vld [vmem:[%s1 + $0xd0] sm:$0xf]
  %v580 = vld [vmem:[%s1 + $0xd4] sm:$0xf]
  %v581 = vld [vmem:[%s1 + $0xd8] sm:$0xf]
  %v582 = vld [vmem:[%s1 + $0xdc] sm:$0xf]
  %v583 = vld [vmem:[%s1 + $0xe0] sm:$0xf]
  %v584 = vld [vmem:[%s1 + $0xe4] sm:$0xf]
  %v585 = vld [vmem:[%s1 + $0xe8] sm:$0xf]
  %v586 = vld [vmem:[%s1 + $0xec] sm:$0xf]
  %v587 = vld [vmem:[%s1 + $0xf0] sm:$0xf]
  %v588 = vld [vmem:[%s1 + $0xf4] sm:$0xf]
  %v589 = vld [vmem:[%s1 + $0xf8] sm:$0xf]
  %v590 = vld [vmem:[%s1 + $0xfc] sm:$0xf]
  %v591 = vld [vmem:[%s1 + $0x100] sm:$0xf]
  %v592 = vld [vmem:[%s1 + $0x104] sm:$0xf]
  %v593 = vld [vmem:[%s1 + $0x108] sm:$0xf]
  %v594 = vld [vmem:[%s1 + $0x10c] sm:$0xf]
  %v595 = vld [vmem:[%s1 + $0x110] sm:$0xf]
  %v596 = vld [vmem:[%s1 + $0x114] sm:$0xf]
  %v597 = vld [vmem:[%s1 + $0x118] sm:$0xf]
  %v598 = vld [vmem:[%s1 + $0x11c] sm:$0xf]
  %v599 = vld [vmem:[%s1 + $0x120] sm:$0xf]
  %v600 = vld [vmem:[%s1 + $0x124] sm:$0xf]
  %v601 = vld [vmem:[%s1 + $0x128] sm:$0xf]
  %v602 = vld [vmem:[%s1 + $0x12c] sm:$0xf]
  %v603 = vld [vmem:[%s1 + $0x130] sm:$0xf]
  %v604 = vld [vmem:[%s1 + $0x134] sm:$0xf]
  %v605 = vld [vmem:[%s1 + $0x138] sm:$0xf]
  %v606 = vld [vmem:[%s1 + $0x13c] sm:$0xf]
  %v607 = vld [vmem:[%s1 + $0x140] sm:$0xf]
  %v608 = vld [vmem:[%s1 + $0x144] sm:$0xf]
  %v609 = vld [vmem:[%s1 + $0x148] sm:$0xf]
  %v610 = vld [vmem:[%s1 + $0x14c] sm:$0xf]
  %v611 = vld [vmem:[%s1 + $0x150] sm:$0xf]
  %v612 = vld [vmem:[%s1 + $0x154] sm:$0xf]
  %v613 = vld [vmem:[%s1 + $0x158] sm:$0xf]
  %v614 = vld [vmem:[%s1 + $0x15c] sm:$0xf]
  %v615 = vld [vmem:[%s1 + $0x160] sm:$0xf]
  %v616 = vld [vmem:[%s1 + $0x164] sm:$0xf]
  %v617 = vld [vmem:[%s1 + $0x168] sm:$0xf]
  %v618 = vld [vmem:[%s1 + $0x16c] sm:$0xf]
  %v619 = vld [vmem:[%s1 + $0x170] sm:$0xf]
  %v620 = vld [vmem:[%s1 + $0x174] sm:$0xf]
  %v621 = vld [vmem:[%s1 + $0x178] sm:$0xf]
  %v622 = vld [vmem:[%s1 + $0x17c] sm:$0xf]
  %v623 = vld [vmem:[%s1 + $0x180] sm:$0xf]
  %v624 = vld [vmem:[%s1 + $0x184] sm:$0xf]
  %v625 = vld [vmem:[%s1 + $0x188] sm:$0xf]
  %v626 = vld [vmem:[%s1 + $0x18c] sm:$0xf]
  %v627 = vld [vmem:[%s1 + $0x190] sm:$0xf]
  %v628 = vld [vmem:[%s1 + $0x194] sm:$0xf]
  %v629 = vld [vmem:[%s1 + $0x198] sm:$0xf]
  %v630 = vld [vmem:[%s1 + $0x19c] sm:$0xf]
  %v631 = vld [vmem:[%s1 + $0x1a0] sm:$0xf]
  %v632 = vld [vmem:[%s1 + $0x1a4] sm:$0xf]
  %v633 = vld [vmem:[%s1 + $0x1a8] sm:$0xf]
  %v634 = vld [vmem:[%s1 + $0x1ac] sm:$0xf]
  %v635 = vld [vmem:[%s1 + $0x1b0] sm:$0xf]
  %v636 = vld [vmem:[%s1 + $0x1b4] sm:$0xf]
  %v637 = vld [vmem:[%s1 + $0x1b8] sm:$0xf]
  %v638 = vld [vmem:[%s1 + $0x1bc] sm:$0xf]
  %v639 = vld [vmem:[%s1 + $0x1c0] sm:$0xf]
  %v640 = vld [vmem:[%s1 + $0x1c4] sm:$0xf]
  %v641 = vld [vmem:[%s1 + $0x1c8] sm:$0xf]
  %v642 = vld [vmem:[%s1 + $0x1cc] sm:$0xf]
  %v643 = vld [vmem:[%s1 + $0x1d0] sm:$0xf]
  %v644 = vld [vmem:[%s1 + $0x1d4] sm:$0xf]
  %v645 = vld [vmem:[%s1 + $0x1d8] sm:$0xf]
  %v646 = vld [vmem:[%s1 + $0x1dc] sm:$0xf]
  %v647 = vld [vmem:[%s1 + $0x1e0] sm:$0xf]
  %v648 = vld [vmem:[%s1 + $0x1e4] sm:$0xf]
  %v649 = vld [vmem:[%s1 + $0x1e8] sm:$0xf]
  %v650 = vld [vmem:[%s1 + $0x1ec] sm:$0xf]
  %v651 = vld [vmem:[%s1 + $0x1f0] sm:$0xf]
  %v652 = vld [vmem:[%s1 + $0x1f4] sm:$0xf]
  %v653 = vld [vmem:[%s1 + $0x1f8] sm:$0xf]
  %v654 = vld [vmem:[%s1 + $0x1fc] sm:$0xf]
  %v655 = vld [vmem:[%s1 + $0x200] sm:$0xf]
  %v656 = vld [vmem:[%s1 + $0x204] sm:$0xf]
  %v657 = vld [vmem:[%s1 + $0x208] sm:$0xf]
  %v658 = vld [vmem:[%s1 + $0x20c] sm:$0xf]
  %v659 = vld [vmem:[%s1 + $0x210] sm:$0xf]
  %v660 = vld [vmem:[%s1 + $0x214] sm:$0xf]
  %v661 = vld [vmem:[%s1 + $0x218] sm:$0xf]
  %v662 = vld [vmem:[%s1 + $0x21c] sm:$0xf]
  %v663 = vld [vmem:[%s1 + $0x220] sm:$0xf]
  %v664 = vld [vmem:[%s1 + $0x224] sm:$0xf]
  %v665 = vld [vmem:[%s1 + $0x228] sm:$0xf]
  %v666 = vld [vmem:[%s1 + $0x22c] sm:$0xf]
  %v667 = vld [vmem:[%s1 + $0x230] sm:$0xf]
  %v668 = vld [vmem:[%s1 + $0x234] sm:$0xf]
  %v669 = vld [vmem:[%s1 + $0x238] sm:$0xf]
  %v670 = vld [vmem:[%s1 + $0x23c] sm:$0xf]
  %v671 = vld [vmem:[%s1 + $0x240] sm:$0xf]
  %v672 = vld [vmem:[%s1 + $0x244] sm:$0xf]
  %v673 = vld [vmem:[%s1 + $0x248] sm:$0xf]
  %v674 = vld [vmem:[%s1 + $0x24c] sm:$0xf]
  %v675 = vld [vmem:[%s1 + $0x250] sm:$0xf]
  %v676 = vld [vmem:[%s1 + $0x254] sm:$0xf]
  %v677 = vld [vmem:[%s1 + $0x258] sm:$0xf]
  %v678 = vld [vmem:[%s1 + $0x25c] sm:$0xf]
  %v679 = vld [vmem:[%s1 + $0x260] sm:$0xf]
  %v680 = vld [vmem:[%s1 + $0x264] sm:$0xf]
  %v681 = vld [vmem:[%s1 + $0x268] sm:$0xf]
  %v682 = vld [vmem:[%s1 + $0x26c] sm:$0xf]
  %v683 = vld [vmem:[%s1 + $0x270] sm:$0xf]
  %v684 = vld [vmem:[%s1 + $0x274] sm:$0xf]
  %v685 = vld [vmem:[%s1 + $0x278] sm:$0xf]
  %v686 = vld [vmem:[%s1 + $0x27c] sm:$0xf]
  %v687 = vld [vmem:[%s1 + $0x280] sm:$0xf]
  %v688 = vld [vmem:[%s1 + $0x284] sm:$0xf]
  %v689 = vld [vmem:[%s1 + $0x288] sm:$0xf]
  %v690 = vld [vmem:[%s1 + $0x28c] sm:$0xf]
  %v691 = vld [vmem:[%s1 + $0x290] sm:$0xf]
  %v692 = vld [vmem:[%s1 + $0x294] sm:$0xf]
  %v693 = vld [vmem:[%s1 + $0x298] sm:$0xf]
  %v694 = vld [vmem:[%s1 + $0x29c] sm:$0xf]
  %v695 = vld [vmem:[%s1 + $0x2a0] sm:$0xf]
  %v696 = vld [vmem:[%s1 + $0x2a4] sm:$0xf]
  %v697 = vld [vmem:[%s1 + $0x2a8] sm:$0xf]
  %v698 = vld [vmem:[%s1 + $0x2ac] sm:$0xf]
  %v699 = vld [vmem:[%s1 + $0x2b0] sm:$0xf]
  %v700 = vld [vmem:[%s1 + $0x2b4] sm:$0xf]
  %v701 = vld [vmem:[%s1 + $0x2b8] sm:$0xf]
  %v702 = vld [vmem:[%s1 + $0x2bc] sm:$0xf]
  %v703 = vld [vmem:[%s1 + $0x2c0] sm:$0xf]
  %v704 = vld [vmem:[%s1 + $0x2c4] sm:$0xf]
  %v705 = vld [vmem:[%s1 + $0x2c8] sm:$0xf]
  %v706 = vld [vmem:[%s1 + $0x2cc] sm:$0xf]
  %v707 = vld [vmem:[%s1 + $0x2d0] sm:$0xf]
  %v708 = vld [vmem:[%s1 + $0x2d4] sm:$0xf]
  %v709 = vld [vmem:[%s1 + $0x2d8] sm:$0xf]
  %v710 = vld [vmem:[%s1 + $0x2dc] sm:$0xf]
  %v711 = vld [vmem:[%s1 + $0x2e0] sm:$0xf]
  %v712 = vld [vmem:[%s1 + $0x2e4] sm:$0xf]
  %v713 = vld [vmem:[%s1 + $0x2e8] sm:$0xf]
  %v714 = vld [vmem:[%s1 + $0x2ec] sm:$0xf]
  %v715 = vld [vmem:[%s1 + $0x2f0] sm:$0xf]
  %v716 = vld [vmem:[%s1 + $0x2f4] sm:$0xf]
  %v717 = vld [vmem:[%s1 + $0x2f8] sm:$0xf]
  %v718 = vld [vmem:[%s1 + $0x2fc] sm:$0xf]
  %v719 = vld [vmem:[%s1 + $0x300] sm:$0xf]
  %v720 = vld [vmem:[%s1 + $0x304] sm:$0xf]
  %v721 = vld [vmem:[%s1 + $0x308] sm:$0xf]
  %v722 = vld [vmem:[%s1 + $0x30c] sm:$0xf]
  %v723 = vld [vmem:[%s1 + $0x310] sm:$0xf]
  %v724 = vld [vmem:[%s1 + $0x314] sm:$0xf]
  %v725 = vld [vmem:[%s1 + $0x318] sm:$0xf]
  %v726 = vld [vmem:[%s1 + $0x31c] sm:$0xf]
  %v727 = vld [vmem:[%s1 + $0x320] sm:$0xf]
  %v728 = vld [vmem:[%s1 + $0x324] sm:$0xf]
  %v729 = vld [vmem:[%s1 + $0x328] sm:$0xf]
  %v730 = vld [vmem:[%s1 + $0x32c] sm:$0xf]
  %v731 = vld [vmem:[%s1 + $0x330] sm:$0xf]
  %v732 = vld [vmem:[%s1 + $0x334] sm:$0xf]
  %v733 = vld [vmem:[%s1 + $0x338] sm:$0xf]
  %v734 = vld [vmem:[%s1 + $0x33c] sm:$0xf]
  %v735 = vld [vmem:[%s1 + $0x340] sm:$0xf]
  %v736 = vld [vmem:[%s1 + $0x344] sm:$0xf]
  %v737 = vld [vmem:[%s1 + $0x348] sm:$0xf]
  %v738 = vld [vmem:[%s1 + $0x34c] sm:$0xf]
  %v739 = vld [vmem:[%s1 + $0x350] sm:$0xf]
  %v740 = vld [vmem:[%s1 + $0x354] sm:$0xf]
  %v741 = vld [vmem:[%s1 + $0x358] sm:$0xf]
  %v742 = vld [vmem:[%s1 + $0x35c] sm:$0xf]
  %v743 = vld [vmem:[%s1 + $0x360] sm:$0xf]
  %v744 = vld [vmem:[%s1 + $0x364] sm:$0xf]
  %v745 = vld [vmem:[%s1 + $0x368] sm:$0xf]
  %v746 = vld [vmem:[%s1 + $0x36c] sm:$0xf]
  %v747 = vld [vmem:[%s1 + $0x370] sm:$0xf]
  %v748 = vld [vmem:[%s1 + $0x374] sm:$0xf]
  %v749 = vld [vmem:[%s1 + $0x378] sm:$0xf]
  %v750 = vld [vmem:[%s1 + $0x37c] sm:$0xf]
  %v751 = vld [vmem:[%s1 + $0x380] sm:$0xf]
  %v752 = vld [vmem:[%s1 + $0x384] sm:$0xf]
  %v753 = vld [vmem:[%s1 + $0x388] sm:$0xf]
  %v754 = vld [vmem:[%s1 + $0x38c] sm:$0xf]
  %v755 = vld [vmem:[%s1 + $0x390] sm:$0xf]
  %v756 = vld [vmem:[%s1 + $0x394] sm:$0xf]
  %v757 = vld [vmem:[%s1 + $0x398] sm:$0xf]
  %v758 = vld [vmem:[%s1 + $0x39c] sm:$0xf]
  %v759 = vld [vmem:[%s1 + $0x3a0] sm:$0xf]
  %v760 = vld [vmem:[%s1 + $0x3a4] sm:$0xf]
  %v761 = vld [vmem:[%s1 + $0x3a8] sm:$0xf]
  %v762 = vld [vmem:[%s1 + $0x3ac] sm:$0xf]
  %v763 = vld [vmem:[%s1 + $0x3b0] sm:$0xf]
  %v764 = vld [vmem:[%s1 + $0x3b4] sm:$0xf]
  %v765 = vld [vmem:[%s1 + $0x3b8] sm:$0xf]
  %v766 = vld [vmem:[%s1 + $0x3bc] sm:$0xf]
  %v767 = vld [vmem:[%s1 + $0x3c0] sm:$0xf]
  %v768 = vld [vmem:[%s1 + $0x3c4] sm:$0xf]
  %v769 = vld [vmem:[%s1 + $0x3c8] sm:$0xf]
  %v770 = vld [vmem:[%s1 + $0x3cc] sm:$0xf]
  %v771 = vld [vmem:[%s1 + $0x3d0] sm:$0xf]
  %v772 = vld [vmem:[%s1 + $0x3d4] sm:$0xf]
  %v773 = vld [vmem:[%s1 + $0x3d8] sm:$0xf]
  %v774 = vld [vmem:[%s1 + $0x3dc] sm:$0xf]
  %v775 = vld [vmem:[%s1 + $0x3e0] sm:$0xf]
  %v776 = vld [vmem:[%s1 + $0x3e4] sm:$0xf]
  %v777 = vld [vmem:[%s1 + $0x3e8] sm:$0xf]
  %v778 = vld [vmem:[%s1 + $0x3ec] sm:$0xf]
  %v779 = vld [vmem:[%s1 + $0x3f0] sm:$0xf]
  %v780 = vld [vmem:[%s1 + $0x3f4] sm:$0xf]
  %v781 = vld [vmem:[%s1 + $0x3f8] sm:$0xf]
  %v782 = vld [vmem:[%s1 + $0x3fc] sm:$0xf]
  %v783 = vld [vmem:[%s2] sm:$0x1]
  %v785 = vlaneseq
  %v786 = vshrl.u32 %v785, 7
  %v787 = vsub.s32 0, %v786
  %v788 = vrot.slane %v783, %v787
  %v1302 = vunpack.c.l.b16 %v15
  %v1303 = vunpack.c.h.b16 %v15
  %v1304 = vunpack.c.l.b16 %v16
  %v1305 = vunpack.c.h.b16 %v16
  %v1306 = vunpack.c.l.b16 %v17
  %v1307 = vunpack.c.h.b16 %v17
  %v1308 = vunpack.c.l.b16 %v18
  %v1309 = vunpack.c.h.b16 %v18
  %v1310 = vunpack.c.l.b16 %v19
  %v1311 = vunpack.c.h.b16 %v19
  %v1312 = vunpack.c.l.b16 %v20
  %v1313 = vunpack.c.h.b16 %v20
  %v1314 = vunpack.c.l.b16 %v21
  %v1315 = vunpack.c.h.b16 %v21
  %v1316 = vunpack.c.l.b16 %v22
  %v1317 = vunpack.c.h.b16 %v22
  %v1318 = vunpack.c.l.b16 %v23
  %v1319 = vunpack.c.h.b16 %v23
  %v1320 = vunpack.c.l.b16 %v24
  %v1321 = vunpack.c.h.b16 %v24
  %v1322 = vunpack.c.l.b16 %v25
  %v1323 = vunpack.c.h.b16 %v25
  %v1324 = vunpack.c.l.b16 %v26
  %v1325 = vunpack.c.h.b16 %v26
  %v1326 = vunpack.c.l.b16 %v27
  %v1327 = vunpack.c.h.b16 %v27
  %v1328 = vunpack.c.l.b16 %v28
  %v1329 = vunpack.c.h.b16 %v28
  %v1330 = vunpack.c.l.b16 %v29
  %v1331 = vunpack.c.h.b16 %v29
  %v1332 = vunpack.c.l.b16 %v30
  %v1333 = vunpack.c.h.b16 %v30
  %v1334 = vunpack.c.l.b16 %v31
  %v1335 = vunpack.c.h.b16 %v31
  %v1336 = vunpack.c.l.b16 %v32
  %v1337 = vunpack.c.h.b16 %v32
  %v1338 = vunpack.c.l.b16 %v33
  %v1339 = vunpack.c.h.b16 %v33
  %v1340 = vunpack.c.l.b16 %v34
  %v1341 = vunpack.c.h.b16 %v34
  %v1342 = vunpack.c.l.b16 %v35
  %v1343 = vunpack.c.h.b16 %v35
  %v1344 = vunpack.c.l.b16 %v36
  %v1345 = vunpack.c.h.b16 %v36
  %v1346 = vunpack.c.l.b16 %v37
  %v1347 = vunpack.c.h.b16 %v37
  %v1348 = vunpack.c.l.b16 %v38
  %v1349 = vunpack.c.h.b16 %v38
  %v1350 = vunpack.c.l.b16 %v39
  %v1351 = vunpack.c.h.b16 %v39
  %v1352 = vunpack.c.l.b16 %v40
  %v1353 = vunpack.c.h.b16 %v40
  %v1354 = vunpack.c.l.b16 %v41
  %v1355 = vunpack.c.h.b16 %v41
  %v1356 = vunpack.c.l.b16 %v42
  %v1357 = vunpack.c.h.b16 %v42
  %v1358 = vunpack.c.l.b16 %v43
  %v1359 = vunpack.c.h.b16 %v43
  %v1360 = vunpack.c.l.b16 %v44
  %v1361 = vunpack.c.h.b16 %v44
  %v1362 = vunpack.c.l.b16 %v45
  %v1363 = vunpack.c.h.b16 %v45
  %v1364 = vunpack.c.l.b16 %v46
  %v1365 = vunpack.c.h.b16 %v46
  %v1366 = vunpack.c.l.b16 %v47
  %v1367 = vunpack.c.h.b16 %v47
  %v1368 = vunpack.c.l.b16 %v48
  %v1369 = vunpack.c.h.b16 %v48
  %v1370 = vunpack.c.l.b16 %v49
  %v1371 = vunpack.c.h.b16 %v49
  %v1372 = vunpack.c.l.b16 %v50
  %v1373 = vunpack.c.h.b16 %v50
  %v1374 = vunpack.c.l.b16 %v51
  %v1375 = vunpack.c.h.b16 %v51
  %v1376 = vunpack.c.l.b16 %v52
  %v1377 = vunpack.c.h.b16 %v52
  %v1378 = vunpack.c.l.b16 %v53
  %v1379 = vunpack.c.h.b16 %v53
  %v1380 = vunpack.c.l.b16 %v54
  %v1381 = vunpack.c.h.b16 %v54
  %v1382 = vunpack.c.l.b16 %v55
  %v1383 = vunpack.c.h.b16 %v55
  %v1384 = vunpack.c.l.b16 %v56
  %v1385 = vunpack.c.h.b16 %v56
  %v1386 = vunpack.c.l.b16 %v57
  %v1387 = vunpack.c.h.b16 %v57
  %v1388 = vunpack.c.l.b16 %v58
  %v1389 = vunpack.c.h.b16 %v58
  %v1390 = vunpack.c.l.b16 %v59
  %v1391 = vunpack.c.h.b16 %v59
  %v1392 = vunpack.c.l.b16 %v60
  %v1393 = vunpack.c.h.b16 %v60
  %v1394 = vunpack.c.l.b16 %v61
  %v1395 = vunpack.c.h.b16 %v61
  %v1396 = vunpack.c.l.b16 %v62
  %v1397 = vunpack.c.h.b16 %v62
  %v1398 = vunpack.c.l.b16 %v63
  %v1399 = vunpack.c.h.b16 %v63
  %v1400 = vunpack.c.l.b16 %v64
  %v1401 = vunpack.c.h.b16 %v64
  %v1402 = vunpack.c.l.b16 %v65
  %v1403 = vunpack.c.h.b16 %v65
  %v1404 = vunpack.c.l.b16 %v66
  %v1405 = vunpack.c.h.b16 %v66
  %v1406 = vunpack.c.l.b16 %v67
  %v1407 = vunpack.c.h.b16 %v67
  %v1408 = vunpack.c.l.b16 %v68
  %v1409 = vunpack.c.h.b16 %v68
  %v1410 = vunpack.c.l.b16 %v69
  %v1411 = vunpack.c.h.b16 %v69
  %v1412 = vunpack.c.l.b16 %v70
  %v1413 = vunpack.c.h.b16 %v70
  %v1414 = vunpack.c.l.b16 %v71
  %v1415 = vunpack.c.h.b16 %v71
  %v1416 = vunpack.c.l.b16 %v72
  %v1417 = vunpack.c.h.b16 %v72
  %v1418 = vunpack.c.l.b16 %v73
  %v1419 = vunpack.c.h.b16 %v73
  %v1420 = vunpack.c.l.b16 %v74
  %v1421 = vunpack.c.h.b16 %v74
  %v1422 = vunpack.c.l.b16 %v75
  %v1423 = vunpack.c.h.b16 %v75
  %v1424 = vunpack.c.l.b16 %v76
  %v1425 = vunpack.c.h.b16 %v76
  %v1426 = vunpack.c.l.b16 %v77
  %v1427 = vunpack.c.h.b16 %v77
  %v1428 = vunpack.c.l.b16 %v78
  %v1429 = vunpack.c.h.b16 %v78
  %v1430 = vunpack.c.l.b16 %v79
  %v1431 = vunpack.c.h.b16 %v79
  %v1432 = vunpack.c.l.b16 %v80
  %v1433 = vunpack.c.h.b16 %v80
  %v1434 = vunpack.c.l.b16 %v81
  %v1435 = vunpack.c.h.b16 %v81
  %v1436 = vunpack.c.l.b16 %v82
  %v1437 = vunpack.c.h.b16 %v82
  %v1438 = vunpack.c.l.b16 %v83
  %v1439 = vunpack.c.h.b16 %v83
  %v1440 = vunpack.c.l.b16 %v84
  %v1441 = vunpack.c.h.b16 %v84
  %v1442 = vunpack.c.l.b16 %v85
  %v1443 = vunpack.c.h.b16 %v85
  %v1444 = vunpack.c.l.b16 %v86
  %v1445 = vunpack.c.h.b16 %v86
  %v1446 = vunpack.c.l.b16 %v87
  %v1447 = vunpack.c.h.b16 %v87
  %v1448 = vunpack.c.l.b16 %v88
  %v1449 = vunpack.c.h.b16 %v88
  %v1450 = vunpack.c.l.b16 %v89
  %v1451 = vunpack.c.h.b16 %v89
  %v1452 = vunpack.c.l.b16 %v90
  %v1453 = vunpack.c.h.b16 %v90
  %v1454 = vunpack.c.l.b16 %v91
  %v1455 = vunpack.c.h.b16 %v91
  %v1456 = vunpack.c.l.b16 %v92
  %v1457 = vunpack.c.h.b16 %v92
  %v1458 = vunpack.c.l.b16 %v93
  %v1459 = vunpack.c.h.b16 %v93
  %v1460 = vunpack.c.l.b16 %v94
  %v1461 = vunpack.c.h.b16 %v94
  %v1462 = vunpack.c.l.b16 %v95
  %v1463 = vunpack.c.h.b16 %v95
  %v1464 = vunpack.c.l.b16 %v96
  %v1465 = vunpack.c.h.b16 %v96
  %v1466 = vunpack.c.l.b16 %v97
  %v1467 = vunpack.c.h.b16 %v97
  %v1468 = vunpack.c.l.b16 %v98
  %v1469 = vunpack.c.h.b16 %v98
  %v1470 = vunpack.c.l.b16 %v99
  %v1471 = vunpack.c.h.b16 %v99
  %v1472 = vunpack.c.l.b16 %v100
  %v1473 = vunpack.c.h.b16 %v100
  %v1474 = vunpack.c.l.b16 %v101
  %v1475 = vunpack.c.h.b16 %v101
  %v1476 = vunpack.c.l.b16 %v102
  %v1477 = vunpack.c.h.b16 %v102
  %v1478 = vunpack.c.l.b16 %v103
  %v1479 = vunpack.c.h.b16 %v103
  %v1480 = vunpack.c.l.b16 %v104
  %v1481 = vunpack.c.h.b16 %v104
  %v1482 = vunpack.c.l.b16 %v105
  %v1483 = vunpack.c.h.b16 %v105
  %v1484 = vunpack.c.l.b16 %v106
  %v1485 = vunpack.c.h.b16 %v106
  %v1486 = vunpack.c.l.b16 %v107
  %v1487 = vunpack.c.h.b16 %v107
  %v1488 = vunpack.c.l.b16 %v108
  %v1489 = vunpack.c.h.b16 %v108
  %v1490 = vunpack.c.l.b16 %v109
  %v1491 = vunpack.c.h.b16 %v109
  %v1492 = vunpack.c.l.b16 %v110
  %v1493 = vunpack.c.h.b16 %v110
  %v1494 = vunpack.c.l.b16 %v111
  %v1495 = vunpack.c.h.b16 %v111
  %v1496 = vunpack.c.l.b16 %v112
  %v1497 = vunpack.c.h.b16 %v112
  %v1498 = vunpack.c.l.b16 %v113
  %v1499 = vunpack.c.h.b16 %v113
  %v1500 = vunpack.c.l.b16 %v114
  %v1501 = vunpack.c.h.b16 %v114
  %v1502 = vunpack.c.l.b16 %v115
  %v1503 = vunpack.c.h.b16 %v115
  %v1504 = vunpack.c.l.b16 %v116
  %v1505 = vunpack.c.h.b16 %v116
  %v1506 = vunpack.c.l.b16 %v117
  %v1507 = vunpack.c.h.b16 %v117
  %v1508 = vunpack.c.l.b16 %v118
  %v1509 = vunpack.c.h.b16 %v118
  %v1510 = vunpack.c.l.b16 %v119
  %v1511 = vunpack.c.h.b16 %v119
  %v1512 = vunpack.c.l.b16 %v120
  %v1513 = vunpack.c.h.b16 %v120
  %v1514 = vunpack.c.l.b16 %v121
  %v1515 = vunpack.c.h.b16 %v121
  %v1516 = vunpack.c.l.b16 %v122
  %v1517 = vunpack.c.h.b16 %v122
  %v1518 = vunpack.c.l.b16 %v123
  %v1519 = vunpack.c.h.b16 %v123
  %v1520 = vunpack.c.l.b16 %v124
  %v1521 = vunpack.c.h.b16 %v124
  %v1522 = vunpack.c.l.b16 %v125
  %v1523 = vunpack.c.h.b16 %v125
  %v1524 = vunpack.c.l.b16 %v126
  %v1525 = vunpack.c.h.b16 %v126
  %v1526 = vunpack.c.l.b16 %v127
  %v1527 = vunpack.c.h.b16 %v127
  %v1528 = vunpack.c.l.b16 %v128
  %v1529 = vunpack.c.h.b16 %v128
  %v1530 = vunpack.c.l.b16 %v129
  %v1531 = vunpack.c.h.b16 %v129
  %v1532 = vunpack.c.l.b16 %v130
  %v1533 = vunpack.c.h.b16 %v130
  %v1534 = vunpack.c.l.b16 %v131
  %v1535 = vunpack.c.h.b16 %v131
  %v1536 = vunpack.c.l.b16 %v132
  %v1537 = vunpack.c.h.b16 %v132
  %v1538 = vunpack.c.l.b16 %v133
  %v1539 = vunpack.c.h.b16 %v133
  %v1540 = vunpack.c.l.b16 %v134
  %v1541 = vunpack.c.h.b16 %v134
  %v1542 = vunpack.c.l.b16 %v135
  %v1543 = vunpack.c.h.b16 %v135
  %v1544 = vunpack.c.l.b16 %v136
  %v1545 = vunpack.c.h.b16 %v136
  %v1546 = vunpack.c.l.b16 %v137
  %v1547 = vunpack.c.h.b16 %v137
  %v1548 = vunpack.c.l.b16 %v138
  %v1549 = vunpack.c.h.b16 %v138
  %v1550 = vunpack.c.l.b16 %v139
  %v1551 = vunpack.c.h.b16 %v139
  %v1552 = vunpack.c.l.b16 %v140
  %v1553 = vunpack.c.h.b16 %v140
  %v1554 = vunpack.c.l.b16 %v141
  %v1555 = vunpack.c.h.b16 %v141
  %v1556 = vunpack.c.l.b16 %v142
  %v1557 = vunpack.c.h.b16 %v142
  %v1558 = vunpack.c.l.b16 %v143
  %v1559 = vunpack.c.h.b16 %v143
  %v1560 = vunpack.c.l.b16 %v144
  %v1561 = vunpack.c.h.b16 %v144
  %v1562 = vunpack.c.l.b16 %v145
  %v1563 = vunpack.c.h.b16 %v145
  %v1564 = vunpack.c.l.b16 %v146
  %v1565 = vunpack.c.h.b16 %v146
  %v1566 = vunpack.c.l.b16 %v147
  %v1567 = vunpack.c.h.b16 %v147
  %v1568 = vunpack.c.l.b16 %v148
  %v1569 = vunpack.c.h.b16 %v148
  %v1570 = vunpack.c.l.b16 %v149
  %v1571 = vunpack.c.h.b16 %v149
  %v1572 = vunpack.c.l.b16 %v150
  %v1573 = vunpack.c.h.b16 %v150
  %v1574 = vunpack.c.l.b16 %v151
  %v1575 = vunpack.c.h.b16 %v151
  %v1576 = vunpack.c.l.b16 %v152
  %v1577 = vunpack.c.h.b16 %v152
  %v1578 = vunpack.c.l.b16 %v153
  %v1579 = vunpack.c.h.b16 %v153
  %v1580 = vunpack.c.l.b16 %v154
  %v1581 = vunpack.c.h.b16 %v154
  %v1582 = vunpack.c.l.b16 %v155
  %v1583 = vunpack.c.h.b16 %v155
  %v1584 = vunpack.c.l.b16 %v156
  %v1585 = vunpack.c.h.b16 %v156
  %v1586 = vunpack.c.l.b16 %v157
  %v1587 = vunpack.c.h.b16 %v157
  %v1588 = vunpack.c.l.b16 %v158
  %v1589 = vunpack.c.h.b16 %v158
  %v1590 = vunpack.c.l.b16 %v159
  %v1591 = vunpack.c.h.b16 %v159
  %v1592 = vunpack.c.l.b16 %v160
  %v1593 = vunpack.c.h.b16 %v160
  %v1594 = vunpack.c.l.b16 %v161
  %v1595 = vunpack.c.h.b16 %v161
  %v1596 = vunpack.c.l.b16 %v162
  %v1597 = vunpack.c.h.b16 %v162
  %v1598 = vunpack.c.l.b16 %v163
  %v1599 = vunpack.c.h.b16 %v163
  %v1600 = vunpack.c.l.b16 %v164
  %v1601 = vunpack.c.h.b16 %v164
  %v1602 = vunpack.c.l.b16 %v165
  %v1603 = vunpack.c.h.b16 %v165
  %v1604 = vunpack.c.l.b16 %v166
  %v1605 = vunpack.c.h.b16 %v166
  %v1606 = vunpack.c.l.b16 %v167
  %v1607 = vunpack.c.h.b16 %v167
  %v1608 = vunpack.c.l.b16 %v168
  %v1609 = vunpack.c.h.b16 %v168
  %v1610 = vunpack.c.l.b16 %v169
  %v1611 = vunpack.c.h.b16 %v169
  %v1612 = vunpack.c.l.b16 %v170
  %v1613 = vunpack.c.h.b16 %v170
  %v1614 = vunpack.c.l.b16 %v171
  %v1615 = vunpack.c.h.b16 %v171
  %v1616 = vunpack.c.l.b16 %v172
  %v1617 = vunpack.c.h.b16 %v172
  %v1618 = vunpack.c.l.b16 %v173
  %v1619 = vunpack.c.h.b16 %v173
  %v1620 = vunpack.c.l.b16 %v174
  %v1621 = vunpack.c.h.b16 %v174
  %v1622 = vunpack.c.l.b16 %v175
  %v1623 = vunpack.c.h.b16 %v175
  %v1624 = vunpack.c.l.b16 %v176
  %v1625 = vunpack.c.h.b16 %v176
  %v1626 = vunpack.c.l.b16 %v177
  %v1627 = vunpack.c.h.b16 %v177
  %v1628 = vunpack.c.l.b16 %v178
  %v1629 = vunpack.c.h.b16 %v178
  %v1630 = vunpack.c.l.b16 %v179
  %v1631 = vunpack.c.h.b16 %v179
  %v1632 = vunpack.c.l.b16 %v180
  %v1633 = vunpack.c.h.b16 %v180
  %v1634 = vunpack.c.l.b16 %v181
  %v1635 = vunpack.c.h.b16 %v181
  %v1636 = vunpack.c.l.b16 %v182
  %v1637 = vunpack.c.h.b16 %v182
  %v1638 = vunpack.c.l.b16 %v183
  %v1639 = vunpack.c.h.b16 %v183
  %v1640 = vunpack.c.l.b16 %v184
  %v1641 = vunpack.c.h.b16 %v184
  %v1642 = vunpack.c.l.b16 %v185
  %v1643 = vunpack.c.h.b16 %v185
  %v1644 = vunpack.c.l.b16 %v186
  %v1645 = vunpack.c.h.b16 %v186
  %v1646 = vunpack.c.l.b16 %v187
  %v1647 = vunpack.c.h.b16 %v187
  %v1648 = vunpack.c.l.b16 %v188
  %v1649 = vunpack.c.h.b16 %v188
  %v1650 = vunpack.c.l.b16 %v189
  %v1651 = vunpack.c.h.b16 %v189
  %v1652 = vunpack.c.l.b16 %v190
  %v1653 = vunpack.c.h.b16 %v190
  %v1654 = vunpack.c.l.b16 %v191
  %v1655 = vunpack.c.h.b16 %v191
  %v1656 = vunpack.c.l.b16 %v192
  %v1657 = vunpack.c.h.b16 %v192
  %v1658 = vunpack.c.l.b16 %v193
  %v1659 = vunpack.c.h.b16 %v193
  %v1660 = vunpack.c.l.b16 %v194
  %v1661 = vunpack.c.h.b16 %v194
  %v1662 = vunpack.c.l.b16 %v195
  %v1663 = vunpack.c.h.b16 %v195
  %v1664 = vunpack.c.l.b16 %v196
  %v1665 = vunpack.c.h.b16 %v196
  %v1666 = vunpack.c.l.b16 %v197
  %v1667 = vunpack.c.h.b16 %v197
  %v1668 = vunpack.c.l.b16 %v198
  %v1669 = vunpack.c.h.b16 %v198
  %v1670 = vunpack.c.l.b16 %v199
  %v1671 = vunpack.c.h.b16 %v199
  %v1672 = vunpack.c.l.b16 %v200
  %v1673 = vunpack.c.h.b16 %v200
  %v1674 = vunpack.c.l.b16 %v201
  %v1675 = vunpack.c.h.b16 %v201
  %v1676 = vunpack.c.l.b16 %v202
  %v1677 = vunpack.c.h.b16 %v202
  %v1678 = vunpack.c.l.b16 %v203
  %v1679 = vunpack.c.h.b16 %v203
  %v1680 = vunpack.c.l.b16 %v204
  %v1681 = vunpack.c.h.b16 %v204
  %v1682 = vunpack.c.l.b16 %v205
  %v1683 = vunpack.c.h.b16 %v205
  %v1684 = vunpack.c.l.b16 %v206
  %v1685 = vunpack.c.h.b16 %v206
  %v1686 = vunpack.c.l.b16 %v207
  %v1687 = vunpack.c.h.b16 %v207
  %v1688 = vunpack.c.l.b16 %v208
  %v1689 = vunpack.c.h.b16 %v208
  %v1690 = vunpack.c.l.b16 %v209
  %v1691 = vunpack.c.h.b16 %v209
  %v1692 = vunpack.c.l.b16 %v210
  %v1693 = vunpack.c.h.b16 %v210
  %v1694 = vunpack.c.l.b16 %v211
  %v1695 = vunpack.c.h.b16 %v211
  %v1696 = vunpack.c.l.b16 %v212
  %v1697 = vunpack.c.h.b16 %v212
  %v1698 = vunpack.c.l.b16 %v213
  %v1699 = vunpack.c.h.b16 %v213
  %v1700 = vunpack.c.l.b16 %v214
  %v1701 = vunpack.c.h.b16 %v214
  %v1702 = vunpack.c.l.b16 %v215
  %v1703 = vunpack.c.h.b16 %v215
  %v1704 = vunpack.c.l.b16 %v216
  %v1705 = vunpack.c.h.b16 %v216
  %v1706 = vunpack.c.l.b16 %v217
  %v1707 = vunpack.c.h.b16 %v217
  %v1708 = vunpack.c.l.b16 %v218
  %v1709 = vunpack.c.h.b16 %v218
  %v1710 = vunpack.c.l.b16 %v219
  %v1711 = vunpack.c.h.b16 %v219
  %v1712 = vunpack.c.l.b16 %v220
  %v1713 = vunpack.c.h.b16 %v220
  %v1714 = vunpack.c.l.b16 %v221
  %v1715 = vunpack.c.h.b16 %v221
  %v1716 = vunpack.c.l.b16 %v222
  %v1717 = vunpack.c.h.b16 %v222
  %v1718 = vunpack.c.l.b16 %v223
  %v1719 = vunpack.c.h.b16 %v223
  %v1720 = vunpack.c.l.b16 %v224
  %v1721 = vunpack.c.h.b16 %v224
  %v1722 = vunpack.c.l.b16 %v225
  %v1723 = vunpack.c.h.b16 %v225
  %v1724 = vunpack.c.l.b16 %v226
  %v1725 = vunpack.c.h.b16 %v226
  %v1726 = vunpack.c.l.b16 %v227
  %v1727 = vunpack.c.h.b16 %v227
  %v1728 = vunpack.c.l.b16 %v228
  %v1729 = vunpack.c.h.b16 %v228
  %v1730 = vunpack.c.l.b16 %v229
  %v1731 = vunpack.c.h.b16 %v229
  %v1732 = vunpack.c.l.b16 %v230
  %v1733 = vunpack.c.h.b16 %v230
  %v1734 = vunpack.c.l.b16 %v231
  %v1735 = vunpack.c.h.b16 %v231
  %v1736 = vunpack.c.l.b16 %v232
  %v1737 = vunpack.c.h.b16 %v232
  %v1738 = vunpack.c.l.b16 %v233
  %v1739 = vunpack.c.h.b16 %v233
  %v1740 = vunpack.c.l.b16 %v234
  %v1741 = vunpack.c.h.b16 %v234
  %v1742 = vunpack.c.l.b16 %v235
  %v1743 = vunpack.c.h.b16 %v235
  %v1744 = vunpack.c.l.b16 %v236
  %v1745 = vunpack.c.h.b16 %v236
  %v1746 = vunpack.c.l.b16 %v237
  %v1747 = vunpack.c.h.b16 %v237
  %v1748 = vunpack.c.l.b16 %v238
  %v1749 = vunpack.c.h.b16 %v238
  %v1750 = vunpack.c.l.b16 %v239
  %v1751 = vunpack.c.h.b16 %v239
  %v1752 = vunpack.c.l.b16 %v240
  %v1753 = vunpack.c.h.b16 %v240
  %v1754 = vunpack.c.l.b16 %v241
  %v1755 = vunpack.c.h.b16 %v241
  %v1756 = vunpack.c.l.b16 %v242
  %v1757 = vunpack.c.h.b16 %v242
  %v1758 = vunpack.c.l.b16 %v243
  %v1759 = vunpack.c.h.b16 %v243
  %v1760 = vunpack.c.l.b16 %v244
  %v1761 = vunpack.c.h.b16 %v244
  %v1762 = vunpack.c.l.b16 %v245
  %v1763 = vunpack.c.h.b16 %v245
  %v1764 = vunpack.c.l.b16 %v246
  %v1765 = vunpack.c.h.b16 %v246
  %v1766 = vunpack.c.l.b16 %v247
  %v1767 = vunpack.c.h.b16 %v247
  %v1768 = vunpack.c.l.b16 %v248
  %v1769 = vunpack.c.h.b16 %v248
  %v1770 = vunpack.c.l.b16 %v249
  %v1771 = vunpack.c.h.b16 %v249
  %v1772 = vunpack.c.l.b16 %v250
  %v1773 = vunpack.c.h.b16 %v250
  %v1774 = vunpack.c.l.b16 %v251
  %v1775 = vunpack.c.h.b16 %v251
  %v1776 = vunpack.c.l.b16 %v252
  %v1777 = vunpack.c.h.b16 %v252
  %v1778 = vunpack.c.l.b16 %v253
  %v1779 = vunpack.c.h.b16 %v253
  %v1780 = vunpack.c.l.b16 %v254
  %v1781 = vunpack.c.h.b16 %v254
  %v1782 = vunpack.c.l.b16 %v255
  %v1783 = vunpack.c.h.b16 %v255
  %v1784 = vunpack.c.l.b16 %v256
  %v1785 = vunpack.c.h.b16 %v256
  %v1786 = vunpack.c.l.b16 %v257
  %v1787 = vunpack.c.h.b16 %v257
  %v1788 = vunpack.c.l.b16 %v258
  %v1789 = vunpack.c.h.b16 %v258
  %v1790 = vunpack.c.l.b16 %v259
  %v1791 = vunpack.c.h.b16 %v259
  %v1792 = vunpack.c.l.b16 %v260
  %v1793 = vunpack.c.h.b16 %v260
  %v1794 = vunpack.c.l.b16 %v261
  %v1795 = vunpack.c.h.b16 %v261
  %v1796 = vunpack.c.l.b16 %v262
  %v1797 = vunpack.c.h.b16 %v262
  %v1798 = vunpack.c.l.b16 %v263
  %v1799 = vunpack.c.h.b16 %v263
  %v1800 = vunpack.c.l.b16 %v264
  %v1801 = vunpack.c.h.b16 %v264
  %v1802 = vunpack.c.l.b16 %v265
  %v1803 = vunpack.c.h.b16 %v265
  %v1804 = vunpack.c.l.b16 %v266
  %v1805 = vunpack.c.h.b16 %v266
  %v1806 = vunpack.c.l.b16 %v267
  %v1807 = vunpack.c.h.b16 %v267
  %v1808 = vunpack.c.l.b16 %v268
  %v1809 = vunpack.c.h.b16 %v268
  %v1810 = vunpack.c.l.b16 %v269
  %v1811 = vunpack.c.h.b16 %v269
  %v1812 = vunpack.c.l.b16 %v270
  %v1813 = vunpack.c.h.b16 %v270
  %v1814 = vunpack.c.l.b16 %v271
  %v1815 = vunpack.c.h.b16 %v271
  %v1816 = vunpack.c.l.b16 %v272
  %v1817 = vunpack.c.h.b16 %v272
  %v1818 = vunpack.c.l.b16 %v273
  %v1819 = vunpack.c.h.b16 %v273
  %v1820 = vunpack.c.l.b16 %v274
  %v1821 = vunpack.c.h.b16 %v274
  %v1822 = vunpack.c.l.b16 %v275
  %v1823 = vunpack.c.h.b16 %v275
  %v1824 = vunpack.c.l.b16 %v276
  %v1825 = vunpack.c.h.b16 %v276
  %v1826 = vunpack.c.l.b16 %v277
  %v1827 = vunpack.c.h.b16 %v277
  %v1828 = vunpack.c.l.b16 %v278
  %v1829 = vunpack.c.h.b16 %v278
  %v1830 = vunpack.c.l.b16 %v279
  %v1831 = vunpack.c.h.b16 %v279
  %v1832 = vunpack.c.l.b16 %v280
  %v1833 = vunpack.c.h.b16 %v280
  %v1834 = vunpack.c.l.b16 %v281
  %v1835 = vunpack.c.h.b16 %v281
  %v1836 = vunpack.c.l.b16 %v282
  %v1837 = vunpack.c.h.b16 %v282
  %v1838 = vunpack.c.l.b16 %v283
  %v1839 = vunpack.c.h.b16 %v283
  %v1840 = vunpack.c.l.b16 %v284
  %v1841 = vunpack.c.h.b16 %v284
  %v1842 = vunpack.c.l.b16 %v285
  %v1843 = vunpack.c.h.b16 %v285
  %v1844 = vunpack.c.l.b16 %v286
  %v1845 = vunpack.c.h.b16 %v286
  %v1846 = vunpack.c.l.b16 %v287
  %v1847 = vunpack.c.h.b16 %v287
  %v1848 = vunpack.c.l.b16 %v288
  %v1849 = vunpack.c.h.b16 %v288
  %v1850 = vunpack.c.l.b16 %v289
  %v1851 = vunpack.c.h.b16 %v289
  %v1852 = vunpack.c.l.b16 %v290
  %v1853 = vunpack.c.h.b16 %v290
  %v1854 = vunpack.c.l.b16 %v291
  %v1855 = vunpack.c.h.b16 %v291
  %v1856 = vunpack.c.l.b16 %v292
  %v1857 = vunpack.c.h.b16 %v292
  %v1858 = vunpack.c.l.b16 %v293
  %v1859 = vunpack.c.h.b16 %v293
  %v1860 = vunpack.c.l.b16 %v294
  %v1861 = vunpack.c.h.b16 %v294
  %v1862 = vunpack.c.l.b16 %v295
  %v1863 = vunpack.c.h.b16 %v295
  %v1864 = vunpack.c.l.b16 %v296
  %v1865 = vunpack.c.h.b16 %v296
  %v1866 = vunpack.c.l.b16 %v297
  %v1867 = vunpack.c.h.b16 %v297
  %v1868 = vunpack.c.l.b16 %v298
  %v1869 = vunpack.c.h.b16 %v298
  %v1870 = vunpack.c.l.b16 %v299
  %v1871 = vunpack.c.h.b16 %v299
  %v1872 = vunpack.c.l.b16 %v300
  %v1873 = vunpack.c.h.b16 %v300
  %v1874 = vunpack.c.l.b16 %v301
  %v1875 = vunpack.c.h.b16 %v301
  %v1876 = vunpack.c.l.b16 %v302
  %v1877 = vunpack.c.h.b16 %v302
  %v1878 = vunpack.c.l.b16 %v303
  %v1879 = vunpack.c.h.b16 %v303
  %v1880 = vunpack.c.l.b16 %v304
  %v1881 = vunpack.c.h.b16 %v304
  %v1882 = vunpack.c.l.b16 %v305
  %v1883 = vunpack.c.h.b16 %v305
  %v1884 = vunpack.c.l.b16 %v306
  %v1885 = vunpack.c.h.b16 %v306
  %v1886 = vunpack.c.l.b16 %v307
  %v1887 = vunpack.c.h.b16 %v307
  %v1888 = vunpack.c.l.b16 %v308
  %v1889 = vunpack.c.h.b16 %v308
  %v1890 = vunpack.c.l.b16 %v309
  %v1891 = vunpack.c.h.b16 %v309
  %v1892 = vunpack.c.l.b16 %v310
  %v1893 = vunpack.c.h.b16 %v310
  %v1894 = vunpack.c.l.b16 %v311
  %v1895 = vunpack.c.h.b16 %v311
  %v1896 = vunpack.c.l.b16 %v312
  %v1897 = vunpack.c.h.b16 %v312
  %v1898 = vunpack.c.l.b16 %v313
  %v1899 = vunpack.c.h.b16 %v313
  %v1900 = vunpack.c.l.b16 %v314
  %v1901 = vunpack.c.h.b16 %v314
  %v1902 = vunpack.c.l.b16 %v315
  %v1903 = vunpack.c.h.b16 %v315
  %v1904 = vunpack.c.l.b16 %v316
  %v1905 = vunpack.c.h.b16 %v316
  %v1906 = vunpack.c.l.b16 %v317
  %v1907 = vunpack.c.h.b16 %v317
  %v1908 = vunpack.c.l.b16 %v318
  %v1909 = vunpack.c.h.b16 %v318
  %v1910 = vunpack.c.l.b16 %v319
  %v1911 = vunpack.c.h.b16 %v319
  %v1912 = vunpack.c.l.b16 %v320
  %v1913 = vunpack.c.h.b16 %v320
  %v1914 = vunpack.c.l.b16 %v321
  %v1915 = vunpack.c.h.b16 %v321
  %v1916 = vunpack.c.l.b16 %v322
  %v1917 = vunpack.c.h.b16 %v322
  %v1918 = vunpack.c.l.b16 %v323
  %v1919 = vunpack.c.h.b16 %v323
  %v1920 = vunpack.c.l.b16 %v324
  %v1921 = vunpack.c.h.b16 %v324
  %v1922 = vunpack.c.l.b16 %v325
  %v1923 = vunpack.c.h.b16 %v325
  %v1924 = vunpack.c.l.b16 %v326
  %v1925 = vunpack.c.h.b16 %v326
  %v1926 = vunpack.c.l.b16 %v327
  %v1927 = vunpack.c.h.b16 %v327
  %v1928 = vunpack.c.l.b16 %v328
  %v1929 = vunpack.c.h.b16 %v328
  %v1930 = vunpack.c.l.b16 %v329
  %v1931 = vunpack.c.h.b16 %v329
  %v1932 = vunpack.c.l.b16 %v330
  %v1933 = vunpack.c.h.b16 %v330
  %v1934 = vunpack.c.l.b16 %v331
  %v1935 = vunpack.c.h.b16 %v331
  %v1936 = vunpack.c.l.b16 %v332
  %v1937 = vunpack.c.h.b16 %v332
  %v1938 = vunpack.c.l.b16 %v333
  %v1939 = vunpack.c.h.b16 %v333
  %v1940 = vunpack.c.l.b16 %v334
  %v1941 = vunpack.c.h.b16 %v334
  %v1942 = vunpack.c.l.b16 %v335
  %v1943 = vunpack.c.h.b16 %v335
  %v1944 = vunpack.c.l.b16 %v336
  %v1945 = vunpack.c.h.b16 %v336
  %v1946 = vunpack.c.l.b16 %v337
  %v1947 = vunpack.c.h.b16 %v337
  %v1948 = vunpack.c.l.b16 %v338
  %v1949 = vunpack.c.h.b16 %v338
  %v1950 = vunpack.c.l.b16 %v339
  %v1951 = vunpack.c.h.b16 %v339
  %v1952 = vunpack.c.l.b16 %v340
  %v1953 = vunpack.c.h.b16 %v340
  %v1954 = vunpack.c.l.b16 %v341
  %v1955 = vunpack.c.h.b16 %v341
  %v1956 = vunpack.c.l.b16 %v342
  %v1957 = vunpack.c.h.b16 %v342
  %v1958 = vunpack.c.l.b16 %v343
  %v1959 = vunpack.c.h.b16 %v343
  %v1960 = vunpack.c.l.b16 %v344
  %v1961 = vunpack.c.h.b16 %v344
  %v1962 = vunpack.c.l.b16 %v345
  %v1963 = vunpack.c.h.b16 %v345
  %v1964 = vunpack.c.l.b16 %v346
  %v1965 = vunpack.c.h.b16 %v346
  %v1966 = vunpack.c.l.b16 %v347
  %v1967 = vunpack.c.h.b16 %v347
  %v1968 = vunpack.c.l.b16 %v348
  %v1969 = vunpack.c.h.b16 %v348
  %v1970 = vunpack.c.l.b16 %v349
  %v1971 = vunpack.c.h.b16 %v349
  %v1972 = vunpack.c.l.b16 %v350
  %v1973 = vunpack.c.h.b16 %v350
  %v1974 = vunpack.c.l.b16 %v351
  %v1975 = vunpack.c.h.b16 %v351
  %v1976 = vunpack.c.l.b16 %v352
  %v1977 = vunpack.c.h.b16 %v352
  %v1978 = vunpack.c.l.b16 %v353
  %v1979 = vunpack.c.h.b16 %v353
  %v1980 = vunpack.c.l.b16 %v354
  %v1981 = vunpack.c.h.b16 %v354
  %v1982 = vunpack.c.l.b16 %v355
  %v1983 = vunpack.c.h.b16 %v355
  %v1984 = vunpack.c.l.b16 %v356
  %v1985 = vunpack.c.h.b16 %v356
  %v1986 = vunpack.c.l.b16 %v357
  %v1987 = vunpack.c.h.b16 %v357
  %v1988 = vunpack.c.l.b16 %v358
  %v1989 = vunpack.c.h.b16 %v358
  %v1990 = vunpack.c.l.b16 %v359
  %v1991 = vunpack.c.h.b16 %v359
  %v1992 = vunpack.c.l.b16 %v360
  %v1993 = vunpack.c.h.b16 %v360
  %v1994 = vunpack.c.l.b16 %v361
  %v1995 = vunpack.c.h.b16 %v361
  %v1996 = vunpack.c.l.b16 %v362
  %v1997 = vunpack.c.h.b16 %v362
  %v1998 = vunpack.c.l.b16 %v363
  %v1999 = vunpack.c.h.b16 %v363
  %v2000 = vunpack.c.l.b16 %v364
  %v2001 = vunpack.c.h.b16 %v364
  %v2002 = vunpack.c.l.b16 %v365
  %v2003 = vunpack.c.h.b16 %v365
  %v2004 = vunpack.c.l.b16 %v366
  %v2005 = vunpack.c.h.b16 %v366
  %v2006 = vunpack.c.l.b16 %v367
  %v2007 = vunpack.c.h.b16 %v367
  %v2008 = vunpack.c.l.b16 %v368
  %v2009 = vunpack.c.h.b16 %v368
  %v2010 = vunpack.c.l.b16 %v369
  %v2011 = vunpack.c.h.b16 %v369
  %v2012 = vunpack.c.l.b16 %v370
  %v2013 = vunpack.c.h.b16 %v370
  %v2014 = vunpack.c.l.b16 %v371
  %v2015 = vunpack.c.h.b16 %v371
  %v2016 = vunpack.c.l.b16 %v372
  %v2017 = vunpack.c.h.b16 %v372
  %v2018 = vunpack.c.l.b16 %v373
  %v2019 = vunpack.c.h.b16 %v373
  %v2020 = vunpack.c.l.b16 %v374
  %v2021 = vunpack.c.h.b16 %v374
  %v2022 = vunpack.c.l.b16 %v375
  %v2023 = vunpack.c.h.b16 %v375
  %v2024 = vunpack.c.l.b16 %v376
  %v2025 = vunpack.c.h.b16 %v376
  %v2026 = vunpack.c.l.b16 %v377
  %v2027 = vunpack.c.h.b16 %v377
  %v2028 = vunpack.c.l.b16 %v378
  %v2029 = vunpack.c.h.b16 %v378
  %v2030 = vunpack.c.l.b16 %v379
  %v2031 = vunpack.c.h.b16 %v379
  %v2032 = vunpack.c.l.b16 %v380
  %v2033 = vunpack.c.h.b16 %v380
  %v2034 = vunpack.c.l.b16 %v381
  %v2035 = vunpack.c.h.b16 %v381
  %v2036 = vunpack.c.l.b16 %v382
  %v2037 = vunpack.c.h.b16 %v382
  %v2038 = vunpack.c.l.b16 %v383
  %v2039 = vunpack.c.h.b16 %v383
  %v2040 = vunpack.c.l.b16 %v384
  %v2041 = vunpack.c.h.b16 %v384
  %v2042 = vunpack.c.l.b16 %v385
  %v2043 = vunpack.c.h.b16 %v385
  %v2044 = vunpack.c.l.b16 %v386
  %v2045 = vunpack.c.h.b16 %v386
  %v2046 = vunpack.c.l.b16 %v387
  %v2047 = vunpack.c.h.b16 %v387
  %v2048 = vunpack.c.l.b16 %v388
  %v2049 = vunpack.c.h.b16 %v388
  %v2050 = vunpack.c.l.b16 %v389
  %v2051 = vunpack.c.h.b16 %v389
  %v2052 = vunpack.c.l.b16 %v390
  %v2053 = vunpack.c.h.b16 %v390
  %v2054 = vunpack.c.l.b16 %v391
  %v2055 = vunpack.c.h.b16 %v391
  %v2056 = vunpack.c.l.b16 %v392
  %v2057 = vunpack.c.h.b16 %v392
  %v2058 = vunpack.c.l.b16 %v393
  %v2059 = vunpack.c.h.b16 %v393
  %v2060 = vunpack.c.l.b16 %v394
  %v2061 = vunpack.c.h.b16 %v394
  %v2062 = vunpack.c.l.b16 %v395
  %v2063 = vunpack.c.h.b16 %v395
  %v2064 = vunpack.c.l.b16 %v396
  %v2065 = vunpack.c.h.b16 %v396
  %v2066 = vunpack.c.l.b16 %v397
  %v2067 = vunpack.c.h.b16 %v397
  %v2068 = vunpack.c.l.b16 %v398
  %v2069 = vunpack.c.h.b16 %v398
  %v2070 = vunpack.c.l.b16 %v399
  %v2071 = vunpack.c.h.b16 %v399
  %v2072 = vunpack.c.l.b16 %v400
  %v2073 = vunpack.c.h.b16 %v400
  %v2074 = vunpack.c.l.b16 %v401
  %v2075 = vunpack.c.h.b16 %v401
  %v2076 = vunpack.c.l.b16 %v402
  %v2077 = vunpack.c.h.b16 %v402
  %v2078 = vunpack.c.l.b16 %v403
  %v2079 = vunpack.c.h.b16 %v403
  %v2080 = vunpack.c.l.b16 %v404
  %v2081 = vunpack.c.h.b16 %v404
  %v2082 = vunpack.c.l.b16 %v405
  %v2083 = vunpack.c.h.b16 %v405
  %v2084 = vunpack.c.l.b16 %v406
  %v2085 = vunpack.c.h.b16 %v406
  %v2086 = vunpack.c.l.b16 %v407
  %v2087 = vunpack.c.h.b16 %v407
  %v2088 = vunpack.c.l.b16 %v408
  %v2089 = vunpack.c.h.b16 %v408
  %v2090 = vunpack.c.l.b16 %v409
  %v2091 = vunpack.c.h.b16 %v409
  %v2092 = vunpack.c.l.b16 %v410
  %v2093 = vunpack.c.h.b16 %v410
  %v2094 = vunpack.c.l.b16 %v411
  %v2095 = vunpack.c.h.b16 %v411
  %v2096 = vunpack.c.l.b16 %v412
  %v2097 = vunpack.c.h.b16 %v412
  %v2098 = vunpack.c.l.b16 %v413
  %v2099 = vunpack.c.h.b16 %v413
  %v2100 = vunpack.c.l.b16 %v414
  %v2101 = vunpack.c.h.b16 %v414
  %v2102 = vunpack.c.l.b16 %v415
  %v2103 = vunpack.c.h.b16 %v415
  %v2104 = vunpack.c.l.b16 %v416
  %v2105 = vunpack.c.h.b16 %v416
  %v2106 = vunpack.c.l.b16 %v417
  %v2107 = vunpack.c.h.b16 %v417
  %v2108 = vunpack.c.l.b16 %v418
  %v2109 = vunpack.c.h.b16 %v418
  %v2110 = vunpack.c.l.b16 %v419
  %v2111 = vunpack.c.h.b16 %v419
  %v2112 = vunpack.c.l.b16 %v420
  %v2113 = vunpack.c.h.b16 %v420
  %v2114 = vunpack.c.l.b16 %v421
  %v2115 = vunpack.c.h.b16 %v421
  %v2116 = vunpack.c.l.b16 %v422
  %v2117 = vunpack.c.h.b16 %v422
  %v2118 = vunpack.c.l.b16 %v423
  %v2119 = vunpack.c.h.b16 %v423
  %v2120 = vunpack.c.l.b16 %v424
  %v2121 = vunpack.c.h.b16 %v424
  %v2122 = vunpack.c.l.b16 %v425
  %v2123 = vunpack.c.h.b16 %v425
  %v2124 = vunpack.c.l.b16 %v426
  %v2125 = vunpack.c.h.b16 %v426
  %v2126 = vunpack.c.l.b16 %v427
  %v2127 = vunpack.c.h.b16 %v427
  %v2128 = vunpack.c.l.b16 %v428
  %v2129 = vunpack.c.h.b16 %v428
  %v2130 = vunpack.c.l.b16 %v429
  %v2131 = vunpack.c.h.b16 %v429
  %v2132 = vunpack.c.l.b16 %v430
  %v2133 = vunpack.c.h.b16 %v430
  %v2134 = vunpack.c.l.b16 %v431
  %v2135 = vunpack.c.h.b16 %v431
  %v2136 = vunpack.c.l.b16 %v432
  %v2137 = vunpack.c.h.b16 %v432
  %v2138 = vunpack.c.l.b16 %v433
  %v2139 = vunpack.c.h.b16 %v433
  %v2140 = vunpack.c.l.b16 %v434
  %v2141 = vunpack.c.h.b16 %v434
  %v2142 = vunpack.c.l.b16 %v435
  %v2143 = vunpack.c.h.b16 %v435
  %v2144 = vunpack.c.l.b16 %v436
  %v2145 = vunpack.c.h.b16 %v436
  %v2146 = vunpack.c.l.b16 %v437
  %v2147 = vunpack.c.h.b16 %v437
  %v2148 = vunpack.c.l.b16 %v438
  %v2149 = vunpack.c.h.b16 %v438
  %v2150 = vunpack.c.l.b16 %v439
  %v2151 = vunpack.c.h.b16 %v439
  %v2152 = vunpack.c.l.b16 %v440
  %v2153 = vunpack.c.h.b16 %v440
  %v2154 = vunpack.c.l.b16 %v441
  %v2155 = vunpack.c.h.b16 %v441
  %v2156 = vunpack.c.l.b16 %v442
  %v2157 = vunpack.c.h.b16 %v442
  %v2158 = vunpack.c.l.b16 %v443
  %v2159 = vunpack.c.h.b16 %v443
  %v2160 = vunpack.c.l.b16 %v444
  %v2161 = vunpack.c.h.b16 %v444
  %v2162 = vunpack.c.l.b16 %v445
  %v2163 = vunpack.c.h.b16 %v445
  %v2164 = vunpack.c.l.b16 %v446
  %v2165 = vunpack.c.h.b16 %v446
  %v2166 = vunpack.c.l.b16 %v447
  %v2167 = vunpack.c.h.b16 %v447
  %v2168 = vunpack.c.l.b16 %v448
  %v2169 = vunpack.c.h.b16 %v448
  %v2170 = vunpack.c.l.b16 %v449
  %v2171 = vunpack.c.h.b16 %v449
  %v2172 = vunpack.c.l.b16 %v450
  %v2173 = vunpack.c.h.b16 %v450
  %v2174 = vunpack.c.l.b16 %v451
  %v2175 = vunpack.c.h.b16 %v451
  %v2176 = vunpack.c.l.b16 %v452
  %v2177 = vunpack.c.h.b16 %v452
  %v2178 = vunpack.c.l.b16 %v453
  %v2179 = vunpack.c.h.b16 %v453
  %v2180 = vunpack.c.l.b16 %v454
  %v2181 = vunpack.c.h.b16 %v454
  %v2182 = vunpack.c.l.b16 %v455
  %v2183 = vunpack.c.h.b16 %v455
  %v2184 = vunpack.c.l.b16 %v456
  %v2185 = vunpack.c.h.b16 %v456
  %v2186 = vunpack.c.l.b16 %v457
  %v2187 = vunpack.c.h.b16 %v457
  %v2188 = vunpack.c.l.b16 %v458
  %v2189 = vunpack.c.h.b16 %v458
  %v2190 = vunpack.c.l.b16 %v459
  %v2191 = vunpack.c.h.b16 %v459
  %v2192 = vunpack.c.l.b16 %v460
  %v2193 = vunpack.c.h.b16 %v460
  %v2194 = vunpack.c.l.b16 %v461
  %v2195 = vunpack.c.h.b16 %v461
  %v2196 = vunpack.c.l.b16 %v462
  %v2197 = vunpack.c.h.b16 %v462
  %v2198 = vunpack.c.l.b16 %v463
  %v2199 = vunpack.c.h.b16 %v463
  %v2200 = vunpack.c.l.b16 %v464
  %v2201 = vunpack.c.h.b16 %v464
  %v2202 = vunpack.c.l.b16 %v465
  %v2203 = vunpack.c.h.b16 %v465
  %v2204 = vunpack.c.l.b16 %v466
  %v2205 = vunpack.c.h.b16 %v466
  %v2206 = vunpack.c.l.b16 %v467
  %v2207 = vunpack.c.h.b16 %v467
  %v2208 = vunpack.c.l.b16 %v468
  %v2209 = vunpack.c.h.b16 %v468
  %v2210 = vunpack.c.l.b16 %v469
  %v2211 = vunpack.c.h.b16 %v469
  %v2212 = vunpack.c.l.b16 %v470
  %v2213 = vunpack.c.h.b16 %v470
  %v2214 = vunpack.c.l.b16 %v471
  %v2215 = vunpack.c.h.b16 %v471
  %v2216 = vunpack.c.l.b16 %v472
  %v2217 = vunpack.c.h.b16 %v472
  %v2218 = vunpack.c.l.b16 %v473
  %v2219 = vunpack.c.h.b16 %v473
  %v2220 = vunpack.c.l.b16 %v474
  %v2221 = vunpack.c.h.b16 %v474
  %v2222 = vunpack.c.l.b16 %v475
  %v2223 = vunpack.c.h.b16 %v475
  %v2224 = vunpack.c.l.b16 %v476
  %v2225 = vunpack.c.h.b16 %v476
  %v2226 = vunpack.c.l.b16 %v477
  %v2227 = vunpack.c.h.b16 %v477
  %v2228 = vunpack.c.l.b16 %v478
  %v2229 = vunpack.c.h.b16 %v478
  %v2230 = vunpack.c.l.b16 %v479
  %v2231 = vunpack.c.h.b16 %v479
  %v2232 = vunpack.c.l.b16 %v480
  %v2233 = vunpack.c.h.b16 %v480
  %v2234 = vunpack.c.l.b16 %v481
  %v2235 = vunpack.c.h.b16 %v481
  %v2236 = vunpack.c.l.b16 %v482
  %v2237 = vunpack.c.h.b16 %v482
  %v2238 = vunpack.c.l.b16 %v483
  %v2239 = vunpack.c.h.b16 %v483
  %v2240 = vunpack.c.l.b16 %v484
  %v2241 = vunpack.c.h.b16 %v484
  %v2242 = vunpack.c.l.b16 %v485
  %v2243 = vunpack.c.h.b16 %v485
  %v2244 = vunpack.c.l.b16 %v486
  %v2245 = vunpack.c.h.b16 %v486
  %v2246 = vunpack.c.l.b16 %v487
  %v2247 = vunpack.c.h.b16 %v487
  %v2248 = vunpack.c.l.b16 %v488
  %v2249 = vunpack.c.h.b16 %v488
  %v2250 = vunpack.c.l.b16 %v489
  %v2251 = vunpack.c.h.b16 %v489
  %v2252 = vunpack.c.l.b16 %v490
  %v2253 = vunpack.c.h.b16 %v490
  %v2254 = vunpack.c.l.b16 %v491
  %v2255 = vunpack.c.h.b16 %v491
  %v2256 = vunpack.c.l.b16 %v492
  %v2257 = vunpack.c.h.b16 %v492
  %v2258 = vunpack.c.l.b16 %v493
  %v2259 = vunpack.c.h.b16 %v493
  %v2260 = vunpack.c.l.b16 %v494
  %v2261 = vunpack.c.h.b16 %v494
  %v2262 = vunpack.c.l.b16 %v495
  %v2263 = vunpack.c.h.b16 %v495
  %v2264 = vunpack.c.l.b16 %v496
  %v2265 = vunpack.c.h.b16 %v496
  %v2266 = vunpack.c.l.b16 %v497
  %v2267 = vunpack.c.h.b16 %v497
  %v2268 = vunpack.c.l.b16 %v498
  %v2269 = vunpack.c.h.b16 %v498
  %v2270 = vunpack.c.l.b16 %v499
  %v2271 = vunpack.c.h.b16 %v499
  %v2272 = vunpack.c.l.b16 %v500
  %v2273 = vunpack.c.h.b16 %v500
  %v2274 = vunpack.c.l.b16 %v501
  %v2275 = vunpack.c.h.b16 %v501
  %v2276 = vunpack.c.l.b16 %v502
  %v2277 = vunpack.c.h.b16 %v502
  %v2278 = vunpack.c.l.b16 %v503
  %v2279 = vunpack.c.h.b16 %v503
  %v2280 = vunpack.c.l.b16 %v504
  %v2281 = vunpack.c.h.b16 %v504
  %v2282 = vunpack.c.l.b16 %v505
  %v2283 = vunpack.c.h.b16 %v505
  %v2284 = vunpack.c.l.b16 %v506
  %v2285 = vunpack.c.h.b16 %v506
  %v2286 = vunpack.c.l.b16 %v507
  %v2287 = vunpack.c.h.b16 %v507
  %v2288 = vunpack.c.l.b16 %v508
  %v2289 = vunpack.c.h.b16 %v508
  %v2290 = vunpack.c.l.b16 %v509
  %v2291 = vunpack.c.h.b16 %v509
  %v2292 = vunpack.c.l.b16 %v510
  %v2293 = vunpack.c.h.b16 %v510
  %v2294 = vunpack.c.l.b16 %v511
  %v2295 = vunpack.c.h.b16 %v511
  %v2296 = vunpack.c.l.b16 %v512
  %v2297 = vunpack.c.h.b16 %v512
  %v2298 = vunpack.c.l.b16 %v513
  %v2299 = vunpack.c.h.b16 %v513
  %v2300 = vunpack.c.l.b16 %v514
  %v2301 = vunpack.c.h.b16 %v514
  %v2302 = vunpack.c.l.b16 %v515
  %v2303 = vunpack.c.h.b16 %v515
  %v2304 = vunpack.c.l.b16 %v516
  %v2305 = vunpack.c.h.b16 %v516
  %v2306 = vunpack.c.l.b16 %v517
  %v2307 = vunpack.c.h.b16 %v517
  %v2308 = vunpack.c.l.b16 %v518
  %v2309 = vunpack.c.h.b16 %v518
  %v2310 = vunpack.c.l.b16 %v519
  %v2311 = vunpack.c.h.b16 %v519
  %v2312 = vunpack.c.l.b16 %v520
  %v2313 = vunpack.c.h.b16 %v520
  %v2314 = vunpack.c.l.b16 %v521
  %v2315 = vunpack.c.h.b16 %v521
  %v2316 = vunpack.c.l.b16 %v522
  %v2317 = vunpack.c.h.b16 %v522
  %v2318 = vunpack.c.l.b16 %v523
  %v2319 = vunpack.c.h.b16 %v523
  %v2320 = vunpack.c.l.b16 %v524
  %v2321 = vunpack.c.h.b16 %v524
  %v2322 = vunpack.c.l.b16 %v525
  %v2323 = vunpack.c.h.b16 %v525
  %v2324 = vunpack.c.l.b16 %v526
  %v2325 = vunpack.c.h.b16 %v526
  %v2326 = vpack.c.b16 %v1318, %v1302
  %v2327 = vpack.c.b16 %v1319, %v1303
  %v2328 = vpack.c.b16 %v1320, %v1304
  %v2329 = vpack.c.b16 %v1321, %v1305
  %v2330 = vpack.c.b16 %v1322, %v1306
  %v2331 = vpack.c.b16 %v1323, %v1307
  %v2332 = vpack.c.b16 %v1324, %v1308
  %v2333 = vpack.c.b16 %v1325, %v1309
  %v2334 = vpack.c.b16 %v1326, %v1310
  %v2335 = vpack.c.b16 %v1327, %v1311
  %v2336 = vpack.c.b16 %v1328, %v1312
  %v2337 = vpack.c.b16 %v1329, %v1313
  %v2338 = vpack.c.b16 %v1330, %v1314
  %v2339 = vpack.c.b16 %v1331, %v1315
  %v2340 = vpack.c.b16 %v1332, %v1316
  %v2341 = vpack.c.b16 %v1333, %v1317
  %v2342 = vpack.c.b16 %v1350, %v1334
  %v2343 = vpack.c.b16 %v1351, %v1335
  %v2344 = vpack.c.b16 %v1352, %v1336
  %v2345 = vpack.c.b16 %v1353, %v1337
  %v2346 = vpack.c.b16 %v1354, %v1338
  %v2347 = vpack.c.b16 %v1355, %v1339
  %v2348 = vpack.c.b16 %v1356, %v1340
  %v2349 = vpack.c.b16 %v1357, %v1341
  %v2350 = vpack.c.b16 %v1358, %v1342
  %v2351 = vpack.c.b16 %v1359, %v1343
  %v2352 = vpack.c.b16 %v1360, %v1344
  %v2353 = vpack.c.b16 %v1361, %v1345
  %v2354 = vpack.c.b16 %v1362, %v1346
  %v2355 = vpack.c.b16 %v1363, %v1347
  %v2356 = vpack.c.b16 %v1364, %v1348
  %v2357 = vpack.c.b16 %v1365, %v1349
  %v2358 = vpack.c.b16 %v1382, %v1366
  %v2359 = vpack.c.b16 %v1383, %v1367
  %v2360 = vpack.c.b16 %v1384, %v1368
  %v2361 = vpack.c.b16 %v1385, %v1369
  %v2362 = vpack.c.b16 %v1386, %v1370
  %v2363 = vpack.c.b16 %v1387, %v1371
  %v2364 = vpack.c.b16 %v1388, %v1372
  %v2365 = vpack.c.b16 %v1389, %v1373
  %v2366 = vpack.c.b16 %v1390, %v1374
  %v2367 = vpack.c.b16 %v1391, %v1375
  %v2368 = vpack.c.b16 %v1392, %v1376
  %v2369 = vpack.c.b16 %v1393, %v1377
  %v2370 = vpack.c.b16 %v1394, %v1378
  %v2371 = vpack.c.b16 %v1395, %v1379
  %v2372 = vpack.c.b16 %v1396, %v1380
  %v2373 = vpack.c.b16 %v1397, %v1381
  %v2374 = vpack.c.b16 %v1414, %v1398
  %v2375 = vpack.c.b16 %v1415, %v1399
  %v2376 = vpack.c.b16 %v1416, %v1400
  %v2377 = vpack.c.b16 %v1417, %v1401
  %v2378 = vpack.c.b16 %v1418, %v1402
  %v2379 = vpack.c.b16 %v1419, %v1403
  %v2380 = vpack.c.b16 %v1420, %v1404
  %v2381 = vpack.c.b16 %v1421, %v1405
  %v2382 = vpack.c.b16 %v1422, %v1406
  %v2383 = vpack.c.b16 %v1423, %v1407
  %v2384 = vpack.c.b16 %v1424, %v1408
  %v2385 = vpack.c.b16 %v1425, %v1409
  %v2386 = vpack.c.b16 %v1426, %v1410
  %v2387 = vpack.c.b16 %v1427, %v1411
  %v2388 = vpack.c.b16 %v1428, %v1412
  %v2389 = vpack.c.b16 %v1429, %v1413
  %v2390 = vpack.c.b16 %v1446, %v1430
  %v2391 = vpack.c.b16 %v1447, %v1431
  %v2392 = vpack.c.b16 %v1448, %v1432
  %v2393 = vpack.c.b16 %v1449, %v1433
  %v2394 = vpack.c.b16 %v1450, %v1434
  %v2395 = vpack.c.b16 %v1451, %v1435
  %v2396 = vpack.c.b16 %v1452, %v1436
  %v2397 = vpack.c.b16 %v1453, %v1437
  %v2398 = vpack.c.b16 %v1454, %v1438
  %v2399 = vpack.c.b16 %v1455, %v1439
  %v2400 = vpack.c.b16 %v1456, %v1440
  %v2401 = vpack.c.b16 %v1457, %v1441
  %v2402 = vpack.c.b16 %v1458, %v1442
  %v2403 = vpack.c.b16 %v1459, %v1443
  %v2404 = vpack.c.b16 %v1460, %v1444
  %v2405 = vpack.c.b16 %v1461, %v1445
  %v2406 = vpack.c.b16 %v1478, %v1462
  %v2407 = vpack.c.b16 %v1479, %v1463
  %v2408 = vpack.c.b16 %v1480, %v1464
  %v2409 = vpack.c.b16 %v1481, %v1465
  %v2410 = vpack.c.b16 %v1482, %v1466
  %v2411 = vpack.c.b16 %v1483, %v1467
  %v2412 = vpack.c.b16 %v1484, %v1468
  %v2413 = vpack.c.b16 %v1485, %v1469
  %v2414 = vpack.c.b16 %v1486, %v1470
  %v2415 = vpack.c.b16 %v1487, %v1471
  %v2416 = vpack.c.b16 %v1488, %v1472
  %v2417 = vpack.c.b16 %v1489, %v1473
  %v2418 = vpack.c.b16 %v1490, %v1474
  %v2419 = vpack.c.b16 %v1491, %v1475
  %v2420 = vpack.c.b16 %v1492, %v1476
  %v2421 = vpack.c.b16 %v1493, %v1477
  %v2422 = vpack.c.b16 %v1510, %v1494
  %v2423 = vpack.c.b16 %v1511, %v1495
  %v2424 = vpack.c.b16 %v1512, %v1496
  %v2425 = vpack.c.b16 %v1513, %v1497
  %v2426 = vpack.c.b16 %v1514, %v1498
  %v2427 = vpack.c.b16 %v1515, %v1499
  %v2428 = vpack.c.b16 %v1516, %v1500
  %v2429 = vpack.c.b16 %v1517, %v1501
  %v2430 = vpack.c.b16 %v1518, %v1502
  %v2431 = vpack.c.b16 %v1519, %v1503
  %v2432 = vpack.c.b16 %v1520, %v1504
  %v2433 = vpack.c.b16 %v1521, %v1505
  %v2434 = vpack.c.b16 %v1522, %v1506
  %v2435 = vpack.c.b16 %v1523, %v1507
  %v2436 = vpack.c.b16 %v1524, %v1508
  %v2437 = vpack.c.b16 %v1525, %v1509
  %v2438 = vpack.c.b16 %v1542, %v1526
  %v2439 = vpack.c.b16 %v1543, %v1527
  %v2440 = vpack.c.b16 %v1544, %v1528
  %v2441 = vpack.c.b16 %v1545, %v1529
  %v2442 = vpack.c.b16 %v1546, %v1530
  %v2443 = vpack.c.b16 %v1547, %v1531
  %v2444 = vpack.c.b16 %v1548, %v1532
  %v2445 = vpack.c.b16 %v1549, %v1533
  %v2446 = vpack.c.b16 %v1550, %v1534
  %v2447 = vpack.c.b16 %v1551, %v1535
  %v2448 = vpack.c.b16 %v1552, %v1536
  %v2449 = vpack.c.b16 %v1553, %v1537
  %v2450 = vpack.c.b16 %v1554, %v1538
  %v2451 = vpack.c.b16 %v1555, %v1539
  %v2452 = vpack.c.b16 %v1556, %v1540
  %v2453 = vpack.c.b16 %v1557, %v1541
  %v2454 = vpack.c.b16 %v1574, %v1558
  %v2455 = vpack.c.b16 %v1575, %v1559
  %v2456 = vpack.c.b16 %v1576, %v1560
  %v2457 = vpack.c.b16 %v1577, %v1561
  %v2458 = vpack.c.b16 %v1578, %v1562
  %v2459 = vpack.c.b16 %v1579, %v1563
  %v2460 = vpack.c.b16 %v1580, %v1564
  %v2461 = vpack.c.b16 %v1581, %v1565
  %v2462 = vpack.c.b16 %v1582, %v1566
  %v2463 = vpack.c.b16 %v1583, %v1567
  %v2464 = vpack.c.b16 %v1584, %v1568
  %v2465 = vpack.c.b16 %v1585, %v1569
  %v2466 = vpack.c.b16 %v1586, %v1570
  %v2467 = vpack.c.b16 %v1587, %v1571
  %v2468 = vpack.c.b16 %v1588, %v1572
  %v2469 = vpack.c.b16 %v1589, %v1573
  %v2470 = vpack.c.b16 %v1606, %v1590
  %v2471 = vpack.c.b16 %v1607, %v1591
  %v2472 = vpack.c.b16 %v1608, %v1592
  %v2473 = vpack.c.b16 %v1609, %v1593
  %v2474 = vpack.c.b16 %v1610, %v1594
  %v2475 = vpack.c.b16 %v1611, %v1595
  %v2476 = vpack.c.b16 %v1612, %v1596
  %v2477 = vpack.c.b16 %v1613, %v1597
  %v2478 = vpack.c.b16 %v1614, %v1598
  %v2479 = vpack.c.b16 %v1615, %v1599
  %v2480 = vpack.c.b16 %v1616, %v1600
  %v2481 = vpack.c.b16 %v1617, %v1601
  %v2482 = vpack.c.b16 %v1618, %v1602
  %v2483 = vpack.c.b16 %v1619, %v1603
  %v2484 = vpack.c.b16 %v1620, %v1604
  %v2485 = vpack.c.b16 %v1621, %v1605
  %v2486 = vpack.c.b16 %v1638, %v1622
  %v2487 = vpack.c.b16 %v1639, %v1623
  %v2488 = vpack.c.b16 %v1640, %v1624
  %v2489 = vpack.c.b16 %v1641, %v1625
  %v2490 = vpack.c.b16 %v1642, %v1626
  %v2491 = vpack.c.b16 %v1643, %v1627
  %v2492 = vpack.c.b16 %v1644, %v1628
  %v2493 = vpack.c.b16 %v1645, %v1629
  %v2494 = vpack.c.b16 %v1646, %v1630
  %v2495 = vpack.c.b16 %v1647, %v1631
  %v2496 = vpack.c.b16 %v1648, %v1632
  %v2497 = vpack.c.b16 %v1649, %v1633
  %v2498 = vpack.c.b16 %v1650, %v1634
  %v2499 = vpack.c.b16 %v1651, %v1635
  %v2500 = vpack.c.b16 %v1652, %v1636
  %v2501 = vpack.c.b16 %v1653, %v1637
  %v2502 = vpack.c.b16 %v1670, %v1654
  %v2503 = vpack.c.b16 %v1671, %v1655
  %v2504 = vpack.c.b16 %v1672, %v1656
  %v2505 = vpack.c.b16 %v1673, %v1657
  %v2506 = vpack.c.b16 %v1674, %v1658
  %v2507 = vpack.c.b16 %v1675, %v1659
  %v2508 = vpack.c.b16 %v1676, %v1660
  %v2509 = vpack.c.b16 %v1677, %v1661
  %v2510 = vpack.c.b16 %v1678, %v1662
  %v2511 = vpack.c.b16 %v1679, %v1663
  %v2512 = vpack.c.b16 %v1680, %v1664
  %v2513 = vpack.c.b16 %v1681, %v1665
  %v2514 = vpack.c.b16 %v1682, %v1666
  %v2515 = vpack.c.b16 %v1683, %v1667
  %v2516 = vpack.c.b16 %v1684, %v1668
  %v2517 = vpack.c.b16 %v1685, %v1669
  %v2518 = vpack.c.b16 %v1702, %v1686
  %v2519 = vpack.c.b16 %v1703, %v1687
  %v2520 = vpack.c.b16 %v1704, %v1688
  %v2521 = vpack.c.b16 %v1705, %v1689
  %v2522 = vpack.c.b16 %v1706, %v1690
  %v2523 = vpack.c.b16 %v1707, %v1691
  %v2524 = vpack.c.b16 %v1708, %v1692
  %v2525 = vpack.c.b16 %v1709, %v1693
  %v2526 = vpack.c.b16 %v1710, %v1694
  %v2527 = vpack.c.b16 %v1711, %v1695
  %v2528 = vpack.c.b16 %v1712, %v1696
  %v2529 = vpack.c.b16 %v1713, %v1697
  %v2530 = vpack.c.b16 %v1714, %v1698
  %v2531 = vpack.c.b16 %v1715, %v1699
  %v2532 = vpack.c.b16 %v1716, %v1700
  %v2533 = vpack.c.b16 %v1717, %v1701
  %v2534 = vpack.c.b16 %v1734, %v1718
  %v2535 = vpack.c.b16 %v1735, %v1719
  %v2536 = vpack.c.b16 %v1736, %v1720
  %v2537 = vpack.c.b16 %v1737, %v1721
  %v2538 = vpack.c.b16 %v1738, %v1722
  %v2539 = vpack.c.b16 %v1739, %v1723
  %v2540 = vpack.c.b16 %v1740, %v1724
  %v2541 = vpack.c.b16 %v1741, %v1725
  %v2542 = vpack.c.b16 %v1742, %v1726
  %v2543 = vpack.c.b16 %v1743, %v1727
  %v2544 = vpack.c.b16 %v1744, %v1728
  %v2545 = vpack.c.b16 %v1745, %v1729
  %v2546 = vpack.c.b16 %v1746, %v1730
  %v2547 = vpack.c.b16 %v1747, %v1731
  %v2548 = vpack.c.b16 %v1748, %v1732
  %v2549 = vpack.c.b16 %v1749, %v1733
  %v2550 = vpack.c.b16 %v1766, %v1750
  %v2551 = vpack.c.b16 %v1767, %v1751
  %v2552 = vpack.c.b16 %v1768, %v1752
  %v2553 = vpack.c.b16 %v1769, %v1753
  %v2554 = vpack.c.b16 %v1770, %v1754
  %v2555 = vpack.c.b16 %v1771, %v1755
  %v2556 = vpack.c.b16 %v1772, %v1756
  %v2557 = vpack.c.b16 %v1773, %v1757
  %v2558 = vpack.c.b16 %v1774, %v1758
  %v2559 = vpack.c.b16 %v1775, %v1759
  %v2560 = vpack.c.b16 %v1776, %v1760
  %v2561 = vpack.c.b16 %v1777, %v1761
  %v2562 = vpack.c.b16 %v1778, %v1762
  %v2563 = vpack.c.b16 %v1779, %v1763
  %v2564 = vpack.c.b16 %v1780, %v1764
  %v2565 = vpack.c.b16 %v1781, %v1765
  %v2566 = vpack.c.b16 %v1798, %v1782
  %v2567 = vpack.c.b16 %v1799, %v1783
  %v2568 = vpack.c.b16 %v1800, %v1784
  %v2569 = vpack.c.b16 %v1801, %v1785
  %v2570 = vpack.c.b16 %v1802, %v1786
  %v2571 = vpack.c.b16 %v1803, %v1787
  %v2572 = vpack.c.b16 %v1804, %v1788
  %v2573 = vpack.c.b16 %v1805, %v1789
  %v2574 = vpack.c.b16 %v1806, %v1790
  %v2575 = vpack.c.b16 %v1807, %v1791
  %v2576 = vpack.c.b16 %v1808, %v1792
  %v2577 = vpack.c.b16 %v1809, %v1793
  %v2578 = vpack.c.b16 %v1810, %v1794
  %v2579 = vpack.c.b16 %v1811, %v1795
  %v2580 = vpack.c.b16 %v1812, %v1796
  %v2581 = vpack.c.b16 %v1813, %v1797
  %v2582 = vpack.c.b16 %v1830, %v1814
  %v2583 = vpack.c.b16 %v1831, %v1815
  %v2584 = vpack.c.b16 %v1832, %v1816
  %v2585 = vpack.c.b16 %v1833, %v1817
  %v2586 = vpack.c.b16 %v1834, %v1818
  %v2587 = vpack.c.b16 %v1835, %v1819
  %v2588 = vpack.c.b16 %v1836, %v1820
  %v2589 = vpack.c.b16 %v1837, %v1821
  %v2590 = vpack.c.b16 %v1838, %v1822
  %v2591 = vpack.c.b16 %v1839, %v1823
  %v2592 = vpack.c.b16 %v1840, %v1824
  %v2593 = vpack.c.b16 %v1841, %v1825
  %v2594 = vpack.c.b16 %v1842, %v1826
  %v2595 = vpack.c.b16 %v1843, %v1827
  %v2596 = vpack.c.b16 %v1844, %v1828
  %v2597 = vpack.c.b16 %v1845, %v1829
  %v2598 = vpack.c.b16 %v1862, %v1846
  %v2599 = vpack.c.b16 %v1863, %v1847
  %v2600 = vpack.c.b16 %v1864, %v1848
  %v2601 = vpack.c.b16 %v1865, %v1849
  %v2602 = vpack.c.b16 %v1866, %v1850
  %v2603 = vpack.c.b16 %v1867, %v1851
  %v2604 = vpack.c.b16 %v1868, %v1852
  %v2605 = vpack.c.b16 %v1869, %v1853
  %v2606 = vpack.c.b16 %v1870, %v1854
  %v2607 = vpack.c.b16 %v1871, %v1855
  %v2608 = vpack.c.b16 %v1872, %v1856
  %v2609 = vpack.c.b16 %v1873, %v1857
  %v2610 = vpack.c.b16 %v1874, %v1858
  %v2611 = vpack.c.b16 %v1875, %v1859
  %v2612 = vpack.c.b16 %v1876, %v1860
  %v2613 = vpack.c.b16 %v1877, %v1861
  %v2614 = vpack.c.b16 %v1894, %v1878
  %v2615 = vpack.c.b16 %v1895, %v1879
  %v2616 = vpack.c.b16 %v1896, %v1880
  %v2617 = vpack.c.b16 %v1897, %v1881
  %v2618 = vpack.c.b16 %v1898, %v1882
  %v2619 = vpack.c.b16 %v1899, %v1883
  %v2620 = vpack.c.b16 %v1900, %v1884
  %v2621 = vpack.c.b16 %v1901, %v1885
  %v2622 = vpack.c.b16 %v1902, %v1886
  %v2623 = vpack.c.b16 %v1903, %v1887
  %v2624 = vpack.c.b16 %v1904, %v1888
  %v2625 = vpack.c.b16 %v1905, %v1889
  %v2626 = vpack.c.b16 %v1906, %v1890
  %v2627 = vpack.c.b16 %v1907, %v1891
  %v2628 = vpack.c.b16 %v1908, %v1892
  %v2629 = vpack.c.b16 %v1909, %v1893
  %v2630 = vpack.c.b16 %v1926, %v1910
  %v2631 = vpack.c.b16 %v1927, %v1911
  %v2632 = vpack.c.b16 %v1928, %v1912
  %v2633 = vpack.c.b16 %v1929, %v1913
  %v2634 = vpack.c.b16 %v1930, %v1914
  %v2635 = vpack.c.b16 %v1931, %v1915
  %v2636 = vpack.c.b16 %v1932, %v1916
  %v2637 = vpack.c.b16 %v1933, %v1917
  %v2638 = vpack.c.b16 %v1934, %v1918
  %v2639 = vpack.c.b16 %v1935, %v1919
  %v2640 = vpack.c.b16 %v1936, %v1920
  %v2641 = vpack.c.b16 %v1937, %v1921
  %v2642 = vpack.c.b16 %v1938, %v1922
  %v2643 = vpack.c.b16 %v1939, %v1923
  %v2644 = vpack.c.b16 %v1940, %v1924
  %v2645 = vpack.c.b16 %v1941, %v1925
  %v2646 = vpack.c.b16 %v1958, %v1942
  %v2647 = vpack.c.b16 %v1959, %v1943
  %v2648 = vpack.c.b16 %v1960, %v1944
  %v2649 = vpack.c.b16 %v1961, %v1945
  %v2650 = vpack.c.b16 %v1962, %v1946
  %v2651 = vpack.c.b16 %v1963, %v1947
  %v2652 = vpack.c.b16 %v1964, %v1948
  %v2653 = vpack.c.b16 %v1965, %v1949
  %v2654 = vpack.c.b16 %v1966, %v1950
  %v2655 = vpack.c.b16 %v1967, %v1951
  %v2656 = vpack.c.b16 %v1968, %v1952
  %v2657 = vpack.c.b16 %v1969, %v1953
  %v2658 = vpack.c.b16 %v1970, %v1954
  %v2659 = vpack.c.b16 %v1971, %v1955
  %v2660 = vpack.c.b16 %v1972, %v1956
  %v2661 = vpack.c.b16 %v1973, %v1957
  %v2662 = vpack.c.b16 %v1990, %v1974
  %v2663 = vpack.c.b16 %v1991, %v1975
  %v2664 = vpack.c.b16 %v1992, %v1976
  %v2665 = vpack.c.b16 %v1993, %v1977
  %v2666 = vpack.c.b16 %v1994, %v1978
  %v2667 = vpack.c.b16 %v1995, %v1979
  %v2668 = vpack.c.b16 %v1996, %v1980
  %v2669 = vpack.c.b16 %v1997, %v1981
  %v2670 = vpack.c.b16 %v1998, %v1982
  %v2671 = vpack.c.b16 %v1999, %v1983
  %v2672 = vpack.c.b16 %v2000, %v1984
  %v2673 = vpack.c.b16 %v2001, %v1985
  %v2674 = vpack.c.b16 %v2002, %v1986
  %v2675 = vpack.c.b16 %v2003, %v1987
  %v2676 = vpack.c.b16 %v2004, %v1988
  %v2677 = vpack.c.b16 %v2005, %v1989
  %v2678 = vpack.c.b16 %v2022, %v2006
  %v2679 = vpack.c.b16 %v2023, %v2007
  %v2680 = vpack.c.b16 %v2024, %v2008
  %v2681 = vpack.c.b16 %v2025, %v2009
  %v2682 = vpack.c.b16 %v2026, %v2010
  %v2683 = vpack.c.b16 %v2027, %v2011
  %v2684 = vpack.c.b16 %v2028, %v2012
  %v2685 = vpack.c.b16 %v2029, %v2013
  %v2686 = vpack.c.b16 %v2030, %v2014
  %v2687 = vpack.c.b16 %v2031, %v2015
  %v2688 = vpack.c.b16 %v2032, %v2016
  %v2689 = vpack.c.b16 %v2033, %v2017
  %v2690 = vpack.c.b16 %v2034, %v2018
  %v2691 = vpack.c.b16 %v2035, %v2019
  %v2692 = vpack.c.b16 %v2036, %v2020
  %v2693 = vpack.c.b16 %v2037, %v2021
  %v2694 = vpack.c.b16 %v2054, %v2038
  %v2695 = vpack.c.b16 %v2055, %v2039
  %v2696 = vpack.c.b16 %v2056, %v2040
  %v2697 = vpack.c.b16 %v2057, %v2041
  %v2698 = vpack.c.b16 %v2058, %v2042
  %v2699 = vpack.c.b16 %v2059, %v2043
  %v2700 = vpack.c.b16 %v2060, %v2044
  %v2701 = vpack.c.b16 %v2061, %v2045
  %v2702 = vpack.c.b16 %v2062, %v2046
  %v2703 = vpack.c.b16 %v2063, %v2047
  %v2704 = vpack.c.b16 %v2064, %v2048
  %v2705 = vpack.c.b16 %v2065, %v2049
  %v2706 = vpack.c.b16 %v2066, %v2050
  %v2707 = vpack.c.b16 %v2067, %v2051
  %v2708 = vpack.c.b16 %v2068, %v2052
  %v2709 = vpack.c.b16 %v2069, %v2053
  %v2710 = vpack.c.b16 %v2086, %v2070
  %v2711 = vpack.c.b16 %v2087, %v2071
  %v2712 = vpack.c.b16 %v2088, %v2072
  %v2713 = vpack.c.b16 %v2089, %v2073
  %v2714 = vpack.c.b16 %v2090, %v2074
  %v2715 = vpack.c.b16 %v2091, %v2075
  %v2716 = vpack.c.b16 %v2092, %v2076
  %v2717 = vpack.c.b16 %v2093, %v2077
  %v2718 = vpack.c.b16 %v2094, %v2078
  %v2719 = vpack.c.b16 %v2095, %v2079
  %v2720 = vpack.c.b16 %v2096, %v2080
  %v2721 = vpack.c.b16 %v2097, %v2081
  %v2722 = vpack.c.b16 %v2098, %v2082
  %v2723 = vpack.c.b16 %v2099, %v2083
  %v2724 = vpack.c.b16 %v2100, %v2084
  %v2725 = vpack.c.b16 %v2101, %v2085
  %v2726 = vpack.c.b16 %v2118, %v2102
  %v2727 = vpack.c.b16 %v2119, %v2103
  %v2728 = vpack.c.b16 %v2120, %v2104
  %v2729 = vpack.c.b16 %v2121, %v2105
  %v2730 = vpack.c.b16 %v2122, %v2106
  %v2731 = vpack.c.b16 %v2123, %v2107
  %v2732 = vpack.c.b16 %v2124, %v2108
  %v2733 = vpack.c.b16 %v2125, %v2109
  %v2734 = vpack.c.b16 %v2126, %v2110
  %v2735 = vpack.c.b16 %v2127, %v2111
  %v2736 = vpack.c.b16 %v2128, %v2112
  %v2737 = vpack.c.b16 %v2129, %v2113
  %v2738 = vpack.c.b16 %v2130, %v2114
  %v2739 = vpack.c.b16 %v2131, %v2115
  %v2740 = vpack.c.b16 %v2132, %v2116
  %v2741 = vpack.c.b16 %v2133, %v2117
  %v2742 = vpack.c.b16 %v2150, %v2134
  %v2743 = vpack.c.b16 %v2151, %v2135
  %v2744 = vpack.c.b16 %v2152, %v2136
  %v2745 = vpack.c.b16 %v2153, %v2137
  %v2746 = vpack.c.b16 %v2154, %v2138
  %v2747 = vpack.c.b16 %v2155, %v2139
  %v2748 = vpack.c.b16 %v2156, %v2140
  %v2749 = vpack.c.b16 %v2157, %v2141
  %v2750 = vpack.c.b16 %v2158, %v2142
  %v2751 = vpack.c.b16 %v2159, %v2143
  %v2752 = vpack.c.b16 %v2160, %v2144
  %v2753 = vpack.c.b16 %v2161, %v2145
  %v2754 = vpack.c.b16 %v2162, %v2146
  %v2755 = vpack.c.b16 %v2163, %v2147
  %v2756 = vpack.c.b16 %v2164, %v2148
  %v2757 = vpack.c.b16 %v2165, %v2149
  %v2758 = vpack.c.b16 %v2182, %v2166
  %v2759 = vpack.c.b16 %v2183, %v2167
  %v2760 = vpack.c.b16 %v2184, %v2168
  %v2761 = vpack.c.b16 %v2185, %v2169
  %v2762 = vpack.c.b16 %v2186, %v2170
  %v2763 = vpack.c.b16 %v2187, %v2171
  %v2764 = vpack.c.b16 %v2188, %v2172
  %v2765 = vpack.c.b16 %v2189, %v2173
  %v2766 = vpack.c.b16 %v2190, %v2174
  %v2767 = vpack.c.b16 %v2191, %v2175
  %v2768 = vpack.c.b16 %v2192, %v2176
  %v2769 = vpack.c.b16 %v2193, %v2177
  %v2770 = vpack.c.b16 %v2194, %v2178
  %v2771 = vpack.c.b16 %v2195, %v2179
  %v2772 = vpack.c.b16 %v2196, %v2180
  %v2773 = vpack.c.b16 %v2197, %v2181
  %v2774 = vpack.c.b16 %v2214, %v2198
  %v2775 = vpack.c.b16 %v2215, %v2199
  %v2776 = vpack.c.b16 %v2216, %v2200
  %v2777 = vpack.c.b16 %v2217, %v2201
  %v2778 = vpack.c.b16 %v2218, %v2202
  %v2779 = vpack.c.b16 %v2219, %v2203
  %v2780 = vpack.c.b16 %v2220, %v2204
  %v2781 = vpack.c.b16 %v2221, %v2205
  %v2782 = vpack.c.b16 %v2222, %v2206
  %v2783 = vpack.c.b16 %v2223, %v2207
  %v2784 = vpack.c.b16 %v2224, %v2208
  %v2785 = vpack.c.b16 %v2225, %v2209
  %v2786 = vpack.c.b16 %v2226, %v2210
  %v2787 = vpack.c.b16 %v2227, %v2211
  %v2788 = vpack.c.b16 %v2228, %v2212
  %v2789 = vpack.c.b16 %v2229, %v2213
  %v2790 = vpack.c.b16 %v2246, %v2230
  %v2791 = vpack.c.b16 %v2247, %v2231
  %v2792 = vpack.c.b16 %v2248, %v2232
  %v2793 = vpack.c.b16 %v2249, %v2233
  %v2794 = vpack.c.b16 %v2250, %v2234
  %v2795 = vpack.c.b16 %v2251, %v2235
  %v2796 = vpack.c.b16 %v2252, %v2236
  %v2797 = vpack.c.b16 %v2253, %v2237
  %v2798 = vpack.c.b16 %v2254, %v2238
  %v2799 = vpack.c.b16 %v2255, %v2239
  %v2800 = vpack.c.b16 %v2256, %v2240
  %v2801 = vpack.c.b16 %v2257, %v2241
  %v2802 = vpack.c.b16 %v2258, %v2242
  %v2803 = vpack.c.b16 %v2259, %v2243
  %v2804 = vpack.c.b16 %v2260, %v2244
  %v2805 = vpack.c.b16 %v2261, %v2245
  %v2806 = vpack.c.b16 %v2278, %v2262
  %v2807 = vpack.c.b16 %v2279, %v2263
  %v2808 = vpack.c.b16 %v2280, %v2264
  %v2809 = vpack.c.b16 %v2281, %v2265
  %v2810 = vpack.c.b16 %v2282, %v2266
  %v2811 = vpack.c.b16 %v2283, %v2267
  %v2812 = vpack.c.b16 %v2284, %v2268
  %v2813 = vpack.c.b16 %v2285, %v2269
  %v2814 = vpack.c.b16 %v2286, %v2270
  %v2815 = vpack.c.b16 %v2287, %v2271
  %v2816 = vpack.c.b16 %v2288, %v2272
  %v2817 = vpack.c.b16 %v2289, %v2273
  %v2818 = vpack.c.b16 %v2290, %v2274
  %v2819 = vpack.c.b16 %v2291, %v2275
  %v2820 = vpack.c.b16 %v2292, %v2276
  %v2821 = vpack.c.b16 %v2293, %v2277
  %v2822 = vpack.c.b16 %v2310, %v2294
  %v2823 = vpack.c.b16 %v2311, %v2295
  %v2824 = vpack.c.b16 %v2312, %v2296
  %v2825 = vpack.c.b16 %v2313, %v2297
  %v2826 = vpack.c.b16 %v2314, %v2298
  %v2827 = vpack.c.b16 %v2315, %v2299
  %v2828 = vpack.c.b16 %v2316, %v2300
  %v2829 = vpack.c.b16 %v2317, %v2301
  %v2830 = vpack.c.b16 %v2318, %v2302
  %v2831 = vpack.c.b16 %v2319, %v2303
  %v2832 = vpack.c.b16 %v2320, %v2304
  %v2833 = vpack.c.b16 %v2321, %v2305
  %v2834 = vpack.c.b16 %v2322, %v2306
  %v2835 = vpack.c.b16 %v2323, %v2307
  %v2836 = vpack.c.b16 %v2324, %v2308
  %v2837 = vpack.c.b16 %v2325, %v2309
  %v3606 = vunpack.c.l.b16 %v527
  %v3607 = vunpack.c.l.b16 %v528
  %v3608 = vunpack.c.l.b16 %v529
  %v3609 = vunpack.c.l.b16 %v530
  %v3610 = vunpack.c.l.b16 %v531
  %v3611 = vunpack.c.l.b16 %v532
  %v3612 = vunpack.c.l.b16 %v533
  %v3613 = vunpack.c.l.b16 %v534
  %v3614 = vunpack.c.l.b16 %v535
  %v3615 = vunpack.c.l.b16 %v536
  %v3616 = vunpack.c.l.b16 %v537
  %v3617 = vunpack.c.l.b16 %v538
  %v3618 = vunpack.c.l.b16 %v539
  %v3619 = vunpack.c.l.b16 %v540
  %v3620 = vunpack.c.l.b16 %v541
  %v3621 = vunpack.c.l.b16 %v542
  %v3622 = vunpack.c.l.b16 %v543
  %v3623 = vunpack.c.l.b16 %v544
  %v3624 = vunpack.c.l.b16 %v545
  %v3625 = vunpack.c.l.b16 %v546
  %v3626 = vunpack.c.l.b16 %v547
  %v3627 = vunpack.c.l.b16 %v548
  %v3628 = vunpack.c.l.b16 %v549
  %v3629 = vunpack.c.l.b16 %v550
  %v3630 = vunpack.c.l.b16 %v551
  %v3631 = vunpack.c.l.b16 %v552
  %v3632 = vunpack.c.l.b16 %v553
  %v3633 = vunpack.c.l.b16 %v554
  %v3634 = vunpack.c.l.b16 %v555
  %v3635 = vunpack.c.l.b16 %v556
  %v3636 = vunpack.c.l.b16 %v557
  %v3637 = vunpack.c.l.b16 %v558
  %v3638 = vunpack.c.l.b16 %v559
  %v3639 = vunpack.c.l.b16 %v560
  %v3640 = vunpack.c.l.b16 %v561
  %v3641 = vunpack.c.l.b16 %v562
  %v3642 = vunpack.c.l.b16 %v563
  %v3643 = vunpack.c.l.b16 %v564
  %v3644 = vunpack.c.l.b16 %v565
  %v3645 = vunpack.c.l.b16 %v566
  %v3646 = vunpack.c.l.b16 %v567
  %v3647 = vunpack.c.l.b16 %v568
  %v3648 = vunpack.c.l.b16 %v569
  %v3649 = vunpack.c.l.b16 %v570
  %v3650 = vunpack.c.l.b16 %v571
  %v3651 = vunpack.c.l.b16 %v572
  %v3652 = vunpack.c.l.b16 %v573
  %v3653 = vunpack.c.l.b16 %v574
  %v3654 = vunpack.c.l.b16 %v575
  %v3655 = vunpack.c.l.b16 %v576
  %v3656 = vunpack.c.l.b16 %v577
  %v3657 = vunpack.c.l.b16 %v578
  %v3658 = vunpack.c.l.b16 %v579
  %v3659 = vunpack.c.l.b16 %v580
  %v3660 = vunpack.c.l.b16 %v581
  %v3661 = vunpack.c.l.b16 %v582
  %v3662 = vunpack.c.l.b16 %v583
  %v3663 = vunpack.c.l.b16 %v584
  %v3664 = vunpack.c.l.b16 %v585
  %v3665 = vunpack.c.l.b16 %v586
  %v3666 = vunpack.c.l.b16 %v587
  %v3667 = vunpack.c.l.b16 %v588
  %v3668 = vunpack.c.l.b16 %v589
  %v3669 = vunpack.c.l.b16 %v590
  %v3670 = vunpack.c.l.b16 %v591
  %v3671 = vunpack.c.l.b16 %v592
  %v3672 = vunpack.c.l.b16 %v593
  %v3673 = vunpack.c.l.b16 %v594
  %v3674 = vunpack.c.l.b16 %v595
  %v3675 = vunpack.c.l.b16 %v596
  %v3676 = vunpack.c.l.b16 %v597
  %v3677 = vunpack.c.l.b16 %v598
  %v3678 = vunpack.c.l.b16 %v599
  %v3679 = vunpack.c.l.b16 %v600
  %v3680 = vunpack.c.l.b16 %v601
  %v3681 = vunpack.c.l.b16 %v602
  %v3682 = vunpack.c.l.b16 %v603
  %v3683 = vunpack.c.l.b16 %v604
  %v3684 = vunpack.c.l.b16 %v605
  %v3685 = vunpack.c.l.b16 %v606
  %v3686 = vunpack.c.l.b16 %v607
  %v3687 = vunpack.c.l.b16 %v608
  %v3688 = vunpack.c.l.b16 %v609
  %v3689 = vunpack.c.l.b16 %v610
  %v3690 = vunpack.c.l.b16 %v611
  %v3691 = vunpack.c.l.b16 %v612
  %v3692 = vunpack.c.l.b16 %v613
  %v3693 = vunpack.c.l.b16 %v614
  %v3694 = vunpack.c.l.b16 %v615
  %v3695 = vunpack.c.l.b16 %v616
  %v3696 = vunpack.c.l.b16 %v617
  %v3697 = vunpack.c.l.b16 %v618
  %v3698 = vunpack.c.l.b16 %v619
  %v3699 = vunpack.c.l.b16 %v620
  %v3700 = vunpack.c.l.b16 %v621
  %v3701 = vunpack.c.l.b16 %v622
  %v3702 = vunpack.c.l.b16 %v623
  %v3703 = vunpack.c.l.b16 %v624
  %v3704 = vunpack.c.l.b16 %v625
  %v3705 = vunpack.c.l.b16 %v626
  %v3706 = vunpack.c.l.b16 %v627
  %v3707 = vunpack.c.l.b16 %v628
  %v3708 = vunpack.c.l.b16 %v629
  %v3709 = vunpack.c.l.b16 %v630
  %v3710 = vunpack.c.l.b16 %v631
  %v3711 = vunpack.c.l.b16 %v632
  %v3712 = vunpack.c.l.b16 %v633
  %v3713 = vunpack.c.l.b16 %v634
  %v3714 = vunpack.c.l.b16 %v635
  %v3715 = vunpack.c.l.b16 %v636
  %v3716 = vunpack.c.l.b16 %v637
  %v3717 = vunpack.c.l.b16 %v638
  %v3718 = vunpack.c.l.b16 %v639
  %v3719 = vunpack.c.l.b16 %v640
  %v3720 = vunpack.c.l.b16 %v641
  %v3721 = vunpack.c.l.b16 %v642
  %v3722 = vunpack.c.l.b16 %v643
  %v3723 = vunpack.c.l.b16 %v644
  %v3724 = vunpack.c.l.b16 %v645
  %v3725 = vunpack.c.l.b16 %v646
  %v3726 = vunpack.c.l.b16 %v647
  %v3727 = vunpack.c.l.b16 %v648
  %v3728 = vunpack.c.l.b16 %v649
  %v3729 = vunpack.c.l.b16 %v650
  %v3730 = vunpack.c.l.b16 %v651
  %v3731 = vunpack.c.l.b16 %v652
  %v3732 = vunpack.c.l.b16 %v653
  %v3733 = vunpack.c.l.b16 %v654
  %v3734 = vunpack.c.l.b16 %v655
  %v3735 = vunpack.c.l.b16 %v656
  %v3736 = vunpack.c.l.b16 %v657
  %v3737 = vunpack.c.l.b16 %v658
  %v3738 = vunpack.c.l.b16 %v659
  %v3739 = vunpack.c.l.b16 %v660
  %v3740 = vunpack.c.l.b16 %v661
  %v3741 = vunpack.c.l.b16 %v662
  %v3742 = vunpack.c.l.b16 %v663
  %v3743 = vunpack.c.l.b16 %v664
  %v3744 = vunpack.c.l.b16 %v665
  %v3745 = vunpack.c.l.b16 %v666
  %v3746 = vunpack.c.l.b16 %v667
  %v3747 = vunpack.c.l.b16 %v668
  %v3748 = vunpack.c.l.b16 %v669
  %v3749 = vunpack.c.l.b16 %v670
  %v3750 = vunpack.c.l.b16 %v671
  %v3751 = vunpack.c.l.b16 %v672
  %v3752 = vunpack.c.l.b16 %v673
  %v3753 = vunpack.c.l.b16 %v674
  %v3754 = vunpack.c.l.b16 %v675
  %v3755 = vunpack.c.l.b16 %v676
  %v3756 = vunpack.c.l.b16 %v677
  %v3757 = vunpack.c.l.b16 %v678
  %v3758 = vunpack.c.l.b16 %v679
  %v3759 = vunpack.c.l.b16 %v680
  %v3760 = vunpack.c.l.b16 %v681
  %v3761 = vunpack.c.l.b16 %v682
  %v3762 = vunpack.c.l.b16 %v683
  %v3763 = vunpack.c.l.b16 %v684
  %v3764 = vunpack.c.l.b16 %v685
  %v3765 = vunpack.c.l.b16 %v686
  %v3766 = vunpack.c.l.b16 %v687
  %v3767 = vunpack.c.l.b16 %v688
  %v3768 = vunpack.c.l.b16 %v689
  %v3769 = vunpack.c.l.b16 %v690
  %v3770 = vunpack.c.l.b16 %v691
  %v3771 = vunpack.c.l.b16 %v692
  %v3772 = vunpack.c.l.b16 %v693
  %v3773 = vunpack.c.l.b16 %v694
  %v3774 = vunpack.c.l.b16 %v695
  %v3775 = vunpack.c.l.b16 %v696
  %v3776 = vunpack.c.l.b16 %v697
  %v3777 = vunpack.c.l.b16 %v698
  %v3778 = vunpack.c.l.b16 %v699
  %v3779 = vunpack.c.l.b16 %v700
  %v3780 = vunpack.c.l.b16 %v701
  %v3781 = vunpack.c.l.b16 %v702
  %v3782 = vunpack.c.l.b16 %v703
  %v3783 = vunpack.c.l.b16 %v704
  %v3784 = vunpack.c.l.b16 %v705
  %v3785 = vunpack.c.l.b16 %v706
  %v3786 = vunpack.c.l.b16 %v707
  %v3787 = vunpack.c.l.b16 %v708
  %v3788 = vunpack.c.l.b16 %v709
  %v3789 = vunpack.c.l.b16 %v710
  %v3790 = vunpack.c.l.b16 %v711
  %v3791 = vunpack.c.l.b16 %v712
  %v3792 = vunpack.c.l.b16 %v713
  %v3793 = vunpack.c.l.b16 %v714
  %v3794 = vunpack.c.l.b16 %v715
  %v3795 = vunpack.c.l.b16 %v716
  %v3796 = vunpack.c.l.b16 %v717
  %v3797 = vunpack.c.l.b16 %v718
  %v3798 = vunpack.c.l.b16 %v719
  %v3799 = vunpack.c.l.b16 %v720
  %v3800 = vunpack.c.l.b16 %v721
  %v3801 = vunpack.c.l.b16 %v722
  %v3802 = vunpack.c.l.b16 %v723
  %v3803 = vunpack.c.l.b16 %v724
  %v3804 = vunpack.c.l.b16 %v725
  %v3805 = vunpack.c.l.b16 %v726
  %v3806 = vunpack.c.l.b16 %v727
  %v3807 = vunpack.c.l.b16 %v728
  %v3808 = vunpack.c.l.b16 %v729
  %v3809 = vunpack.c.l.b16 %v730
  %v3810 = vunpack.c.l.b16 %v731
  %v3811 = vunpack.c.l.b16 %v732
  %v3812 = vunpack.c.l.b16 %v733
  %v3813 = vunpack.c.l.b16 %v734
  %v3814 = vunpack.c.l.b16 %v735
  %v3815 = vunpack.c.l.b16 %v736
  %v3816 = vunpack.c.l.b16 %v737
  %v3817 = vunpack.c.l.b16 %v738
  %v3818 = vunpack.c.l.b16 %v739
  %v3819 = vunpack.c.l.b16 %v740
  %v3820 = vunpack.c.l.b16 %v741
  %v3821 = vunpack.c.l.b16 %v742
  %v3822 = vunpack.c.l.b16 %v743
  %v3823 = vunpack.c.l.b16 %v744
  %v3824 = vunpack.c.l.b16 %v745
  %v3825 = vunpack.c.l.b16 %v746
  %v3826 = vunpack.c.l.b16 %v747
  %v3827 = vunpack.c.l.b16 %v748
  %v3828 = vunpack.c.l.b16 %v749
  %v3829 = vunpack.c.l.b16 %v750
  %v3830 = vunpack.c.l.b16 %v751
  %v3831 = vunpack.c.l.b16 %v752
  %v3832 = vunpack.c.l.b16 %v753
  %v3833 = vunpack.c.l.b16 %v754
  %v3834 = vunpack.c.l.b16 %v755
  %v3835 = vunpack.c.l.b16 %v756
  %v3836 = vunpack.c.l.b16 %v757
  %v3837 = vunpack.c.l.b16 %v758
  %v3838 = vunpack.c.l.b16 %v759
  %v3839 = vunpack.c.l.b16 %v760
  %v3840 = vunpack.c.l.b16 %v761
  %v3841 = vunpack.c.l.b16 %v762
  %v3842 = vunpack.c.l.b16 %v763
  %v3843 = vunpack.c.l.b16 %v764
  %v3844 = vunpack.c.l.b16 %v765
  %v3845 = vunpack.c.l.b16 %v766
  %v3846 = vunpack.c.l.b16 %v767
  %v3847 = vunpack.c.l.b16 %v768
  %v3848 = vunpack.c.l.b16 %v769
  %v3849 = vunpack.c.l.b16 %v770
  %v3850 = vunpack.c.l.b16 %v771
  %v3851 = vunpack.c.l.b16 %v772
  %v3852 = vunpack.c.l.b16 %v773
  %v3853 = vunpack.c.l.b16 %v774
  %v3854 = vunpack.c.l.b16 %v775
  %v3855 = vunpack.c.l.b16 %v776
  %v3856 = vunpack.c.l.b16 %v777
  %v3857 = vunpack.c.l.b16 %v778
  %v3858 = vunpack.c.l.b16 %v779
  %v3859 = vunpack.c.l.b16 %v780
  %v3860 = vunpack.c.l.b16 %v781
  %v3861 = vunpack.c.l.b16 %v782
  %v3862 = vpack.c.b16 %v3607, %v3606
  %v3863 = vpack.c.b16 %v3609, %v3608
  %v3864 = vpack.c.b16 %v3611, %v3610
  %v3865 = vpack.c.b16 %v3613, %v3612
  %v3866 = vpack.c.b16 %v3615, %v3614
  %v3867 = vpack.c.b16 %v3617, %v3616
  %v3868 = vpack.c.b16 %v3619, %v3618
  %v3869 = vpack.c.b16 %v3621, %v3620
  %v3870 = vpack.c.b16 %v3623, %v3622
  %v3871 = vpack.c.b16 %v3625, %v3624
  %v3872 = vpack.c.b16 %v3627, %v3626
  %v3873 = vpack.c.b16 %v3629, %v3628
  %v3874 = vpack.c.b16 %v3631, %v3630
  %v3875 = vpack.c.b16 %v3633, %v3632
  %v3876 = vpack.c.b16 %v3635, %v3634
  %v3877 = vpack.c.b16 %v3637, %v3636
  %v3878 = vpack.c.b16 %v3639, %v3638
  %v3879 = vpack.c.b16 %v3641, %v3640
  %v3880 = vpack.c.b16 %v3643, %v3642
  %v3881 = vpack.c.b16 %v3645, %v3644
  %v3882 = vpack.c.b16 %v3647, %v3646
  %v3883 = vpack.c.b16 %v3649, %v3648
  %v3884 = vpack.c.b16 %v3651, %v3650
  %v3885 = vpack.c.b16 %v3653, %v3652
  %v3886 = vpack.c.b16 %v3655, %v3654
  %v3887 = vpack.c.b16 %v3657, %v3656
  %v3888 = vpack.c.b16 %v3659, %v3658
  %v3889 = vpack.c.b16 %v3661, %v3660
  %v3890 = vpack.c.b16 %v3663, %v3662
  %v3891 = vpack.c.b16 %v3665, %v3664
  %v3892 = vpack.c.b16 %v3667, %v3666
  %v3893 = vpack.c.b16 %v3669, %v3668
  %v3894 = vpack.c.b16 %v3671, %v3670
  %v3895 = vpack.c.b16 %v3673, %v3672
  %v3896 = vpack.c.b16 %v3675, %v3674
  %v3897 = vpack.c.b16 %v3677, %v3676
  %v3898 = vpack.c.b16 %v3679, %v3678
  %v3899 = vpack.c.b16 %v3681, %v3680
  %v3900 = vpack.c.b16 %v3683, %v3682
  %v3901 = vpack.c.b16 %v3685, %v3684
  %v3902 = vpack.c.b16 %v3687, %v3686
  %v3903 = vpack.c.b16 %v3689, %v3688
  %v3904 = vpack.c.b16 %v3691, %v3690
  %v3905 = vpack.c.b16 %v3693, %v3692
  %v3906 = vpack.c.b16 %v3695, %v3694
  %v3907 = vpack.c.b16 %v3697, %v3696
  %v3908 = vpack.c.b16 %v3699, %v3698
  %v3909 = vpack.c.b16 %v3701, %v3700
  %v3910 = vpack.c.b16 %v3703, %v3702
  %v3911 = vpack.c.b16 %v3705, %v3704
  %v3912 = vpack.c.b16 %v3707, %v3706
  %v3913 = vpack.c.b16 %v3709, %v3708
  %v3914 = vpack.c.b16 %v3711, %v3710
  %v3915 = vpack.c.b16 %v3713, %v3712
  %v3916 = vpack.c.b16 %v3715, %v3714
  %v3917 = vpack.c.b16 %v3717, %v3716
  %v3918 = vpack.c.b16 %v3719, %v3718
  %v3919 = vpack.c.b16 %v3721, %v3720
  %v3920 = vpack.c.b16 %v3723, %v3722
  %v3921 = vpack.c.b16 %v3725, %v3724
  %v3922 = vpack.c.b16 %v3727, %v3726
  %v3923 = vpack.c.b16 %v3729, %v3728
  %v3924 = vpack.c.b16 %v3731, %v3730
  %v3925 = vpack.c.b16 %v3733, %v3732
  %v3926 = vpack.c.b16 %v3735, %v3734
  %v3927 = vpack.c.b16 %v3737, %v3736
  %v3928 = vpack.c.b16 %v3739, %v3738
  %v3929 = vpack.c.b16 %v3741, %v3740
  %v3930 = vpack.c.b16 %v3743, %v3742
  %v3931 = vpack.c.b16 %v3745, %v3744
  %v3932 = vpack.c.b16 %v3747, %v3746
  %v3933 = vpack.c.b16 %v3749, %v3748
  %v3934 = vpack.c.b16 %v3751, %v3750
  %v3935 = vpack.c.b16 %v3753, %v3752
  %v3936 = vpack.c.b16 %v3755, %v3754
  %v3937 = vpack.c.b16 %v3757, %v3756
  %v3938 = vpack.c.b16 %v3759, %v3758
  %v3939 = vpack.c.b16 %v3761, %v3760
  %v3940 = vpack.c.b16 %v3763, %v3762
  %v3941 = vpack.c.b16 %v3765, %v3764
  %v3942 = vpack.c.b16 %v3767, %v3766
  %v3943 = vpack.c.b16 %v3769, %v3768
  %v3944 = vpack.c.b16 %v3771, %v3770
  %v3945 = vpack.c.b16 %v3773, %v3772
  %v3946 = vpack.c.b16 %v3775, %v3774
  %v3947 = vpack.c.b16 %v3777, %v3776
  %v3948 = vpack.c.b16 %v3779, %v3778
  %v3949 = vpack.c.b16 %v3781, %v3780
  %v3950 = vpack.c.b16 %v3783, %v3782
  %v3951 = vpack.c.b16 %v3785, %v3784
  %v3952 = vpack.c.b16 %v3787, %v3786
  %v3953 = vpack.c.b16 %v3789, %v3788
  %v3954 = vpack.c.b16 %v3791, %v3790
  %v3955 = vpack.c.b16 %v3793, %v3792
  %v3956 = vpack.c.b16 %v3795, %v3794
  %v3957 = vpack.c.b16 %v3797, %v3796
  %v3958 = vpack.c.b16 %v3799, %v3798
  %v3959 = vpack.c.b16 %v3801, %v3800
  %v3960 = vpack.c.b16 %v3803, %v3802
  %v3961 = vpack.c.b16 %v3805, %v3804
  %v3962 = vpack.c.b16 %v3807, %v3806
  %v3963 = vpack.c.b16 %v3809, %v3808
  %v3964 = vpack.c.b16 %v3811, %v3810
  %v3965 = vpack.c.b16 %v3813, %v3812
  %v3966 = vpack.c.b16 %v3815, %v3814
  %v3967 = vpack.c.b16 %v3817, %v3816
  %v3968 = vpack.c.b16 %v3819, %v3818
  %v3969 = vpack.c.b16 %v3821, %v3820
  %v3970 = vpack.c.b16 %v3823, %v3822
  %v3971 = vpack.c.b16 %v3825, %v3824
  %v3972 = vpack.c.b16 %v3827, %v3826
  %v3973 = vpack.c.b16 %v3829, %v3828
  %v3974 = vpack.c.b16 %v3831, %v3830
  %v3975 = vpack.c.b16 %v3833, %v3832
  %v3976 = vpack.c.b16 %v3835, %v3834
  %v3977 = vpack.c.b16 %v3837, %v3836
  %v3978 = vpack.c.b16 %v3839, %v3838
  %v3979 = vpack.c.b16 %v3841, %v3840
  %v3980 = vpack.c.b16 %v3843, %v3842
  %v3981 = vpack.c.b16 %v3845, %v3844
  %v3982 = vpack.c.b16 %v3847, %v3846
  %v3983 = vpack.c.b16 %v3849, %v3848
  %v3984 = vpack.c.b16 %v3851, %v3850
  %v3985 = vpack.c.b16 %v3853, %v3852
  %v3986 = vpack.c.b16 %v3855, %v3854
  %v3987 = vpack.c.b16 %v3857, %v3856
  %v3988 = vpack.c.b16 %v3859, %v3858
  %v3989 = vpack.c.b16 %v3861, %v3860
  %4118 = vmatprep.subr.bf16.mxu0 0
  %4119 = vmatpush1.bf16.msra.mxu0 %v3869
  %4120 = vmatprep.subr.bf16.mxu0 0
  %4121 = vmatpush1.bf16.msra.mxu0 %v3868
  %4122 = vmatprep.subr.bf16.mxu0 0
  %4123 = vmatpush1.bf16.msra.mxu0 %v3867
  %4124 = vmatprep.subr.bf16.mxu0 0
  %4125 = vmatpush1.bf16.msra.mxu0 %v3866
  %4126 = vmatprep.subr.bf16.mxu0 0
  %4127 = vmatpush1.bf16.msra.mxu0 %v3865
  %4128 = vmatprep.subr.bf16.mxu0 0
  %4129 = vmatpush1.bf16.msra.mxu0 %v3864
  %4130 = vmatprep.subr.bf16.mxu0 0
  %4131 = vmatpush1.bf16.msra.mxu0 %v3863
  %4132 = vmatprep.subr.bf16.mxu0 0
  %4133 = vmatpush1.bf16.msra.mxu0 %v3862
  %4134 = vmatprep.subr.bf16.mxu0 0
  %4135 = vmatpush2.bf16.msra.mxu0 %v3877
  %4136 = vmatprep.subr.bf16.mxu0 0
  %4137 = vmatpush2.bf16.msra.mxu0 %v3876
  %4138 = vmatprep.subr.bf16.mxu0 0
  %4139 = vmatpush2.bf16.msra.mxu0 %v3875
  %4140 = vmatprep.subr.bf16.mxu0 0
  %4141 = vmatpush2.bf16.msra.mxu0 %v3874
  %4142 = vmatprep.subr.bf16.mxu0 0
  %4143 = vmatpush2.bf16.msra.mxu0 %v3873
  %4144 = vmatprep.subr.bf16.mxu0 0
  %4145 = vmatpush2.bf16.msra.mxu0 %v3872
  %4146 = vmatprep.subr.bf16.mxu0 0
  %4147 = vmatpush2.bf16.msra.mxu0 %v3871
  %4148 = vmatprep.subr.bf16.mxu0 0
  %4149 = vmatpush2.bf16.msra.mxu0 %v3870
  %4150 = vmatprep.mubr.bf16.mxu0 %v2327
  %4151 = vmatmul.mubr.bf16.gmra.mxu0 %v2326
  %v4152 = vpop.f32.mrf.mxu0
  %v4153 = vadd.f32 %v788, %v4152
  %v4154 = vpop.f32.mrf.mxu0
  %v4155 = vpop.f32.mrf.mxu0
  %v4156 = vadd.f32 %v788, %v4155
  %v4157 = vpop.f32.mrf.mxu0
  %4158 = vmatprep.mubr.bf16.mxu0 %v2343
  %4159 = vmatmul.mubr.bf16.gmra.mxu0 %v2342
  %v4160 = vpop.f32.mrf.mxu0
  %v4161 = vadd.f32 %v788, %v4160
  %v4162 = vpop.f32.mrf.mxu0
  %v4163 = vpop.f32.mrf.mxu0
  %v4164 = vadd.f32 %v788, %v4163
  %v4165 = vpop.f32.mrf.mxu0
  %4166 = vmatprep.mubr.bf16.mxu0 %v2359
  %4167 = vmatmul.mubr.bf16.gmra.mxu0 %v2358
  %v4168 = vpop.f32.mrf.mxu0
  %v4169 = vadd.f32 %v788, %v4168
  %v4170 = vpop.f32.mrf.mxu0
  %v4171 = vpop.f32.mrf.mxu0
  %v4172 = vadd.f32 %v788, %v4171
  %v4173 = vpop.f32.mrf.mxu0
  %4174 = vmatprep.mubr.bf16.mxu0 %v2375
  %4175 = vmatmul.mubr.bf16.gmra.mxu0 %v2374
  %v4176 = vpop.f32.mrf.mxu0
  %v4177 = vadd.f32 %v788, %v4176
  %v4178 = vpop.f32.mrf.mxu0
  %v4179 = vpop.f32.mrf.mxu0
  %v4180 = vadd.f32 %v788, %v4179
  %v4181 = vpop.f32.mrf.mxu0
  %4182 = vmatprep.mubr.bf16.mxu0 %v2391
  %4183 = vmatmul.mubr.bf16.gmra.mxu0 %v2390
  %v4184 = vpop.f32.mrf.mxu0
  %v4185 = vadd.f32 %v788, %v4184
  %v4186 = vpop.f32.mrf.mxu0
  %v4187 = vpop.f32.mrf.mxu0
  %v4188 = vadd.f32 %v788, %v4187
  %v4189 = vpop.f32.mrf.mxu0
  %4190 = vmatprep.mubr.bf16.mxu0 %v2407
  %4191 = vmatmul.mubr.bf16.gmra.mxu0 %v2406
  %v4192 = vpop.f32.mrf.mxu0
  %v4193 = vadd.f32 %v788, %v4192
  %v4194 = vpop.f32.mrf.mxu0
  %v4195 = vpop.f32.mrf.mxu0
  %v4196 = vadd.f32 %v788, %v4195
  %v4197 = vpop.f32.mrf.mxu0
  %4198 = vmatprep.mubr.bf16.mxu0 %v2423
  %4199 = vmatmul.mubr.bf16.gmra.mxu0 %v2422
  %v4200 = vpop.f32.mrf.mxu0
  %v4201 = vadd.f32 %v788, %v4200
  %v4202 = vpop.f32.mrf.mxu0
  %v4203 = vpop.f32.mrf.mxu0
  %v4204 = vadd.f32 %v788, %v4203
  %v4205 = vpop.f32.mrf.mxu0
  %4206 = vmatprep.mubr.bf16.mxu0 %v2439
  %4207 = vmatmul.mubr.bf16.gmra.mxu0 %v2438
  %v4208 = vpop.f32.mrf.mxu0
  %v4209 = vadd.f32 %v788, %v4208
  %v4210 = vpop.f32.mrf.mxu0
  %v4211 = vpop.f32.mrf.mxu0
  %v4212 = vadd.f32 %v788, %v4211
  %v4213 = vpop.f32.mrf.mxu0
  %4214 = vmatprep.mubr.bf16.mxu0 %v2455
  %4215 = vmatmul.mubr.bf16.gmra.mxu0 %v2454
  %v4216 = vpop.f32.mrf.mxu0
  %v4217 = vadd.f32 %v788, %v4216
  %v4218 = vpop.f32.mrf.mxu0
  %v4219 = vpop.f32.mrf.mxu0
  %v4220 = vadd.f32 %v788, %v4219
  %v4221 = vpop.f32.mrf.mxu0
  %4222 = vmatprep.mubr.bf16.mxu0 %v2471
  %4223 = vmatmul.mubr.bf16.gmra.mxu0 %v2470
  %v4224 = vpop.f32.mrf.mxu0
  %v4225 = vadd.f32 %v788, %v4224
  %v4226 = vpop.f32.mrf.mxu0
  %v4227 = vpop.f32.mrf.mxu0
  %v4228 = vadd.f32 %v788, %v4227
  %v4229 = vpop.f32.mrf.mxu0
  %4230 = vmatprep.mubr.bf16.mxu0 %v2487
  %4231 = vmatmul.mubr.bf16.gmra.mxu0 %v2486
  %v4232 = vpop.f32.mrf.mxu0
  %v4233 = vadd.f32 %v788, %v4232
  %v4234 = vpop.f32.mrf.mxu0
  %v4235 = vpop.f32.mrf.mxu0
  %v4236 = vadd.f32 %v788, %v4235
  %v4237 = vpop.f32.mrf.mxu0
  %4238 = vmatprep.mubr.bf16.mxu0 %v2503
  %4239 = vmatmul.mubr.bf16.gmra.mxu0 %v2502
  %v4240 = vpop.f32.mrf.mxu0
  %v4241 = vadd.f32 %v788, %v4240
  %v4242 = vpop.f32.mrf.mxu0
  %v4243 = vpop.f32.mrf.mxu0
  %v4244 = vadd.f32 %v788, %v4243
  %v4245 = vpop.f32.mrf.mxu0
  %4246 = vmatprep.mubr.bf16.mxu0 %v2519
  %4247 = vmatmul.mubr.bf16.gmra.mxu0 %v2518
  %v4248 = vpop.f32.mrf.mxu0
  %v4249 = vadd.f32 %v788, %v4248
  %v4250 = vpop.f32.mrf.mxu0
  %v4251 = vpop.f32.mrf.mxu0
  %v4252 = vadd.f32 %v788, %v4251
  %v4253 = vpop.f32.mrf.mxu0
  %4254 = vmatprep.mubr.bf16.mxu0 %v2535
  %4255 = vmatmul.mubr.bf16.gmra.mxu0 %v2534
  %v4256 = vpop.f32.mrf.mxu0
  %v4257 = vadd.f32 %v788, %v4256
  %v4258 = vpop.f32.mrf.mxu0
  %v4259 = vpop.f32.mrf.mxu0
  %v4260 = vadd.f32 %v788, %v4259
  %v4261 = vpop.f32.mrf.mxu0
  %4262 = vmatprep.mubr.bf16.mxu0 %v2551
  %4263 = vmatmul.mubr.bf16.gmra.mxu0 %v2550
  %v4264 = vpop.f32.mrf.mxu0
  %v4265 = vadd.f32 %v788, %v4264
  %v4266 = vpop.f32.mrf.mxu0
  %v4267 = vpop.f32.mrf.mxu0
  %v4268 = vadd.f32 %v788, %v4267
  %v4269 = vpop.f32.mrf.mxu0
  %4270 = vmatprep.mubr.bf16.mxu0 %v2567
  %4271 = vmatmul.mubr.bf16.gmra.mxu0 %v2566
  %v4272 = vpop.f32.mrf.mxu0
  %v4273 = vadd.f32 %v788, %v4272
  %v4274 = vpop.f32.mrf.mxu0
  %v4275 = vpop.f32.mrf.mxu0
  %v4276 = vadd.f32 %v788, %v4275
  %v4277 = vpop.f32.mrf.mxu0
  %4278 = vmatprep.mubr.bf16.mxu0 %v2583
  %4279 = vmatmul.mubr.bf16.gmra.mxu0 %v2582
  %v4280 = vpop.f32.mrf.mxu0
  %v4281 = vadd.f32 %v788, %v4280
  %v4282 = vpop.f32.mrf.mxu0
  %v4283 = vpop.f32.mrf.mxu0
  %v4284 = vadd.f32 %v788, %v4283
  %v4285 = vpop.f32.mrf.mxu0
  %4286 = vmatprep.mubr.bf16.mxu0 %v2599
  %4287 = vmatmul.mubr.bf16.gmra.mxu0 %v2598
  %v4288 = vpop.f32.mrf.mxu0
  %v4289 = vadd.f32 %v788, %v4288
  %v4290 = vpop.f32.mrf.mxu0
  %v4291 = vpop.f32.mrf.mxu0
  %v4292 = vadd.f32 %v788, %v4291
  %v4293 = vpop.f32.mrf.mxu0
  %4294 = vmatprep.mubr.bf16.mxu0 %v2615
  %4295 = vmatmul.mubr.bf16.gmra.mxu0 %v2614
  %v4296 = vpop.f32.mrf.mxu0
  %v4297 = vadd.f32 %v788, %v4296
  %v4298 = vpop.f32.mrf.mxu0
  %v4299 = vpop.f32.mrf.mxu0
  %v4300 = vadd.f32 %v788, %v4299
  %v4301 = vpop.f32.mrf.mxu0
  %4302 = vmatprep.mubr.bf16.mxu0 %v2631
  %4303 = vmatmul.mubr.bf16.gmra.mxu0 %v2630
  %v4304 = vpop.f32.mrf.mxu0
  %v4305 = vadd.f32 %v788, %v4304
  %v4306 = vpop.f32.mrf.mxu0
  %v4307 = vpop.f32.mrf.mxu0
  %v4308 = vadd.f32 %v788, %v4307
  %v4309 = vpop.f32.mrf.mxu0
  %4310 = vmatprep.mubr.bf16.mxu0 %v2647
  %4311 = vmatmul.mubr.bf16.gmra.mxu0 %v2646
  %v4312 = vpop.f32.mrf.mxu0
  %v4313 = vadd.f32 %v788, %v4312
  %v4314 = vpop.f32.mrf.mxu0
  %v4315 = vpop.f32.mrf.mxu0
  %v4316 = vadd.f32 %v788, %v4315
  %v4317 = vpop.f32.mrf.mxu0
  %4318 = vmatprep.mubr.bf16.mxu0 %v2663
  %4319 = vmatmul.mubr.bf16.gmra.mxu0 %v2662
  %v4320 = vpop.f32.mrf.mxu0
  %v4321 = vadd.f32 %v788, %v4320
  %v4322 = vpop.f32.mrf.mxu0
  %v4323 = vpop.f32.mrf.mxu0
  %v4324 = vadd.f32 %v788, %v4323
  %v4325 = vpop.f32.mrf.mxu0
  %4326 = vmatprep.mubr.bf16.mxu0 %v2679
  %4327 = vmatmul.mubr.bf16.gmra.mxu0 %v2678
  %v4328 = vpop.f32.mrf.mxu0
  %v4329 = vadd.f32 %v788, %v4328
  %v4330 = vpop.f32.mrf.mxu0
  %v4331 = vpop.f32.mrf.mxu0
  %v4332 = vadd.f32 %v788, %v4331
  %v4333 = vpop.f32.mrf.mxu0
  %4334 = vmatprep.mubr.bf16.mxu0 %v2695
  %4335 = vmatmul.mubr.bf16.gmra.mxu0 %v2694
  %v4336 = vpop.f32.mrf.mxu0
  %v4337 = vadd.f32 %v788, %v4336
  %v4338 = vpop.f32.mrf.mxu0
  %v4339 = vpop.f32.mrf.mxu0
  %v4340 = vadd.f32 %v788, %v4339
  %v4341 = vpop.f32.mrf.mxu0
  %4342 = vmatprep.mubr.bf16.mxu0 %v2711
  %4343 = vmatmul.mubr.bf16.gmra.mxu0 %v2710
  %v4344 = vpop.f32.mrf.mxu0
  %v4345 = vadd.f32 %v788, %v4344
  %v4346 = vpop.f32.mrf.mxu0
  %v4347 = vpop.f32.mrf.mxu0
  %v4348 = vadd.f32 %v788, %v4347
  %v4349 = vpop.f32.mrf.mxu0
  %4350 = vmatprep.mubr.bf16.mxu0 %v2727
  %4351 = vmatmul.mubr.bf16.gmra.mxu0 %v2726
  %v4352 = vpop.f32.mrf.mxu0
  %v4353 = vadd.f32 %v788, %v4352
  %v4354 = vpop.f32.mrf.mxu0
  %v4355 = vpop.f32.mrf.mxu0
  %v4356 = vadd.f32 %v788, %v4355
  %v4357 = vpop.f32.mrf.mxu0
  %4358 = vmatprep.mubr.bf16.mxu0 %v2743
  %4359 = vmatmul.mubr.bf16.gmra.mxu0 %v2742
  %v4360 = vpop.f32.mrf.mxu0
  %v4361 = vadd.f32 %v788, %v4360
  %v4362 = vpop.f32.mrf.mxu0
  %v4363 = vpop.f32.mrf.mxu0
  %v4364 = vadd.f32 %v788, %v4363
  %v4365 = vpop.f32.mrf.mxu0
  %4366 = vmatprep.mubr.bf16.mxu0 %v2759
  %4367 = vmatmul.mubr.bf16.gmra.mxu0 %v2758
  %v4368 = vpop.f32.mrf.mxu0
  %v4369 = vadd.f32 %v788, %v4368
  %v4370 = vpop.f32.mrf.mxu0
  %v4371 = vpop.f32.mrf.mxu0
  %v4372 = vadd.f32 %v788, %v4371
  %v4373 = vpop.f32.mrf.mxu0
  %4374 = vmatprep.mubr.bf16.mxu0 %v2775
  %4375 = vmatmul.mubr.bf16.gmra.mxu0 %v2774
  %v4376 = vpop.f32.mrf.mxu0
  %v4377 = vadd.f32 %v788, %v4376
  %v4378 = vpop.f32.mrf.mxu0
  %v4379 = vpop.f32.mrf.mxu0
  %v4380 = vadd.f32 %v788, %v4379
  %v4381 = vpop.f32.mrf.mxu0
  %4382 = vmatprep.mubr.bf16.mxu0 %v2791
  %4383 = vmatmul.mubr.bf16.gmra.mxu0 %v2790
  %v4384 = vpop.f32.mrf.mxu0
  %v4385 = vadd.f32 %v788, %v4384
  %v4386 = vpop.f32.mrf.mxu0
  %v4387 = vpop.f32.mrf.mxu0
  %v4388 = vadd.f32 %v788, %v4387
  %v4389 = vpop.f32.mrf.mxu0
  %4390 = vmatprep.mubr.bf16.mxu0 %v2807
  %4391 = vmatmul.mubr.bf16.gmra.mxu0 %v2806
  %v4392 = vpop.f32.mrf.mxu0
  %v4393 = vadd.f32 %v788, %v4392
  %v4394 = vpop.f32.mrf.mxu0
  %v4395 = vpop.f32.mrf.mxu0
  %v4396 = vadd.f32 %v788, %v4395
  %v4397 = vpop.f32.mrf.mxu0
  %4398 = vmatprep.mubr.bf16.mxu0 %v2823
  %4399 = vmatmul.mubr.bf16.gmra.mxu0 %v2822
  %v4400 = vpop.f32.mrf.mxu0
  %v4401 = vadd.f32 %v788, %v4400
  %v4402 = vpop.f32.mrf.mxu0
  %v4403 = vpop.f32.mrf.mxu0
  %v4404 = vadd.f32 %v788, %v4403
  %v4405 = vpop.f32.mrf.mxu0
  %4406 = vdwg.mxu0
  %4407 = vmatprep.subr.bf16.mxu0 0
  %4408 = vmatpush1.bf16.msra.mxu0 %v3885
  %4409 = vmatprep.subr.bf16.mxu0 0
  %4410 = vmatpush1.bf16.msra.mxu0 %v3884
  %4411 = vmatprep.subr.bf16.mxu0 0
  %4412 = vmatpush1.bf16.msra.mxu0 %v3883
  %4413 = vmatprep.subr.bf16.mxu0 0
  %4414 = vmatpush1.bf16.msra.mxu0 %v3882
  %4415 = vmatprep.subr.bf16.mxu0 0
  %4416 = vmatpush1.bf16.msra.mxu0 %v3881
  %4417 = vmatprep.subr.bf16.mxu0 0
  %4418 = vmatpush1.bf16.msra.mxu0 %v3880
  %4419 = vmatprep.subr.bf16.mxu0 0
  %4420 = vmatpush1.bf16.msra.mxu0 %v3879
  %4421 = vmatprep.subr.bf16.mxu0 0
  %4422 = vmatpush1.bf16.msra.mxu0 %v3878
  %4423 = vmatprep.subr.bf16.mxu0 0
  %4424 = vmatpush2.bf16.msra.mxu0 %v3893
  %4425 = vmatprep.subr.bf16.mxu0 0
  %4426 = vmatpush2.bf16.msra.mxu0 %v3892
  %4427 = vmatprep.subr.bf16.mxu0 0
  %4428 = vmatpush2.bf16.msra.mxu0 %v3891
  %4429 = vmatprep.subr.bf16.mxu0 0
  %4430 = vmatpush2.bf16.msra.mxu0 %v3890
  %4431 = vmatprep.subr.bf16.mxu0 0
  %4432 = vmatpush2.bf16.msra.mxu0 %v3889
  %4433 = vmatprep.subr.bf16.mxu0 0
  %4434 = vmatpush2.bf16.msra.mxu0 %v3888
  %4435 = vmatprep.subr.bf16.mxu0 0
  %4436 = vmatpush2.bf16.msra.mxu0 %v3887
  %4437 = vmatprep.subr.bf16.mxu0 0
  %4438 = vmatpush2.bf16.msra.mxu0 %v3886
  %4439 = vmatprep.mubr.bf16.mxu0 %v2329
  %4440 = vmatmul.mubr.bf16.gmra.mxu0 %v2328
  %v4441 = vpop.f32.mrf.mxu0
  %v4442 = vadd.f32 %v4153, %v4441
  %v4443 = vpop.f32.mrf.mxu0
  %v4444 = vpop.f32.mrf.mxu0
  %v4445 = vadd.f32 %v4156, %v4444
  %v4446 = vpop.f32.mrf.mxu0
  %4447 = vmatprep.mubr.bf16.mxu0 %v2345
  %4448 = vmatmul.mubr.bf16.gmra.mxu0 %v2344
  %v4449 = vpop.f32.mrf.mxu0
  %v4450 = vadd.f32 %v4161, %v4449
  %v4451 = vpop.f32.mrf.mxu0
  %v4452 = vpop.f32.mrf.mxu0
  %v4453 = vadd.f32 %v4164, %v4452
  %v4454 = vpop.f32.mrf.mxu0
  %4455 = vmatprep.mubr.bf16.mxu0 %v2361
  %4456 = vmatmul.mubr.bf16.gmra.mxu0 %v2360
  %v4457 = vpop.f32.mrf.mxu0
  %v4458 = vadd.f32 %v4169, %v4457
  %v4459 = vpop.f32.mrf.mxu0
  %v4460 = vpop.f32.mrf.mxu0
  %v4461 = vadd.f32 %v4172, %v4460
  %v4462 = vpop.f32.mrf.mxu0
  %4463 = vmatprep.mubr.bf16.mxu0 %v2377
  %4464 = vmatmul.mubr.bf16.gmra.mxu0 %v2376
  %v4465 = vpop.f32.mrf.mxu0
  %v4466 = vadd.f32 %v4177, %v4465
  %v4467 = vpop.f32.mrf.mxu0
  %v4468 = vpop.f32.mrf.mxu0
  %v4469 = vadd.f32 %v4180, %v4468
  %v4470 = vpop.f32.mrf.mxu0
  %4471 = vmatprep.mubr.bf16.mxu0 %v2393
  %4472 = vmatmul.mubr.bf16.gmra.mxu0 %v2392
  %v4473 = vpop.f32.mrf.mxu0
  %v4474 = vadd.f32 %v4185, %v4473
  %v4475 = vpop.f32.mrf.mxu0
  %v4476 = vpop.f32.mrf.mxu0
  %v4477 = vadd.f32 %v4188, %v4476
  %v4478 = vpop.f32.mrf.mxu0
  %4479 = vmatprep.mubr.bf16.mxu0 %v2409
  %4480 = vmatmul.mubr.bf16.gmra.mxu0 %v2408
  %v4481 = vpop.f32.mrf.mxu0
  %v4482 = vadd.f32 %v4193, %v4481
  %v4483 = vpop.f32.mrf.mxu0
  %v4484 = vpop.f32.mrf.mxu0
  %v4485 = vadd.f32 %v4196, %v4484
  %v4486 = vpop.f32.mrf.mxu0
  %4487 = vmatprep.mubr.bf16.mxu0 %v2425
  %4488 = vmatmul.mubr.bf16.gmra.mxu0 %v2424
  %v4489 = vpop.f32.mrf.mxu0
  %v4490 = vadd.f32 %v4201, %v4489
  %v4491 = vpop.f32.mrf.mxu0
  %v4492 = vpop.f32.mrf.mxu0
  %v4493 = vadd.f32 %v4204, %v4492
  %v4494 = vpop.f32.mrf.mxu0
  %4495 = vmatprep.mubr.bf16.mxu0 %v2441
  %4496 = vmatmul.mubr.bf16.gmra.mxu0 %v2440
  %v4497 = vpop.f32.mrf.mxu0
  %v4498 = vadd.f32 %v4209, %v4497
  %v4499 = vpop.f32.mrf.mxu0
  %v4500 = vpop.f32.mrf.mxu0
  %v4501 = vadd.f32 %v4212, %v4500
  %v4502 = vpop.f32.mrf.mxu0
  %4503 = vmatprep.mubr.bf16.mxu0 %v2457
  %4504 = vmatmul.mubr.bf16.gmra.mxu0 %v2456
  %v4505 = vpop.f32.mrf.mxu0
  %v4506 = vadd.f32 %v4217, %v4505
  %v4507 = vpop.f32.mrf.mxu0
  %v4508 = vpop.f32.mrf.mxu0
  %v4509 = vadd.f32 %v4220, %v4508
  %v4510 = vpop.f32.mrf.mxu0
  %4511 = vmatprep.mubr.bf16.mxu0 %v2473
  %4512 = vmatmul.mubr.bf16.gmra.mxu0 %v2472
  %v4513 = vpop.f32.mrf.mxu0
  %v4514 = vadd.f32 %v4225, %v4513
  %v4515 = vpop.f32.mrf.mxu0
  %v4516 = vpop.f32.mrf.mxu0
  %v4517 = vadd.f32 %v4228, %v4516
  %v4518 = vpop.f32.mrf.mxu0
  %4519 = vmatprep.mubr.bf16.mxu0 %v2489
  %4520 = vmatmul.mubr.bf16.gmra.mxu0 %v2488
  %v4521 = vpop.f32.mrf.mxu0
  %v4522 = vadd.f32 %v4233, %v4521
  %v4523 = vpop.f32.mrf.mxu0
  %v4524 = vpop.f32.mrf.mxu0
  %v4525 = vadd.f32 %v4236, %v4524
  %v4526 = vpop.f32.mrf.mxu0
  %4527 = vmatprep.mubr.bf16.mxu0 %v2505
  %4528 = vmatmul.mubr.bf16.gmra.mxu0 %v2504
  %v4529 = vpop.f32.mrf.mxu0
  %v4530 = vadd.f32 %v4241, %v4529
  %v4531 = vpop.f32.mrf.mxu0
  %v4532 = vpop.f32.mrf.mxu0
  %v4533 = vadd.f32 %v4244, %v4532
  %v4534 = vpop.f32.mrf.mxu0
  %4535 = vmatprep.mubr.bf16.mxu0 %v2521
  %4536 = vmatmul.mubr.bf16.gmra.mxu0 %v2520
  %v4537 = vpop.f32.mrf.mxu0
  %v4538 = vadd.f32 %v4249, %v4537
  %v4539 = vpop.f32.mrf.mxu0
  %v4540 = vpop.f32.mrf.mxu0
  %v4541 = vadd.f32 %v4252, %v4540
  %v4542 = vpop.f32.mrf.mxu0
  %4543 = vmatprep.mubr.bf16.mxu0 %v2537
  %4544 = vmatmul.mubr.bf16.gmra.mxu0 %v2536
  %v4545 = vpop.f32.mrf.mxu0
  %v4546 = vadd.f32 %v4257, %v4545
  %v4547 = vpop.f32.mrf.mxu0
  %v4548 = vpop.f32.mrf.mxu0
  %v4549 = vadd.f32 %v4260, %v4548
  %v4550 = vpop.f32.mrf.mxu0
  %4551 = vmatprep.mubr.bf16.mxu0 %v2553
  %4552 = vmatmul.mubr.bf16.gmra.mxu0 %v2552
  %v4553 = vpop.f32.mrf.mxu0
  %v4554 = vadd.f32 %v4265, %v4553
  %v4555 = vpop.f32.mrf.mxu0
  %v4556 = vpop.f32.mrf.mxu0
  %v4557 = vadd.f32 %v4268, %v4556
  %v4558 = vpop.f32.mrf.mxu0
  %4559 = vmatprep.mubr.bf16.mxu0 %v2569
  %4560 = vmatmul.mubr.bf16.gmra.mxu0 %v2568
  %v4561 = vpop.f32.mrf.mxu0
  %v4562 = vadd.f32 %v4273, %v4561
  %v4563 = vpop.f32.mrf.mxu0
  %v4564 = vpop.f32.mrf.mxu0
  %v4565 = vadd.f32 %v4276, %v4564
  %v4566 = vpop.f32.mrf.mxu0
  %4567 = vmatprep.mubr.bf16.mxu0 %v2585
  %4568 = vmatmul.mubr.bf16.gmra.mxu0 %v2584
  %v4569 = vpop.f32.mrf.mxu0
  %v4570 = vadd.f32 %v4281, %v4569
  %v4571 = vpop.f32.mrf.mxu0
  %v4572 = vpop.f32.mrf.mxu0
  %v4573 = vadd.f32 %v4284, %v4572
  %v4574 = vpop.f32.mrf.mxu0
  %4575 = vmatprep.mubr.bf16.mxu0 %v2601
  %4576 = vmatmul.mubr.bf16.gmra.mxu0 %v2600
  %v4577 = vpop.f32.mrf.mxu0
  %v4578 = vadd.f32 %v4289, %v4577
  %v4579 = vpop.f32.mrf.mxu0
  %v4580 = vpop.f32.mrf.mxu0
  %v4581 = vadd.f32 %v4292, %v4580
  %v4582 = vpop.f32.mrf.mxu0
  %4583 = vmatprep.mubr.bf16.mxu0 %v2617
  %4584 = vmatmul.mubr.bf16.gmra.mxu0 %v2616
  %v4585 = vpop.f32.mrf.mxu0
  %v4586 = vadd.f32 %v4297, %v4585
  %v4587 = vpop.f32.mrf.mxu0
  %v4588 = vpop.f32.mrf.mxu0
  %v4589 = vadd.f32 %v4300, %v4588
  %v4590 = vpop.f32.mrf.mxu0
  %4591 = vmatprep.mubr.bf16.mxu0 %v2633
  %4592 = vmatmul.mubr.bf16.gmra.mxu0 %v2632
  %v4593 = vpop.f32.mrf.mxu0
  %v4594 = vadd.f32 %v4305, %v4593
  %v4595 = vpop.f32.mrf.mxu0
  %v4596 = vpop.f32.mrf.mxu0
  %v4597 = vadd.f32 %v4308, %v4596
  %v4598 = vpop.f32.mrf.mxu0
  %4599 = vmatprep.mubr.bf16.mxu0 %v2649
  %4600 = vmatmul.mubr.bf16.gmra.mxu0 %v2648
  %v4601 = vpop.f32.mrf.mxu0
  %v4602 = vadd.f32 %v4313, %v4601
  %v4603 = vpop.f32.mrf.mxu0
  %v4604 = vpop.f32.mrf.mxu0
  %v4605 = vadd.f32 %v4316, %v4604
  %v4606 = vpop.f32.mrf.mxu0
  %4607 = vmatprep.mubr.bf16.mxu0 %v2665
  %4608 = vmatmul.mubr.bf16.gmra.mxu0 %v2664
  %v4609 = vpop.f32.mrf.mxu0
  %v4610 = vadd.f32 %v4321, %v4609
  %v4611 = vpop.f32.mrf.mxu0
  %v4612 = vpop.f32.mrf.mxu0
  %v4613 = vadd.f32 %v4324, %v4612
  %v4614 = vpop.f32.mrf.mxu0
  %4615 = vmatprep.mubr.bf16.mxu0 %v2681
  %4616 = vmatmul.mubr.bf16.gmra.mxu0 %v2680
  %v4617 = vpop.f32.mrf.mxu0
  %v4618 = vadd.f32 %v4329, %v4617
  %v4619 = vpop.f32.mrf.mxu0
  %v4620 = vpop.f32.mrf.mxu0
  %v4621 = vadd.f32 %v4332, %v4620
  %v4622 = vpop.f32.mrf.mxu0
  %4623 = vmatprep.mubr.bf16.mxu0 %v2697
  %4624 = vmatmul.mubr.bf16.gmra.mxu0 %v2696
  %v4625 = vpop.f32.mrf.mxu0
  %v4626 = vadd.f32 %v4337, %v4625
  %v4627 = vpop.f32.mrf.mxu0
  %v4628 = vpop.f32.mrf.mxu0
  %v4629 = vadd.f32 %v4340, %v4628
  %v4630 = vpop.f32.mrf.mxu0
  %4631 = vmatprep.mubr.bf16.mxu0 %v2713
  %4632 = vmatmul.mubr.bf16.gmra.mxu0 %v2712
  %v4633 = vpop.f32.mrf.mxu0
  %v4634 = vadd.f32 %v4345, %v4633
  %v4635 = vpop.f32.mrf.mxu0
  %v4636 = vpop.f32.mrf.mxu0
  %v4637 = vadd.f32 %v4348, %v4636
  %v4638 = vpop.f32.mrf.mxu0
  %4639 = vmatprep.mubr.bf16.mxu0 %v2729
  %4640 = vmatmul.mubr.bf16.gmra.mxu0 %v2728
  %v4641 = vpop.f32.mrf.mxu0
  %v4642 = vadd.f32 %v4353, %v4641
  %v4643 = vpop.f32.mrf.mxu0
  %v4644 = vpop.f32.mrf.mxu0
  %v4645 = vadd.f32 %v4356, %v4644
  %v4646 = vpop.f32.mrf.mxu0
  %4647 = vmatprep.mubr.bf16.mxu0 %v2745
  %4648 = vmatmul.mubr.bf16.gmra.mxu0 %v2744
  %v4649 = vpop.f32.mrf.mxu0
  %v4650 = vadd.f32 %v4361, %v4649
  %v4651 = vpop.f32.mrf.mxu0
  %v4652 = vpop.f32.mrf.mxu0
  %v4653 = vadd.f32 %v4364, %v4652
  %v4654 = vpop.f32.mrf.mxu0
  %4655 = vmatprep.mubr.bf16.mxu0 %v2761
  %4656 = vmatmul.mubr.bf16.gmra.mxu0 %v2760
  %v4657 = vpop.f32.mrf.mxu0
  %v4658 = vadd.f32 %v4369, %v4657
  %v4659 = vpop.f32.mrf.mxu0
  %v4660 = vpop.f32.mrf.mxu0
  %v4661 = vadd.f32 %v4372, %v4660
  %v4662 = vpop.f32.mrf.mxu0
  %4663 = vmatprep.mubr.bf16.mxu0 %v2777
  %4664 = vmatmul.mubr.bf16.gmra.mxu0 %v2776
  %v4665 = vpop.f32.mrf.mxu0
  %v4666 = vadd.f32 %v4377, %v4665
  %v4667 = vpop.f32.mrf.mxu0
  %v4668 = vpop.f32.mrf.mxu0
  %v4669 = vadd.f32 %v4380, %v4668
  %v4670 = vpop.f32.mrf.mxu0
  %4671 = vmatprep.mubr.bf16.mxu0 %v2793
  %4672 = vmatmul.mubr.bf16.gmra.mxu0 %v2792
  %v4673 = vpop.f32.mrf.mxu0
  %v4674 = vadd.f32 %v4385, %v4673
  %v4675 = vpop.f32.mrf.mxu0
  %v4676 = vpop.f32.mrf.mxu0
  %v4677 = vadd.f32 %v4388, %v4676
  %v4678 = vpop.f32.mrf.mxu0
  %4679 = vmatprep.mubr.bf16.mxu0 %v2809
  %4680 = vmatmul.mubr.bf16.gmra.mxu0 %v2808
  %v4681 = vpop.f32.mrf.mxu0
  %v4682 = vadd.f32 %v4393, %v4681
  %v4683 = vpop.f32.mrf.mxu0
  %v4684 = vpop.f32.mrf.mxu0
  %v4685 = vadd.f32 %v4396, %v4684
  %v4686 = vpop.f32.mrf.mxu0
  %4687 = vmatprep.mubr.bf16.mxu0 %v2825
  %4688 = vmatmul.mubr.bf16.gmra.mxu0 %v2824
  %v4689 = vpop.f32.mrf.mxu0
  %v4690 = vadd.f32 %v4401, %v4689
  %v4691 = vpop.f32.mrf.mxu0
  %v4692 = vpop.f32.mrf.mxu0
  %v4693 = vadd.f32 %v4404, %v4692
  %v4694 = vpop.f32.mrf.mxu0
  %4695 = vdwg.mxu0
  %4696 = vmatprep.subr.bf16.mxu0 0
  %4697 = vmatpush1.bf16.msra.mxu0 %v3901
  %4698 = vmatprep.subr.bf16.mxu0 0
  %4699 = vmatpush1.bf16.msra.mxu0 %v3900
  %4700 = vmatprep.subr.bf16.mxu0 0
  %4701 = vmatpush1.bf16.msra.mxu0 %v3899
  %4702 = vmatprep.subr.bf16.mxu0 0
  %4703 = vmatpush1.bf16.msra.mxu0 %v3898
  %4704 = vmatprep.subr.bf16.mxu0 0
  %4705 = vmatpush1.bf16.msra.mxu0 %v3897
  %4706 = vmatprep.subr.bf16.mxu0 0
  %4707 = vmatpush1.bf16.msra.mxu0 %v3896
  %4708 = vmatprep.subr.bf16.mxu0 0
  %4709 = vmatpush1.bf16.msra.mxu0 %v3895
  %4710 = vmatprep.subr.bf16.mxu0 0
  %4711 = vmatpush1.bf16.msra.mxu0 %v3894
  %4712 = vmatprep.subr.bf16.mxu0 0
  %4713 = vmatpush2.bf16.msra.mxu0 %v3909
  %4714 = vmatprep.subr.bf16.mxu0 0
  %4715 = vmatpush2.bf16.msra.mxu0 %v3908
  %4716 = vmatprep.subr.bf16.mxu0 0
  %4717 = vmatpush2.bf16.msra.mxu0 %v3907
  %4718 = vmatprep.subr.bf16.mxu0 0
  %4719 = vmatpush2.bf16.msra.mxu0 %v3906
  %4720 = vmatprep.subr.bf16.mxu0 0
  %4721 = vmatpush2.bf16.msra.mxu0 %v3905
  %4722 = vmatprep.subr.bf16.mxu0 0
  %4723 = vmatpush2.bf16.msra.mxu0 %v3904
  %4724 = vmatprep.subr.bf16.mxu0 0
  %4725 = vmatpush2.bf16.msra.mxu0 %v3903
  %4726 = vmatprep.subr.bf16.mxu0 0
  %4727 = vmatpush2.bf16.msra.mxu0 %v3902
  %4728 = vmatprep.mubr.bf16.mxu0 %v2331
  %4729 = vmatmul.mubr.bf16.gmra.mxu0 %v2330
  %v4730 = vpop.f32.mrf.mxu0
  %v4731 = vadd.f32 %v4442, %v4730
  %v4732 = vpop.f32.mrf.mxu0
  %v4733 = vpop.f32.mrf.mxu0
  %v4734 = vadd.f32 %v4445, %v4733
  %v4735 = vpop.f32.mrf.mxu0
  %4736 = vmatprep.mubr.bf16.mxu0 %v2347
  %4737 = vmatmul.mubr.bf16.gmra.mxu0 %v2346
  %v4738 = vpop.f32.mrf.mxu0
  %v4739 = vadd.f32 %v4450, %v4738
  %v4740 = vpop.f32.mrf.mxu0
  %v4741 = vpop.f32.mrf.mxu0
  %v4742 = vadd.f32 %v4453, %v4741
  %v4743 = vpop.f32.mrf.mxu0
  %4744 = vmatprep.mubr.bf16.mxu0 %v2363
  %4745 = vmatmul.mubr.bf16.gmra.mxu0 %v2362
  %v4746 = vpop.f32.mrf.mxu0
  %v4747 = vadd.f32 %v4458, %v4746
  %v4748 = vpop.f32.mrf.mxu0
  %v4749 = vpop.f32.mrf.mxu0
  %v4750 = vadd.f32 %v4461, %v4749
  %v4751 = vpop.f32.mrf.mxu0
  %4752 = vmatprep.mubr.bf16.mxu0 %v2379
  %4753 = vmatmul.mubr.bf16.gmra.mxu0 %v2378
  %v4754 = vpop.f32.mrf.mxu0
  %v4755 = vadd.f32 %v4466, %v4754
  %v4756 = vpop.f32.mrf.mxu0
  %v4757 = vpop.f32.mrf.mxu0
  %v4758 = vadd.f32 %v4469, %v4757
  %v4759 = vpop.f32.mrf.mxu0
  %4760 = vmatprep.mubr.bf16.mxu0 %v2395
  %4761 = vmatmul.mubr.bf16.gmra.mxu0 %v2394
  %v4762 = vpop.f32.mrf.mxu0
  %v4763 = vadd.f32 %v4474, %v4762
  %v4764 = vpop.f32.mrf.mxu0
  %v4765 = vpop.f32.mrf.mxu0
  %v4766 = vadd.f32 %v4477, %v4765
  %v4767 = vpop.f32.mrf.mxu0
  %4768 = vmatprep.mubr.bf16.mxu0 %v2411
  %4769 = vmatmul.mubr.bf16.gmra.mxu0 %v2410
  %v4770 = vpop.f32.mrf.mxu0
  %v4771 = vadd.f32 %v4482, %v4770
  %v4772 = vpop.f32.mrf.mxu0
  %v4773 = vpop.f32.mrf.mxu0
  %v4774 = vadd.f32 %v4485, %v4773
  %v4775 = vpop.f32.mrf.mxu0
  %4776 = vmatprep.mubr.bf16.mxu0 %v2427
  %4777 = vmatmul.mubr.bf16.gmra.mxu0 %v2426
  %v4778 = vpop.f32.mrf.mxu0
  %v4779 = vadd.f32 %v4490, %v4778
  %v4780 = vpop.f32.mrf.mxu0
  %v4781 = vpop.f32.mrf.mxu0
  %v4782 = vadd.f32 %v4493, %v4781
  %v4783 = vpop.f32.mrf.mxu0
  %4784 = vmatprep.mubr.bf16.mxu0 %v2443
  %4785 = vmatmul.mubr.bf16.gmra.mxu0 %v2442
  %v4786 = vpop.f32.mrf.mxu0
  %v4787 = vadd.f32 %v4498, %v4786
  %v4788 = vpop.f32.mrf.mxu0
  %v4789 = vpop.f32.mrf.mxu0
  %v4790 = vadd.f32 %v4501, %v4789
  %v4791 = vpop.f32.mrf.mxu0
  %4792 = vmatprep.mubr.bf16.mxu0 %v2459
  %4793 = vmatmul.mubr.bf16.gmra.mxu0 %v2458
  %v4794 = vpop.f32.mrf.mxu0
  %v4795 = vadd.f32 %v4506, %v4794
  %v4796 = vpop.f32.mrf.mxu0
  %v4797 = vpop.f32.mrf.mxu0
  %v4798 = vadd.f32 %v4509, %v4797
  %v4799 = vpop.f32.mrf.mxu0
  %4800 = vmatprep.mubr.bf16.mxu0 %v2475
  %4801 = vmatmul.mubr.bf16.gmra.mxu0 %v2474
  %v4802 = vpop.f32.mrf.mxu0
  %v4803 = vadd.f32 %v4514, %v4802
  %v4804 = vpop.f32.mrf.mxu0
  %v4805 = vpop.f32.mrf.mxu0
  %v4806 = vadd.f32 %v4517, %v4805
  %v4807 = vpop.f32.mrf.mxu0
  %4808 = vmatprep.mubr.bf16.mxu0 %v2491
  %4809 = vmatmul.mubr.bf16.gmra.mxu0 %v2490
  %v4810 = vpop.f32.mrf.mxu0
  %v4811 = vadd.f32 %v4522, %v4810
  %v4812 = vpop.f32.mrf.mxu0
  %v4813 = vpop.f32.mrf.mxu0
  %v4814 = vadd.f32 %v4525, %v4813
  %v4815 = vpop.f32.mrf.mxu0
  %4816 = vmatprep.mubr.bf16.mxu0 %v2507
  %4817 = vmatmul.mubr.bf16.gmra.mxu0 %v2506
  %v4818 = vpop.f32.mrf.mxu0
  %v4819 = vadd.f32 %v4530, %v4818
  %v4820 = vpop.f32.mrf.mxu0
  %v4821 = vpop.f32.mrf.mxu0
  %v4822 = vadd.f32 %v4533, %v4821
  %v4823 = vpop.f32.mrf.mxu0
  %4824 = vmatprep.mubr.bf16.mxu0 %v2523
  %4825 = vmatmul.mubr.bf16.gmra.mxu0 %v2522
  %v4826 = vpop.f32.mrf.mxu0
  %v4827 = vadd.f32 %v4538, %v4826
  %v4828 = vpop.f32.mrf.mxu0
  %v4829 = vpop.f32.mrf.mxu0
  %v4830 = vadd.f32 %v4541, %v4829
  %v4831 = vpop.f32.mrf.mxu0
  %4832 = vmatprep.mubr.bf16.mxu0 %v2539
  %4833 = vmatmul.mubr.bf16.gmra.mxu0 %v2538
  %v4834 = vpop.f32.mrf.mxu0
  %v4835 = vadd.f32 %v4546, %v4834
  %v4836 = vpop.f32.mrf.mxu0
  %v4837 = vpop.f32.mrf.mxu0
  %v4838 = vadd.f32 %v4549, %v4837
  %v4839 = vpop.f32.mrf.mxu0
  %4840 = vmatprep.mubr.bf16.mxu0 %v2555
  %4841 = vmatmul.mubr.bf16.gmra.mxu0 %v2554
  %v4842 = vpop.f32.mrf.mxu0
  %v4843 = vadd.f32 %v4554, %v4842
  %v4844 = vpop.f32.mrf.mxu0
  %v4845 = vpop.f32.mrf.mxu0
  %v4846 = vadd.f32 %v4557, %v4845
  %v4847 = vpop.f32.mrf.mxu0
  %4848 = vmatprep.mubr.bf16.mxu0 %v2571
  %4849 = vmatmul.mubr.bf16.gmra.mxu0 %v2570
  %v4850 = vpop.f32.mrf.mxu0
  %v4851 = vadd.f32 %v4562, %v4850
  %v4852 = vpop.f32.mrf.mxu0
  %v4853 = vpop.f32.mrf.mxu0
  %v4854 = vadd.f32 %v4565, %v4853
  %v4855 = vpop.f32.mrf.mxu0
  %4856 = vmatprep.mubr.bf16.mxu0 %v2587
  %4857 = vmatmul.mubr.bf16.gmra.mxu0 %v2586
  %v4858 = vpop.f32.mrf.mxu0
  %v4859 = vadd.f32 %v4570, %v4858
  %v4860 = vpop.f32.mrf.mxu0
  %v4861 = vpop.f32.mrf.mxu0
  %v4862 = vadd.f32 %v4573, %v4861
  %v4863 = vpop.f32.mrf.mxu0
  %4864 = vmatprep.mubr.bf16.mxu0 %v2603
  %4865 = vmatmul.mubr.bf16.gmra.mxu0 %v2602
  %v4866 = vpop.f32.mrf.mxu0
  %v4867 = vadd.f32 %v4578, %v4866
  %v4868 = vpop.f32.mrf.mxu0
  %v4869 = vpop.f32.mrf.mxu0
  %v4870 = vadd.f32 %v4581, %v4869
  %v4871 = vpop.f32.mrf.mxu0
  %4872 = vmatprep.mubr.bf16.mxu0 %v2619
  %4873 = vmatmul.mubr.bf16.gmra.mxu0 %v2618
  %v4874 = vpop.f32.mrf.mxu0
  %v4875 = vadd.f32 %v4586, %v4874
  %v4876 = vpop.f32.mrf.mxu0
  %v4877 = vpop.f32.mrf.mxu0
  %v4878 = vadd.f32 %v4589, %v4877
  %v4879 = vpop.f32.mrf.mxu0
  %4880 = vmatprep.mubr.bf16.mxu0 %v2635
  %4881 = vmatmul.mubr.bf16.gmra.mxu0 %v2634
  %v4882 = vpop.f32.mrf.mxu0
  %v4883 = vadd.f32 %v4594, %v4882
  %v4884 = vpop.f32.mrf.mxu0
  %v4885 = vpop.f32.mrf.mxu0
  %v4886 = vadd.f32 %v4597, %v4885
  %v4887 = vpop.f32.mrf.mxu0
  %4888 = vmatprep.mubr.bf16.mxu0 %v2651
  %4889 = vmatmul.mubr.bf16.gmra.mxu0 %v2650
  %v4890 = vpop.f32.mrf.mxu0
  %v4891 = vadd.f32 %v4602, %v4890
  %v4892 = vpop.f32.mrf.mxu0
  %v4893 = vpop.f32.mrf.mxu0
  %v4894 = vadd.f32 %v4605, %v4893
  %v4895 = vpop.f32.mrf.mxu0
  %4896 = vmatprep.mubr.bf16.mxu0 %v2667
  %4897 = vmatmul.mubr.bf16.gmra.mxu0 %v2666
  %v4898 = vpop.f32.mrf.mxu0
  %v4899 = vadd.f32 %v4610, %v4898
  %v4900 = vpop.f32.mrf.mxu0
  %v4901 = vpop.f32.mrf.mxu0
  %v4902 = vadd.f32 %v4613, %v4901
  %v4903 = vpop.f32.mrf.mxu0
  %4904 = vmatprep.mubr.bf16.mxu0 %v2683
  %4905 = vmatmul.mubr.bf16.gmra.mxu0 %v2682
  %v4906 = vpop.f32.mrf.mxu0
  %v4907 = vadd.f32 %v4618, %v4906
  %v4908 = vpop.f32.mrf.mxu0
  %v4909 = vpop.f32.mrf.mxu0
  %v4910 = vadd.f32 %v4621, %v4909
  %v4911 = vpop.f32.mrf.mxu0
  %4912 = vmatprep.mubr.bf16.mxu0 %v2699
  %4913 = vmatmul.mubr.bf16.gmra.mxu0 %v2698
  %v4914 = vpop.f32.mrf.mxu0
  %v4915 = vadd.f32 %v4626, %v4914
  %v4916 = vpop.f32.mrf.mxu0
  %v4917 = vpop.f32.mrf.mxu0
  %v4918 = vadd.f32 %v4629, %v4917
  %v4919 = vpop.f32.mrf.mxu0
  %4920 = vmatprep.mubr.bf16.mxu0 %v2715
  %4921 = vmatmul.mubr.bf16.gmra.mxu0 %v2714
  %v4922 = vpop.f32.mrf.mxu0
  %v4923 = vadd.f32 %v4634, %v4922
  %v4924 = vpop.f32.mrf.mxu0
  %v4925 = vpop.f32.mrf.mxu0
  %v4926 = vadd.f32 %v4637, %v4925
  %v4927 = vpop.f32.mrf.mxu0
  %4928 = vmatprep.mubr.bf16.mxu0 %v2731
  %4929 = vmatmul.mubr.bf16.gmra.mxu0 %v2730
  %v4930 = vpop.f32.mrf.mxu0
  %v4931 = vadd.f32 %v4642, %v4930
  %v4932 = vpop.f32.mrf.mxu0
  %v4933 = vpop.f32.mrf.mxu0
  %v4934 = vadd.f32 %v4645, %v4933
  %v4935 = vpop.f32.mrf.mxu0
  %4936 = vmatprep.mubr.bf16.mxu0 %v2747
  %4937 = vmatmul.mubr.bf16.gmra.mxu0 %v2746
  %v4938 = vpop.f32.mrf.mxu0
  %v4939 = vadd.f32 %v4650, %v4938
  %v4940 = vpop.f32.mrf.mxu0
  %v4941 = vpop.f32.mrf.mxu0
  %v4942 = vadd.f32 %v4653, %v4941
  %v4943 = vpop.f32.mrf.mxu0
  %4944 = vmatprep.mubr.bf16.mxu0 %v2763
  %4945 = vmatmul.mubr.bf16.gmra.mxu0 %v2762
  %v4946 = vpop.f32.mrf.mxu0
  %v4947 = vadd.f32 %v4658, %v4946
  %v4948 = vpop.f32.mrf.mxu0
  %v4949 = vpop.f32.mrf.mxu0
  %v4950 = vadd.f32 %v4661, %v4949
  %v4951 = vpop.f32.mrf.mxu0
  %4952 = vmatprep.mubr.bf16.mxu0 %v2779
  %4953 = vmatmul.mubr.bf16.gmra.mxu0 %v2778
  %v4954 = vpop.f32.mrf.mxu0
  %v4955 = vadd.f32 %v4666, %v4954
  %v4956 = vpop.f32.mrf.mxu0
  %v4957 = vpop.f32.mrf.mxu0
  %v4958 = vadd.f32 %v4669, %v4957
  %v4959 = vpop.f32.mrf.mxu0
  %4960 = vmatprep.mubr.bf16.mxu0 %v2795
  %4961 = vmatmul.mubr.bf16.gmra.mxu0 %v2794
  %v4962 = vpop.f32.mrf.mxu0
  %v4963 = vadd.f32 %v4674, %v4962
  %v4964 = vpop.f32.mrf.mxu0
  %v4965 = vpop.f32.mrf.mxu0
  %v4966 = vadd.f32 %v4677, %v4965
  %v4967 = vpop.f32.mrf.mxu0
  %4968 = vmatprep.mubr.bf16.mxu0 %v2811
  %4969 = vmatmul.mubr.bf16.gmra.mxu0 %v2810
  %v4970 = vpop.f32.mrf.mxu0
  %v4971 = vadd.f32 %v4682, %v4970
  %v4972 = vpop.f32.mrf.mxu0
  %v4973 = vpop.f32.mrf.mxu0
  %v4974 = vadd.f32 %v4685, %v4973
  %v4975 = vpop.f32.mrf.mxu0
  %4976 = vmatprep.mubr.bf16.mxu0 %v2827
  %4977 = vmatmul.mubr.bf16.gmra.mxu0 %v2826
  %v4978 = vpop.f32.mrf.mxu0
  %v4979 = vadd.f32 %v4690, %v4978
  %v4980 = vpop.f32.mrf.mxu0
  %v4981 = vpop.f32.mrf.mxu0
  %v4982 = vadd.f32 %v4693, %v4981
  %v4983 = vpop.f32.mrf.mxu0
  %4984 = vdwg.mxu0
  %4985 = vmatprep.subr.bf16.mxu0 0
  %4986 = vmatpush1.bf16.msra.mxu0 %v3917
  %4987 = vmatprep.subr.bf16.mxu0 0
  %4988 = vmatpush1.bf16.msra.mxu0 %v3916
  %4989 = vmatprep.subr.bf16.mxu0 0
  %4990 = vmatpush1.bf16.msra.mxu0 %v3915
  %4991 = vmatprep.subr.bf16.mxu0 0
  %4992 = vmatpush1.bf16.msra.mxu0 %v3914
  %4993 = vmatprep.subr.bf16.mxu0 0
  %4994 = vmatpush1.bf16.msra.mxu0 %v3913
  %4995 = vmatprep.subr.bf16.mxu0 0
  %4996 = vmatpush1.bf16.msra.mxu0 %v3912
  %4997 = vmatprep.subr.bf16.mxu0 0
  %4998 = vmatpush1.bf16.msra.mxu0 %v3911
  %4999 = vmatprep.subr.bf16.mxu0 0
  %5000 = vmatpush1.bf16.msra.mxu0 %v3910
  %5001 = vmatprep.subr.bf16.mxu0 0
  %5002 = vmatpush2.bf16.msra.mxu0 %v3925
  %5003 = vmatprep.subr.bf16.mxu0 0
  %5004 = vmatpush2.bf16.msra.mxu0 %v3924
  %5005 = vmatprep.subr.bf16.mxu0 0
  %5006 = vmatpush2.bf16.msra.mxu0 %v3923
  %5007 = vmatprep.subr.bf16.mxu0 0
  %5008 = vmatpush2.bf16.msra.mxu0 %v3922
  %5009 = vmatprep.subr.bf16.mxu0 0
  %5010 = vmatpush2.bf16.msra.mxu0 %v3921
  %5011 = vmatprep.subr.bf16.mxu0 0
  %5012 = vmatpush2.bf16.msra.mxu0 %v3920
  %5013 = vmatprep.subr.bf16.mxu0 0
  %5014 = vmatpush2.bf16.msra.mxu0 %v3919
  %5015 = vmatprep.subr.bf16.mxu0 0
  %5016 = vmatpush2.bf16.msra.mxu0 %v3918
  %5017 = vmatprep.mubr.bf16.mxu0 %v2333
  %5018 = vmatmul.mubr.bf16.gmra.mxu0 %v2332
  %v5019 = vpop.f32.mrf.mxu0
  %v5020 = vadd.f32 %v4731, %v5019
  %v5021 = vpop.f32.mrf.mxu0
  %v5022 = vpop.f32.mrf.mxu0
  %v5023 = vadd.f32 %v4734, %v5022
  %v5024 = vpop.f32.mrf.mxu0
  %5025 = vmatprep.mubr.bf16.mxu0 %v2349
  %5026 = vmatmul.mubr.bf16.gmra.mxu0 %v2348
  %v5027 = vpop.f32.mrf.mxu0
  %v5028 = vadd.f32 %v4739, %v5027
  %v5029 = vpop.f32.mrf.mxu0
  %v5030 = vpop.f32.mrf.mxu0
  %v5031 = vadd.f32 %v4742, %v5030
  %v5032 = vpop.f32.mrf.mxu0
  %5033 = vmatprep.mubr.bf16.mxu0 %v2365
  %5034 = vmatmul.mubr.bf16.gmra.mxu0 %v2364
  %v5035 = vpop.f32.mrf.mxu0
  %v5036 = vadd.f32 %v4747, %v5035
  %v5037 = vpop.f32.mrf.mxu0
  %v5038 = vpop.f32.mrf.mxu0
  %v5039 = vadd.f32 %v4750, %v5038
  %v5040 = vpop.f32.mrf.mxu0
  %5041 = vmatprep.mubr.bf16.mxu0 %v2381
  %5042 = vmatmul.mubr.bf16.gmra.mxu0 %v2380
  %v5043 = vpop.f32.mrf.mxu0
  %v5044 = vadd.f32 %v4755, %v5043
  %v5045 = vpop.f32.mrf.mxu0
  %v5046 = vpop.f32.mrf.mxu0
  %v5047 = vadd.f32 %v4758, %v5046
  %v5048 = vpop.f32.mrf.mxu0
  %5049 = vmatprep.mubr.bf16.mxu0 %v2397
  %5050 = vmatmul.mubr.bf16.gmra.mxu0 %v2396
  %v5051 = vpop.f32.mrf.mxu0
  %v5052 = vadd.f32 %v4763, %v5051
  %v5053 = vpop.f32.mrf.mxu0
  %v5054 = vpop.f32.mrf.mxu0
  %v5055 = vadd.f32 %v4766, %v5054
  %v5056 = vpop.f32.mrf.mxu0
  %5057 = vmatprep.mubr.bf16.mxu0 %v2413
  %5058 = vmatmul.mubr.bf16.gmra.mxu0 %v2412
  %v5059 = vpop.f32.mrf.mxu0
  %v5060 = vadd.f32 %v4771, %v5059
  %v5061 = vpop.f32.mrf.mxu0
  %v5062 = vpop.f32.mrf.mxu0
  %v5063 = vadd.f32 %v4774, %v5062
  %v5064 = vpop.f32.mrf.mxu0
  %5065 = vmatprep.mubr.bf16.mxu0 %v2429
  %5066 = vmatmul.mubr.bf16.gmra.mxu0 %v2428
  %v5067 = vpop.f32.mrf.mxu0
  %v5068 = vadd.f32 %v4779, %v5067
  %v5069 = vpop.f32.mrf.mxu0
  %v5070 = vpop.f32.mrf.mxu0
  %v5071 = vadd.f32 %v4782, %v5070
  %v5072 = vpop.f32.mrf.mxu0
  %5073 = vmatprep.mubr.bf16.mxu0 %v2445
  %5074 = vmatmul.mubr.bf16.gmra.mxu0 %v2444
  %v5075 = vpop.f32.mrf.mxu0
  %v5076 = vadd.f32 %v4787, %v5075
  %v5077 = vpop.f32.mrf.mxu0
  %v5078 = vpop.f32.mrf.mxu0
  %v5079 = vadd.f32 %v4790, %v5078
  %v5080 = vpop.f32.mrf.mxu0
  %5081 = vmatprep.mubr.bf16.mxu0 %v2461
  %5082 = vmatmul.mubr.bf16.gmra.mxu0 %v2460
  %v5083 = vpop.f32.mrf.mxu0
  %v5084 = vadd.f32 %v4795, %v5083
  %v5085 = vpop.f32.mrf.mxu0
  %v5086 = vpop.f32.mrf.mxu0
  %v5087 = vadd.f32 %v4798, %v5086
  %v5088 = vpop.f32.mrf.mxu0
  %5089 = vmatprep.mubr.bf16.mxu0 %v2477
  %5090 = vmatmul.mubr.bf16.gmra.mxu0 %v2476
  %v5091 = vpop.f32.mrf.mxu0
  %v5092 = vadd.f32 %v4803, %v5091
  %v5093 = vpop.f32.mrf.mxu0
  %v5094 = vpop.f32.mrf.mxu0
  %v5095 = vadd.f32 %v4806, %v5094
  %v5096 = vpop.f32.mrf.mxu0
  %5097 = vmatprep.mubr.bf16.mxu0 %v2493
  %5098 = vmatmul.mubr.bf16.gmra.mxu0 %v2492
  %v5099 = vpop.f32.mrf.mxu0
  %v5100 = vadd.f32 %v4811, %v5099
  %v5101 = vpop.f32.mrf.mxu0
  %v5102 = vpop.f32.mrf.mxu0
  %v5103 = vadd.f32 %v4814, %v5102
  %v5104 = vpop.f32.mrf.mxu0
  %5105 = vmatprep.mubr.bf16.mxu0 %v2509
  %5106 = vmatmul.mubr.bf16.gmra.mxu0 %v2508
  %v5107 = vpop.f32.mrf.mxu0
  %v5108 = vadd.f32 %v4819, %v5107
  %v5109 = vpop.f32.mrf.mxu0
  %v5110 = vpop.f32.mrf.mxu0
  %v5111 = vadd.f32 %v4822, %v5110
  %v5112 = vpop.f32.mrf.mxu0
  %5113 = vmatprep.mubr.bf16.mxu0 %v2525
  %5114 = vmatmul.mubr.bf16.gmra.mxu0 %v2524
  %v5115 = vpop.f32.mrf.mxu0
  %v5116 = vadd.f32 %v4827, %v5115
  %v5117 = vpop.f32.mrf.mxu0
  %v5118 = vpop.f32.mrf.mxu0
  %v5119 = vadd.f32 %v4830, %v5118
  %v5120 = vpop.f32.mrf.mxu0
  %5121 = vmatprep.mubr.bf16.mxu0 %v2541
  %5122 = vmatmul.mubr.bf16.gmra.mxu0 %v2540
  %v5123 = vpop.f32.mrf.mxu0
  %v5124 = vadd.f32 %v4835, %v5123
  %v5125 = vpop.f32.mrf.mxu0
  %v5126 = vpop.f32.mrf.mxu0
  %v5127 = vadd.f32 %v4838, %v5126
  %v5128 = vpop.f32.mrf.mxu0
  %5129 = vmatprep.mubr.bf16.mxu0 %v2557
  %5130 = vmatmul.mubr.bf16.gmra.mxu0 %v2556
  %v5131 = vpop.f32.mrf.mxu0
  %v5132 = vadd.f32 %v4843, %v5131
  %v5133 = vpop.f32.mrf.mxu0
  %v5134 = vpop.f32.mrf.mxu0
  %v5135 = vadd.f32 %v4846, %v5134
  %v5136 = vpop.f32.mrf.mxu0
  %5137 = vmatprep.mubr.bf16.mxu0 %v2573
  %5138 = vmatmul.mubr.bf16.gmra.mxu0 %v2572
  %v5139 = vpop.f32.mrf.mxu0
  %v5140 = vadd.f32 %v4851, %v5139
  %v5141 = vpop.f32.mrf.mxu0
  %v5142 = vpop.f32.mrf.mxu0
  %v5143 = vadd.f32 %v4854, %v5142
  %v5144 = vpop.f32.mrf.mxu0
  %5145 = vmatprep.mubr.bf16.mxu0 %v2589
  %5146 = vmatmul.mubr.bf16.gmra.mxu0 %v2588
  %v5147 = vpop.f32.mrf.mxu0
  %v5148 = vadd.f32 %v4859, %v5147
  %v5149 = vpop.f32.mrf.mxu0
  %v5150 = vpop.f32.mrf.mxu0
  %v5151 = vadd.f32 %v4862, %v5150
  %v5152 = vpop.f32.mrf.mxu0
  %5153 = vmatprep.mubr.bf16.mxu0 %v2605
  %5154 = vmatmul.mubr.bf16.gmra.mxu0 %v2604
  %v5155 = vpop.f32.mrf.mxu0
  %v5156 = vadd.f32 %v4867, %v5155
  %v5157 = vpop.f32.mrf.mxu0
  %v5158 = vpop.f32.mrf.mxu0
  %v5159 = vadd.f32 %v4870, %v5158
  %v5160 = vpop.f32.mrf.mxu0
  %5161 = vmatprep.mubr.bf16.mxu0 %v2621
  %5162 = vmatmul.mubr.bf16.gmra.mxu0 %v2620
  %v5163 = vpop.f32.mrf.mxu0
  %v5164 = vadd.f32 %v4875, %v5163
  %v5165 = vpop.f32.mrf.mxu0
  %v5166 = vpop.f32.mrf.mxu0
  %v5167 = vadd.f32 %v4878, %v5166
  %v5168 = vpop.f32.mrf.mxu0
  %5169 = vmatprep.mubr.bf16.mxu0 %v2637
  %5170 = vmatmul.mubr.bf16.gmra.mxu0 %v2636
  %v5171 = vpop.f32.mrf.mxu0
  %v5172 = vadd.f32 %v4883, %v5171
  %v5173 = vpop.f32.mrf.mxu0
  %v5174 = vpop.f32.mrf.mxu0
  %v5175 = vadd.f32 %v4886, %v5174
  %v5176 = vpop.f32.mrf.mxu0
  %5177 = vmatprep.mubr.bf16.mxu0 %v2653
  %5178 = vmatmul.mubr.bf16.gmra.mxu0 %v2652
  %v5179 = vpop.f32.mrf.mxu0
  %v5180 = vadd.f32 %v4891, %v5179
  %v5181 = vpop.f32.mrf.mxu0
  %v5182 = vpop.f32.mrf.mxu0
  %v5183 = vadd.f32 %v4894, %v5182
  %v5184 = vpop.f32.mrf.mxu0
  %5185 = vmatprep.mubr.bf16.mxu0 %v2669
  %5186 = vmatmul.mubr.bf16.gmra.mxu0 %v2668
  %v5187 = vpop.f32.mrf.mxu0
  %v5188 = vadd.f32 %v4899, %v5187
  %v5189 = vpop.f32.mrf.mxu0
  %v5190 = vpop.f32.mrf.mxu0
  %v5191 = vadd.f32 %v4902, %v5190
  %v5192 = vpop.f32.mrf.mxu0
  %5193 = vmatprep.mubr.bf16.mxu0 %v2685
  %5194 = vmatmul.mubr.bf16.gmra.mxu0 %v2684
  %v5195 = vpop.f32.mrf.mxu0
  %v5196 = vadd.f32 %v4907, %v5195
  %v5197 = vpop.f32.mrf.mxu0
  %v5198 = vpop.f32.mrf.mxu0
  %v5199 = vadd.f32 %v4910, %v5198
  %v5200 = vpop.f32.mrf.mxu0
  %5201 = vmatprep.mubr.bf16.mxu0 %v2701
  %5202 = vmatmul.mubr.bf16.gmra.mxu0 %v2700
  %v5203 = vpop.f32.mrf.mxu0
  %v5204 = vadd.f32 %v4915, %v5203
  %v5205 = vpop.f32.mrf.mxu0
  %v5206 = vpop.f32.mrf.mxu0
  %v5207 = vadd.f32 %v4918, %v5206
  %v5208 = vpop.f32.mrf.mxu0
  %5209 = vmatprep.mubr.bf16.mxu0 %v2717
  %5210 = vmatmul.mubr.bf16.gmra.mxu0 %v2716
  %v5211 = vpop.f32.mrf.mxu0
  %v5212 = vadd.f32 %v4923, %v5211
  %v5213 = vpop.f32.mrf.mxu0
  %v5214 = vpop.f32.mrf.mxu0
  %v5215 = vadd.f32 %v4926, %v5214
  %v5216 = vpop.f32.mrf.mxu0
  %5217 = vmatprep.mubr.bf16.mxu0 %v2733
  %5218 = vmatmul.mubr.bf16.gmra.mxu0 %v2732
  %v5219 = vpop.f32.mrf.mxu0
  %v5220 = vadd.f32 %v4931, %v5219
  %v5221 = vpop.f32.mrf.mxu0
  %v5222 = vpop.f32.mrf.mxu0
  %v5223 = vadd.f32 %v4934, %v5222
  %v5224 = vpop.f32.mrf.mxu0
  %5225 = vmatprep.mubr.bf16.mxu0 %v2749
  %5226 = vmatmul.mubr.bf16.gmra.mxu0 %v2748
  %v5227 = vpop.f32.mrf.mxu0
  %v5228 = vadd.f32 %v4939, %v5227
  %v5229 = vpop.f32.mrf.mxu0
  %v5230 = vpop.f32.mrf.mxu0
  %v5231 = vadd.f32 %v4942, %v5230
  %v5232 = vpop.f32.mrf.mxu0
  %5233 = vmatprep.mubr.bf16.mxu0 %v2765
  %5234 = vmatmul.mubr.bf16.gmra.mxu0 %v2764
  %v5235 = vpop.f32.mrf.mxu0
  %v5236 = vadd.f32 %v4947, %v5235
  %v5237 = vpop.f32.mrf.mxu0
  %v5238 = vpop.f32.mrf.mxu0
  %v5239 = vadd.f32 %v4950, %v5238
  %v5240 = vpop.f32.mrf.mxu0
  %5241 = vmatprep.mubr.bf16.mxu0 %v2781
  %5242 = vmatmul.mubr.bf16.gmra.mxu0 %v2780
  %v5243 = vpop.f32.mrf.mxu0
  %v5244 = vadd.f32 %v4955, %v5243
  %v5245 = vpop.f32.mrf.mxu0
  %v5246 = vpop.f32.mrf.mxu0
  %v5247 = vadd.f32 %v4958, %v5246
  %v5248 = vpop.f32.mrf.mxu0
  %5249 = vmatprep.mubr.bf16.mxu0 %v2797
  %5250 = vmatmul.mubr.bf16.gmra.mxu0 %v2796
  %v5251 = vpop.f32.mrf.mxu0
  %v5252 = vadd.f32 %v4963, %v5251
  %v5253 = vpop.f32.mrf.mxu0
  %v5254 = vpop.f32.mrf.mxu0
  %v5255 = vadd.f32 %v4966, %v5254
  %v5256 = vpop.f32.mrf.mxu0
  %5257 = vmatprep.mubr.bf16.mxu0 %v2813
  %5258 = vmatmul.mubr.bf16.gmra.mxu0 %v2812
  %v5259 = vpop.f32.mrf.mxu0
  %v5260 = vadd.f32 %v4971, %v5259
  %v5261 = vpop.f32.mrf.mxu0
  %v5262 = vpop.f32.mrf.mxu0
  %v5263 = vadd.f32 %v4974, %v5262
  %v5264 = vpop.f32.mrf.mxu0
  %5265 = vmatprep.mubr.bf16.mxu0 %v2829
  %5266 = vmatmul.mubr.bf16.gmra.mxu0 %v2828
  %v5267 = vpop.f32.mrf.mxu0
  %v5268 = vadd.f32 %v4979, %v5267
  %v5269 = vpop.f32.mrf.mxu0
  %v5270 = vpop.f32.mrf.mxu0
  %v5271 = vadd.f32 %v4982, %v5270
  %v5272 = vpop.f32.mrf.mxu0
  %5273 = vdwg.mxu0
  %5274 = vmatprep.subr.bf16.mxu0 0
  %5275 = vmatpush1.bf16.msra.mxu0 %v3933
  %5276 = vmatprep.subr.bf16.mxu0 0
  %5277 = vmatpush1.bf16.msra.mxu0 %v3932
  %5278 = vmatprep.subr.bf16.mxu0 0
  %5279 = vmatpush1.bf16.msra.mxu0 %v3931
  %5280 = vmatprep.subr.bf16.mxu0 0
  %5281 = vmatpush1.bf16.msra.mxu0 %v3930
  %5282 = vmatprep.subr.bf16.mxu0 0
  %5283 = vmatpush1.bf16.msra.mxu0 %v3929
  %5284 = vmatprep.subr.bf16.mxu0 0
  %5285 = vmatpush1.bf16.msra.mxu0 %v3928
  %5286 = vmatprep.subr.bf16.mxu0 0
  %5287 = vmatpush1.bf16.msra.mxu0 %v3927
  %5288 = vmatprep.subr.bf16.mxu0 0
  %5289 = vmatpush1.bf16.msra.mxu0 %v3926
  %5290 = vmatprep.subr.bf16.mxu0 0
  %5291 = vmatpush2.bf16.msra.mxu0 %v3941
  %5292 = vmatprep.subr.bf16.mxu0 0
  %5293 = vmatpush2.bf16.msra.mxu0 %v3940
  %5294 = vmatprep.subr.bf16.mxu0 0
  %5295 = vmatpush2.bf16.msra.mxu0 %v3939
  %5296 = vmatprep.subr.bf16.mxu0 0
  %5297 = vmatpush2.bf16.msra.mxu0 %v3938
  %5298 = vmatprep.subr.bf16.mxu0 0
  %5299 = vmatpush2.bf16.msra.mxu0 %v3937
  %5300 = vmatprep.subr.bf16.mxu0 0
  %5301 = vmatpush2.bf16.msra.mxu0 %v3936
  %5302 = vmatprep.subr.bf16.mxu0 0
  %5303 = vmatpush2.bf16.msra.mxu0 %v3935
  %5304 = vmatprep.subr.bf16.mxu0 0
  %5305 = vmatpush2.bf16.msra.mxu0 %v3934
  %5306 = vmatprep.mubr.bf16.mxu0 %v2335
  %5307 = vmatmul.mubr.bf16.gmra.mxu0 %v2334
  %v5308 = vpop.f32.mrf.mxu0
  %v5309 = vadd.f32 %v5020, %v5308
  %v5310 = vpop.f32.mrf.mxu0
  %v5311 = vpop.f32.mrf.mxu0
  %v5312 = vadd.f32 %v5023, %v5311
  %v5313 = vpop.f32.mrf.mxu0
  %5314 = vmatprep.mubr.bf16.mxu0 %v2351
  %5315 = vmatmul.mubr.bf16.gmra.mxu0 %v2350
  %v5316 = vpop.f32.mrf.mxu0
  %v5317 = vadd.f32 %v5028, %v5316
  %v5318 = vpop.f32.mrf.mxu0
  %v5319 = vpop.f32.mrf.mxu0
  %v5320 = vadd.f32 %v5031, %v5319
  %v5321 = vpop.f32.mrf.mxu0
  %5322 = vmatprep.mubr.bf16.mxu0 %v2367
  %5323 = vmatmul.mubr.bf16.gmra.mxu0 %v2366
  %v5324 = vpop.f32.mrf.mxu0
  %v5325 = vadd.f32 %v5036, %v5324
  %v5326 = vpop.f32.mrf.mxu0
  %v5327 = vpop.f32.mrf.mxu0
  %v5328 = vadd.f32 %v5039, %v5327
  %v5329 = vpop.f32.mrf.mxu0
  %5330 = vmatprep.mubr.bf16.mxu0 %v2383
  %5331 = vmatmul.mubr.bf16.gmra.mxu0 %v2382
  %v5332 = vpop.f32.mrf.mxu0
  %v5333 = vadd.f32 %v5044, %v5332
  %v5334 = vpop.f32.mrf.mxu0
  %v5335 = vpop.f32.mrf.mxu0
  %v5336 = vadd.f32 %v5047, %v5335
  %v5337 = vpop.f32.mrf.mxu0
  %5338 = vmatprep.mubr.bf16.mxu0 %v2399
  %5339 = vmatmul.mubr.bf16.gmra.mxu0 %v2398
  %v5340 = vpop.f32.mrf.mxu0
  %v5341 = vadd.f32 %v5052, %v5340
  %v5342 = vpop.f32.mrf.mxu0
  %v5343 = vpop.f32.mrf.mxu0
  %v5344 = vadd.f32 %v5055, %v5343
  %v5345 = vpop.f32.mrf.mxu0
  %5346 = vmatprep.mubr.bf16.mxu0 %v2415
  %5347 = vmatmul.mubr.bf16.gmra.mxu0 %v2414
  %v5348 = vpop.f32.mrf.mxu0
  %v5349 = vadd.f32 %v5060, %v5348
  %v5350 = vpop.f32.mrf.mxu0
  %v5351 = vpop.f32.mrf.mxu0
  %v5352 = vadd.f32 %v5063, %v5351
  %v5353 = vpop.f32.mrf.mxu0
  %5354 = vmatprep.mubr.bf16.mxu0 %v2431
  %5355 = vmatmul.mubr.bf16.gmra.mxu0 %v2430
  %v5356 = vpop.f32.mrf.mxu0
  %v5357 = vadd.f32 %v5068, %v5356
  %v5358 = vpop.f32.mrf.mxu0
  %v5359 = vpop.f32.mrf.mxu0
  %v5360 = vadd.f32 %v5071, %v5359
  %v5361 = vpop.f32.mrf.mxu0
  %5362 = vmatprep.mubr.bf16.mxu0 %v2447
  %5363 = vmatmul.mubr.bf16.gmra.mxu0 %v2446
  %v5364 = vpop.f32.mrf.mxu0
  %v5365 = vadd.f32 %v5076, %v5364
  %v5366 = vpop.f32.mrf.mxu0
  %v5367 = vpop.f32.mrf.mxu0
  %v5368 = vadd.f32 %v5079, %v5367
  %v5369 = vpop.f32.mrf.mxu0
  %5370 = vmatprep.mubr.bf16.mxu0 %v2463
  %5371 = vmatmul.mubr.bf16.gmra.mxu0 %v2462
  %v5372 = vpop.f32.mrf.mxu0
  %v5373 = vadd.f32 %v5084, %v5372
  %v5374 = vpop.f32.mrf.mxu0
  %v5375 = vpop.f32.mrf.mxu0
  %v5376 = vadd.f32 %v5087, %v5375
  %v5377 = vpop.f32.mrf.mxu0
  %5378 = vmatprep.mubr.bf16.mxu0 %v2479
  %5379 = vmatmul.mubr.bf16.gmra.mxu0 %v2478
  %v5380 = vpop.f32.mrf.mxu0
  %v5381 = vadd.f32 %v5092, %v5380
  %v5382 = vpop.f32.mrf.mxu0
  %v5383 = vpop.f32.mrf.mxu0
  %v5384 = vadd.f32 %v5095, %v5383
  %v5385 = vpop.f32.mrf.mxu0
  %5386 = vmatprep.mubr.bf16.mxu0 %v2495
  %5387 = vmatmul.mubr.bf16.gmra.mxu0 %v2494
  %v5388 = vpop.f32.mrf.mxu0
  %v5389 = vadd.f32 %v5100, %v5388
  %v5390 = vpop.f32.mrf.mxu0
  %v5391 = vpop.f32.mrf.mxu0
  %v5392 = vadd.f32 %v5103, %v5391
  %v5393 = vpop.f32.mrf.mxu0
  %5394 = vmatprep.mubr.bf16.mxu0 %v2511
  %5395 = vmatmul.mubr.bf16.gmra.mxu0 %v2510
  %v5396 = vpop.f32.mrf.mxu0
  %v5397 = vadd.f32 %v5108, %v5396
  %v5398 = vpop.f32.mrf.mxu0
  %v5399 = vpop.f32.mrf.mxu0
  %v5400 = vadd.f32 %v5111, %v5399
  %v5401 = vpop.f32.mrf.mxu0
  %5402 = vmatprep.mubr.bf16.mxu0 %v2527
  %5403 = vmatmul.mubr.bf16.gmra.mxu0 %v2526
  %v5404 = vpop.f32.mrf.mxu0
  %v5405 = vadd.f32 %v5116, %v5404
  %v5406 = vpop.f32.mrf.mxu0
  %v5407 = vpop.f32.mrf.mxu0
  %v5408 = vadd.f32 %v5119, %v5407
  %v5409 = vpop.f32.mrf.mxu0
  %5410 = vmatprep.mubr.bf16.mxu0 %v2543
  %5411 = vmatmul.mubr.bf16.gmra.mxu0 %v2542
  %v5412 = vpop.f32.mrf.mxu0
  %v5413 = vadd.f32 %v5124, %v5412
  %v5414 = vpop.f32.mrf.mxu0
  %v5415 = vpop.f32.mrf.mxu0
  %v5416 = vadd.f32 %v5127, %v5415
  %v5417 = vpop.f32.mrf.mxu0
  %5418 = vmatprep.mubr.bf16.mxu0 %v2559
  %5419 = vmatmul.mubr.bf16.gmra.mxu0 %v2558
  %v5420 = vpop.f32.mrf.mxu0
  %v5421 = vadd.f32 %v5132, %v5420
  %v5422 = vpop.f32.mrf.mxu0
  %v5423 = vpop.f32.mrf.mxu0
  %v5424 = vadd.f32 %v5135, %v5423
  %v5425 = vpop.f32.mrf.mxu0
  %5426 = vmatprep.mubr.bf16.mxu0 %v2575
  %5427 = vmatmul.mubr.bf16.gmra.mxu0 %v2574
  %v5428 = vpop.f32.mrf.mxu0
  %v5429 = vadd.f32 %v5140, %v5428
  %v5430 = vpop.f32.mrf.mxu0
  %v5431 = vpop.f32.mrf.mxu0
  %v5432 = vadd.f32 %v5143, %v5431
  %v5433 = vpop.f32.mrf.mxu0
  %5434 = vmatprep.mubr.bf16.mxu0 %v2591
  %5435 = vmatmul.mubr.bf16.gmra.mxu0 %v2590
  %v5436 = vpop.f32.mrf.mxu0
  %v5437 = vadd.f32 %v5148, %v5436
  %v5438 = vpop.f32.mrf.mxu0
  %v5439 = vpop.f32.mrf.mxu0
  %v5440 = vadd.f32 %v5151, %v5439
  %v5441 = vpop.f32.mrf.mxu0
  %5442 = vmatprep.mubr.bf16.mxu0 %v2607
  %5443 = vmatmul.mubr.bf16.gmra.mxu0 %v2606
  %v5444 = vpop.f32.mrf.mxu0
  %v5445 = vadd.f32 %v5156, %v5444
  %v5446 = vpop.f32.mrf.mxu0
  %v5447 = vpop.f32.mrf.mxu0
  %v5448 = vadd.f32 %v5159, %v5447
  %v5449 = vpop.f32.mrf.mxu0
  %5450 = vmatprep.mubr.bf16.mxu0 %v2623
  %5451 = vmatmul.mubr.bf16.gmra.mxu0 %v2622
  %v5452 = vpop.f32.mrf.mxu0
  %v5453 = vadd.f32 %v5164, %v5452
  %v5454 = vpop.f32.mrf.mxu0
  %v5455 = vpop.f32.mrf.mxu0
  %v5456 = vadd.f32 %v5167, %v5455
  %v5457 = vpop.f32.mrf.mxu0
  %5458 = vmatprep.mubr.bf16.mxu0 %v2639
  %5459 = vmatmul.mubr.bf16.gmra.mxu0 %v2638
  %v5460 = vpop.f32.mrf.mxu0
  %v5461 = vadd.f32 %v5172, %v5460
  %v5462 = vpop.f32.mrf.mxu0
  %v5463 = vpop.f32.mrf.mxu0
  %v5464 = vadd.f32 %v5175, %v5463
  %v5465 = vpop.f32.mrf.mxu0
  %5466 = vmatprep.mubr.bf16.mxu0 %v2655
  %5467 = vmatmul.mubr.bf16.gmra.mxu0 %v2654
  %v5468 = vpop.f32.mrf.mxu0
  %v5469 = vadd.f32 %v5180, %v5468
  %v5470 = vpop.f32.mrf.mxu0
  %v5471 = vpop.f32.mrf.mxu0
  %v5472 = vadd.f32 %v5183, %v5471
  %v5473 = vpop.f32.mrf.mxu0
  %5474 = vmatprep.mubr.bf16.mxu0 %v2671
  %5475 = vmatmul.mubr.bf16.gmra.mxu0 %v2670
  %v5476 = vpop.f32.mrf.mxu0
  %v5477 = vadd.f32 %v5188, %v5476
  %v5478 = vpop.f32.mrf.mxu0
  %v5479 = vpop.f32.mrf.mxu0
  %v5480 = vadd.f32 %v5191, %v5479
  %v5481 = vpop.f32.mrf.mxu0
  %5482 = vmatprep.mubr.bf16.mxu0 %v2687
  %5483 = vmatmul.mubr.bf16.gmra.mxu0 %v2686
  %v5484 = vpop.f32.mrf.mxu0
  %v5485 = vadd.f32 %v5196, %v5484
  %v5486 = vpop.f32.mrf.mxu0
  %v5487 = vpop.f32.mrf.mxu0
  %v5488 = vadd.f32 %v5199, %v5487
  %v5489 = vpop.f32.mrf.mxu0
  %5490 = vmatprep.mubr.bf16.mxu0 %v2703
  %5491 = vmatmul.mubr.bf16.gmra.mxu0 %v2702
  %v5492 = vpop.f32.mrf.mxu0
  %v5493 = vadd.f32 %v5204, %v5492
  %v5494 = vpop.f32.mrf.mxu0
  %v5495 = vpop.f32.mrf.mxu0
  %v5496 = vadd.f32 %v5207, %v5495
  %v5497 = vpop.f32.mrf.mxu0
  %5498 = vmatprep.mubr.bf16.mxu0 %v2719
  %5499 = vmatmul.mubr.bf16.gmra.mxu0 %v2718
  %v5500 = vpop.f32.mrf.mxu0
  %v5501 = vadd.f32 %v5212, %v5500
  %v5502 = vpop.f32.mrf.mxu0
  %v5503 = vpop.f32.mrf.mxu0
  %v5504 = vadd.f32 %v5215, %v5503
  %v5505 = vpop.f32.mrf.mxu0
  %5506 = vmatprep.mubr.bf16.mxu0 %v2735
  %5507 = vmatmul.mubr.bf16.gmra.mxu0 %v2734
  %v5508 = vpop.f32.mrf.mxu0
  %v5509 = vadd.f32 %v5220, %v5508
  %v5510 = vpop.f32.mrf.mxu0
  %v5511 = vpop.f32.mrf.mxu0
  %v5512 = vadd.f32 %v5223, %v5511
  %v5513 = vpop.f32.mrf.mxu0
  %5514 = vmatprep.mubr.bf16.mxu0 %v2751
  %5515 = vmatmul.mubr.bf16.gmra.mxu0 %v2750
  %v5516 = vpop.f32.mrf.mxu0
  %v5517 = vadd.f32 %v5228, %v5516
  %v5518 = vpop.f32.mrf.mxu0
  %v5519 = vpop.f32.mrf.mxu0
  %v5520 = vadd.f32 %v5231, %v5519
  %v5521 = vpop.f32.mrf.mxu0
  %5522 = vmatprep.mubr.bf16.mxu0 %v2767
  %5523 = vmatmul.mubr.bf16.gmra.mxu0 %v2766
  %v5524 = vpop.f32.mrf.mxu0
  %v5525 = vadd.f32 %v5236, %v5524
  %v5526 = vpop.f32.mrf.mxu0
  %v5527 = vpop.f32.mrf.mxu0
  %v5528 = vadd.f32 %v5239, %v5527
  %v5529 = vpop.f32.mrf.mxu0
  %5530 = vmatprep.mubr.bf16.mxu0 %v2783
  %5531 = vmatmul.mubr.bf16.gmra.mxu0 %v2782
  %v5532 = vpop.f32.mrf.mxu0
  %v5533 = vadd.f32 %v5244, %v5532
  %v5534 = vpop.f32.mrf.mxu0
  %v5535 = vpop.f32.mrf.mxu0
  %v5536 = vadd.f32 %v5247, %v5535
  %v5537 = vpop.f32.mrf.mxu0
  %5538 = vmatprep.mubr.bf16.mxu0 %v2799
  %5539 = vmatmul.mubr.bf16.gmra.mxu0 %v2798
  %v5540 = vpop.f32.mrf.mxu0
  %v5541 = vadd.f32 %v5252, %v5540
  %v5542 = vpop.f32.mrf.mxu0
  %v5543 = vpop.f32.mrf.mxu0
  %v5544 = vadd.f32 %v5255, %v5543
  %v5545 = vpop.f32.mrf.mxu0
  %5546 = vmatprep.mubr.bf16.mxu0 %v2815
  %5547 = vmatmul.mubr.bf16.gmra.mxu0 %v2814
  %v5548 = vpop.f32.mrf.mxu0
  %v5549 = vadd.f32 %v5260, %v5548
  %v5550 = vpop.f32.mrf.mxu0
  %v5551 = vpop.f32.mrf.mxu0
  %v5552 = vadd.f32 %v5263, %v5551
  %v5553 = vpop.f32.mrf.mxu0
  %5554 = vmatprep.mubr.bf16.mxu0 %v2831
  %5555 = vmatmul.mubr.bf16.gmra.mxu0 %v2830
  %v5556 = vpop.f32.mrf.mxu0
  %v5557 = vadd.f32 %v5268, %v5556
  %v5558 = vpop.f32.mrf.mxu0
  %v5559 = vpop.f32.mrf.mxu0
  %v5560 = vadd.f32 %v5271, %v5559
  %v5561 = vpop.f32.mrf.mxu0
  %5562 = vdwg.mxu0
  %5563 = vmatprep.subr.bf16.mxu0 0
  %5564 = vmatpush1.bf16.msra.mxu0 %v3949
  %5565 = vmatprep.subr.bf16.mxu0 0
  %5566 = vmatpush1.bf16.msra.mxu0 %v3948
  %5567 = vmatprep.subr.bf16.mxu0 0
  %5568 = vmatpush1.bf16.msra.mxu0 %v3947
  %5569 = vmatprep.subr.bf16.mxu0 0
  %5570 = vmatpush1.bf16.msra.mxu0 %v3946
  %5571 = vmatprep.subr.bf16.mxu0 0
  %5572 = vmatpush1.bf16.msra.mxu0 %v3945
  %5573 = vmatprep.subr.bf16.mxu0 0
  %5574 = vmatpush1.bf16.msra.mxu0 %v3944
  %5575 = vmatprep.subr.bf16.mxu0 0
  %5576 = vmatpush1.bf16.msra.mxu0 %v3943
  %5577 = vmatprep.subr.bf16.mxu0 0
  %5578 = vmatpush1.bf16.msra.mxu0 %v3942
  %5579 = vmatprep.subr.bf16.mxu0 0
  %5580 = vmatpush2.bf16.msra.mxu0 %v3957
  %5581 = vmatprep.subr.bf16.mxu0 0
  %5582 = vmatpush2.bf16.msra.mxu0 %v3956
  %5583 = vmatprep.subr.bf16.mxu0 0
  %5584 = vmatpush2.bf16.msra.mxu0 %v3955
  %5585 = vmatprep.subr.bf16.mxu0 0
  %5586 = vmatpush2.bf16.msra.mxu0 %v3954
  %5587 = vmatprep.subr.bf16.mxu0 0
  %5588 = vmatpush2.bf16.msra.mxu0 %v3953
  %5589 = vmatprep.subr.bf16.mxu0 0
  %5590 = vmatpush2.bf16.msra.mxu0 %v3952
  %5591 = vmatprep.subr.bf16.mxu0 0
  %5592 = vmatpush2.bf16.msra.mxu0 %v3951
  %5593 = vmatprep.subr.bf16.mxu0 0
  %5594 = vmatpush2.bf16.msra.mxu0 %v3950
  %5595 = vmatprep.mubr.bf16.mxu0 %v2337
  %5596 = vmatmul.mubr.bf16.gmra.mxu0 %v2336
  %v5597 = vpop.f32.mrf.mxu0
  %v5598 = vadd.f32 %v5309, %v5597
  %v5599 = vpop.f32.mrf.mxu0
  %v5600 = vpop.f32.mrf.mxu0
  %v5601 = vadd.f32 %v5312, %v5600
  %v5602 = vpop.f32.mrf.mxu0
  %5603 = vmatprep.mubr.bf16.mxu0 %v2353
  %5604 = vmatmul.mubr.bf16.gmra.mxu0 %v2352
  %v5605 = vpop.f32.mrf.mxu0
  %v5606 = vadd.f32 %v5317, %v5605
  %v5607 = vpop.f32.mrf.mxu0
  %v5608 = vpop.f32.mrf.mxu0
  %v5609 = vadd.f32 %v5320, %v5608
  %v5610 = vpop.f32.mrf.mxu0
  %5611 = vmatprep.mubr.bf16.mxu0 %v2369
  %5612 = vmatmul.mubr.bf16.gmra.mxu0 %v2368
  %v5613 = vpop.f32.mrf.mxu0
  %v5614 = vadd.f32 %v5325, %v5613
  %v5615 = vpop.f32.mrf.mxu0
  %v5616 = vpop.f32.mrf.mxu0
  %v5617 = vadd.f32 %v5328, %v5616
  %v5618 = vpop.f32.mrf.mxu0
  %5619 = vmatprep.mubr.bf16.mxu0 %v2385
  %5620 = vmatmul.mubr.bf16.gmra.mxu0 %v2384
  %v5621 = vpop.f32.mrf.mxu0
  %v5622 = vadd.f32 %v5333, %v5621
  %v5623 = vpop.f32.mrf.mxu0
  %v5624 = vpop.f32.mrf.mxu0
  %v5625 = vadd.f32 %v5336, %v5624
  %v5626 = vpop.f32.mrf.mxu0
  %5627 = vmatprep.mubr.bf16.mxu0 %v2401
  %5628 = vmatmul.mubr.bf16.gmra.mxu0 %v2400
  %v5629 = vpop.f32.mrf.mxu0
  %v5630 = vadd.f32 %v5341, %v5629
  %v5631 = vpop.f32.mrf.mxu0
  %v5632 = vpop.f32.mrf.mxu0
  %v5633 = vadd.f32 %v5344, %v5632
  %v5634 = vpop.f32.mrf.mxu0
  %5635 = vmatprep.mubr.bf16.mxu0 %v2417
  %5636 = vmatmul.mubr.bf16.gmra.mxu0 %v2416
  %v5637 = vpop.f32.mrf.mxu0
  %v5638 = vadd.f32 %v5349, %v5637
  %v5639 = vpop.f32.mrf.mxu0
  %v5640 = vpop.f32.mrf.mxu0
  %v5641 = vadd.f32 %v5352, %v5640
  %v5642 = vpop.f32.mrf.mxu0
  %5643 = vmatprep.mubr.bf16.mxu0 %v2433
  %5644 = vmatmul.mubr.bf16.gmra.mxu0 %v2432
  %v5645 = vpop.f32.mrf.mxu0
  %v5646 = vadd.f32 %v5357, %v5645
  %v5647 = vpop.f32.mrf.mxu0
  %v5648 = vpop.f32.mrf.mxu0
  %v5649 = vadd.f32 %v5360, %v5648
  %v5650 = vpop.f32.mrf.mxu0
  %5651 = vmatprep.mubr.bf16.mxu0 %v2449
  %5652 = vmatmul.mubr.bf16.gmra.mxu0 %v2448
  %v5653 = vpop.f32.mrf.mxu0
  %v5654 = vadd.f32 %v5365, %v5653
  %v5655 = vpop.f32.mrf.mxu0
  %v5656 = vpop.f32.mrf.mxu0
  %v5657 = vadd.f32 %v5368, %v5656
  %v5658 = vpop.f32.mrf.mxu0
  %5659 = vmatprep.mubr.bf16.mxu0 %v2465
  %5660 = vmatmul.mubr.bf16.gmra.mxu0 %v2464
  %v5661 = vpop.f32.mrf.mxu0
  %v5662 = vadd.f32 %v5373, %v5661
  %v5663 = vpop.f32.mrf.mxu0
  %v5664 = vpop.f32.mrf.mxu0
  %v5665 = vadd.f32 %v5376, %v5664
  %v5666 = vpop.f32.mrf.mxu0
  %5667 = vmatprep.mubr.bf16.mxu0 %v2481
  %5668 = vmatmul.mubr.bf16.gmra.mxu0 %v2480
  %v5669 = vpop.f32.mrf.mxu0
  %v5670 = vadd.f32 %v5381, %v5669
  %v5671 = vpop.f32.mrf.mxu0
  %v5672 = vpop.f32.mrf.mxu0
  %v5673 = vadd.f32 %v5384, %v5672
  %v5674 = vpop.f32.mrf.mxu0
  %5675 = vmatprep.mubr.bf16.mxu0 %v2497
  %5676 = vmatmul.mubr.bf16.gmra.mxu0 %v2496
  %v5677 = vpop.f32.mrf.mxu0
  %v5678 = vadd.f32 %v5389, %v5677
  %v5679 = vpop.f32.mrf.mxu0
  %v5680 = vpop.f32.mrf.mxu0
  %v5681 = vadd.f32 %v5392, %v5680
  %v5682 = vpop.f32.mrf.mxu0
  %5683 = vmatprep.mubr.bf16.mxu0 %v2513
  %5684 = vmatmul.mubr.bf16.gmra.mxu0 %v2512
  %v5685 = vpop.f32.mrf.mxu0
  %v5686 = vadd.f32 %v5397, %v5685
  %v5687 = vpop.f32.mrf.mxu0
  %v5688 = vpop.f32.mrf.mxu0
  %v5689 = vadd.f32 %v5400, %v5688
  %v5690 = vpop.f32.mrf.mxu0
  %5691 = vmatprep.mubr.bf16.mxu0 %v2529
  %5692 = vmatmul.mubr.bf16.gmra.mxu0 %v2528
  %v5693 = vpop.f32.mrf.mxu0
  %v5694 = vadd.f32 %v5405, %v5693
  %v5695 = vpop.f32.mrf.mxu0
  %v5696 = vpop.f32.mrf.mxu0
  %v5697 = vadd.f32 %v5408, %v5696
  %v5698 = vpop.f32.mrf.mxu0
  %5699 = vmatprep.mubr.bf16.mxu0 %v2545
  %5700 = vmatmul.mubr.bf16.gmra.mxu0 %v2544
  %v5701 = vpop.f32.mrf.mxu0
  %v5702 = vadd.f32 %v5413, %v5701
  %v5703 = vpop.f32.mrf.mxu0
  %v5704 = vpop.f32.mrf.mxu0
  %v5705 = vadd.f32 %v5416, %v5704
  %v5706 = vpop.f32.mrf.mxu0
  %5707 = vmatprep.mubr.bf16.mxu0 %v2561
  %5708 = vmatmul.mubr.bf16.gmra.mxu0 %v2560
  %v5709 = vpop.f32.mrf.mxu0
  %v5710 = vadd.f32 %v5421, %v5709
  %v5711 = vpop.f32.mrf.mxu0
  %v5712 = vpop.f32.mrf.mxu0
  %v5713 = vadd.f32 %v5424, %v5712
  %v5714 = vpop.f32.mrf.mxu0
  %5715 = vmatprep.mubr.bf16.mxu0 %v2577
  %5716 = vmatmul.mubr.bf16.gmra.mxu0 %v2576
  %v5717 = vpop.f32.mrf.mxu0
  %v5718 = vadd.f32 %v5429, %v5717
  %v5719 = vpop.f32.mrf.mxu0
  %v5720 = vpop.f32.mrf.mxu0
  %v5721 = vadd.f32 %v5432, %v5720
  %v5722 = vpop.f32.mrf.mxu0
  %5723 = vmatprep.mubr.bf16.mxu0 %v2593
  %5724 = vmatmul.mubr.bf16.gmra.mxu0 %v2592
  %v5725 = vpop.f32.mrf.mxu0
  %v5726 = vadd.f32 %v5437, %v5725
  %v5727 = vpop.f32.mrf.mxu0
  %v5728 = vpop.f32.mrf.mxu0
  %v5729 = vadd.f32 %v5440, %v5728
  %v5730 = vpop.f32.mrf.mxu0
  %5731 = vmatprep.mubr.bf16.mxu0 %v2609
  %5732 = vmatmul.mubr.bf16.gmra.mxu0 %v2608
  %v5733 = vpop.f32.mrf.mxu0
  %v5734 = vadd.f32 %v5445, %v5733
  %v5735 = vpop.f32.mrf.mxu0
  %v5736 = vpop.f32.mrf.mxu0
  %v5737 = vadd.f32 %v5448, %v5736
  %v5738 = vpop.f32.mrf.mxu0
  %5739 = vmatprep.mubr.bf16.mxu0 %v2625
  %5740 = vmatmul.mubr.bf16.gmra.mxu0 %v2624
  %v5741 = vpop.f32.mrf.mxu0
  %v5742 = vadd.f32 %v5453, %v5741
  %v5743 = vpop.f32.mrf.mxu0
  %v5744 = vpop.f32.mrf.mxu0
  %v5745 = vadd.f32 %v5456, %v5744
  %v5746 = vpop.f32.mrf.mxu0
  %5747 = vmatprep.mubr.bf16.mxu0 %v2641
  %5748 = vmatmul.mubr.bf16.gmra.mxu0 %v2640
  %v5749 = vpop.f32.mrf.mxu0
  %v5750 = vadd.f32 %v5461, %v5749
  %v5751 = vpop.f32.mrf.mxu0
  %v5752 = vpop.f32.mrf.mxu0
  %v5753 = vadd.f32 %v5464, %v5752
  %v5754 = vpop.f32.mrf.mxu0
  %5755 = vmatprep.mubr.bf16.mxu0 %v2657
  %5756 = vmatmul.mubr.bf16.gmra.mxu0 %v2656
  %v5757 = vpop.f32.mrf.mxu0
  %v5758 = vadd.f32 %v5469, %v5757
  %v5759 = vpop.f32.mrf.mxu0
  %v5760 = vpop.f32.mrf.mxu0
  %v5761 = vadd.f32 %v5472, %v5760
  %v5762 = vpop.f32.mrf.mxu0
  %5763 = vmatprep.mubr.bf16.mxu0 %v2673
  %5764 = vmatmul.mubr.bf16.gmra.mxu0 %v2672
  %v5765 = vpop.f32.mrf.mxu0
  %v5766 = vadd.f32 %v5477, %v5765
  %v5767 = vpop.f32.mrf.mxu0
  %v5768 = vpop.f32.mrf.mxu0
  %v5769 = vadd.f32 %v5480, %v5768
  %v5770 = vpop.f32.mrf.mxu0
  %5771 = vmatprep.mubr.bf16.mxu0 %v2689
  %5772 = vmatmul.mubr.bf16.gmra.mxu0 %v2688
  %v5773 = vpop.f32.mrf.mxu0
  %v5774 = vadd.f32 %v5485, %v5773
  %v5775 = vpop.f32.mrf.mxu0
  %v5776 = vpop.f32.mrf.mxu0
  %v5777 = vadd.f32 %v5488, %v5776
  %v5778 = vpop.f32.mrf.mxu0
  %5779 = vmatprep.mubr.bf16.mxu0 %v2705
  %5780 = vmatmul.mubr.bf16.gmra.mxu0 %v2704
  %v5781 = vpop.f32.mrf.mxu0
  %v5782 = vadd.f32 %v5493, %v5781
  %v5783 = vpop.f32.mrf.mxu0
  %v5784 = vpop.f32.mrf.mxu0
  %v5785 = vadd.f32 %v5496, %v5784
  %v5786 = vpop.f32.mrf.mxu0
  %5787 = vmatprep.mubr.bf16.mxu0 %v2721
  %5788 = vmatmul.mubr.bf16.gmra.mxu0 %v2720
  %v5789 = vpop.f32.mrf.mxu0
  %v5790 = vadd.f32 %v5501, %v5789
  %v5791 = vpop.f32.mrf.mxu0
  %v5792 = vpop.f32.mrf.mxu0
  %v5793 = vadd.f32 %v5504, %v5792
  %v5794 = vpop.f32.mrf.mxu0
  %5795 = vmatprep.mubr.bf16.mxu0 %v2737
  %5796 = vmatmul.mubr.bf16.gmra.mxu0 %v2736
  %v5797 = vpop.f32.mrf.mxu0
  %v5798 = vadd.f32 %v5509, %v5797
  %v5799 = vpop.f32.mrf.mxu0
  %v5800 = vpop.f32.mrf.mxu0
  %v5801 = vadd.f32 %v5512, %v5800
  %v5802 = vpop.f32.mrf.mxu0
  %5803 = vmatprep.mubr.bf16.mxu0 %v2753
  %5804 = vmatmul.mubr.bf16.gmra.mxu0 %v2752
  %v5805 = vpop.f32.mrf.mxu0
  %v5806 = vadd.f32 %v5517, %v5805
  %v5807 = vpop.f32.mrf.mxu0
  %v5808 = vpop.f32.mrf.mxu0
  %v5809 = vadd.f32 %v5520, %v5808
  %v5810 = vpop.f32.mrf.mxu0
  %5811 = vmatprep.mubr.bf16.mxu0 %v2769
  %5812 = vmatmul.mubr.bf16.gmra.mxu0 %v2768
  %v5813 = vpop.f32.mrf.mxu0
  %v5814 = vadd.f32 %v5525, %v5813
  %v5815 = vpop.f32.mrf.mxu0
  %v5816 = vpop.f32.mrf.mxu0
  %v5817 = vadd.f32 %v5528, %v5816
  %v5818 = vpop.f32.mrf.mxu0
  %5819 = vmatprep.mubr.bf16.mxu0 %v2785
  %5820 = vmatmul.mubr.bf16.gmra.mxu0 %v2784
  %v5821 = vpop.f32.mrf.mxu0
  %v5822 = vadd.f32 %v5533, %v5821
  %v5823 = vpop.f32.mrf.mxu0
  %v5824 = vpop.f32.mrf.mxu0
  %v5825 = vadd.f32 %v5536, %v5824
  %v5826 = vpop.f32.mrf.mxu0
  %5827 = vmatprep.mubr.bf16.mxu0 %v2801
  %5828 = vmatmul.mubr.bf16.gmra.mxu0 %v2800
  %v5829 = vpop.f32.mrf.mxu0
  %v5830 = vadd.f32 %v5541, %v5829
  %v5831 = vpop.f32.mrf.mxu0
  %v5832 = vpop.f32.mrf.mxu0
  %v5833 = vadd.f32 %v5544, %v5832
  %v5834 = vpop.f32.mrf.mxu0
  %5835 = vmatprep.mubr.bf16.mxu0 %v2817
  %5836 = vmatmul.mubr.bf16.gmra.mxu0 %v2816
  %v5837 = vpop.f32.mrf.mxu0
  %v5838 = vadd.f32 %v5549, %v5837
  %v5839 = vpop.f32.mrf.mxu0
  %v5840 = vpop.f32.mrf.mxu0
  %v5841 = vadd.f32 %v5552, %v5840
  %v5842 = vpop.f32.mrf.mxu0
  %5843 = vmatprep.mubr.bf16.mxu0 %v2833
  %5844 = vmatmul.mubr.bf16.gmra.mxu0 %v2832
  %v5845 = vpop.f32.mrf.mxu0
  %v5846 = vadd.f32 %v5557, %v5845
  %v5847 = vpop.f32.mrf.mxu0
  %v5848 = vpop.f32.mrf.mxu0
  %v5849 = vadd.f32 %v5560, %v5848
  %v5850 = vpop.f32.mrf.mxu0
  %5851 = vdwg.mxu0
  %5852 = vmatprep.subr.bf16.mxu0 0
  %5853 = vmatpush1.bf16.msra.mxu0 %v3965
  %5854 = vmatprep.subr.bf16.mxu0 0
  %5855 = vmatpush1.bf16.msra.mxu0 %v3964
  %5856 = vmatprep.subr.bf16.mxu0 0
  %5857 = vmatpush1.bf16.msra.mxu0 %v3963
  %5858 = vmatprep.subr.bf16.mxu0 0
  %5859 = vmatpush1.bf16.msra.mxu0 %v3962
  %5860 = vmatprep.subr.bf16.mxu0 0
  %5861 = vmatpush1.bf16.msra.mxu0 %v3961
  %5862 = vmatprep.subr.bf16.mxu0 0
  %5863 = vmatpush1.bf16.msra.mxu0 %v3960
  %5864 = vmatprep.subr.bf16.mxu0 0
  %5865 = vmatpush1.bf16.msra.mxu0 %v3959
  %5866 = vmatprep.subr.bf16.mxu0 0
  %5867 = vmatpush1.bf16.msra.mxu0 %v3958
  %5868 = vmatprep.subr.bf16.mxu0 0
  %5869 = vmatpush2.bf16.msra.mxu0 %v3973
  %5870 = vmatprep.subr.bf16.mxu0 0
  %5871 = vmatpush2.bf16.msra.mxu0 %v3972
  %5872 = vmatprep.subr.bf16.mxu0 0
  %5873 = vmatpush2.bf16.msra.mxu0 %v3971
  %5874 = vmatprep.subr.bf16.mxu0 0
  %5875 = vmatpush2.bf16.msra.mxu0 %v3970
  %5876 = vmatprep.subr.bf16.mxu0 0
  %5877 = vmatpush2.bf16.msra.mxu0 %v3969
  %5878 = vmatprep.subr.bf16.mxu0 0
  %5879 = vmatpush2.bf16.msra.mxu0 %v3968
  %5880 = vmatprep.subr.bf16.mxu0 0
  %5881 = vmatpush2.bf16.msra.mxu0 %v3967
  %5882 = vmatprep.subr.bf16.mxu0 0
  %5883 = vmatpush2.bf16.msra.mxu0 %v3966
  %5884 = vmatprep.mubr.bf16.mxu0 %v2339
  %5885 = vmatmul.mubr.bf16.gmra.mxu0 %v2338
  %v5886 = vpop.f32.mrf.mxu0
  %v5887 = vadd.f32 %v5598, %v5886
  %v5888 = vpop.f32.mrf.mxu0
  %v5889 = vpop.f32.mrf.mxu0
  %v5890 = vadd.f32 %v5601, %v5889
  %v5891 = vpop.f32.mrf.mxu0
  %5892 = vmatprep.mubr.bf16.mxu0 %v2355
  %5893 = vmatmul.mubr.bf16.gmra.mxu0 %v2354
  %v5894 = vpop.f32.mrf.mxu0
  %v5895 = vadd.f32 %v5606, %v5894
  %v5896 = vpop.f32.mrf.mxu0
  %v5897 = vpop.f32.mrf.mxu0
  %v5898 = vadd.f32 %v5609, %v5897
  %v5899 = vpop.f32.mrf.mxu0
  %5900 = vmatprep.mubr.bf16.mxu0 %v2371
  %5901 = vmatmul.mubr.bf16.gmra.mxu0 %v2370
  %v5902 = vpop.f32.mrf.mxu0
  %v5903 = vadd.f32 %v5614, %v5902
  %v5904 = vpop.f32.mrf.mxu0
  %v5905 = vpop.f32.mrf.mxu0
  %v5906 = vadd.f32 %v5617, %v5905
  %v5907 = vpop.f32.mrf.mxu0
  %5908 = vmatprep.mubr.bf16.mxu0 %v2387
  %5909 = vmatmul.mubr.bf16.gmra.mxu0 %v2386
  %v5910 = vpop.f32.mrf.mxu0
  %v5911 = vadd.f32 %v5622, %v5910
  %v5912 = vpop.f32.mrf.mxu0
  %v5913 = vpop.f32.mrf.mxu0
  %v5914 = vadd.f32 %v5625, %v5913
  %v5915 = vpop.f32.mrf.mxu0
  %5916 = vmatprep.mubr.bf16.mxu0 %v2403
  %5917 = vmatmul.mubr.bf16.gmra.mxu0 %v2402
  %v5918 = vpop.f32.mrf.mxu0
  %v5919 = vadd.f32 %v5630, %v5918
  %v5920 = vpop.f32.mrf.mxu0
  %v5921 = vpop.f32.mrf.mxu0
  %v5922 = vadd.f32 %v5633, %v5921
  %v5923 = vpop.f32.mrf.mxu0
  %5924 = vmatprep.mubr.bf16.mxu0 %v2419
  %5925 = vmatmul.mubr.bf16.gmra.mxu0 %v2418
  %v5926 = vpop.f32.mrf.mxu0
  %v5927 = vadd.f32 %v5638, %v5926
  %v5928 = vpop.f32.mrf.mxu0
  %v5929 = vpop.f32.mrf.mxu0
  %v5930 = vadd.f32 %v5641, %v5929
  %v5931 = vpop.f32.mrf.mxu0
  %5932 = vmatprep.mubr.bf16.mxu0 %v2435
  %5933 = vmatmul.mubr.bf16.gmra.mxu0 %v2434
  %v5934 = vpop.f32.mrf.mxu0
  %v5935 = vadd.f32 %v5646, %v5934
  %v5936 = vpop.f32.mrf.mxu0
  %v5937 = vpop.f32.mrf.mxu0
  %v5938 = vadd.f32 %v5649, %v5937
  %v5939 = vpop.f32.mrf.mxu0
  %5940 = vmatprep.mubr.bf16.mxu0 %v2451
  %5941 = vmatmul.mubr.bf16.gmra.mxu0 %v2450
  %v5942 = vpop.f32.mrf.mxu0
  %v5943 = vadd.f32 %v5654, %v5942
  %v5944 = vpop.f32.mrf.mxu0
  %v5945 = vpop.f32.mrf.mxu0
  %v5946 = vadd.f32 %v5657, %v5945
  %v5947 = vpop.f32.mrf.mxu0
  %5948 = vmatprep.mubr.bf16.mxu0 %v2467
  %5949 = vmatmul.mubr.bf16.gmra.mxu0 %v2466
  %v5950 = vpop.f32.mrf.mxu0
  %v5951 = vadd.f32 %v5662, %v5950
  %v5952 = vpop.f32.mrf.mxu0
  %v5953 = vpop.f32.mrf.mxu0
  %v5954 = vadd.f32 %v5665, %v5953
  %v5955 = vpop.f32.mrf.mxu0
  %5956 = vmatprep.mubr.bf16.mxu0 %v2483
  %5957 = vmatmul.mubr.bf16.gmra.mxu0 %v2482
  %v5958 = vpop.f32.mrf.mxu0
  %v5959 = vadd.f32 %v5670, %v5958
  %v5960 = vpop.f32.mrf.mxu0
  %v5961 = vpop.f32.mrf.mxu0
  %v5962 = vadd.f32 %v5673, %v5961
  %v5963 = vpop.f32.mrf.mxu0
  %5964 = vmatprep.mubr.bf16.mxu0 %v2499
  %5965 = vmatmul.mubr.bf16.gmra.mxu0 %v2498
  %v5966 = vpop.f32.mrf.mxu0
  %v5967 = vadd.f32 %v5678, %v5966
  %v5968 = vpop.f32.mrf.mxu0
  %v5969 = vpop.f32.mrf.mxu0
  %v5970 = vadd.f32 %v5681, %v5969
  %v5971 = vpop.f32.mrf.mxu0
  %5972 = vmatprep.mubr.bf16.mxu0 %v2515
  %5973 = vmatmul.mubr.bf16.gmra.mxu0 %v2514
  %v5974 = vpop.f32.mrf.mxu0
  %v5975 = vadd.f32 %v5686, %v5974
  %v5976 = vpop.f32.mrf.mxu0
  %v5977 = vpop.f32.mrf.mxu0
  %v5978 = vadd.f32 %v5689, %v5977
  %v5979 = vpop.f32.mrf.mxu0
  %5980 = vmatprep.mubr.bf16.mxu0 %v2531
  %5981 = vmatmul.mubr.bf16.gmra.mxu0 %v2530
  %v5982 = vpop.f32.mrf.mxu0
  %v5983 = vadd.f32 %v5694, %v5982
  %v5984 = vpop.f32.mrf.mxu0
  %v5985 = vpop.f32.mrf.mxu0
  %v5986 = vadd.f32 %v5697, %v5985
  %v5987 = vpop.f32.mrf.mxu0
  %5988 = vmatprep.mubr.bf16.mxu0 %v2547
  %5989 = vmatmul.mubr.bf16.gmra.mxu0 %v2546
  %v5990 = vpop.f32.mrf.mxu0
  %v5991 = vadd.f32 %v5702, %v5990
  %v5992 = vpop.f32.mrf.mxu0
  %v5993 = vpop.f32.mrf.mxu0
  %v5994 = vadd.f32 %v5705, %v5993
  %v5995 = vpop.f32.mrf.mxu0
  %5996 = vmatprep.mubr.bf16.mxu0 %v2563
  %5997 = vmatmul.mubr.bf16.gmra.mxu0 %v2562
  %v5998 = vpop.f32.mrf.mxu0
  %v5999 = vadd.f32 %v5710, %v5998
  %v6000 = vpop.f32.mrf.mxu0
  %v6001 = vpop.f32.mrf.mxu0
  %v6002 = vadd.f32 %v5713, %v6001
  %v6003 = vpop.f32.mrf.mxu0
  %6004 = vmatprep.mubr.bf16.mxu0 %v2579
  %6005 = vmatmul.mubr.bf16.gmra.mxu0 %v2578
  %v6006 = vpop.f32.mrf.mxu0
  %v6007 = vadd.f32 %v5718, %v6006
  %v6008 = vpop.f32.mrf.mxu0
  %v6009 = vpop.f32.mrf.mxu0
  %v6010 = vadd.f32 %v5721, %v6009
  %v6011 = vpop.f32.mrf.mxu0
  %6012 = vmatprep.mubr.bf16.mxu0 %v2595
  %6013 = vmatmul.mubr.bf16.gmra.mxu0 %v2594
  %v6014 = vpop.f32.mrf.mxu0
  %v6015 = vadd.f32 %v5726, %v6014
  %v6016 = vpop.f32.mrf.mxu0
  %v6017 = vpop.f32.mrf.mxu0
  %v6018 = vadd.f32 %v5729, %v6017
  %v6019 = vpop.f32.mrf.mxu0
  %6020 = vmatprep.mubr.bf16.mxu0 %v2611
  %6021 = vmatmul.mubr.bf16.gmra.mxu0 %v2610
  %v6022 = vpop.f32.mrf.mxu0
  %v6023 = vadd.f32 %v5734, %v6022
  %v6024 = vpop.f32.mrf.mxu0
  %v6025 = vpop.f32.mrf.mxu0
  %v6026 = vadd.f32 %v5737, %v6025
  %v6027 = vpop.f32.mrf.mxu0
  %6028 = vmatprep.mubr.bf16.mxu0 %v2627
  %6029 = vmatmul.mubr.bf16.gmra.mxu0 %v2626
  %v6030 = vpop.f32.mrf.mxu0
  %v6031 = vadd.f32 %v5742, %v6030
  %v6032 = vpop.f32.mrf.mxu0
  %v6033 = vpop.f32.mrf.mxu0
  %v6034 = vadd.f32 %v5745, %v6033
  %v6035 = vpop.f32.mrf.mxu0
  %6036 = vmatprep.mubr.bf16.mxu0 %v2643
  %6037 = vmatmul.mubr.bf16.gmra.mxu0 %v2642
  %v6038 = vpop.f32.mrf.mxu0
  %v6039 = vadd.f32 %v5750, %v6038
  %v6040 = vpop.f32.mrf.mxu0
  %v6041 = vpop.f32.mrf.mxu0
  %v6042 = vadd.f32 %v5753, %v6041
  %v6043 = vpop.f32.mrf.mxu0
  %6044 = vmatprep.mubr.bf16.mxu0 %v2659
  %6045 = vmatmul.mubr.bf16.gmra.mxu0 %v2658
  %v6046 = vpop.f32.mrf.mxu0
  %v6047 = vadd.f32 %v5758, %v6046
  %v6048 = vpop.f32.mrf.mxu0
  %v6049 = vpop.f32.mrf.mxu0
  %v6050 = vadd.f32 %v5761, %v6049
  %v6051 = vpop.f32.mrf.mxu0
  %6052 = vmatprep.mubr.bf16.mxu0 %v2675
  %6053 = vmatmul.mubr.bf16.gmra.mxu0 %v2674
  %v6054 = vpop.f32.mrf.mxu0
  %v6055 = vadd.f32 %v5766, %v6054
  %v6056 = vpop.f32.mrf.mxu0
  %v6057 = vpop.f32.mrf.mxu0
  %v6058 = vadd.f32 %v5769, %v6057
  %v6059 = vpop.f32.mrf.mxu0
  %6060 = vmatprep.mubr.bf16.mxu0 %v2691
  %6061 = vmatmul.mubr.bf16.gmra.mxu0 %v2690
  %v6062 = vpop.f32.mrf.mxu0
  %v6063 = vadd.f32 %v5774, %v6062
  %v6064 = vpop.f32.mrf.mxu0
  %v6065 = vpop.f32.mrf.mxu0
  %v6066 = vadd.f32 %v5777, %v6065
  %v6067 = vpop.f32.mrf.mxu0
  %6068 = vmatprep.mubr.bf16.mxu0 %v2707
  %6069 = vmatmul.mubr.bf16.gmra.mxu0 %v2706
  %v6070 = vpop.f32.mrf.mxu0
  %v6071 = vadd.f32 %v5782, %v6070
  %v6072 = vpop.f32.mrf.mxu0
  %v6073 = vpop.f32.mrf.mxu0
  %v6074 = vadd.f32 %v5785, %v6073
  %v6075 = vpop.f32.mrf.mxu0
  %6076 = vmatprep.mubr.bf16.mxu0 %v2723
  %6077 = vmatmul.mubr.bf16.gmra.mxu0 %v2722
  %v6078 = vpop.f32.mrf.mxu0
  %v6079 = vadd.f32 %v5790, %v6078
  %v6080 = vpop.f32.mrf.mxu0
  %v6081 = vpop.f32.mrf.mxu0
  %v6082 = vadd.f32 %v5793, %v6081
  %v6083 = vpop.f32.mrf.mxu0
  %6084 = vmatprep.mubr.bf16.mxu0 %v2739
  %6085 = vmatmul.mubr.bf16.gmra.mxu0 %v2738
  %v6086 = vpop.f32.mrf.mxu0
  %v6087 = vadd.f32 %v5798, %v6086
  %v6088 = vpop.f32.mrf.mxu0
  %v6089 = vpop.f32.mrf.mxu0
  %v6090 = vadd.f32 %v5801, %v6089
  %v6091 = vpop.f32.mrf.mxu0
  %6092 = vmatprep.mubr.bf16.mxu0 %v2755
  %6093 = vmatmul.mubr.bf16.gmra.mxu0 %v2754
  %v6094 = vpop.f32.mrf.mxu0
  %v6095 = vadd.f32 %v5806, %v6094
  %v6096 = vpop.f32.mrf.mxu0
  %v6097 = vpop.f32.mrf.mxu0
  %v6098 = vadd.f32 %v5809, %v6097
  %v6099 = vpop.f32.mrf.mxu0
  %6100 = vmatprep.mubr.bf16.mxu0 %v2771
  %6101 = vmatmul.mubr.bf16.gmra.mxu0 %v2770
  %v6102 = vpop.f32.mrf.mxu0
  %v6103 = vadd.f32 %v5814, %v6102
  %v6104 = vpop.f32.mrf.mxu0
  %v6105 = vpop.f32.mrf.mxu0
  %v6106 = vadd.f32 %v5817, %v6105
  %v6107 = vpop.f32.mrf.mxu0
  %6108 = vmatprep.mubr.bf16.mxu0 %v2787
  %6109 = vmatmul.mubr.bf16.gmra.mxu0 %v2786
  %v6110 = vpop.f32.mrf.mxu0
  %v6111 = vadd.f32 %v5822, %v6110
  %v6112 = vpop.f32.mrf.mxu0
  %v6113 = vpop.f32.mrf.mxu0
  %v6114 = vadd.f32 %v5825, %v6113
  %v6115 = vpop.f32.mrf.mxu0
  %6116 = vmatprep.mubr.bf16.mxu0 %v2803
  %6117 = vmatmul.mubr.bf16.gmra.mxu0 %v2802
  %v6118 = vpop.f32.mrf.mxu0
  %v6119 = vadd.f32 %v5830, %v6118
  %v6120 = vpop.f32.mrf.mxu0
  %v6121 = vpop.f32.mrf.mxu0
  %v6122 = vadd.f32 %v5833, %v6121
  %v6123 = vpop.f32.mrf.mxu0
  %6124 = vmatprep.mubr.bf16.mxu0 %v2819
  %6125 = vmatmul.mubr.bf16.gmra.mxu0 %v2818
  %v6126 = vpop.f32.mrf.mxu0
  %v6127 = vadd.f32 %v5838, %v6126
  %v6128 = vpop.f32.mrf.mxu0
  %v6129 = vpop.f32.mrf.mxu0
  %v6130 = vadd.f32 %v5841, %v6129
  %v6131 = vpop.f32.mrf.mxu0
  %6132 = vmatprep.mubr.bf16.mxu0 %v2835
  %6133 = vmatmul.mubr.bf16.gmra.mxu0 %v2834
  %v6134 = vpop.f32.mrf.mxu0
  %v6135 = vadd.f32 %v5846, %v6134
  %v6136 = vpop.f32.mrf.mxu0
  %v6137 = vpop.f32.mrf.mxu0
  %v6138 = vadd.f32 %v5849, %v6137
  %v6139 = vpop.f32.mrf.mxu0
  %6140 = vdwg.mxu0
  %6141 = vmatprep.subr.bf16.mxu0 0
  %6142 = vmatpush1.bf16.msra.mxu0 %v3981
  %6143 = vmatprep.subr.bf16.mxu0 0
  %6144 = vmatpush1.bf16.msra.mxu0 %v3980
  %6145 = vmatprep.subr.bf16.mxu0 0
  %6146 = vmatpush1.bf16.msra.mxu0 %v3979
  %6147 = vmatprep.subr.bf16.mxu0 0
  %6148 = vmatpush1.bf16.msra.mxu0 %v3978
  %6149 = vmatprep.subr.bf16.mxu0 0
  %6150 = vmatpush1.bf16.msra.mxu0 %v3977
  %6151 = vmatprep.subr.bf16.mxu0 0
  %6152 = vmatpush1.bf16.msra.mxu0 %v3976
  %6153 = vmatprep.subr.bf16.mxu0 0
  %6154 = vmatpush1.bf16.msra.mxu0 %v3975
  %6155 = vmatprep.subr.bf16.mxu0 0
  %6156 = vmatpush1.bf16.msra.mxu0 %v3974
  %6157 = vmatprep.subr.bf16.mxu0 0
  %6158 = vmatpush2.bf16.msra.mxu0 %v3989
  %6159 = vmatprep.subr.bf16.mxu0 0
  %6160 = vmatpush2.bf16.msra.mxu0 %v3988
  %6161 = vmatprep.subr.bf16.mxu0 0
  %6162 = vmatpush2.bf16.msra.mxu0 %v3987
  %6163 = vmatprep.subr.bf16.mxu0 0
  %6164 = vmatpush2.bf16.msra.mxu0 %v3986
  %6165 = vmatprep.subr.bf16.mxu0 0
  %6166 = vmatpush2.bf16.msra.mxu0 %v3985
  %6167 = vmatprep.subr.bf16.mxu0 0
  %6168 = vmatpush2.bf16.msra.mxu0 %v3984
  %6169 = vmatprep.subr.bf16.mxu0 0
  %6170 = vmatpush2.bf16.msra.mxu0 %v3983
  %6171 = vmatprep.subr.bf16.mxu0 0
  %6172 = vmatpush2.bf16.msra.mxu0 %v3982
  %6173 = vmatprep.mubr.bf16.mxu0 %v2341
  %6174 = vmatmul.mubr.bf16.gmra.mxu0 %v2340
  %v6175 = vpop.f32.mrf.mxu0
  %v6176 = vadd.f32 %v5887, %v6175
  %v6177 = vpop.f32.mrf.mxu0
  %v6178 = vpop.f32.mrf.mxu0
  %v6179 = vadd.f32 %v5890, %v6178
  %v6180 = vpop.f32.mrf.mxu0
  %6181 = vmatprep.mubr.bf16.mxu0 %v2357
  %6182 = vmatmul.mubr.bf16.gmra.mxu0 %v2356
  %v6183 = vpop.f32.mrf.mxu0
  %v6184 = vadd.f32 %v5895, %v6183
  %v6185 = vpop.f32.mrf.mxu0
  %v6186 = vpop.f32.mrf.mxu0
  %v6187 = vadd.f32 %v5898, %v6186
  %v6188 = vpop.f32.mrf.mxu0
  %6189 = vmatprep.mubr.bf16.mxu0 %v2373
  %6190 = vmatmul.mubr.bf16.gmra.mxu0 %v2372
  %v6191 = vpop.f32.mrf.mxu0
  %v6192 = vadd.f32 %v5903, %v6191
  %v6193 = vpop.f32.mrf.mxu0
  %v6194 = vpop.f32.mrf.mxu0
  %v6195 = vadd.f32 %v5906, %v6194
  %v6196 = vpop.f32.mrf.mxu0
  %6197 = vmatprep.mubr.bf16.mxu0 %v2389
  %6198 = vmatmul.mubr.bf16.gmra.mxu0 %v2388
  %v6199 = vpop.f32.mrf.mxu0
  %v6200 = vadd.f32 %v5911, %v6199
  %v6201 = vpop.f32.mrf.mxu0
  %v6202 = vpop.f32.mrf.mxu0
  %v6203 = vadd.f32 %v5914, %v6202
  %v6204 = vpop.f32.mrf.mxu0
  %6205 = vmatprep.mubr.bf16.mxu0 %v2405
  %6206 = vmatmul.mubr.bf16.gmra.mxu0 %v2404
  %v6207 = vpop.f32.mrf.mxu0
  %v6208 = vadd.f32 %v5919, %v6207
  %v6209 = vpop.f32.mrf.mxu0
  %v6210 = vpop.f32.mrf.mxu0
  %v6211 = vadd.f32 %v5922, %v6210
  %v6212 = vpop.f32.mrf.mxu0
  %6213 = vmatprep.mubr.bf16.mxu0 %v2421
  %6214 = vmatmul.mubr.bf16.gmra.mxu0 %v2420
  %v6215 = vpop.f32.mrf.mxu0
  %v6216 = vadd.f32 %v5927, %v6215
  %v6217 = vpop.f32.mrf.mxu0
  %v6218 = vpop.f32.mrf.mxu0
  %v6219 = vadd.f32 %v5930, %v6218
  %v6220 = vpop.f32.mrf.mxu0
  %6221 = vmatprep.mubr.bf16.mxu0 %v2437
  %6222 = vmatmul.mubr.bf16.gmra.mxu0 %v2436
  %v6223 = vpop.f32.mrf.mxu0
  %v6224 = vadd.f32 %v5935, %v6223
  %v6225 = vpop.f32.mrf.mxu0
  %v6226 = vpop.f32.mrf.mxu0
  %v6227 = vadd.f32 %v5938, %v6226
  %v6228 = vpop.f32.mrf.mxu0
  %6229 = vmatprep.mubr.bf16.mxu0 %v2453
  %6230 = vmatmul.mubr.bf16.gmra.mxu0 %v2452
  %v6231 = vpop.f32.mrf.mxu0
  %v6232 = vadd.f32 %v5943, %v6231
  %v6233 = vpop.f32.mrf.mxu0
  %v6234 = vpop.f32.mrf.mxu0
  %v6235 = vadd.f32 %v5946, %v6234
  %v6236 = vpop.f32.mrf.mxu0
  %6237 = vmatprep.mubr.bf16.mxu0 %v2469
  %6238 = vmatmul.mubr.bf16.gmra.mxu0 %v2468
  %v6239 = vpop.f32.mrf.mxu0
  %v6240 = vadd.f32 %v5951, %v6239
  %v6241 = vpop.f32.mrf.mxu0
  %v6242 = vpop.f32.mrf.mxu0
  %v6243 = vadd.f32 %v5954, %v6242
  %v6244 = vpop.f32.mrf.mxu0
  %6245 = vmatprep.mubr.bf16.mxu0 %v2485
  %6246 = vmatmul.mubr.bf16.gmra.mxu0 %v2484
  %v6247 = vpop.f32.mrf.mxu0
  %v6248 = vadd.f32 %v5959, %v6247
  %v6249 = vpop.f32.mrf.mxu0
  %v6250 = vpop.f32.mrf.mxu0
  %v6251 = vadd.f32 %v5962, %v6250
  %v6252 = vpop.f32.mrf.mxu0
  %6253 = vmatprep.mubr.bf16.mxu0 %v2501
  %6254 = vmatmul.mubr.bf16.gmra.mxu0 %v2500
  %v6255 = vpop.f32.mrf.mxu0
  %v6256 = vadd.f32 %v5967, %v6255
  %v6257 = vpop.f32.mrf.mxu0
  %v6258 = vpop.f32.mrf.mxu0
  %v6259 = vadd.f32 %v5970, %v6258
  %v6260 = vpop.f32.mrf.mxu0
  %6261 = vmatprep.mubr.bf16.mxu0 %v2517
  %6262 = vmatmul.mubr.bf16.gmra.mxu0 %v2516
  %v6263 = vpop.f32.mrf.mxu0
  %v6264 = vadd.f32 %v5975, %v6263
  %v6265 = vpop.f32.mrf.mxu0
  %v6266 = vpop.f32.mrf.mxu0
  %v6267 = vadd.f32 %v5978, %v6266
  %v6268 = vpop.f32.mrf.mxu0
  %6269 = vmatprep.mubr.bf16.mxu0 %v2533
  %6270 = vmatmul.mubr.bf16.gmra.mxu0 %v2532
  %v6271 = vpop.f32.mrf.mxu0
  %v6272 = vadd.f32 %v5983, %v6271
  %v6273 = vpop.f32.mrf.mxu0
  %v6274 = vpop.f32.mrf.mxu0
  %v6275 = vadd.f32 %v5986, %v6274
  %v6276 = vpop.f32.mrf.mxu0
  %6277 = vmatprep.mubr.bf16.mxu0 %v2549
  %6278 = vmatmul.mubr.bf16.gmra.mxu0 %v2548
  %v6279 = vpop.f32.mrf.mxu0
  %v6280 = vadd.f32 %v5991, %v6279
  %v6281 = vpop.f32.mrf.mxu0
  %v6282 = vpop.f32.mrf.mxu0
  %v6283 = vadd.f32 %v5994, %v6282
  %v6284 = vpop.f32.mrf.mxu0
  %6285 = vmatprep.mubr.bf16.mxu0 %v2565
  %6286 = vmatmul.mubr.bf16.gmra.mxu0 %v2564
  %v6287 = vpop.f32.mrf.mxu0
  %v6288 = vadd.f32 %v5999, %v6287
  %v6289 = vpop.f32.mrf.mxu0
  %v6290 = vpop.f32.mrf.mxu0
  %v6291 = vadd.f32 %v6002, %v6290
  %v6292 = vpop.f32.mrf.mxu0
  %6293 = vmatprep.mubr.bf16.mxu0 %v2581
  %6294 = vmatmul.mubr.bf16.gmra.mxu0 %v2580
  %v6295 = vpop.f32.mrf.mxu0
  %v6296 = vadd.f32 %v6007, %v6295
  %v6297 = vpop.f32.mrf.mxu0
  %v6298 = vpop.f32.mrf.mxu0
  %v6299 = vadd.f32 %v6010, %v6298
  %v6300 = vpop.f32.mrf.mxu0
  %6301 = vmatprep.mubr.bf16.mxu0 %v2597
  %6302 = vmatmul.mubr.bf16.gmra.mxu0 %v2596
  %v6303 = vpop.f32.mrf.mxu0
  %v6304 = vadd.f32 %v6015, %v6303
  %v6305 = vpop.f32.mrf.mxu0
  %v6306 = vpop.f32.mrf.mxu0
  %v6307 = vadd.f32 %v6018, %v6306
  %v6308 = vpop.f32.mrf.mxu0
  %6309 = vmatprep.mubr.bf16.mxu0 %v2613
  %6310 = vmatmul.mubr.bf16.gmra.mxu0 %v2612
  %v6311 = vpop.f32.mrf.mxu0
  %v6312 = vadd.f32 %v6023, %v6311
  %v6313 = vpop.f32.mrf.mxu0
  %v6314 = vpop.f32.mrf.mxu0
  %v6315 = vadd.f32 %v6026, %v6314
  %v6316 = vpop.f32.mrf.mxu0
  %6317 = vmatprep.mubr.bf16.mxu0 %v2629
  %6318 = vmatmul.mubr.bf16.gmra.mxu0 %v2628
  %v6319 = vpop.f32.mrf.mxu0
  %v6320 = vadd.f32 %v6031, %v6319
  %v6321 = vpop.f32.mrf.mxu0
  %v6322 = vpop.f32.mrf.mxu0
  %v6323 = vadd.f32 %v6034, %v6322
  %v6324 = vpop.f32.mrf.mxu0
  %6325 = vmatprep.mubr.bf16.mxu0 %v2645
  %6326 = vmatmul.mubr.bf16.gmra.mxu0 %v2644
  %v6327 = vpop.f32.mrf.mxu0
  %v6328 = vadd.f32 %v6039, %v6327
  %v6329 = vpop.f32.mrf.mxu0
  %v6330 = vpop.f32.mrf.mxu0
  %v6331 = vadd.f32 %v6042, %v6330
  %v6332 = vpop.f32.mrf.mxu0
  %6333 = vmatprep.mubr.bf16.mxu0 %v2661
  %6334 = vmatmul.mubr.bf16.gmra.mxu0 %v2660
  %v6335 = vpop.f32.mrf.mxu0
  %v6336 = vadd.f32 %v6047, %v6335
  %v6337 = vpop.f32.mrf.mxu0
  %v6338 = vpop.f32.mrf.mxu0
  %v6339 = vadd.f32 %v6050, %v6338
  %v6340 = vpop.f32.mrf.mxu0
  %6341 = vmatprep.mubr.bf16.mxu0 %v2677
  %6342 = vmatmul.mubr.bf16.gmra.mxu0 %v2676
  %v6343 = vpop.f32.mrf.mxu0
  %v6344 = vadd.f32 %v6055, %v6343
  %v6345 = vpop.f32.mrf.mxu0
  %v6346 = vpop.f32.mrf.mxu0
  %v6347 = vadd.f32 %v6058, %v6346
  %v6348 = vpop.f32.mrf.mxu0
  %6349 = vmatprep.mubr.bf16.mxu0 %v2693
  %6350 = vmatmul.mubr.bf16.gmra.mxu0 %v2692
  %v6351 = vpop.f32.mrf.mxu0
  %v6352 = vadd.f32 %v6063, %v6351
  %v6353 = vpop.f32.mrf.mxu0
  %v6354 = vpop.f32.mrf.mxu0
  %v6355 = vadd.f32 %v6066, %v6354
  %v6356 = vpop.f32.mrf.mxu0
  %6357 = vmatprep.mubr.bf16.mxu0 %v2709
  %6358 = vmatmul.mubr.bf16.gmra.mxu0 %v2708
  %v6359 = vpop.f32.mrf.mxu0
  %v6360 = vadd.f32 %v6071, %v6359
  %v6361 = vpop.f32.mrf.mxu0
  %v6362 = vpop.f32.mrf.mxu0
  %v6363 = vadd.f32 %v6074, %v6362
  %v6364 = vpop.f32.mrf.mxu0
  %6365 = vmatprep.mubr.bf16.mxu0 %v2725
  %6366 = vmatmul.mubr.bf16.gmra.mxu0 %v2724
  %v6367 = vpop.f32.mrf.mxu0
  %v6368 = vadd.f32 %v6079, %v6367
  %v6369 = vpop.f32.mrf.mxu0
  %v6370 = vpop.f32.mrf.mxu0
  %v6371 = vadd.f32 %v6082, %v6370
  %v6372 = vpop.f32.mrf.mxu0
  %6373 = vmatprep.mubr.bf16.mxu0 %v2741
  %6374 = vmatmul.mubr.bf16.gmra.mxu0 %v2740
  %v6375 = vpop.f32.mrf.mxu0
  %v6376 = vadd.f32 %v6087, %v6375
  %v6377 = vpop.f32.mrf.mxu0
  %v6378 = vpop.f32.mrf.mxu0
  %v6379 = vadd.f32 %v6090, %v6378
  %v6380 = vpop.f32.mrf.mxu0
  %6381 = vmatprep.mubr.bf16.mxu0 %v2757
  %6382 = vmatmul.mubr.bf16.gmra.mxu0 %v2756
  %v6383 = vpop.f32.mrf.mxu0
  %v6384 = vadd.f32 %v6095, %v6383
  %v6385 = vpop.f32.mrf.mxu0
  %v6386 = vpop.f32.mrf.mxu0
  %v6387 = vadd.f32 %v6098, %v6386
  %v6388 = vpop.f32.mrf.mxu0
  %6389 = vmatprep.mubr.bf16.mxu0 %v2773
  %6390 = vmatmul.mubr.bf16.gmra.mxu0 %v2772
  %v6391 = vpop.f32.mrf.mxu0
  %v6392 = vadd.f32 %v6103, %v6391
  %v6393 = vpop.f32.mrf.mxu0
  %v6394 = vpop.f32.mrf.mxu0
  %v6395 = vadd.f32 %v6106, %v6394
  %v6396 = vpop.f32.mrf.mxu0
  %6397 = vmatprep.mubr.bf16.mxu0 %v2789
  %6398 = vmatmul.mubr.bf16.gmra.mxu0 %v2788
  %v6399 = vpop.f32.mrf.mxu0
  %v6400 = vadd.f32 %v6111, %v6399
  %v6401 = vpop.f32.mrf.mxu0
  %v6402 = vpop.f32.mrf.mxu0
  %v6403 = vadd.f32 %v6114, %v6402
  %v6404 = vpop.f32.mrf.mxu0
  %6405 = vmatprep.mubr.bf16.mxu0 %v2805
  %6406 = vmatmul.mubr.bf16.gmra.mxu0 %v2804
  %v6407 = vpop.f32.mrf.mxu0
  %v6408 = vadd.f32 %v6119, %v6407
  %v6409 = vpop.f32.mrf.mxu0
  %v6410 = vpop.f32.mrf.mxu0
  %v6411 = vadd.f32 %v6122, %v6410
  %v6412 = vpop.f32.mrf.mxu0
  %6413 = vmatprep.mubr.bf16.mxu0 %v2821
  %6414 = vmatmul.mubr.bf16.gmra.mxu0 %v2820
  %v6415 = vpop.f32.mrf.mxu0
  %v6416 = vadd.f32 %v6127, %v6415
  %v6417 = vpop.f32.mrf.mxu0
  %v6418 = vpop.f32.mrf.mxu0
  %v6419 = vadd.f32 %v6130, %v6418
  %v6420 = vpop.f32.mrf.mxu0
  %6421 = vmatprep.mubr.bf16.mxu0 %v2837
  %6422 = vmatmul.mubr.bf16.gmra.mxu0 %v2836
  %v6423 = vpop.f32.mrf.mxu0
  %v6424 = vadd.f32 %v6135, %v6423
  %v6425 = vpop.f32.mrf.mxu0
  %v6426 = vpop.f32.mrf.mxu0
  %v6427 = vadd.f32 %v6138, %v6426
  %v6428 = vpop.f32.mrf.mxu0
  %6429 = vdwg.mxu0
  %v6430 = vtanh.pop %v6176
  %v6431 = vtanh.pop %v6179
  %v6432 = vtanh.pop %v6184
  %v6433 = vtanh.pop %v6187
  %v6434 = vtanh.pop %v6192
  %v6435 = vtanh.pop %v6195
  %v6436 = vtanh.pop %v6200
  %v6437 = vtanh.pop %v6203
  %v6438 = vtanh.pop %v6208
  %v6439 = vtanh.pop %v6211
  %v6440 = vtanh.pop %v6216
  %v6441 = vtanh.pop %v6219
  %v6442 = vtanh.pop %v6224
  %v6443 = vtanh.pop %v6227
  %v6444 = vtanh.pop %v6232
  %v6445 = vtanh.pop %v6235
  %v6446 = vtanh.pop %v6240
  %v6447 = vtanh.pop %v6243
  %v6448 = vtanh.pop %v6248
  %v6449 = vtanh.pop %v6251
  %v6450 = vtanh.pop %v6256
  %v6451 = vtanh.pop %v6259
  %v6452 = vtanh.pop %v6264
  %v6453 = vtanh.pop %v6267
  %v6454 = vtanh.pop %v6272
  %v6455 = vtanh.pop %v6275
  %v6456 = vtanh.pop %v6280
  %v6457 = vtanh.pop %v6283
  %v6458 = vtanh.pop %v6288
  %v6459 = vtanh.pop %v6291
  %v6460 = vtanh.pop %v6296
  %v6461 = vtanh.pop %v6299
  %v6462 = vtanh.pop %v6304
  %v6463 = vtanh.pop %v6307
  %v6464 = vtanh.pop %v6312
  %v6465 = vtanh.pop %v6315
  %v6466 = vtanh.pop %v6320
  %v6467 = vtanh.pop %v6323
  %v6468 = vtanh.pop %v6328
  %v6469 = vtanh.pop %v6331
  %v6470 = vtanh.pop %v6336
  %v6471 = vtanh.pop %v6339
  %v6472 = vtanh.pop %v6344
  %v6473 = vtanh.pop %v6347
  %v6474 = vtanh.pop %v6352
  %v6475 = vtanh.pop %v6355
  %v6476 = vtanh.pop %v6360
  %v6477 = vtanh.pop %v6363
  %v6478 = vtanh.pop %v6368
  %v6479 = vtanh.pop %v6371
  %v6480 = vtanh.pop %v6376
  %v6481 = vtanh.pop %v6379
  %v6482 = vtanh.pop %v6384
  %v6483 = vtanh.pop %v6387
  %v6484 = vtanh.pop %v6392
  %v6485 = vtanh.pop %v6395
  %v6486 = vtanh.pop %v6400
  %v6487 = vtanh.pop %v6403
  %v6488 = vtanh.pop %v6408
  %v6489 = vtanh.pop %v6411
  %v6490 = vtanh.pop %v6416
  %v6491 = vtanh.pop %v6419
  %v6492 = vtanh.pop %v6424
  %v6493 = vtanh.pop %v6427
  %vm6494 = vcmask 31744
  %6495 = vst.msk [vmem:[%s3] sm:$0xff] %vm6494, %v6430
  %6496 = vst.msk [vmem:[%s3 + $0x8] sm:$0xff] %vm6494, %v6431
  %6497 = vst.msk [vmem:[%s3 + $0x10] sm:$0xff] %vm6494, %v6432
  %6498 = vst.msk [vmem:[%s3 + $0x18] sm:$0xff] %vm6494, %v6433
  %6499 = vst.msk [vmem:[%s3 + $0x20] sm:$0xff] %vm6494, %v6434
  %6500 = vst.msk [vmem:[%s3 + $0x28] sm:$0xff] %vm6494, %v6435
  %6501 = vst.msk [vmem:[%s3 + $0x30] sm:$0xff] %vm6494, %v6436
  %6502 = vst.msk [vmem:[%s3 + $0x38] sm:$0xff] %vm6494, %v6437
  %6503 = vst.msk [vmem:[%s3 + $0x40] sm:$0xff] %vm6494, %v6438
  %6504 = vst.msk [vmem:[%s3 + $0x48] sm:$0xff] %vm6494, %v6439
  %6505 = vst.msk [vmem:[%s3 + $0x50] sm:$0xff] %vm6494, %v6440
  %6506 = vst.msk [vmem:[%s3 + $0x58] sm:$0xff] %vm6494, %v6441
  %6507 = vst.msk [vmem:[%s3 + $0x60] sm:$0xff] %vm6494, %v6442
  %6508 = vst.msk [vmem:[%s3 + $0x68] sm:$0xff] %vm6494, %v6443
  %6509 = vst.msk [vmem:[%s3 + $0x70] sm:$0xff] %vm6494, %v6444
  %6510 = vst.msk [vmem:[%s3 + $0x78] sm:$0xff] %vm6494, %v6445
  %6511 = vst.msk [vmem:[%s3 + $0x80] sm:$0xff] %vm6494, %v6446
  %6512 = vst.msk [vmem:[%s3 + $0x88] sm:$0xff] %vm6494, %v6447
  %6513 = vst.msk [vmem:[%s3 + $0x90] sm:$0xff] %vm6494, %v6448
  %6514 = vst.msk [vmem:[%s3 + $0x98] sm:$0xff] %vm6494, %v6449
  %6515 = vst.msk [vmem:[%s3 + $0xa0] sm:$0xff] %vm6494, %v6450
  %6516 = vst.msk [vmem:[%s3 + $0xa8] sm:$0xff] %vm6494, %v6451
  %6517 = vst.msk [vmem:[%s3 + $0xb0] sm:$0xff] %vm6494, %v6452
  %6518 = vst.msk [vmem:[%s3 + $0xb8] sm:$0xff] %vm6494, %v6453
  %6519 = vst.msk [vmem:[%s3 + $0xc0] sm:$0xff] %vm6494, %v6454
  %6520 = vst.msk [vmem:[%s3 + $0xc8] sm:$0xff] %vm6494, %v6455
  %6521 = vst.msk [vmem:[%s3 + $0xd0] sm:$0xff] %vm6494, %v6456
  %6522 = vst.msk [vmem:[%s3 + $0xd8] sm:$0xff] %vm6494, %v6457
  %6523 = vst.msk [vmem:[%s3 + $0xe0] sm:$0xff] %vm6494, %v6458
  %6524 = vst.msk [vmem:[%s3 + $0xe8] sm:$0xff] %vm6494, %v6459
  %6525 = vst.msk [vmem:[%s3 + $0xf0] sm:$0xff] %vm6494, %v6460
  %6526 = vst.msk [vmem:[%s3 + $0xf8] sm:$0xff] %vm6494, %v6461
  %6527 = vst.msk [vmem:[%s3 + $0x100] sm:$0xff] %vm6494, %v6462
  %6528 = vst.msk [vmem:[%s3 + $0x108] sm:$0xff] %vm6494, %v6463
  %6529 = vst.msk [vmem:[%s3 + $0x110] sm:$0xff] %vm6494, %v6464
  %6530 = vst.msk [vmem:[%s3 + $0x118] sm:$0xff] %vm6494, %v6465
  %6531 = vst.msk [vmem:[%s3 + $0x120] sm:$0xff] %vm6494, %v6466
  %6532 = vst.msk [vmem:[%s3 + $0x128] sm:$0xff] %vm6494, %v6467
  %6533 = vst.msk [vmem:[%s3 + $0x130] sm:$0xff] %vm6494, %v6468
  %6534 = vst.msk [vmem:[%s3 + $0x138] sm:$0xff] %vm6494, %v6469
  %6535 = vst.msk [vmem:[%s3 + $0x140] sm:$0xff] %vm6494, %v6470
  %6536 = vst.msk [vmem:[%s3 + $0x148] sm:$0xff] %vm6494, %v6471
  %6537 = vst.msk [vmem:[%s3 + $0x150] sm:$0xff] %vm6494, %v6472
  %6538 = vst.msk [vmem:[%s3 + $0x158] sm:$0xff] %vm6494, %v6473
  %6539 = vst.msk [vmem:[%s3 + $0x160] sm:$0xff] %vm6494, %v6474
  %6540 = vst.msk [vmem:[%s3 + $0x168] sm:$0xff] %vm6494, %v6475
  %6541 = vst.msk [vmem:[%s3 + $0x170] sm:$0xff] %vm6494, %v6476
  %6542 = vst.msk [vmem:[%s3 + $0x178] sm:$0xff] %vm6494, %v6477
  %6543 = vst.msk [vmem:[%s3 + $0x180] sm:$0xff] %vm6494, %v6478
  %6544 = vst.msk [vmem:[%s3 + $0x188] sm:$0xff] %vm6494, %v6479
  %6545 = vst.msk [vmem:[%s3 + $0x190] sm:$0xff] %vm6494, %v6480
  %6546 = vst.msk [vmem:[%s3 + $0x198] sm:$0xff] %vm6494, %v6481
  %6547 = vst.msk [vmem:[%s3 + $0x1a0] sm:$0xff] %vm6494, %v6482
  %6548 = vst.msk [vmem:[%s3 + $0x1a8] sm:$0xff] %vm6494, %v6483
  %6549 = vst.msk [vmem:[%s3 + $0x1b0] sm:$0xff] %vm6494, %v6484
  %6550 = vst.msk [vmem:[%s3 + $0x1b8] sm:$0xff] %vm6494, %v6485
  %6551 = vst.msk [vmem:[%s3 + $0x1c0] sm:$0xff] %vm6494, %v6486
  %6552 = vst.msk [vmem:[%s3 + $0x1c8] sm:$0xff] %vm6494, %v6487
  %6553 = vst.msk [vmem:[%s3 + $0x1d0] sm:$0xff] %vm6494, %v6488
  %6554 = vst.msk [vmem:[%s3 + $0x1d8] sm:$0xff] %vm6494, %v6489
  %6555 = vst.msk [vmem:[%s3 + $0x1e0] sm:$0xff] %vm6494, %v6490
  %6556 = vst.msk [vmem:[%s3 + $0x1e8] sm:$0xff] %vm6494, %v6491
  %6557 = vst.msk [vmem:[%s3 + $0x1f0] sm:$0xff] %vm6494, %v6492
  %6558 = vst.msk [vmem:[%s3 + $0x1f8] sm:$0xff] %vm6494, %v6493
  // Predicated region
  $region14: #{generator_forward.7} parent=0 // pred_check
    _
  $region15: #{generator_forward.7} parent=0 // pred_check_branch
    %6560 = sbr.rel (0) target = $region17
  $region16: #{generator_forward.7} parent=0 // pred_region
    _
  $region17: #{generator_forward.7} parent=0 // pred_fallthru
    _
  // Predicated region
  $region18: #{generator_forward.7} parent=0 // pred_check
    _
  $region19: #{generator_forward.7} parent=0 // pred_check_branch
    %6562 = sbr.rel (0) target = $region21
  $region20: #{generator_forward.7} parent=0 // pred_region
    _
  $region21: #{generator_forward.7} parent=0 // pred_fallthru
    _

</llo_original>
